<compile_context>
chip_gen: v5e
topology: v5e:2x2
jax: 0.10.0
libtpu: 0.0.40
codegen_flags: <defaults>
</compile_context>

<pallas_src>
import functools

import jax
import jax.numpy as jnp
from jax.experimental import pallas as pl
from jax.experimental.pallas import tpu as pltpu
from jax.scipy.linalg import block_diag

# ----------------------------------------------------------------------------
# Hyper-parameters (SysModel.m / SysModel.n / args) -- small but representative
# ----------------------------------------------------------------------------
M = 4            # state dimension m
N = 2            # observation dimension n
IN_MULT = 5      # args.in_mult_KNet
OUT_MULT = 4     # args.out_mult_KNet
B = 8            # args.n_batch
T = 12           # sequence length processed inside the kernel

M2 = M * M
N2 = N * N
D_IN_Q = M * IN_MULT                 # 20
D_HID_Q = M2                         # 16
D_IN_SIG = D_HID_Q + M * IN_MULT     # 36
D_HID_SIG = M2                       # 16
D_IN_S = N2 + 2 * N * IN_MULT        # 24
D_HID_S = N2                         # 4
D_FC1_OUT = N2                       # 4
D_FC2_IN = D_HID_S + D_HID_SIG       # 20
D_FC2_HID = D_FC2_IN * OUT_MULT      # 80
D_FC2_OUT = N * M                    # 8
D_FC3_OUT = M2                       # 16
D_FC4_OUT = D_HID_SIG                # 16
D_FC5_OUT = M * IN_MULT              # 20
D_FC6_OUT = M * IN_MULT              # 20
D_FC7_OUT = 2 * N * IN_MULT          # 20

D_DIFF = 2 * N + 2 * M               # 12 : [obs|obs_innov|fw_evol|fw_update]
D_FEAT = D_FC7_OUT + D_FC6_OUT + D_FC5_OUT   # 60 : [fc7|fc6|fc5]
D_HALL = 2 * M2 + N2                 # 36 : [h_Q|h_Sigma|h_S]
D_GATES = 3 * (D_HID_Q + D_HID_SIG + D_HID_S)  # 108

# gi_all column layout: [S-part | Sigma-part | Q-part]  (matches feats layout)
GI_S0, GI_S1 = 0, 3 * D_HID_S                      # 0..12
GI_G0, GI_G1 = GI_S1, GI_S1 + 3 * D_HID_SIG        # 12..60
GI_Q0, GI_Q1 = GI_G1, GI_G1 + 3 * D_HID_Q          # 60..108
# gh_all column layout: [Q | Sigma | S]  (matches h_all layout)
GH_Q0, GH_Q1 = 0, 3 * D_HID_Q                      # 0..48
GH_G0, GH_G1 = GH_Q1, GH_Q1 + 3 * D_HID_SIG        # 48..96
GH_S0, GH_S1 = GH_G1, GH_G1 + 3 * D_HID_S          # 96..108
# fused out_Sigma matmul output layout: [fc1 | fc2a_sigma | fc4_sigma]
SIG_FC1_0, SIG_FC1_1 = 0, D_FC1_OUT                         # 0..4
SIG_FC2_0, SIG_FC2_1 = SIG_FC1_1, SIG_FC1_1 + D_FC2_HID     # 4..84
SIG_FC4_0, SIG_FC4_1 = SIG_FC2_1, SIG_FC2_1 + M2            # 84..100
# fused out_S matmul output layout: [fc2a_S | fc3_S(+fc3_b)]
SO_FC2_0, SO_FC2_1 = 0, D_FC2_HID                           # 0..80
SO_FC3_0, SO_FC3_1 = D_FC2_HID, D_FC2_HID + M2              # 80..96
# h_all lane layout
H_Q0, H_Q1 = 0, M2
H_G0, H_G1 = M2, 2 * M2
H_S0, H_S1 = 2 * M2, 2 * M2 + N2

# Packed init-state slab lane offsets: [x_post0 | y_prev0 | h_Q0 | h_Sigma0 | h_S0]
O_X = 0
O_Y = M
O_HQ = M + N
D_INIT = O_HQ + D_HALL               # 42

# Packed final-state slab lane offsets: [x_post | h_Q | h_Sigma | h_S]
F_X = 0
F_HQ = M
F_HSIG = F_HQ + M2
F_HS = F_HSIG + M2
D_FINAL = F_HS + N2                  # 40

# Approximate per-step matmul "K*N" sum for the CostEstimate
_MM_KN = (M * (M + N) + D_DIFF * D_FEAT + D_HALL * D_GATES + D_FEAT * D_GATES
          + D_HID_Q * 3 * D_HID_SIG
          + D_HID_SIG * (D_FC1_OUT + D_FC2_HID + M2)
          + D_FC1_OUT * 3 * D_HID_S
          + D_HID_S * (D_FC2_HID + M2)
          + D_FC2_HID * D_FC2_OUT + D_FC2_OUT * M2 + M2 * M2
          + (M * N) * M)


# ----------------------------------------------------------------------------
# Host-side slab packing (one bf16 NN-weight slab + one f32 aux slab)
# ----------------------------------------------------------------------------
def _round_up(x, m):
    return (x + m - 1) // m * m


class _Slab:
    """Pack 2D blocks into one (rows, 128) slab; remember (row_off, K, Ncols)."""

    def __init__(self, dtype, row_align, lanes=128):
        self.dtype = dtype
        self.row_align = row_align
        self.lanes = lanes
        self.rows = 0
        self.offs = {}
        self.blocks = []

    def add(self, name, arr):
        arr = jnp.asarray(arr, jnp.float32)
        k, n = arr.shape
        assert n <= self.lanes, (name, arr.shape)
        self.offs[name] = (self.rows, int(k), int(n))
        rp = _round_up(k, self.row_align)
        blk = jnp.zeros((rp, self.lanes), jnp.float32).at[:k, :n].set(arr)
        self.blocks.append(blk)
        self.rows += rp

    def build(self):
        slab = jnp.concatenate(self.blocks, axis=0).astype(self.dtype)
        return slab, self.offs


def build_slabs(p, Ft, Ht, Em):
    """Fuse / block-diagonalize the module weights host-side and pack them."""
    g_wih_a, g_wih_b = p["g_wih"][:D_HID_Q], p["g_wih"][D_HID_Q:]
    s_wih_a, s_wih_b = p["s_wih"][:D_FC1_OUT], p["s_wih"][D_FC1_OUT:]
    fc2a_wa, fc2a_wb = p["fc2a_w"][:D_HID_SIG], p["fc2a_w"][D_HID_SIG:]
    fc3_wa, fc3_wb = p["fc3_w"][:D_HID_S], p["fc3_w"][D_HID_S:]
    fc4_wa, fc4_wb = p["fc4_w"][:D_HID_SIG], p["fc4_w"][D_HID_SIG:]

    wb = _Slab(jnp.bfloat16, row_align=16)            # NN matrices (MXU, bf16)
    wb.add("W_feat", block_diag(p["fc7_w"], p["fc6_w"], p["fc5_w"]))   # (12,60)
    wb.add("W_hh", block_diag(p["q_whh"], p["g_whh"], p["s_whh"]))     # (36,108)
    wb.add("W_gi", block_diag(s_wih_b, g_wih_b, p["q_wih"]))           # (60,108)
    wb.add("W_g_a", g_wih_a)                                           # (16,48)
    wb.add("W_sig", jnp.concatenate([p["fc1_w"], fc2a_wa, fc4_wa], 1))  # (16,100)
    wb.add("W_s_a", s_wih_a)                                           # (4,12)
    wb.add("W_s", jnp.concatenate([fc2a_wb, fc3_wa], 1))               # (4,96)
    wb.add("fc2b_w", p["fc2b_w"])                                      # (80,8)
    wb.add("fc3_wb", fc3_wb)                                           # (8,16)
    wb.add("fc4_wb", fc4_wb)                                           # (16,16)
    w_slab, w_offs = wb.build()

    ab = _Slab(jnp.float32, row_align=8)               # biases + system matrices
    ab.add("W_prior", jnp.concatenate([Ft, Ft @ Ht], axis=1))          # (4,6)
    ab.add("Em", Em)                                                   # (8,4)
    ab.add("b_feat", jnp.concatenate([p["fc7_b"], p["fc6_b"], p["fc5_b"]], 1))
    ab.add("b_hh", jnp.concatenate([p["q_bhh"], p["g_bhh"], p["s_bhh"]], 1))
    ab.add("b_gi", jnp.concatenate([p["s_bih"], p["g_bih"], p["q_bih"]], 1))
    ab.add("b_sig", jnp.concatenate([p["fc1_b"], p["fc2a_b"], p["fc4_b"]], 1))
    ab.add("b_s", jnp.concatenate(
        [jnp.zeros((1, D_FC2_HID), jnp.float32), p["fc3_b"]], 1))
    ab.add("fc2b_b", p["fc2b_b"])
    a_slab, a_offs = ab.build()
    return w_slab, w_offs, a_slab, a_offs


# ----------------------------------------------------------------------------
# Pallas kernel: full T-step recurrence in one invocation, state in vregs
# ----------------------------------------------------------------------------
def _make_kernel(w_offs, a_offs):
    def kernel(y_ref, init_ref, w_ref, a_ref, xseq_ref, final_ref):
        def W(name):
            o, k, n = w_offs[name]
            return w_ref[o:o + k, 0:n]

        def A(name):
            o, k, n = a_offs[name]
            return a_ref[o:o + k, 0:n]

        # Resident operands -- loaded once, reused by every unrolled step.
        W_feat, W_hh, W_gi = W("W_feat"), W("W_hh"), W("W_gi")
        W_g_a, W_sig, W_s_a, W_s = W("W_g_a"), W("W_sig"), W("W_s_a"), W("W_s")
        W_fc2b, W_fc3b, W_fc4b = W("fc2b_w"), W("fc3_wb"), W("fc4_wb")
        W_prior, Em = A("W_prior"), A("Em")
        b_feat, b_hh, b_gi = A("b_feat"), A("b_hh"), A("b_gi")
        b_sig, b_s, b_fc2b = A("b_sig"), A("b_s"), A("fc2b_b")

        def mm16(a, w):   # NN matmul: bf16 inputs, f32 MXU accumulation
            return jnp.dot(a.astype(jnp.bfloat16), w,
                           preferred_element_type=jnp.float32)

        def mm32(a, w):   # system-dynamics matmul kept in f32
            return jnp.dot(a, w, preferred_element_type=jnp.float32)

        def l2n(x):
            # F.normalize(p=2, dim=1, eps=1e-12) via rsqrt (EUP slot)
            ss = jnp.sum(x * x, axis=1, keepdims=True)
            return x * jax.lax.rsqrt(jnp.maximum(ss, 1e-24))

        def gru(gi, gh, h, hid):
            # PyTorch nn.GRU gate order (r, z, n); reset applied to (W_hn h + b_hn)
            r = jax.nn.sigmoid(gi[:, :hid] + gh[:, :hid])
            z = jax.nn.sigmoid(gi[:, hid:2 * hid] + gh[:, hid:2 * hid])
            n = jnp.tanh(gi[:, 2 * hid:] + r * gh[:, 2 * hid:])
            return (1.0 - z) * n + z * h

        relu = lambda v: jnp.maximum(v, 0.0)

        # InitSequence / init_hidden_KNet state, carried as plain values.
        x_post = init_ref[:, O_X:O_X + M]
        x_post_prev = x_post
        x_prior_prev = x_post
        y_prev = init_ref[:, O_Y:O_Y + N]
        h_all = init_ref[:, O_HQ:O_HQ + D_HALL]        # [h_Q | h_Sigma | h_S]

        for t in range(y_ref.shape[0]):                # fully unrolled time loop
            y = y_ref[t]                               # (Bb, n)

            # ---- step_prior: x_prior and m1y from one fused matmul ----------
            prior = mm32(x_post, W_prior)              # (Bb, m+n)
            x_prior = prior[:, 0:M]
            m1y = prior[:, M:M + N]

            # ---- step_KGain_est: normalized feature differences -------------
            diffs = jnp.concatenate(
                [l2n(y - y_prev), l2n(y - m1y),
                 l2n(x_post - x_post_prev), l2n(x_post - x_prior_prev)], axis=1)

            # ---- KGain_step ---------------------------------------------------
            # FC7/FC6/FC5 fused (block-diag); GRU x-side and h-side fused too.
            feats = relu(mm16(diffs, W_feat) + b_feat)           # [fc7|fc6|fc5]
            gh_all = mm16(h_all, W_hh) + b_hh                    # off critical chain
            gi_all = mm16(feats, W_gi) + b_gi                    # [S|Sigma|Q] parts

            out_Q = gru(gi_all[:, GI_Q0:GI_Q1], gh_all[:, GH_Q0:GH_Q1],
                        h_all[:, H_Q0:H_Q1], D_HID_Q)
            gi_sig = gi_all[:, GI_G0:GI_G1] + mm16(out_Q, W_g_a)
            out_Sigma = gru(gi_sig, gh_all[:, GH_G0:GH_G1],
                            h_all[:, H_G0:H_G1], D_HID_SIG)

            sig_out = mm16(out_Sigma, W_sig) + b_sig    # [fc1 | fc2a_sig | fc4_sig]
            out_fc1 = relu(sig_out[:, SIG_FC1_0:SIG_FC1_1])
            gi_s = gi_all[:, GI_S0:GI_S1] + mm16(out_fc1, W_s_a)
            out_S = gru(gi_s, gh_all[:, GH_S0:GH_S1],
                        h_all[:, H_S0:H_S1], D_HID_S)

            s_out = mm16(out_S, W_s) + b_s              # [fc2a_S | fc3_S + fc3_b]
            hid2 = relu(sig_out[:, SIG_FC2_0:SIG_FC2_1] + s_out[:, SO_FC2_0:SO_FC2_1])
            out_fc2 = mm16(hid2, W_fc2b) + b_fc2b       # KGain flat, (Bb, m*n)
            out_fc3 = relu(s_out[:, SO_FC3_0:SO_FC3_1] + mm16(out_fc2, W_fc3b))
            out_fc4 = relu(sig_out[:, SIG_FC4_0:SIG_FC4_1] + mm16(out_fc3, W_fc4b))

            # ---- innovation + posterior update (bmm via (KG*tile(dy)) @ Em) ---
            dy = y - m1y
            dy_tiled = jnp.concatenate([dy] * M, axis=1)
            inov = mm32(out_fc2 * dy_tiled, Em)
            x_post_new = x_prior + inov

            xseq_ref[t] = x_post_new                    # VMEM store; 1 HBM DMA at end

            # ---- recurrent state update (matches PyTorch KNet_step ordering) --
            x_post_prev = x_post
            x_post = x_post_new
            x_prior_prev = x_prior
            y_prev = y
            h_all = jnp.concatenate([out_Q, out_fc4, out_S], axis=1)

        final_ref[:, F_X:F_X + M] = x_post
        final_ref[:, F_HQ:F_HQ + M2] = h_all[:, H_Q0:H_Q1]
        final_ref[:, F_HSIG:F_HSIG + M2] = h_all[:, H_G0:H_G1]
        final_ref[:, F_HS:F_HS + N2] = h_all[:, H_S0:H_S1]

    return kernel


def knet_filter_pallas(y_seq, init_state, w_slab, a_slab, w_offs, a_offs,
                       *, batch_blocks=1):
    """Run all T KNet_steps inside one pallas_call. Returns (x_post_seq, final)."""
    T_, Bfull, n_obs = y_seq.shape
    assert Bfull % batch_blocks == 0
    Bb = Bfull // batch_blocks
    # TODO(synk): on v7x use batch_blocks=2 (needs Bb % 8 == 0) for the 2nd core.
    assert batch_blocks == 1 or Bb % 8 == 0, "per-core batch must stay 8-aligned"

    kernel = _make_kernel(w_offs, a_offs)

    in_specs = [
        pl.BlockSpec((T_, Bb, n_obs), lambda c: (0, c, 0)),     # y, resident
        pl.BlockSpec((Bb, D_INIT), lambda c: (c, 0)),           # packed init state
        pl.BlockSpec(w_slab.shape, lambda c: (0, 0)),           # bf16 NN weights
        pl.BlockSpec(a_slab.shape, lambda c: (0, 0)),           # f32 biases/system
    ]
    out_shape = (
        jax.ShapeDtypeStruct((T_, Bfull, M), jnp.float32),      # m1x_posterior seq
        jax.ShapeDtypeStruct((Bfull, D_FINAL), jnp.float32),    # [x|h_Q|h_Sig|h_S]
    )
    out_specs = (
        pl.BlockSpec((T_, Bb, M), lambda c: (0, c, 0)),
        pl.BlockSpec((Bb, D_FINAL), lambda c: (c, 0)),
    )

    cost = pl.CostEstimate(
        flops=int(2 * Bfull * T_ * _MM_KN),
        transcendentals=int(T_ * Bfull
                            * (3 * (D_HID_Q + D_HID_SIG + D_HID_S) + 4)),
        bytes_accessed=int(y_seq.size * 4 + init_state.size * 4
                           + w_slab.size * 2 + a_slab.size * 4
                           + (T_ * Bfull * M + Bfull * D_FINAL) * 4),
    )

    fn = pl.pallas_call(
        kernel,
        grid=(batch_blocks,),
        in_specs=in_specs,
        out_specs=out_specs,
        out_shape=out_shape,
        compiler_params=pltpu.CompilerParams(
            dimension_semantics=("parallel",)),
        cost_estimate=cost,
    )
    return fn(y_seq, init_state, w_slab, a_slab)


# ----------------------------------------------------------------------------
# Deterministic parameter construction (PyTorch init, pre-transposed to (in,out))
# ----------------------------------------------------------------------------
def _uniform(key, shape, scale):
    return jax.random.uniform(key, shape, jnp.float32, -scale, scale)


def build_raw_params(key):
    keys = iter(jax.random.split(key, 64))

    def gru(d_in, d_hid):
        s = 1.0 / float(d_hid) ** 0.5
        wih = _uniform(next(keys), (3 * d_hid, d_in), s)    # PyTorch layout (3H, in)
        whh = _uniform(next(keys), (3 * d_hid, d_hid), s)
        bih = _uniform(next(keys), (3 * d_hid,), s)
        bhh = _uniform(next(keys), (3 * d_hid,), s)
        return wih.T, whh.T, bih[None, :], bhh[None, :]

    def linear(d_in, d_out):
        s = 1.0 / float(d_in) ** 0.5
        w = _uniform(next(keys), (d_out, d_in), s)
        b = _uniform(next(keys), (d_out,), s)
        return w.T, b[None, :]

    p = {}
    p["q_wih"], p["q_whh"], p["q_bih"], p["q_bhh"] = gru(D_IN_Q, D_HID_Q)
    p["g_wih"], p["g_whh"], p["g_bih"], p["g_bhh"] = gru(D_IN_SIG, D_HID_SIG)
    p["s_wih"], p["s_whh"], p["s_bih"], p["s_bhh"] = gru(D_IN_S, D_HID_S)
    p["fc1_w"], p["fc1_b"] = linear(D_HID_SIG, D_FC1_OUT)
    p["fc2a_w"], p["fc2a_b"] = linear(D_FC2_IN, D_FC2_HID)
    p["fc2b_w"], p["fc2b_b"] = linear(D_FC2_HID, D_FC2_OUT)
    p["fc3_w"], p["fc3_b"] = linear(D_HID_S + D_FC2_OUT, D_FC3_OUT)
    p["fc4_w"], p["fc4_b"] = linear(D_HID_SIG + D_FC3_OUT, D_FC4_OUT)
    p["fc5_w"], p["fc5_b"] = linear(M, D_FC5_OUT)
    p["fc6_w"], p["fc6_b"] = linear(M, D_FC6_OUT)
    p["fc7_w"], p["fc7_b"] = linear(2 * N, D_FC7_OUT)
    return p


# ----------------------------------------------------------------------------
# Pure-JAX reference: faithful port of the PyTorch module (original layout).
# nn_dtype selects the precision of the NN (Linear/GRU) matmul inputs so the
# kernel's bf16 MXU path can be checked tightly; system matmuls stay f32.
# ----------------------------------------------------------------------------
def _l2n_ref(x):
    nrm = jnp.sqrt(jnp.sum(x * x, axis=1, keepdims=True))
    return x / jnp.maximum(nrm, 1e-12)


def _gru_ref(x, h, wih_t, whh_t, bih, bhh, hid, mm):
    gi = mm(x, wih_t) + bih
    gh = mm(h, whh_t) + bhh
    r = jax.nn.sigmoid(gi[:, :hid] + gh[:, :hid])
    z = jax.nn.sigmoid(gi[:, hid:2 * hid] + gh[:, hid:2 * hid])
    n = jnp.tanh(gi[:, 2 * hid:] + r * gh[:, 2 * hid:])
    return (1.0 - z) * n + z * h


@functools.partial(jax.jit, static_argnames=("nn_dtype",))
def knet_reference(y_seq, x0, y_prev0, h_Q0, h_Sig0, h_S0, Ft, Ht, p, nn_dtype):
    sys_mm = lambda a, w: jnp.dot(a, w, preferred_element_type=jnp.float32,
                                  precision=jax.lax.Precision.HIGHEST)
    if nn_dtype == jnp.float32:
        mm = sys_mm
    else:
        mm = lambda a, w: jnp.dot(a.astype(nn_dtype), w.astype(nn_dtype),
                                  preferred_element_type=jnp.float32)
    relu = lambda v: jnp.maximum(v, 0.0)

    x_post, x_post_prev, x_prior_prev, y_prev = x0, x0, x0, y_prev0
    h_Q, h_Sig, h_S = h_Q0, h_Sig0, h_S0
    outs = []
    for t in range(y_seq.shape[0]):
        y = y_seq[t]
        x_prior = sys_mm(x_post, Ft)
        m1y = sys_mm(x_prior, Ht)
        obs_diff = _l2n_ref(y - y_prev)
        obs_innov_diff = _l2n_ref(y - m1y)
        fw_evol_diff = _l2n_ref(x_post - x_post_prev)
        fw_update_diff = _l2n_ref(x_post - x_prior_prev)

        out_fc5 = relu(mm(fw_update_diff, p["fc5_w"]) + p["fc5_b"])
        h_Q = _gru_ref(out_fc5, h_Q, p["q_wih"], p["q_whh"],
                       p["q_bih"], p["q_bhh"], D_HID_Q, mm)
        out_Q = h_Q
        out_fc6 = relu(mm(fw_evol_diff, p["fc6_w"]) + p["fc6_b"])
        in_Sigma = jnp.concatenate([out_Q, out_fc6], axis=1)
        out_Sigma = _gru_ref(in_Sigma, h_Sig, p["g_wih"], p["g_whh"],
                             p["g_bih"], p["g_bhh"], D_HID_SIG, mm)
        h_Sig = out_Sigma
        out_fc1 = relu(mm(out_Sigma, p["fc1_w"]) + p["fc1_b"])
        in_fc7 = jnp.concatenate([obs_diff, obs_innov_diff], axis=1)
        out_fc7 = relu(mm(in_fc7, p["fc7_w"]) + p["fc7_b"])
        in_S = jnp.concatenate([out_fc1, out_fc7], axis=1)
        h_S = _gru_ref(in_S, h_S, p["s_wih"], p["s_whh"],
                       p["s_bih"], p["s_bhh"], D_HID_S, mm)
        out_S = h_S
        in_fc2 = jnp.concatenate([out_Sigma, out_S], axis=1)
        hid2 = relu(mm(in_fc2, p["fc2a_w"]) + p["fc2a_b"])
        out_fc2 = mm(hid2, p["fc2b_w"]) + p["fc2b_b"]
        in_fc3 = jnp.concatenate([out_S, out_fc2], axis=1)
        out_fc3 = relu(mm(in_fc3, p["fc3_w"]) + p["fc3_b"])
        in_fc4 = jnp.concatenate([out_Sigma, out_fc3], axis=1)
        out_fc4 = relu(mm(in_fc4, p["fc4_w"]) + p["fc4_b"])
        h_Sig = out_fc4

        dy = y - m1y
        KG = out_fc2.reshape(out_fc2.shape[0], M, N)
        inov = jnp.einsum("bmn,bn->bm", KG, dy,
                          precision=jax.lax.Precision.HIGHEST)
        x_post_prev = x_post
        x_post = x_prior + inov
        x_prior_prev = x_prior
        y_prev = y
        outs.append(x_post)
    return jnp.stack(outs, axis=0), h_Q, h_Sig, h_S


if __name__ == "__main__":
    key = jax.random.PRNGKey(0)
    k_f, k_h, k_x0, k_y, k_w = jax.random.split(key, 5)

    # Linear system dynamics f(x)=F x, h(x)=H x (synthetic, deterministic).
    F = 0.9 * jnp.eye(M, dtype=jnp.float32) + 0.05 * _uniform(k_f, (M, M), 1.0)
    H = jnp.eye(N, M, dtype=jnp.float32) + 0.05 * _uniform(k_h, (N, M), 1.0)
    Ft, Ht = F.T, H.T                                        # row-vector convention
    Em = jnp.kron(jnp.eye(M, dtype=jnp.float32),
                  jnp.ones((N, 1), dtype=jnp.float32))       # (m*n, m)

    # init_hidden_KNet priors
    prior_Q = 0.1 * jnp.eye(M, dtype=jnp.float32)
    prior_Sigma = 0.2 * jnp.eye(M, dtype=jnp.float32)
    prior_S = 0.3 * jnp.eye(N, dtype=jnp.float32)
    h_Q0 = jnp.tile(prior_Q.reshape(1, -1), (B, 1))
    h_Sig0 = jnp.tile(prior_Sigma.reshape(1, -1), (B, 1))
    h_S0 = jnp.tile(prior_S.reshape(1, -1), (B, 1))

    # InitSequence
    M1_0 = jax.random.normal(k_x0, (B, M, 1), jnp.float32)
    x0 = M1_0[:, :, 0]
    y_prev0 = x0 @ Ht                                        # h(m1x_posterior)

    # Observation sequence (T, B, n, 1) as PyTorch would feed per step; squeeze.
    y_seq = jax.random.normal(k_y, (T, B, N, 1), jnp.float32)[..., 0]

    raw = build_raw_params(k_w)
    w_slab, w_offs, a_slab, a_offs = build_slabs(raw, Ft, Ht, Em)

    init_state = jnp.concatenate([x0, y_prev0, h_Q0, h_Sig0, h_S0], axis=1)
    assert init_state.shape == (B, D_INIT)

    # ---- run the Pallas kernel (whole sequence, one call) -------------------
    x_seq, final_state = jax.block_until_ready(
        knet_filter_pallas(y_seq, init_state, w_slab, a_slab, w_offs, a_offs))
    m1x_posterior_seq = x_seq[..., None]         # back to PyTorch shape (T,B,m,1)

    # ---- references: bf16-NN (tight) and full-f32 (loose) -------------------
    ref16_seq, r16_hQ, r16_hSig, r16_hS = knet_reference(
        y_seq, x0, y_prev0, h_Q0, h_Sig0, h_S0, Ft, Ht, raw,
        nn_dtype=jnp.bfloat16)
    ref32_seq, _, _, _ = knet_reference(
        y_seq, x0, y_prev0, h_Q0, h_Sig0, h_S0, Ft, Ht, raw,
        nn_dtype=jnp.float32)
    ref16_seq = jax.block_until_ready(ref16_seq)
    ref16_final = jnp.concatenate([ref16_seq[-1], r16_hQ, r16_hSig, r16_hS], axis=1)

    assert m1x_posterior_seq.shape == (T, B, M, 1)
    assert bool(jnp.isfinite(x_seq).all())
    assert bool(jnp.isfinite(final_state).all())

    err_seq16 = float(jnp.max(jnp.abs(x_seq - ref16_seq)))
    err_fin16 = float(jnp.max(jnp.abs(final_state - ref16_final)))
    err_seq32 = float(jnp.max(jnp.abs(x_seq - ref32_seq)))
    # Tight check vs a reference using the same bf16 NN-matmul semantics.
    assert err_seq16 < 2e-2, f"posterior mismatch vs bf16 reference: {err_seq16}"
    assert err_fin16 < 2e-2, f"final-state mismatch vs bf16 reference: {err_fin16}"
    # Loose sanity vs the full-f32 PyTorch-faithful reference (bf16 MXU drift).
    assert err_seq32 < 0.25, f"posterior drift vs f32 reference too large: {err_seq32}"

    print("KERNEL_OK")
</pallas_src>

<mosaic_0001>
module attributes {stable_mosaic.version = 11 : i64} {
  func.func @kernel(%arg0: i32, %arg1: memref<12x8x2xf32, #tpu.memory_space<vmem>>, %arg2: memref<8x42xf32, #tpu.memory_space<vmem>>, %arg3: memref<304x128xbf16, #tpu.memory_space<vmem>>, %arg4: memref<64x128xf32, #tpu.memory_space<vmem>>, %arg5: memref<12x8x4xf32, #tpu.memory_space<vmem>>, %arg6: memref<8x40xf32, #tpu.memory_space<vmem>>) attributes {dimension_semantics = [#tpu.dimension_semantics<parallel>], iteration_bounds = array<i64: 1>, scalar_prefetch = 0 : i64, scratch_operands = 0 : i64, tpu.core_type = #tpu.core_type<tc>, window_params = [{transform_indices = @transform_0, window_bounds = array<i64: 12, 8, 2>}, {transform_indices = @transform_1, window_bounds = array<i64: 8, 42>}, {pipeline_mode = #tpu.pipeline_mode<synchronous>, transform_indices = @transform_2, window_bounds = array<i64: 304, 128>}, {pipeline_mode = #tpu.pipeline_mode<synchronous>, transform_indices = @transform_3, window_bounds = array<i64: 64, 128>}, {transform_indices = @transform_4, window_bounds = array<i64: 12, 8, 4>}, {transform_indices = @transform_5, window_bounds = array<i64: 8, 40>}]} {
    %c0 = arith.constant 0 : index
    %c0_0 = arith.constant 0 : index
    %0 = vector.load %arg3[%c0, %c0_0] : memref<304x128xbf16, #tpu.memory_space<vmem>>, vector<12x60xbf16>
    %c16 = arith.constant 16 : index
    %c0_1 = arith.constant 0 : index
    %1 = vector.load %arg3[%c16, %c0_1] : memref<304x128xbf16, #tpu.memory_space<vmem>>, vector<36x108xbf16>
    %c64 = arith.constant 64 : index
    %c0_2 = arith.constant 0 : index
    %2 = vector.load %arg3[%c64, %c0_2] : memref<304x128xbf16, #tpu.memory_space<vmem>>, vector<60x108xbf16>
    %c128 = arith.constant 128 : index
    %c0_3 = arith.constant 0 : index
    %3 = vector.load %arg3[%c128, %c0_3] : memref<304x128xbf16, #tpu.memory_space<vmem>>, vector<16x48xbf16>
    %c144 = arith.constant 144 : index
    %c0_4 = arith.constant 0 : index
    %4 = vector.load %arg3[%c144, %c0_4] : memref<304x128xbf16, #tpu.memory_space<vmem>>, vector<16x100xbf16>
    %c160 = arith.constant 160 : index
    %c0_5 = arith.constant 0 : index
    %5 = vector.load %arg3[%c160, %c0_5] : memref<304x128xbf16, #tpu.memory_space<vmem>>, vector<4x12xbf16>
    %c176 = arith.constant 176 : index
    %c0_6 = arith.constant 0 : index
    %6 = vector.load %arg3[%c176, %c0_6] : memref<304x128xbf16, #tpu.memory_space<vmem>>, vector<4x96xbf16>
    %c192 = arith.constant 192 : index
    %c0_7 = arith.constant 0 : index
    %7 = vector.load %arg3[%c192, %c0_7] : memref<304x128xbf16, #tpu.memory_space<vmem>>, vector<80x8xbf16>
    %c272 = arith.constant 272 : index
    %c0_8 = arith.constant 0 : index
    %8 = vector.load %arg3[%c272, %c0_8] : memref<304x128xbf16, #tpu.memory_space<vmem>>, vector<8x16xbf16>
    %c288 = arith.constant 288 : index
    %c0_9 = arith.constant 0 : index
    %9 = vector.load %arg3[%c288, %c0_9] : memref<304x128xbf16, #tpu.memory_space<vmem>>, vector<16x16xbf16>
    %c0_10 = arith.constant 0 : index
    %c0_11 = arith.constant 0 : index
    %10 = vector.load %arg4[%c0_10, %c0_11] : memref<64x128xf32, #tpu.memory_space<vmem>>, vector<4x6xf32>
    %c8 = arith.constant 8 : index
    %c0_12 = arith.constant 0 : index
    %11 = vector.load %arg4[%c8, %c0_12] : memref<64x128xf32, #tpu.memory_space<vmem>>, vector<8x4xf32>
    %c16_13 = arith.constant 16 : index
    %c0_14 = arith.constant 0 : index
    %12 = vector.load %arg4[%c16_13, %c0_14] : memref<64x128xf32, #tpu.memory_space<vmem>>, vector<1x60xf32>
    %c24 = arith.constant 24 : index
    %c0_15 = arith.constant 0 : index
    %13 = vector.load %arg4[%c24, %c0_15] : memref<64x128xf32, #tpu.memory_space<vmem>>, vector<1x108xf32>
    %c32 = arith.constant 32 : index
    %c0_16 = arith.constant 0 : index
    %14 = vector.load %arg4[%c32, %c0_16] : memref<64x128xf32, #tpu.memory_space<vmem>>, vector<1x108xf32>
    %c40 = arith.constant 40 : index
    %c0_17 = arith.constant 0 : index
    %15 = vector.load %arg4[%c40, %c0_17] : memref<64x128xf32, #tpu.memory_space<vmem>>, vector<1x100xf32>
    %c48 = arith.constant 48 : index
    %c0_18 = arith.constant 0 : index
    %16 = vector.load %arg4[%c48, %c0_18] : memref<64x128xf32, #tpu.memory_space<vmem>>, vector<1x96xf32>
    %c56 = arith.constant 56 : index
    %c0_19 = arith.constant 0 : index
    %17 = vector.load %arg4[%c56, %c0_19] : memref<64x128xf32, #tpu.memory_space<vmem>>, vector<1x8xf32>
    %c0_20 = arith.constant 0 : index
    %c0_21 = arith.constant 0 : index
    %18 = vector.load %arg2[%c0_20, %c0_21] : memref<8x42xf32, #tpu.memory_space<vmem>>, vector<8x4xf32>
    %c0_22 = arith.constant 0 : index
    %c4 = arith.constant 4 : index
    %19 = vector.load %arg2[%c0_22, %c4] : memref<8x42xf32, #tpu.memory_space<vmem>>, vector<8x2xf32>
    %c0_23 = arith.constant 0 : index
    %c6 = arith.constant 6 : index
    %20 = vector.load %arg2[%c0_23, %c6] : memref<8x42xf32, #tpu.memory_space<vmem>>, vector<8x36xf32>
    %c0_24 = arith.constant 0 : index
    %c0_25 = arith.constant 0 : index
    %c0_26 = arith.constant 0 : index
    %21 = vector.load %arg1[%c0_24, %c0_25, %c0_26] : memref<12x8x2xf32, #tpu.memory_space<vmem>>, vector<1x8x2xf32>
    %22 = vector.shape_cast %21 : vector<1x8x2xf32> to vector<8x2xf32>
    %cst = arith.constant dense<0.000000e+00> : vector<8x6xf32>
    %23 = tpu.matmul %18, %10, %cst {dimension_numbers = #tpu.dot_dimension_numbers<[1], [0], [0], [1], [0, 0, 1, 1], [], []>} : vector<8x4xf32>, vector<4x6xf32>, vector<8x6xf32> -> vector<8x6xf32>
    %24 = vector.extract_strided_slice %23 {offsets = [0, 0], sizes = [8, 4], strides = [1, 1]} : vector<8x6xf32> to vector<8x4xf32>
    %25 = vector.extract_strided_slice %23 {offsets = [0, 4], sizes = [8, 2], strides = [1, 1]} : vector<8x6xf32> to vector<8x2xf32>
    %26 = arith.subf %22, %19 : vector<8x2xf32>
    %27 = arith.mulf %26, %26 : vector<8x2xf32>
    %cst_27 = arith.constant dense<0.000000e+00> : vector<8xf32>
    %28 = vector.multi_reduction <add>, %27, %cst_27 [1] : vector<8x2xf32> to vector<8xf32>
    %29 = vector.shape_cast %28 : vector<8xf32> to vector<8x1xf32>
    %cst_28 = arith.constant 1.000000e-24 : f32
    %30 = vector.broadcast %cst_28 : f32 to vector<8x1xf32>
    %31 = arith.maximumf %29, %30 : vector<8x1xf32>
    %32 = math.rsqrt %31 : vector<8x1xf32>
    %33 = vector.broadcast %32 : vector<8x1xf32> to vector<8x2xf32>
    %34 = arith.mulf %26, %33 : vector<8x2xf32>
    %35 = arith.subf %22, %25 : vector<8x2xf32>
    %36 = arith.mulf %35, %35 : vector<8x2xf32>
    %cst_29 = arith.constant dense<0.000000e+00> : vector<8xf32>
    %37 = vector.multi_reduction <add>, %36, %cst_29 [1] : vector<8x2xf32> to vector<8xf32>
    %38 = vector.shape_cast %37 : vector<8xf32> to vector<8x1xf32>
    %cst_30 = arith.constant 1.000000e-24 : f32
    %39 = vector.broadcast %cst_30 : f32 to vector<8x1xf32>
    %40 = arith.maximumf %38, %39 : vector<8x1xf32>
    %41 = math.rsqrt %40 : vector<8x1xf32>
    %42 = vector.broadcast %41 : vector<8x1xf32> to vector<8x2xf32>
    %43 = arith.mulf %35, %42 : vector<8x2xf32>
    %44 = arith.subf %18, %18 : vector<8x4xf32>
    %45 = arith.mulf %44, %44 : vector<8x4xf32>
    %cst_31 = arith.constant dense<0.000000e+00> : vector<8xf32>
    %46 = vector.multi_reduction <add>, %45, %cst_31 [1] : vector<8x4xf32> to vector<8xf32>
    %47 = vector.shape_cast %46 : vector<8xf32> to vector<8x1xf32>
    %cst_32 = arith.constant 1.000000e-24 : f32
    %48 = vector.broadcast %cst_32 : f32 to vector<8x1xf32>
    %49 = arith.maximumf %47, %48 : vector<8x1xf32>
    %50 = math.rsqrt %49 : vector<8x1xf32>
    %51 = vector.broadcast %50 : vector<8x1xf32> to vector<8x4xf32>
    %52 = arith.mulf %44, %51 : vector<8x4xf32>
    %53 = arith.subf %18, %18 : vector<8x4xf32>
    %54 = arith.mulf %53, %53 : vector<8x4xf32>
    %cst_33 = arith.constant dense<0.000000e+00> : vector<8xf32>
    %55 = vector.multi_reduction <add>, %54, %cst_33 [1] : vector<8x4xf32> to vector<8xf32>
    %56 = vector.shape_cast %55 : vector<8xf32> to vector<8x1xf32>
    %cst_34 = arith.constant 1.000000e-24 : f32
    %57 = vector.broadcast %cst_34 : f32 to vector<8x1xf32>
    %58 = arith.maximumf %56, %57 : vector<8x1xf32>
    %59 = math.rsqrt %58 : vector<8x1xf32>
    %60 = vector.broadcast %59 : vector<8x1xf32> to vector<8x4xf32>
    %61 = arith.mulf %53, %60 : vector<8x4xf32>
    %62 = tpu.concatenate %34, %43, %52, %61 in 1 : vector<8x2xf32>, vector<8x2xf32>, vector<8x4xf32>, vector<8x4xf32> -> vector<8x12xf32>
    %63 = arith.truncf %62 : vector<8x12xf32> to vector<8x12xbf16>
    %cst_35 = arith.constant dense<0.000000e+00> : vector<8x60xf32>
    %64 = tpu.matmul %63, %0, %cst_35 {dimension_numbers = #tpu.dot_dimension_numbers<[1], [0], [0], [1], [0, 0, 1, 1], [], []>} : vector<8x12xbf16>, vector<12x60xbf16>, vector<8x60xf32> -> vector<8x60xf32>
    %65 = vector.broadcast %12 : vector<1x60xf32> to vector<8x60xf32>
    %66 = arith.addf %64, %65 : vector<8x60xf32>
    %cst_36 = arith.constant 0.000000e+00 : f32
    %67 = vector.broadcast %cst_36 : f32 to vector<8x60xf32>
    %68 = arith.maximumf %66, %67 : vector<8x60xf32>
    %69 = arith.truncf %20 : vector<8x36xf32> to vector<8x36xbf16>
    %cst_37 = arith.constant dense<0.000000e+00> : vector<8x108xf32>
    %70 = tpu.matmul %69, %1, %cst_37 {dimension_numbers = #tpu.dot_dimension_numbers<[1], [0], [0], [1], [0, 0, 1, 1], [], []>} : vector<8x36xbf16>, vector<36x108xbf16>, vector<8x108xf32> -> vector<8x108xf32>
    %71 = vector.broadcast %13 : vector<1x108xf32> to vector<8x108xf32>
    %72 = arith.addf %70, %71 : vector<8x108xf32>
    %73 = arith.truncf %68 : vector<8x60xf32> to vector<8x60xbf16>
    %cst_38 = arith.constant dense<0.000000e+00> : vector<8x108xf32>
    %74 = tpu.matmul %73, %2, %cst_38 {dimension_numbers = #tpu.dot_dimension_numbers<[1], [0], [0], [1], [0, 0, 1, 1], [], []>} : vector<8x60xbf16>, vector<60x108xbf16>, vector<8x108xf32> -> vector<8x108xf32>
    %75 = vector.broadcast %14 : vector<1x108xf32> to vector<8x108xf32>
    %76 = arith.addf %74, %75 : vector<8x108xf32>
    %77 = vector.extract_strided_slice %76 {offsets = [0, 60], sizes = [8, 48], strides = [1, 1]} : vector<8x108xf32> to vector<8x48xf32>
    %78 = vector.extract_strided_slice %72 {offsets = [0, 0], sizes = [8, 48], strides = [1, 1]} : vector<8x108xf32> to vector<8x48xf32>
    %79 = vector.extract_strided_slice %20 {offsets = [0, 0], sizes = [8, 16], strides = [1, 1]} : vector<8x36xf32> to vector<8x16xf32>
    %80 = vector.extract_strided_slice %77 {offsets = [0, 0], sizes = [8, 16], strides = [1, 1]} : vector<8x48xf32> to vector<8x16xf32>
    %81 = vector.extract_strided_slice %78 {offsets = [0, 0], sizes = [8, 16], strides = [1, 1]} : vector<8x48xf32> to vector<8x16xf32>
    %82 = arith.addf %80, %81 : vector<8x16xf32>
    %83 = arith.negf %82 : vector<8x16xf32>
    %84 = math.exp %83 : vector<8x16xf32>
    %cst_39 = arith.constant 1.000000e+00 : f32
    %85 = vector.broadcast %cst_39 : f32 to vector<8x16xf32>
    %86 = arith.addf %85, %84 : vector<8x16xf32>
    %87 = arith.divf %85, %86 : vector<8x16xf32>
    %88 = vector.extract_strided_slice %77 {offsets = [0, 16], sizes = [8, 16], strides = [1, 1]} : vector<8x48xf32> to vector<8x16xf32>
    %89 = vector.extract_strided_slice %78 {offsets = [0, 16], sizes = [8, 16], strides = [1, 1]} : vector<8x48xf32> to vector<8x16xf32>
    %90 = arith.addf %88, %89 : vector<8x16xf32>
    %91 = arith.negf %90 : vector<8x16xf32>
    %92 = math.exp %91 : vector<8x16xf32>
    %cst_40 = arith.constant 1.000000e+00 : f32
    %93 = vector.broadcast %cst_40 : f32 to vector<8x16xf32>
    %94 = arith.addf %93, %92 : vector<8x16xf32>
    %95 = arith.divf %93, %94 : vector<8x16xf32>
    %96 = vector.extract_strided_slice %77 {offsets = [0, 32], sizes = [8, 16], strides = [1, 1]} : vector<8x48xf32> to vector<8x16xf32>
    %97 = vector.extract_strided_slice %78 {offsets = [0, 32], sizes = [8, 16], strides = [1, 1]} : vector<8x48xf32> to vector<8x16xf32>
    %98 = arith.mulf %87, %97 : vector<8x16xf32>
    %99 = arith.addf %96, %98 : vector<8x16xf32>
    %100 = math.tanh %99 : vector<8x16xf32>
    %cst_41 = arith.constant 1.000000e+00 : f32
    %101 = vector.broadcast %cst_41 : f32 to vector<8x16xf32>
    %102 = arith.subf %101, %95 : vector<8x16xf32>
    %103 = arith.mulf %102, %100 : vector<8x16xf32>
    %104 = arith.mulf %95, %79 : vector<8x16xf32>
    %105 = arith.addf %103, %104 : vector<8x16xf32>
    %106 = vector.extract_strided_slice %76 {offsets = [0, 12], sizes = [8, 48], strides = [1, 1]} : vector<8x108xf32> to vector<8x48xf32>
    %107 = arith.truncf %105 : vector<8x16xf32> to vector<8x16xbf16>
    %cst_42 = arith.constant dense<0.000000e+00> : vector<8x48xf32>
    %108 = tpu.matmul %107, %3, %cst_42 {dimension_numbers = #tpu.dot_dimension_numbers<[1], [0], [0], [1], [0, 0, 1, 1], [], []>} : vector<8x16xbf16>, vector<16x48xbf16>, vector<8x48xf32> -> vector<8x48xf32>
    %109 = arith.addf %106, %108 : vector<8x48xf32>
    %110 = vector.extract_strided_slice %72 {offsets = [0, 48], sizes = [8, 48], strides = [1, 1]} : vector<8x108xf32> to vector<8x48xf32>
    %111 = vector.extract_strided_slice %20 {offsets = [0, 16], sizes = [8, 16], strides = [1, 1]} : vector<8x36xf32> to vector<8x16xf32>
    %112 = vector.extract_strided_slice %109 {offsets = [0, 0], sizes = [8, 16], strides = [1, 1]} : vector<8x48xf32> to vector<8x16xf32>
    %113 = vector.extract_strided_slice %110 {offsets = [0, 0], sizes = [8, 16], strides = [1, 1]} : vector<8x48xf32> to vector<8x16xf32>
    %114 = arith.addf %112, %113 : vector<8x16xf32>
    %115 = arith.negf %114 : vector<8x16xf32>
    %116 = math.exp %115 : vector<8x16xf32>
    %cst_43 = arith.constant 1.000000e+00 : f32
    %117 = vector.broadcast %cst_43 : f32 to vector<8x16xf32>
    %118 = arith.addf %117, %116 : vector<8x16xf32>
    %119 = arith.divf %117, %118 : vector<8x16xf32>
    %120 = vector.extract_strided_slice %109 {offsets = [0, 16], sizes = [8, 16], strides = [1, 1]} : vector<8x48xf32> to vector<8x16xf32>
    %121 = vector.extract_strided_slice %110 {offsets = [0, 16], sizes = [8, 16], strides = [1, 1]} : vector<8x48xf32> to vector<8x16xf32>
    %122 = arith.addf %120, %121 : vector<8x16xf32>
    %123 = arith.negf %122 : vector<8x16xf32>
    %124 = math.exp %123 : vector<8x16xf32>
    %cst_44 = arith.constant 1.000000e+00 : f32
    %125 = vector.broadcast %cst_44 : f32 to vector<8x16xf32>
    %126 = arith.addf %125, %124 : vector<8x16xf32>
    %127 = arith.divf %125, %126 : vector<8x16xf32>
    %128 = vector.extract_strided_slice %109 {offsets = [0, 32], sizes = [8, 16], strides = [1, 1]} : vector<8x48xf32> to vector<8x16xf32>
    %129 = vector.extract_strided_slice %110 {offsets = [0, 32], sizes = [8, 16], strides = [1, 1]} : vector<8x48xf32> to vector<8x16xf32>
    %130 = arith.mulf %119, %129 : vector<8x16xf32>
    %131 = arith.addf %128, %130 : vector<8x16xf32>
    %132 = math.tanh %131 : vector<8x16xf32>
    %cst_45 = arith.constant 1.000000e+00 : f32
    %133 = vector.broadcast %cst_45 : f32 to vector<8x16xf32>
    %134 = arith.subf %133, %127 : vector<8x16xf32>
    %135 = arith.mulf %134, %132 : vector<8x16xf32>
    %136 = arith.mulf %127, %111 : vector<8x16xf32>
    %137 = arith.addf %135, %136 : vector<8x16xf32>
    %138 = arith.truncf %137 : vector<8x16xf32> to vector<8x16xbf16>
    %cst_46 = arith.constant dense<0.000000e+00> : vector<8x100xf32>
    %139 = tpu.matmul %138, %4, %cst_46 {dimension_numbers = #tpu.dot_dimension_numbers<[1], [0], [0], [1], [0, 0, 1, 1], [], []>} : vector<8x16xbf16>, vector<16x100xbf16>, vector<8x100xf32> -> vector<8x100xf32>
    %140 = vector.broadcast %15 : vector<1x100xf32> to vector<8x100xf32>
    %141 = arith.addf %139, %140 : vector<8x100xf32>
    %142 = vector.extract_strided_slice %141 {offsets = [0, 0], sizes = [8, 4], strides = [1, 1]} : vector<8x100xf32> to vector<8x4xf32>
    %cst_47 = arith.constant 0.000000e+00 : f32
    %143 = vector.broadcast %cst_47 : f32 to vector<8x4xf32>
    %144 = arith.maximumf %142, %143 : vector<8x4xf32>
    %145 = vector.extract_strided_slice %76 {offsets = [0, 0], sizes = [8, 12], strides = [1, 1]} : vector<8x108xf32> to vector<8x12xf32>
    %146 = arith.truncf %144 : vector<8x4xf32> to vector<8x4xbf16>
    %cst_48 = arith.constant dense<0.000000e+00> : vector<8x12xf32>
    %147 = tpu.matmul %146, %5, %cst_48 {dimension_numbers = #tpu.dot_dimension_numbers<[1], [0], [0], [1], [0, 0, 1, 1], [], []>} : vector<8x4xbf16>, vector<4x12xbf16>, vector<8x12xf32> -> vector<8x12xf32>
    %148 = arith.addf %145, %147 : vector<8x12xf32>
    %149 = vector.extract_strided_slice %72 {offsets = [0, 96], sizes = [8, 12], strides = [1, 1]} : vector<8x108xf32> to vector<8x12xf32>
    %150 = vector.extract_strided_slice %20 {offsets = [0, 32], sizes = [8, 4], strides = [1, 1]} : vector<8x36xf32> to vector<8x4xf32>
    %151 = vector.extract_strided_slice %148 {offsets = [0, 0], sizes = [8, 4], strides = [1, 1]} : vector<8x12xf32> to vector<8x4xf32>
    %152 = vector.extract_strided_slice %149 {offsets = [0, 0], sizes = [8, 4], strides = [1, 1]} : vector<8x12xf32> to vector<8x4xf32>
    %153 = arith.addf %151, %152 : vector<8x4xf32>
    %154 = arith.negf %153 : vector<8x4xf32>
    %155 = math.exp %154 : vector<8x4xf32>
    %cst_49 = arith.constant 1.000000e+00 : f32
    %156 = vector.broadcast %cst_49 : f32 to vector<8x4xf32>
    %157 = arith.addf %156, %155 : vector<8x4xf32>
    %158 = arith.divf %156, %157 : vector<8x4xf32>
    %159 = vector.extract_strided_slice %148 {offsets = [0, 4], sizes = [8, 4], strides = [1, 1]} : vector<8x12xf32> to vector<8x4xf32>
    %160 = vector.extract_strided_slice %149 {offsets = [0, 4], sizes = [8, 4], strides = [1, 1]} : vector<8x12xf32> to vector<8x4xf32>
    %161 = arith.addf %159, %160 : vector<8x4xf32>
    %162 = arith.negf %161 : vector<8x4xf32>
    %163 = math.exp %162 : vector<8x4xf32>
    %cst_50 = arith.constant 1.000000e+00 : f32
    %164 = vector.broadcast %cst_50 : f32 to vector<8x4xf32>
    %165 = arith.addf %164, %163 : vector<8x4xf32>
    %166 = arith.divf %164, %165 : vector<8x4xf32>
    %167 = vector.extract_strided_slice %148 {offsets = [0, 8], sizes = [8, 4], strides = [1, 1]} : vector<8x12xf32> to vector<8x4xf32>
    %168 = vector.extract_strided_slice %149 {offsets = [0, 8], sizes = [8, 4], strides = [1, 1]} : vector<8x12xf32> to vector<8x4xf32>
    %169 = arith.mulf %158, %168 : vector<8x4xf32>
    %170 = arith.addf %167, %169 : vector<8x4xf32>
    %171 = math.tanh %170 : vector<8x4xf32>
    %cst_51 = arith.constant 1.000000e+00 : f32
    %172 = vector.broadcast %cst_51 : f32 to vector<8x4xf32>
    %173 = arith.subf %172, %166 : vector<8x4xf32>
    %174 = arith.mulf %173, %171 : vector<8x4xf32>
    %175 = arith.mulf %166, %150 : vector<8x4xf32>
    %176 = arith.addf %174, %175 : vector<8x4xf32>
    %177 = arith.truncf %176 : vector<8x4xf32> to vector<8x4xbf16>
    %cst_52 = arith.constant dense<0.000000e+00> : vector<8x96xf32>
    %178 = tpu.matmul %177, %6, %cst_52 {dimension_numbers = #tpu.dot_dimension_numbers<[1], [0], [0], [1], [0, 0, 1, 1], [], []>} : vector<8x4xbf16>, vector<4x96xbf16>, vector<8x96xf32> -> vector<8x96xf32>
    %179 = vector.broadcast %16 : vector<1x96xf32> to vector<8x96xf32>
    %180 = arith.addf %178, %179 : vector<8x96xf32>
    %181 = vector.extract_strided_slice %141 {offsets = [0, 4], sizes = [8, 80], strides = [1, 1]} : vector<8x100xf32> to vector<8x80xf32>
    %182 = vector.extract_strided_slice %180 {offsets = [0, 0], sizes = [8, 80], strides = [1, 1]} : vector<8x96xf32> to vector<8x80xf32>
    %183 = arith.addf %181, %182 : vector<8x80xf32>
    %cst_53 = arith.constant 0.000000e+00 : f32
    %184 = vector.broadcast %cst_53 : f32 to vector<8x80xf32>
    %185 = arith.maximumf %183, %184 : vector<8x80xf32>
    %186 = arith.truncf %185 : vector<8x80xf32> to vector<8x80xbf16>
    %cst_54 = arith.constant dense<0.000000e+00> : vector<8x8xf32>
    %187 = tpu.matmul %186, %7, %cst_54 {dimension_numbers = #tpu.dot_dimension_numbers<[1], [0], [0], [1], [0, 0, 1, 1], [], []>} : vector<8x80xbf16>, vector<80x8xbf16>, vector<8x8xf32> -> vector<8x8xf32>
    %188 = vector.broadcast %17 : vector<1x8xf32> to vector<8x8xf32>
    %189 = arith.addf %187, %188 : vector<8x8xf32>
    %190 = vector.extract_strided_slice %180 {offsets = [0, 80], sizes = [8, 16], strides = [1, 1]} : vector<8x96xf32> to vector<8x16xf32>
    %191 = arith.truncf %189 : vector<8x8xf32> to vector<8x8xbf16>
    %cst_55 = arith.constant dense<0.000000e+00> : vector<8x16xf32>
    %192 = tpu.matmul %191, %8, %cst_55 {dimension_numbers = #tpu.dot_dimension_numbers<[1], [0], [0], [1], [0, 0, 1, 1], [], []>} : vector<8x8xbf16>, vector<8x16xbf16>, vector<8x16xf32> -> vector<8x16xf32>
    %193 = arith.addf %190, %192 : vector<8x16xf32>
    %cst_56 = arith.constant 0.000000e+00 : f32
    %194 = vector.broadcast %cst_56 : f32 to vector<8x16xf32>
    %195 = arith.maximumf %193, %194 : vector<8x16xf32>
    %196 = vector.extract_strided_slice %141 {offsets = [0, 84], sizes = [8, 16], strides = [1, 1]} : vector<8x100xf32> to vector<8x16xf32>
    %197 = arith.truncf %195 : vector<8x16xf32> to vector<8x16xbf16>
    %cst_57 = arith.constant dense<0.000000e+00> : vector<8x16xf32>
    %198 = tpu.matmul %197, %9, %cst_57 {dimension_numbers = #tpu.dot_dimension_numbers<[1], [0], [0], [1], [0, 0, 1, 1], [], []>} : vector<8x16xbf16>, vector<16x16xbf16>, vector<8x16xf32> -> vector<8x16xf32>
    %199 = arith.addf %196, %198 : vector<8x16xf32>
    %cst_58 = arith.constant 0.000000e+00 : f32
    %200 = vector.broadcast %cst_58 : f32 to vector<8x16xf32>
    %201 = arith.maximumf %199, %200 : vector<8x16xf32>
    %202 = arith.subf %22, %25 : vector<8x2xf32>
    %203 = tpu.concatenate %202, %202, %202, %202 in 1 : vector<8x2xf32>, vector<8x2xf32>, vector<8x2xf32>, vector<8x2xf32> -> vector<8x8xf32>
    %204 = arith.mulf %189, %203 : vector<8x8xf32>
    %cst_59 = arith.constant dense<0.000000e+00> : vector<8x4xf32>
    %205 = tpu.matmul %204, %11, %cst_59 {dimension_numbers = #tpu.dot_dimension_numbers<[1], [0], [0], [1], [0, 0, 1, 1], [], []>} : vector<8x8xf32>, vector<8x4xf32>, vector<8x4xf32> -> vector<8x4xf32>
    %206 = arith.addf %24, %205 : vector<8x4xf32>
    %c0_60 = arith.constant 0 : index
    %c0_61 = arith.constant 0 : index
    %c0_62 = arith.constant 0 : index
    %207 = vector.load %arg5[%c0_60, %c0_61, %c0_62] : memref<12x8x4xf32, #tpu.memory_space<vmem>>, vector<1x8x4xf32>
    %208 = vector.shape_cast %207 : vector<1x8x4xf32> to vector<8x4xf32>
    %209 = vector.shape_cast %206 : vector<8x4xf32> to vector<1x8x4xf32>
    tpu.vector_store %arg5[%c0_60, %c0_61, %c0_62], %209 {strides = array<i32>} : memref<12x8x4xf32, #tpu.memory_space<vmem>>, vector<1x8x4xf32>,
    %210 = tpu.concatenate %105, %201, %176 in 1 : vector<8x16xf32>, vector<8x16xf32>, vector<8x4xf32> -> vector<8x36xf32>
    %c1 = arith.constant 1 : index
    %c0_63 = arith.constant 0 : index
    %c0_64 = arith.constant 0 : index
    %211 = vector.load %arg1[%c1, %c0_63, %c0_64] : memref<12x8x2xf32, #tpu.memory_space<vmem>>, vector<1x8x2xf32>
    %212 = vector.shape_cast %211 : vector<1x8x2xf32> to vector<8x2xf32>
    %cst_65 = arith.constant dense<0.000000e+00> : vector<8x6xf32>
    %213 = tpu.matmul %206, %10, %cst_65 {dimension_numbers = #tpu.dot_dimension_numbers<[1], [0], [0], [1], [0, 0, 1, 1], [], []>} : vector<8x4xf32>, vector<4x6xf32>, vector<8x6xf32> -> vector<8x6xf32>
    %214 = vector.extract_strided_slice %213 {offsets = [0, 0], sizes = [8, 4], strides = [1, 1]} : vector<8x6xf32> to vector<8x4xf32>
    %215 = vector.extract_strided_slice %213 {offsets = [0, 4], sizes = [8, 2], strides = [1, 1]} : vector<8x6xf32> to vector<8x2xf32>
    %216 = arith.subf %212, %22 : vector<8x2xf32>
    %217 = arith.mulf %216, %216 : vector<8x2xf32>
    %cst_66 = arith.constant dense<0.000000e+00> : vector<8xf32>
    %218 = vector.multi_reduction <add>, %217, %cst_66 [1] : vector<8x2xf32> to vector<8xf32>
    %219 = vector.shape_cast %218 : vector<8xf32> to vector<8x1xf32>
    %cst_67 = arith.constant 1.000000e-24 : f32
    %220 = vector.broadcast %cst_67 : f32 to vector<8x1xf32>
    %221 = arith.maximumf %219, %220 : vector<8x1xf32>
    %222 = math.rsqrt %221 : vector<8x1xf32>
    %223 = vector.broadcast %222 : vector<8x1xf32> to vector<8x2xf32>
    %224 = arith.mulf %216, %223 : vector<8x2xf32>
    %225 = arith.subf %212, %215 : vector<8x2xf32>
    %226 = arith.mulf %225, %225 : vector<8x2xf32>
    %cst_68 = arith.constant dense<0.000000e+00> : vector<8xf32>
    %227 = vector.multi_reduction <add>, %226, %cst_68 [1] : vector<8x2xf32> to vector<8xf32>
    %228 = vector.shape_cast %227 : vector<8xf32> to vector<8x1xf32>
    %cst_69 = arith.constant 1.000000e-24 : f32
    %229 = vector.broadcast %cst_69 : f32 to vector<8x1xf32>
    %230 = arith.maximumf %228, %229 : vector<8x1xf32>
    %231 = math.rsqrt %230 : vector<8x1xf32>
    %232 = vector.broadcast %231 : vector<8x1xf32> to vector<8x2xf32>
    %233 = arith.mulf %225, %232 : vector<8x2xf32>
    %234 = arith.subf %206, %18 : vector<8x4xf32>
    %235 = arith.mulf %234, %234 : vector<8x4xf32>
    %cst_70 = arith.constant dense<0.000000e+00> : vector<8xf32>
    %236 = vector.multi_reduction <add>, %235, %cst_70 [1] : vector<8x4xf32> to vector<8xf32>
    %237 = vector.shape_cast %236 : vector<8xf32> to vector<8x1xf32>
    %cst_71 = arith.constant 1.000000e-24 : f32
    %238 = vector.broadcast %cst_71 : f32 to vector<8x1xf32>
    %239 = arith.maximumf %237, %238 : vector<8x1xf32>
    %240 = math.rsqrt %239 : vector<8x1xf32>
    %241 = vector.broadcast %240 : vector<8x1xf32> to vector<8x4xf32>
    %242 = arith.mulf %234, %241 : vector<8x4xf32>
    %243 = arith.subf %206, %24 : vector<8x4xf32>
    %244 = arith.mulf %243, %243 : vector<8x4xf32>
    %cst_72 = arith.constant dense<0.000000e+00> : vector<8xf32>
    %245 = vector.multi_reduction <add>, %244, %cst_72 [1] : vector<8x4xf32> to vector<8xf32>
    %246 = vector.shape_cast %245 : vector<8xf32> to vector<8x1xf32>
    %cst_73 = arith.constant 1.000000e-24 : f32
    %247 = vector.broadcast %cst_73 : f32 to vector<8x1xf32>
    %248 = arith.maximumf %246, %247 : vector<8x1xf32>
    %249 = math.rsqrt %248 : vector<8x1xf32>
    %250 = vector.broadcast %249 : vector<8x1xf32> to vector<8x4xf32>
    %251 = arith.mulf %243, %250 : vector<8x4xf32>
    %252 = tpu.concatenate %224, %233, %242, %251 in 1 : vector<8x2xf32>, vector<8x2xf32>, vector<8x4xf32>, vector<8x4xf32> -> vector<8x12xf32>
    %253 = arith.truncf %252 : vector<8x12xf32> to vector<8x12xbf16>
    %cst_74 = arith.constant dense<0.000000e+00> : vector<8x60xf32>
    %254 = tpu.matmul %253, %0, %cst_74 {dimension_numbers = #tpu.dot_dimension_numbers<[1], [0], [0], [1], [0, 0, 1, 1], [], []>} : vector<8x12xbf16>, vector<12x60xbf16>, vector<8x60xf32> -> vector<8x60xf32>
    %255 = vector.broadcast %12 : vector<1x60xf32> to vector<8x60xf32>
    %256 = arith.addf %254, %255 : vector<8x60xf32>
    %cst_75 = arith.constant 0.000000e+00 : f32
    %257 = vector.broadcast %cst_75 : f32 to vector<8x60xf32>
    %258 = arith.maximumf %256, %257 : vector<8x60xf32>
    %259 = arith.truncf %210 : vector<8x36xf32> to vector<8x36xbf16>
    %cst_76 = arith.constant dense<0.000000e+00> : vector<8x108xf32>
    %260 = tpu.matmul %259, %1, %cst_76 {dimension_numbers = #tpu.dot_dimension_numbers<[1], [0], [0], [1], [0, 0, 1, 1], [], []>} : vector<8x36xbf16>, vector<36x108xbf16>, vector<8x108xf32> -> vector<8x108xf32>
    %261 = vector.broadcast %13 : vector<1x108xf32> to vector<8x108xf32>
    %262 = arith.addf %260, %261 : vector<8x108xf32>
    %263 = arith.truncf %258 : vector<8x60xf32> to vector<8x60xbf16>
    %cst_77 = arith.constant dense<0.000000e+00> : vector<8x108xf32>
    %264 = tpu.matmul %263, %2, %cst_77 {dimension_numbers = #tpu.dot_dimension_numbers<[1], [0], [0], [1], [0, 0, 1, 1], [], []>} : vector<8x60xbf16>, vector<60x108xbf16>, vector<8x108xf32> -> vector<8x108xf32>
    %265 = vector.broadcast %14 : vector<1x108xf32> to vector<8x108xf32>
    %266 = arith.addf %264, %265 : vector<8x108xf32>
    %267 = vector.extract_strided_slice %266 {offsets = [0, 60], sizes = [8, 48], strides = [1, 1]} : vector<8x108xf32> to vector<8x48xf32>
    %268 = vector.extract_strided_slice %262 {offsets = [0, 0], sizes = [8, 48], strides = [1, 1]} : vector<8x108xf32> to vector<8x48xf32>
    %269 = vector.extract_strided_slice %210 {offsets = [0, 0], sizes = [8, 16], strides = [1, 1]} : vector<8x36xf32> to vector<8x16xf32>
    %270 = vector.extract_strided_slice %267 {offsets = [0, 0], sizes = [8, 16], strides = [1, 1]} : vector<8x48xf32> to vector<8x16xf32>
    %271 = vector.extract_strided_slice %268 {offsets = [0, 0], sizes = [8, 16], strides = [1, 1]} : vector<8x48xf32> to vector<8x16xf32>
    %272 = arith.addf %270, %271 : vector<8x16xf32>
    %273 = arith.negf %272 : vector<8x16xf32>
    %274 = math.exp %273 : vector<8x16xf32>
    %cst_78 = arith.constant 1.000000e+00 : f32
    %275 = vector.broadcast %cst_78 : f32 to vector<8x16xf32>
    %276 = arith.addf %275, %274 : vector<8x16xf32>
    %277 = arith.divf %275, %276 : vector<8x16xf32>
    %278 = vector.extract_strided_slice %267 {offsets = [0, 16], sizes = [8, 16], strides = [1, 1]} : vector<8x48xf32> to vector<8x16xf32>
    %279 = vector.extract_strided_slice %268 {offsets = [0, 16], sizes = [8, 16], strides = [1, 1]} : vector<8x48xf32> to vector<8x16xf32>
    %280 = arith.addf %278, %279 : vector<8x16xf32>
    %281 = arith.negf %280 : vector<8x16xf32>
    %282 = math.exp %281 : vector<8x16xf32>
    %cst_79 = arith.constant 1.000000e+00 : f32
    %283 = vector.broadcast %cst_79 : f32 to vector<8x16xf32>
    %284 = arith.addf %283, %282 : vector<8x16xf32>
    %285 = arith.divf %283, %284 : vector<8x16xf32>
    %286 = vector.extract_strided_slice %267 {offsets = [0, 32], sizes = [8, 16], strides = [1, 1]} : vector<8x48xf32> to vector<8x16xf32>
    %287 = vector.extract_strided_slice %268 {offsets = [0, 32], sizes = [8, 16], strides = [1, 1]} : vector<8x48xf32> to vector<8x16xf32>
    %288 = arith.mulf %277, %287 : vector<8x16xf32>
    %289 = arith.addf %286, %288 : vector<8x16xf32>
    %290 = math.tanh %289 : vector<8x16xf32>
    %cst_80 = arith.constant 1.000000e+00 : f32
    %291 = vector.broadcast %cst_80 : f32 to vector<8x16xf32>
    %292 = arith.subf %291, %285 : vector<8x16xf32>
    %293 = arith.mulf %292, %290 : vector<8x16xf32>
    %294 = arith.mulf %285, %269 : vector<8x16xf32>
    %295 = arith.addf %293, %294 : vector<8x16xf32>
    %296 = vector.extract_strided_slice %266 {offsets = [0, 12], sizes = [8, 48], strides = [1, 1]} : vector<8x108xf32> to vector<8x48xf32>
    %297 = arith.truncf %295 : vector<8x16xf32> to vector<8x16xbf16>
    %cst_81 = arith.constant dense<0.000000e+00> : vector<8x48xf32>
    %298 = tpu.matmul %297, %3, %cst_81 {dimension_numbers = #tpu.dot_dimension_numbers<[1], [0], [0], [1], [0, 0, 1, 1], [], []>} : vector<8x16xbf16>, vector<16x48xbf16>, vector<8x48xf32> -> vector<8x48xf32>
    %299 = arith.addf %296, %298 : vector<8x48xf32>
    %300 = vector.extract_strided_slice %262 {offsets = [0, 48], sizes = [8, 48], strides = [1, 1]} : vector<8x108xf32> to vector<8x48xf32>
    %301 = vector.extract_strided_slice %210 {offsets = [0, 16], sizes = [8, 16], strides = [1, 1]} : vector<8x36xf32> to vector<8x16xf32>
    %302 = vector.extract_strided_slice %299 {offsets = [0, 0], sizes = [8, 16], strides = [1, 1]} : vector<8x48xf32> to vector<8x16xf32>
    %303 = vector.extract_strided_slice %300 {offsets = [0, 0], sizes = [8, 16], strides = [1, 1]} : vector<8x48xf32> to vector<8x16xf32>
    %304 = arith.addf %302, %303 : vector<8x16xf32>
    %305 = arith.negf %304 : vector<8x16xf32>
    %306 = math.exp %305 : vector<8x16xf32>
    %cst_82 = arith.constant 1.000000e+00 : f32
    %307 = vector.broadcast %cst_82 : f32 to vector<8x16xf32>
    %308 = arith.addf %307, %306 : vector<8x16xf32>
    %309 = arith.divf %307, %308 : vector<8x16xf32>
    %310 = vector.extract_strided_slice %299 {offsets = [0, 16], sizes = [8, 16], strides = [1, 1]} : vector<8x48xf32> to vector<8x16xf32>
    %311 = vector.extract_strided_slice %300 {offsets = [0, 16], sizes = [8, 16], strides = [1, 1]} : vector<8x48xf32> to vector<8x16xf32>
    %312 = arith.addf %310, %311 : vector<8x16xf32>
    %313 = arith.negf %312 : vector<8x16xf32>
    %314 = math.exp %313 : vector<8x16xf32>
    %cst_83 = arith.constant 1.000000e+00 : f32
    %315 = vector.broadcast %cst_83 : f32 to vector<8x16xf32>
    %316 = arith.addf %315, %314 : vector<8x16xf32>
    %317 = arith.divf %315, %316 : vector<8x16xf32>
    %318 = vector.extract_strided_slice %299 {offsets = [0, 32], sizes = [8, 16], strides = [1, 1]} : vector<8x48xf32> to vector<8x16xf32>
    %319 = vector.extract_strided_slice %300 {offsets = [0, 32], sizes = [8, 16], strides = [1, 1]} : vector<8x48xf32> to vector<8x16xf32>
    %320 = arith.mulf %309, %319 : vector<8x16xf32>
    %321 = arith.addf %318, %320 : vector<8x16xf32>
    %322 = math.tanh %321 : vector<8x16xf32>
    %cst_84 = arith.constant 1.000000e+00 : f32
    %323 = vector.broadcast %cst_84 : f32 to vector<8x16xf32>
    %324 = arith.subf %323, %317 : vector<8x16xf32>
    %325 = arith.mulf %324, %322 : vector<8x16xf32>
    %326 = arith.mulf %317, %301 : vector<8x16xf32>
    %327 = arith.addf %325, %326 : vector<8x16xf32>
    %328 = arith.truncf %327 : vector<8x16xf32> to vector<8x16xbf16>
    %cst_85 = arith.constant dense<0.000000e+00> : vector<8x100xf32>
    %329 = tpu.matmul %328, %4, %cst_85 {dimension_numbers = #tpu.dot_dimension_numbers<[1], [0], [0], [1], [0, 0, 1, 1], [], []>} : vector<8x16xbf16>, vector<16x100xbf16>, vector<8x100xf32> -> vector<8x100xf32>
    %330 = vector.broadcast %15 : vector<1x100xf32> to vector<8x100xf32>
    %331 = arith.addf %329, %330 : vector<8x100xf32>
    %332 = vector.extract_strided_slice %331 {offsets = [0, 0], sizes = [8, 4], strides = [1, 1]} : vector<8x100xf32> to vector<8x4xf32>
    %cst_86 = arith.constant 0.000000e+00 : f32
    %333 = vector.broadcast %cst_86 : f32 to vector<8x4xf32>
    %334 = arith.maximumf %332, %333 : vector<8x4xf32>
    %335 = vector.extract_strided_slice %266 {offsets = [0, 0], sizes = [8, 12], strides = [1, 1]} : vector<8x108xf32> to vector<8x12xf32>
    %336 = arith.truncf %334 : vector<8x4xf32> to vector<8x4xbf16>
    %cst_87 = arith.constant dense<0.000000e+00> : vector<8x12xf32>
    %337 = tpu.matmul %336, %5, %cst_87 {dimension_numbers = #tpu.dot_dimension_numbers<[1], [0], [0], [1], [0, 0, 1, 1], [], []>} : vector<8x4xbf16>, vector<4x12xbf16>, vector<8x12xf32> -> vector<8x12xf32>
    %338 = arith.addf %335, %337 : vector<8x12xf32>
    %339 = vector.extract_strided_slice %262 {offsets = [0, 96], sizes = [8, 12], strides = [1, 1]} : vector<8x108xf32> to vector<8x12xf32>
    %340 = vector.extract_strided_slice %210 {offsets = [0, 32], sizes = [8, 4], strides = [1, 1]} : vector<8x36xf32> to vector<8x4xf32>
    %341 = vector.extract_strided_slice %338 {offsets = [0, 0], sizes = [8, 4], strides = [1, 1]} : vector<8x12xf32> to vector<8x4xf32>
    %342 = vector.extract_strided_slice %339 {offsets = [0, 0], sizes = [8, 4], strides = [1, 1]} : vector<8x12xf32> to vector<8x4xf32>
    %343 = arith.addf %341, %342 : vector<8x4xf32>
    %344 = arith.negf %343 : vector<8x4xf32>
    %345 = math.exp %344 : vector<8x4xf32>
    %cst_88 = arith.constant 1.000000e+00 : f32
    %346 = vector.broadcast %cst_88 : f32 to vector<8x4xf32>
    %347 = arith.addf %346, %345 : vector<8x4xf32>
    %348 = arith.divf %346, %347 : vector<8x4xf32>
    %349 = vector.extract_strided_slice %338 {offsets = [0, 4], sizes = [8, 4], strides = [1, 1]} : vector<8x12xf32> to vector<8x4xf32>
    %350 = vector.extract_strided_slice %339 {offsets = [0, 4], sizes = [8, 4], strides = [1, 1]} : vector<8x12xf32> to vector<8x4xf32>
    %351 = arith.addf %349, %350 : vector<8x4xf32>
    %352 = arith.negf %351 : vector<8x4xf32>
    %353 = math.exp %352 : vector<8x4xf32>
    %cst_89 = arith.constant 1.000000e+00 : f32
    %354 = vector.broadcast %cst_89 : f32 to vector<8x4xf32>
    %355 = arith.addf %354, %353 : vector<8x4xf32>
    %356 = arith.divf %354, %355 : vector<8x4xf32>
    %357 = vector.extract_strided_slice %338 {offsets = [0, 8], sizes = [8, 4], strides = [1, 1]} : vector<8x12xf32> to vector<8x4xf32>
    %358 = vector.extract_strided_slice %339 {offsets = [0, 8], sizes = [8, 4], strides = [1, 1]} : vector<8x12xf32> to vector<8x4xf32>
    %359 = arith.mulf %348, %358 : vector<8x4xf32>
    %360 = arith.addf %357, %359 : vector<8x4xf32>
    %361 = math.tanh %360 : vector<8x4xf32>
    %cst_90 = arith.constant 1.000000e+00 : f32
    %362 = vector.broadcast %cst_90 : f32 to vector<8x4xf32>
    %363 = arith.subf %362, %356 : vector<8x4xf32>
    %364 = arith.mulf %363, %361 : vector<8x4xf32>
    %365 = arith.mulf %356, %340 : vector<8x4xf32>
    %366 = arith.addf %364, %365 : vector<8x4xf32>
    %367 = arith.truncf %366 : vector<8x4xf32> to vector<8x4xbf16>
    %cst_91 = arith.constant dense<0.000000e+00> : vector<8x96xf32>
    %368 = tpu.matmul %367, %6, %cst_91 {dimension_numbers = #tpu.dot_dimension_numbers<[1], [0], [0], [1], [0, 0, 1, 1], [], []>} : vector<8x4xbf16>, vector<4x96xbf16>, vector<8x96xf32> -> vector<8x96xf32>
    %369 = vector.broadcast %16 : vector<1x96xf32> to vector<8x96xf32>
    %370 = arith.addf %368, %369 : vector<8x96xf32>
    %371 = vector.extract_strided_slice %331 {offsets = [0, 4], sizes = [8, 80], strides = [1, 1]} : vector<8x100xf32> to vector<8x80xf32>
    %372 = vector.extract_strided_slice %370 {offsets = [0, 0], sizes = [8, 80], strides = [1, 1]} : vector<8x96xf32> to vector<8x80xf32>
    %373 = arith.addf %371, %372 : vector<8x80xf32>
    %cst_92 = arith.constant 0.000000e+00 : f32
    %374 = vector.broadcast %cst_92 : f32 to vector<8x80xf32>
    %375 = arith.maximumf %373, %374 : vector<8x80xf32>
    %376 = arith.truncf %375 : vector<8x80xf32> to vector<8x80xbf16>
    %cst_93 = arith.constant dense<0.000000e+00> : vector<8x8xf32>
    %377 = tpu.matmul %376, %7, %cst_93 {dimension_numbers = #tpu.dot_dimension_numbers<[1], [0], [0], [1], [0, 0, 1, 1], [], []>} : vector<8x80xbf16>, vector<80x8xbf16>, vector<8x8xf32> -> vector<8x8xf32>
    %378 = vector.broadcast %17 : vector<1x8xf32> to vector<8x8xf32>
    %379 = arith.addf %377, %378 : vector<8x8xf32>
    %380 = vector.extract_strided_slice %370 {offsets = [0, 80], sizes = [8, 16], strides = [1, 1]} : vector<8x96xf32> to vector<8x16xf32>
    %381 = arith.truncf %379 : vector<8x8xf32> to vector<8x8xbf16>
    %cst_94 = arith.constant dense<0.000000e+00> : vector<8x16xf32>
    %382 = tpu.matmul %381, %8, %cst_94 {dimension_numbers = #tpu.dot_dimension_numbers<[1], [0], [0], [1], [0, 0, 1, 1], [], []>} : vector<8x8xbf16>, vector<8x16xbf16>, vector<8x16xf32> -> vector<8x16xf32>
    %383 = arith.addf %380, %382 : vector<8x16xf32>
    %cst_95 = arith.constant 0.000000e+00 : f32
    %384 = vector.broadcast %cst_95 : f32 to vector<8x16xf32>
    %385 = arith.maximumf %383, %384 : vector<8x16xf32>
    %386 = vector.extract_strided_slice %331 {offsets = [0, 84], sizes = [8, 16], strides = [1, 1]} : vector<8x100xf32> to vector<8x16xf32>
    %387 = arith.truncf %385 : vector<8x16xf32> to vector<8x16xbf16>
    %cst_96 = arith.constant dense<0.000000e+00> : vector<8x16xf32>
    %388 = tpu.matmul %387, %9, %cst_96 {dimension_numbers = #tpu.dot_dimension_numbers<[1], [0], [0], [1], [0, 0, 1, 1], [], []>} : vector<8x16xbf16>, vector<16x16xbf16>, vector<8x16xf32> -> vector<8x16xf32>
    %389 = arith.addf %386, %388 : vector<8x16xf32>
    %cst_97 = arith.constant 0.000000e+00 : f32
    %390 = vector.broadcast %cst_97 : f32 to vector<8x16xf32>
    %391 = arith.maximumf %389, %390 : vector<8x16xf32>
    %392 = arith.subf %212, %215 : vector<8x2xf32>
    %393 = tpu.concatenate %392, %392, %392, %392 in 1 : vector<8x2xf32>, vector<8x2xf32>, vector<8x2xf32>, vector<8x2xf32> -> vector<8x8xf32>
    %394 = arith.mulf %379, %393 : vector<8x8xf32>
    %cst_98 = arith.constant dense<0.000000e+00> : vector<8x4xf32>
    %395 = tpu.matmul %394, %11, %cst_98 {dimension_numbers = #tpu.dot_dimension_numbers<[1], [0], [0], [1], [0, 0, 1, 1], [], []>} : vector<8x8xf32>, vector<8x4xf32>, vector<8x4xf32> -> vector<8x4xf32>
    %396 = arith.addf %214, %395 : vector<8x4xf32>
    %c1_99 = arith.constant 1 : index
    %c0_100 = arith.constant 0 : index
    %c0_101 = arith.constant 0 : index
    %397 = vector.load %arg5[%c1_99, %c0_100, %c0_101] : memref<12x8x4xf32, #tpu.memory_space<vmem>>, vector<1x8x4xf32>
    %398 = vector.shape_cast %397 : vector<1x8x4xf32> to vector<8x4xf32>
    %399 = vector.shape_cast %396 : vector<8x4xf32> to vector<1x8x4xf32>
    tpu.vector_store %arg5[%c1_99, %c0_100, %c0_101], %399 {strides = array<i32>} : memref<12x8x4xf32, #tpu.memory_space<vmem>>, vector<1x8x4xf32>,
    %400 = tpu.concatenate %295, %391, %366 in 1 : vector<8x16xf32>, vector<8x16xf32>, vector<8x4xf32> -> vector<8x36xf32>
    %c2 = arith.constant 2 : index
    %c0_102 = arith.constant 0 : index
    %c0_103 = arith.constant 0 : index
    %401 = vector.load %arg1[%c2, %c0_102, %c0_103] : memref<12x8x2xf32, #tpu.memory_space<vmem>>, vector<1x8x2xf32>
    %402 = vector.shape_cast %401 : vector<1x8x2xf32> to vector<8x2xf32>
    %cst_104 = arith.constant dense<0.000000e+00> : vector<8x6xf32>
    %403 = tpu.matmul %396, %10, %cst_104 {dimension_numbers = #tpu.dot_dimension_numbers<[1], [0], [0], [1], [0, 0, 1, 1], [], []>} : vector<8x4xf32>, vector<4x6xf32>, vector<8x6xf32> -> vector<8x6xf32>
    %404 = vector.extract_strided_slice %403 {offsets = [0, 0], sizes = [8, 4], strides = [1, 1]} : vector<8x6xf32> to vector<8x4xf32>
    %405 = vector.extract_strided_slice %403 {offsets = [0, 4], sizes = [8, 2], strides = [1, 1]} : vector<8x6xf32> to vector<8x2xf32>
    %406 = arith.subf %402, %212 : vector<8x2xf32>
    %407 = arith.mulf %406, %406 : vector<8x2xf32>
    %cst_105 = arith.constant dense<0.000000e+00> : vector<8xf32>
    %408 = vector.multi_reduction <add>, %407, %cst_105 [1] : vector<8x2xf32> to vector<8xf32>
    %409 = vector.shape_cast %408 : vector<8xf32> to vector<8x1xf32>
    %cst_106 = arith.constant 1.000000e-24 : f32
    %410 = vector.broadcast %cst_106 : f32 to vector<8x1xf32>
    %411 = arith.maximumf %409, %410 : vector<8x1xf32>
    %412 = math.rsqrt %411 : vector<8x1xf32>
    %413 = vector.broadcast %412 : vector<8x1xf32> to vector<8x2xf32>
    %414 = arith.mulf %406, %413 : vector<8x2xf32>
    %415 = arith.subf %402, %405 : vector<8x2xf32>
    %416 = arith.mulf %415, %415 : vector<8x2xf32>
    %cst_107 = arith.constant dense<0.000000e+00> : vector<8xf32>
    %417 = vector.multi_reduction <add>, %416, %cst_107 [1] : vector<8x2xf32> to vector<8xf32>
    %418 = vector.shape_cast %417 : vector<8xf32> to vector<8x1xf32>
    %cst_108 = arith.constant 1.000000e-24 : f32
    %419 = vector.broadcast %cst_108 : f32 to vector<8x1xf32>
    %420 = arith.maximumf %418, %419 : vector<8x1xf32>
    %421 = math.rsqrt %420 : vector<8x1xf32>
    %422 = vector.broadcast %421 : vector<8x1xf32> to vector<8x2xf32>
    %423 = arith.mulf %415, %422 : vector<8x2xf32>
    %424 = arith.subf %396, %206 : vector<8x4xf32>
    %425 = arith.mulf %424, %424 : vector<8x4xf32>
    %cst_109 = arith.constant dense<0.000000e+00> : vector<8xf32>
    %426 = vector.multi_reduction <add>, %425, %cst_109 [1] : vector<8x4xf32> to vector<8xf32>
    %427 = vector.shape_cast %426 : vector<8xf32> to vector<8x1xf32>
    %cst_110 = arith.constant 1.000000e-24 : f32
    %428 = vector.broadcast %cst_110 : f32 to vector<8x1xf32>
    %429 = arith.maximumf %427, %428 : vector<8x1xf32>
    %430 = math.rsqrt %429 : vector<8x1xf32>
    %431 = vector.broadcast %430 : vector<8x1xf32> to vector<8x4xf32>
    %432 = arith.mulf %424, %431 : vector<8x4xf32>
    %433 = arith.subf %396, %214 : vector<8x4xf32>
    %434 = arith.mulf %433, %433 : vector<8x4xf32>
    %cst_111 = arith.constant dense<0.000000e+00> : vector<8xf32>
    %435 = vector.multi_reduction <add>, %434, %cst_111 [1] : vector<8x4xf32> to vector<8xf32>
    %436 = vector.shape_cast %435 : vector<8xf32> to vector<8x1xf32>
    %cst_112 = arith.constant 1.000000e-24 : f32
    %437 = vector.broadcast %cst_112 : f32 to vector<8x1xf32>
    %438 = arith.maximumf %436, %437 : vector<8x1xf32>
    %439 = math.rsqrt %438 : vector<8x1xf32>
    %440 = vector.broadcast %439 : vector<8x1xf32> to vector<8x4xf32>
    %441 = arith.mulf %433, %440 : vector<8x4xf32>
    %442 = tpu.concatenate %414, %423, %432, %441 in 1 : vector<8x2xf32>, vector<8x2xf32>, vector<8x4xf32>, vector<8x4xf32> -> vector<8x12xf32>
    %443 = arith.truncf %442 : vector<8x12xf32> to vector<8x12xbf16>
    %cst_113 = arith.constant dense<0.000000e+00> : vector<8x60xf32>
    %444 = tpu.matmul %443, %0, %cst_113 {dimension_numbers = #tpu.dot_dimension_numbers<[1], [0], [0], [1], [0, 0, 1, 1], [], []>} : vector<8x12xbf16>, vector<12x60xbf16>, vector<8x60xf32> -> vector<8x60xf32>
    %445 = vector.broadcast %12 : vector<1x60xf32> to vector<8x60xf32>
    %446 = arith.addf %444, %445 : vector<8x60xf32>
    %cst_114 = arith.constant 0.000000e+00 : f32
    %447 = vector.broadcast %cst_114 : f32 to vector<8x60xf32>
    %448 = arith.maximumf %446, %447 : vector<8x60xf32>
    %449 = arith.truncf %400 : vector<8x36xf32> to vector<8x36xbf16>
    %cst_115 = arith.constant dense<0.000000e+00> : vector<8x108xf32>
    %450 = tpu.matmul %449, %1, %cst_115 {dimension_numbers = #tpu.dot_dimension_numbers<[1], [0], [0], [1], [0, 0, 1, 1], [], []>} : vector<8x36xbf16>, vector<36x108xbf16>, vector<8x108xf32> -> vector<8x108xf32>
    %451 = vector.broadcast %13 : vector<1x108xf32> to vector<8x108xf32>
    %452 = arith.addf %450, %451 : vector<8x108xf32>
    %453 = arith.truncf %448 : vector<8x60xf32> to vector<8x60xbf16>
    %cst_116 = arith.constant dense<0.000000e+00> : vector<8x108xf32>
    %454 = tpu.matmul %453, %2, %cst_116 {dimension_numbers = #tpu.dot_dimension_numbers<[1], [0], [0], [1], [0, 0, 1, 1], [], []>} : vector<8x60xbf16>, vector<60x108xbf16>, vector<8x108xf32> -> vector<8x108xf32>
    %455 = vector.broadcast %14 : vector<1x108xf32> to vector<8x108xf32>
    %456 = arith.addf %454, %455 : vector<8x108xf32>
    %457 = vector.extract_strided_slice %456 {offsets = [0, 60], sizes = [8, 48], strides = [1, 1]} : vector<8x108xf32> to vector<8x48xf32>
    %458 = vector.extract_strided_slice %452 {offsets = [0, 0], sizes = [8, 48], strides = [1, 1]} : vector<8x108xf32> to vector<8x48xf32>
    %459 = vector.extract_strided_slice %400 {offsets = [0, 0], sizes = [8, 16], strides = [1, 1]} : vector<8x36xf32> to vector<8x16xf32>
    %460 = vector.extract_strided_slice %457 {offsets = [0, 0], sizes = [8, 16], strides = [1, 1]} : vector<8x48xf32> to vector<8x16xf32>
    %461 = vector.extract_strided_slice %458 {offsets = [0, 0], sizes = [8, 16], strides = [1, 1]} : vector<8x48xf32> to vector<8x16xf32>
    %462 = arith.addf %460, %461 : vector<8x16xf32>
    %463 = arith.negf %462 : vector<8x16xf32>
    %464 = math.exp %463 : vector<8x16xf32>
    %cst_117 = arith.constant 1.000000e+00 : f32
    %465 = vector.broadcast %cst_117 : f32 to vector<8x16xf32>
    %466 = arith.addf %465, %464 : vector<8x16xf32>
    %467 = arith.divf %465, %466 : vector<8x16xf32>
    %468 = vector.extract_strided_slice %457 {offsets = [0, 16], sizes = [8, 16], strides = [1, 1]} : vector<8x48xf32> to vector<8x16xf32>
    %469 = vector.extract_strided_slice %458 {offsets = [0, 16], sizes = [8, 16], strides = [1, 1]} : vector<8x48xf32> to vector<8x16xf32>
    %470 = arith.addf %468, %469 : vector<8x16xf32>
    %471 = arith.negf %470 : vector<8x16xf32>
    %472 = math.exp %471 : vector<8x16xf32>
    %cst_118 = arith.constant 1.000000e+00 : f32
    %473 = vector.broadcast %cst_118 : f32 to vector<8x16xf32>
    %474 = arith.addf %473, %472 : vector<8x16xf32>
    %475 = arith.divf %473, %474 : vector<8x16xf32>
    %476 = vector.extract_strided_slice %457 {offsets = [0, 32], sizes = [8, 16], strides = [1, 1]} : vector<8x48xf32> to vector<8x16xf32>
    %477 = vector.extract_strided_slice %458 {offsets = [0, 32], sizes = [8, 16], strides = [1, 1]} : vector<8x48xf32> to vector<8x16xf32>
    %478 = arith.mulf %467, %477 : vector<8x16xf32>
    %479 = arith.addf %476, %478 : vector<8x16xf32>
    %480 = math.tanh %479 : vector<8x16xf32>
    %cst_119 = arith.constant 1.000000e+00 : f32
    %481 = vector.broadcast %cst_119 : f32 to vector<8x16xf32>
    %482 = arith.subf %481, %475 : vector<8x16xf32>
    %483 = arith.mulf %482, %480 : vector<8x16xf32>
    %484 = arith.mulf %475, %459 : vector<8x16xf32>
    %485 = arith.addf %483, %484 : vector<8x16xf32>
    %486 = vector.extract_strided_slice %456 {offsets = [0, 12], sizes = [8, 48], strides = [1, 1]} : vector<8x108xf32> to vector<8x48xf32>
    %487 = arith.truncf %485 : vector<8x16xf32> to vector<8x16xbf16>
    %cst_120 = arith.constant dense<0.000000e+00> : vector<8x48xf32>
    %488 = tpu.matmul %487, %3, %cst_120 {dimension_numbers = #tpu.dot_dimension_numbers<[1], [0], [0], [1], [0, 0, 1, 1], [], []>} : vector<8x16xbf16>, vector<16x48xbf16>, vector<8x48xf32> -> vector<8x48xf32>
    %489 = arith.addf %486, %488 : vector<8x48xf32>
    %490 = vector.extract_strided_slice %452 {offsets = [0, 48], sizes = [8, 48], strides = [1, 1]} : vector<8x108xf32> to vector<8x48xf32>
    %491 = vector.extract_strided_slice %400 {offsets = [0, 16], sizes = [8, 16], strides = [1, 1]} : vector<8x36xf32> to vector<8x16xf32>
    %492 = vector.extract_strided_slice %489 {offsets = [0, 0], sizes = [8, 16], strides = [1, 1]} : vector<8x48xf32> to vector<8x16xf32>
    %493 = vector.extract_strided_slice %490 {offsets = [0, 0], sizes = [8, 16], strides = [1, 1]} : vector<8x48xf32> to vector<8x16xf32>
    %494 = arith.addf %492, %493 : vector<8x16xf32>
    %495 = arith.negf %494 : vector<8x16xf32>
    %496 = math.exp %495 : vector<8x16xf32>
    %cst_121 = arith.constant 1.000000e+00 : f32
    %497 = vector.broadcast %cst_121 : f32 to vector<8x16xf32>
    %498 = arith.addf %497, %496 : vector<8x16xf32>
    %499 = arith.divf %497, %498 : vector<8x16xf32>
    %500 = vector.extract_strided_slice %489 {offsets = [0, 16], sizes = [8, 16], strides = [1, 1]} : vector<8x48xf32> to vector<8x16xf32>
    %501 = vector.extract_strided_slice %490 {offsets = [0, 16], sizes = [8, 16], strides = [1, 1]} : vector<8x48xf32> to vector<8x16xf32>
    %502 = arith.addf %500, %501 : vector<8x16xf32>
    %503 = arith.negf %502 : vector<8x16xf32>
    %504 = math.exp %503 : vector<8x16xf32>
    %cst_122 = arith.constant 1.000000e+00 : f32
    %505 = vector.broadcast %cst_122 : f32 to vector<8x16xf32>
    %506 = arith.addf %505, %504 : vector<8x16xf32>
    %507 = arith.divf %505, %506 : vector<8x16xf32>
    %508 = vector.extract_strided_slice %489 {offsets = [0, 32], sizes = [8, 16], strides = [1, 1]} : vector<8x48xf32> to vector<8x16xf32>
    %509 = vector.extract_strided_slice %490 {offsets = [0, 32], sizes = [8, 16], strides = [1, 1]} : vector<8x48xf32> to vector<8x16xf32>
    %510 = arith.mulf %499, %509 : vector<8x16xf32>
    %511 = arith.addf %508, %510 : vector<8x16xf32>
    %512 = math.tanh %511 : vector<8x16xf32>
    %cst_123 = arith.constant 1.000000e+00 : f32
    %513 = vector.broadcast %cst_123 : f32 to vector<8x16xf32>
    %514 = arith.subf %513, %507 : vector<8x16xf32>
    %515 = arith.mulf %514, %512 : vector<8x16xf32>
    %516 = arith.mulf %507, %491 : vector<8x16xf32>
    %517 = arith.addf %515, %516 : vector<8x16xf32>
    %518 = arith.truncf %517 : vector<8x16xf32> to vector<8x16xbf16>
    %cst_124 = arith.constant dense<0.000000e+00> : vector<8x100xf32>
    %519 = tpu.matmul %518, %4, %cst_124 {dimension_numbers = #tpu.dot_dimension_numbers<[1], [0], [0], [1], [0, 0, 1, 1], [], []>} : vector<8x16xbf16>, vector<16x100xbf16>, vector<8x100xf32> -> vector<8x100xf32>
    %520 = vector.broadcast %15 : vector<1x100xf32> to vector<8x100xf32>
    %521 = arith.addf %519, %520 : vector<8x100xf32>
    %522 = vector.extract_strided_slice %521 {offsets = [0, 0], sizes = [8, 4], strides = [1, 1]} : vector<8x100xf32> to vector<8x4xf32>
    %cst_125 = arith.constant 0.000000e+00 : f32
    %523 = vector.broadcast %cst_125 : f32 to vector<8x4xf32>
    %524 = arith.maximumf %522, %523 : vector<8x4xf32>
    %525 = vector.extract_strided_slice %456 {offsets = [0, 0], sizes = [8, 12], strides = [1, 1]} : vector<8x108xf32> to vector<8x12xf32>
    %526 = arith.truncf %524 : vector<8x4xf32> to vector<8x4xbf16>
    %cst_126 = arith.constant dense<0.000000e+00> : vector<8x12xf32>
    %527 = tpu.matmul %526, %5, %cst_126 {dimension_numbers = #tpu.dot_dimension_numbers<[1], [0], [0], [1], [0, 0, 1, 1], [], []>} : vector<8x4xbf16>, vector<4x12xbf16>, vector<8x12xf32> -> vector<8x12xf32>
    %528 = arith.addf %525, %527 : vector<8x12xf32>
    %529 = vector.extract_strided_slice %452 {offsets = [0, 96], sizes = [8, 12], strides = [1, 1]} : vector<8x108xf32> to vector<8x12xf32>
    %530 = vector.extract_strided_slice %400 {offsets = [0, 32], sizes = [8, 4], strides = [1, 1]} : vector<8x36xf32> to vector<8x4xf32>
    %531 = vector.extract_strided_slice %528 {offsets = [0, 0], sizes = [8, 4], strides = [1, 1]} : vector<8x12xf32> to vector<8x4xf32>
    %532 = vector.extract_strided_slice %529 {offsets = [0, 0], sizes = [8, 4], strides = [1, 1]} : vector<8x12xf32> to vector<8x4xf32>
    %533 = arith.addf %531, %532 : vector<8x4xf32>
    %534 = arith.negf %533 : vector<8x4xf32>
    %535 = math.exp %534 : vector<8x4xf32>
    %cst_127 = arith.constant 1.000000e+00 : f32
    %536 = vector.broadcast %cst_127 : f32 to vector<8x4xf32>
    %537 = arith.addf %536, %535 : vector<8x4xf32>
    %538 = arith.divf %536, %537 : vector<8x4xf32>
    %539 = vector.extract_strided_slice %528 {offsets = [0, 4], sizes = [8, 4], strides = [1, 1]} : vector<8x12xf32> to vector<8x4xf32>
    %540 = vector.extract_strided_slice %529 {offsets = [0, 4], sizes = [8, 4], strides = [1, 1]} : vector<8x12xf32> to vector<8x4xf32>
    %541 = arith.addf %539, %540 : vector<8x4xf32>
    %542 = arith.negf %541 : vector<8x4xf32>
    %543 = math.exp %542 : vector<8x4xf32>
    %cst_128 = arith.constant 1.000000e+00 : f32
    %544 = vector.broadcast %cst_128 : f32 to vector<8x4xf32>
    %545 = arith.addf %544, %543 : vector<8x4xf32>
    %546 = arith.divf %544, %545 : vector<8x4xf32>
    %547 = vector.extract_strided_slice %528 {offsets = [0, 8], sizes = [8, 4], strides = [1, 1]} : vector<8x12xf32> to vector<8x4xf32>
    %548 = vector.extract_strided_slice %529 {offsets = [0, 8], sizes = [8, 4], strides = [1, 1]} : vector<8x12xf32> to vector<8x4xf32>
    %549 = arith.mulf %538, %548 : vector<8x4xf32>
    %550 = arith.addf %547, %549 : vector<8x4xf32>
    %551 = math.tanh %550 : vector<8x4xf32>
    %cst_129 = arith.constant 1.000000e+00 : f32
    %552 = vector.broadcast %cst_129 : f32 to vector<8x4xf32>
    %553 = arith.subf %552, %546 : vector<8x4xf32>
    %554 = arith.mulf %553, %551 : vector<8x4xf32>
    %555 = arith.mulf %546, %530 : vector<8x4xf32>
    %556 = arith.addf %554, %555 : vector<8x4xf32>
    %557 = arith.truncf %556 : vector<8x4xf32> to vector<8x4xbf16>
    %cst_130 = arith.constant dense<0.000000e+00> : vector<8x96xf32>
    %558 = tpu.matmul %557, %6, %cst_130 {dimension_numbers = #tpu.dot_dimension_numbers<[1], [0], [0], [1], [0, 0, 1, 1], [], []>} : vector<8x4xbf16>, vector<4x96xbf16>, vector<8x96xf32> -> vector<8x96xf32>
    %559 = vector.broadcast %16 : vector<1x96xf32> to vector<8x96xf32>
    %560 = arith.addf %558, %559 : vector<8x96xf32>
    %561 = vector.extract_strided_slice %521 {offsets = [0, 4], sizes = [8, 80], strides = [1, 1]} : vector<8x100xf32> to vector<8x80xf32>
    %562 = vector.extract_strided_slice %560 {offsets = [0, 0], sizes = [8, 80], strides = [1, 1]} : vector<8x96xf32> to vector<8x80xf32>
    %563 = arith.addf %561, %562 : vector<8x80xf32>
    %cst_131 = arith.constant 0.000000e+00 : f32
    %564 = vector.broadcast %cst_131 : f32 to vector<8x80xf32>
    %565 = arith.maximumf %563, %564 : vector<8x80xf32>
    %566 = arith.truncf %565 : vector<8x80xf32> to vector<8x80xbf16>
    %cst_132 = arith.constant dense<0.000000e+00> : vector<8x8xf32>
    %567 = tpu.matmul %566, %7, %cst_132 {dimension_numbers = #tpu.dot_dimension_numbers<[1], [0], [0], [1], [0, 0, 1, 1], [], []>} : vector<8x80xbf16>, vector<80x8xbf16>, vector<8x8xf32> -> vector<8x8xf32>
    %568 = vector.broadcast %17 : vector<1x8xf32> to vector<8x8xf32>
    %569 = arith.addf %567, %568 : vector<8x8xf32>
    %570 = vector.extract_strided_slice %560 {offsets = [0, 80], sizes = [8, 16], strides = [1, 1]} : vector<8x96xf32> to vector<8x16xf32>
    %571 = arith.truncf %569 : vector<8x8xf32> to vector<8x8xbf16>
    %cst_133 = arith.constant dense<0.000000e+00> : vector<8x16xf32>
    %572 = tpu.matmul %571, %8, %cst_133 {dimension_numbers = #tpu.dot_dimension_numbers<[1], [0], [0], [1], [0, 0, 1, 1], [], []>} : vector<8x8xbf16>, vector<8x16xbf16>, vector<8x16xf32> -> vector<8x16xf32>
    %573 = arith.addf %570, %572 : vector<8x16xf32>
    %cst_134 = arith.constant 0.000000e+00 : f32
    %574 = vector.broadcast %cst_134 : f32 to vector<8x16xf32>
    %575 = arith.maximumf %573, %574 : vector<8x16xf32>
    %576 = vector.extract_strided_slice %521 {offsets = [0, 84], sizes = [8, 16], strides = [1, 1]} : vector<8x100xf32> to vector<8x16xf32>
    %577 = arith.truncf %575 : vector<8x16xf32> to vector<8x16xbf16>
    %cst_135 = arith.constant dense<0.000000e+00> : vector<8x16xf32>
    %578 = tpu.matmul %577, %9, %cst_135 {dimension_numbers = #tpu.dot_dimension_numbers<[1], [0], [0], [1], [0, 0, 1, 1], [], []>} : vector<8x16xbf16>, vector<16x16xbf16>, vector<8x16xf32> -> vector<8x16xf32>
    %579 = arith.addf %576, %578 : vector<8x16xf32>
    %cst_136 = arith.constant 0.000000e+00 : f32
    %580 = vector.broadcast %cst_136 : f32 to vector<8x16xf32>
    %581 = arith.maximumf %579, %580 : vector<8x16xf32>
    %582 = arith.subf %402, %405 : vector<8x2xf32>
    %583 = tpu.concatenate %582, %582, %582, %582 in 1 : vector<8x2xf32>, vector<8x2xf32>, vector<8x2xf32>, vector<8x2xf32> -> vector<8x8xf32>
    %584 = arith.mulf %569, %583 : vector<8x8xf32>
    %cst_137 = arith.constant dense<0.000000e+00> : vector<8x4xf32>
    %585 = tpu.matmul %584, %11, %cst_137 {dimension_numbers = #tpu.dot_dimension_numbers<[1], [0], [0], [1], [0, 0, 1, 1], [], []>} : vector<8x8xf32>, vector<8x4xf32>, vector<8x4xf32> -> vector<8x4xf32>
    %586 = arith.addf %404, %585 : vector<8x4xf32>
    %c2_138 = arith.constant 2 : index
    %c0_139 = arith.constant 0 : index
    %c0_140 = arith.constant 0 : index
    %587 = vector.load %arg5[%c2_138, %c0_139, %c0_140] : memref<12x8x4xf32, #tpu.memory_space<vmem>>, vector<1x8x4xf32>
    %588 = vector.shape_cast %587 : vector<1x8x4xf32> to vector<8x4xf32>
    %589 = vector.shape_cast %586 : vector<8x4xf32> to vector<1x8x4xf32>
    tpu.vector_store %arg5[%c2_138, %c0_139, %c0_140], %589 {strides = array<i32>} : memref<12x8x4xf32, #tpu.memory_space<vmem>>, vector<1x8x4xf32>,
    %590 = tpu.concatenate %485, %581, %556 in 1 : vector<8x16xf32>, vector<8x16xf32>, vector<8x4xf32> -> vector<8x36xf32>
    %c3 = arith.constant 3 : index
    %c0_141 = arith.constant 0 : index
    %c0_142 = arith.constant 0 : index
    %591 = vector.load %arg1[%c3, %c0_141, %c0_142] : memref<12x8x2xf32, #tpu.memory_space<vmem>>, vector<1x8x2xf32>
    %592 = vector.shape_cast %591 : vector<1x8x2xf32> to vector<8x2xf32>
    %cst_143 = arith.constant dense<0.000000e+00> : vector<8x6xf32>
    %593 = tpu.matmul %586, %10, %cst_143 {dimension_numbers = #tpu.dot_dimension_numbers<[1], [0], [0], [1], [0, 0, 1, 1], [], []>} : vector<8x4xf32>, vector<4x6xf32>, vector<8x6xf32> -> vector<8x6xf32>
    %594 = vector.extract_strided_slice %593 {offsets = [0, 0], sizes = [8, 4], strides = [1, 1]} : vector<8x6xf32> to vector<8x4xf32>
    %595 = vector.extract_strided_slice %593 {offsets = [0, 4], sizes = [8, 2], strides = [1, 1]} : vector<8x6xf32> to vector<8x2xf32>
    %596 = arith.subf %592, %402 : vector<8x2xf32>
    %597 = arith.mulf %596, %596 : vector<8x2xf32>
    %cst_144 = arith.constant dense<0.000000e+00> : vector<8xf32>
    %598 = vector.multi_reduction <add>, %597, %cst_144 [1] : vector<8x2xf32> to vector<8xf32>
    %599 = vector.shape_cast %598 : vector<8xf32> to vector<8x1xf32>
    %cst_145 = arith.constant 1.000000e-24 : f32
    %600 = vector.broadcast %cst_145 : f32 to vector<8x1xf32>
    %601 = arith.maximumf %599, %600 : vector<8x1xf32>
    %602 = math.rsqrt %601 : vector<8x1xf32>
    %603 = vector.broadcast %602 : vector<8x1xf32> to vector<8x2xf32>
    %604 = arith.mulf %596, %603 : vector<8x2xf32>
    %605 = arith.subf %592, %595 : vector<8x2xf32>
    %606 = arith.mulf %605, %605 : vector<8x2xf32>
    %cst_146 = arith.constant dense<0.000000e+00> : vector<8xf32>
    %607 = vector.multi_reduction <add>, %606, %cst_146 [1] : vector<8x2xf32> to vector<8xf32>
    %608 = vector.shape_cast %607 : vector<8xf32> to vector<8x1xf32>
    %cst_147 = arith.constant 1.000000e-24 : f32
    %609 = vector.broadcast %cst_147 : f32 to vector<8x1xf32>
    %610 = arith.maximumf %608, %609 : vector<8x1xf32>
    %611 = math.rsqrt %610 : vector<8x1xf32>
    %612 = vector.broadcast %611 : vector<8x1xf32> to vector<8x2xf32>
    %613 = arith.mulf %605, %612 : vector<8x2xf32>
    %614 = arith.subf %586, %396 : vector<8x4xf32>
    %615 = arith.mulf %614, %614 : vector<8x4xf32>
    %cst_148 = arith.constant dense<0.000000e+00> : vector<8xf32>
    %616 = vector.multi_reduction <add>, %615, %cst_148 [1] : vector<8x4xf32> to vector<8xf32>
    %617 = vector.shape_cast %616 : vector<8xf32> to vector<8x1xf32>
    %cst_149 = arith.constant 1.000000e-24 : f32
    %618 = vector.broadcast %cst_149 : f32 to vector<8x1xf32>
    %619 = arith.maximumf %617, %618 : vector<8x1xf32>
    %620 = math.rsqrt %619 : vector<8x1xf32>
    %621 = vector.broadcast %620 : vector<8x1xf32> to vector<8x4xf32>
    %622 = arith.mulf %614, %621 : vector<8x4xf32>
    %623 = arith.subf %586, %404 : vector<8x4xf32>
    %624 = arith.mulf %623, %623 : vector<8x4xf32>
    %cst_150 = arith.constant dense<0.000000e+00> : vector<8xf32>
    %625 = vector.multi_reduction <add>, %624, %cst_150 [1] : vector<8x4xf32> to vector<8xf32>
    %626 = vector.shape_cast %625 : vector<8xf32> to vector<8x1xf32>
    %cst_151 = arith.constant 1.000000e-24 : f32
    %627 = vector.broadcast %cst_151 : f32 to vector<8x1xf32>
    %628 = arith.maximumf %626, %627 : vector<8x1xf32>
    %629 = math.rsqrt %628 : vector<8x1xf32>
    %630 = vector.broadcast %629 : vector<8x1xf32> to vector<8x4xf32>
    %631 = arith.mulf %623, %630 : vector<8x4xf32>
    %632 = tpu.concatenate %604, %613, %622, %631 in 1 : vector<8x2xf32>, vector<8x2xf32>, vector<8x4xf32>, vector<8x4xf32> -> vector<8x12xf32>
    %633 = arith.truncf %632 : vector<8x12xf32> to vector<8x12xbf16>
    %cst_152 = arith.constant dense<0.000000e+00> : vector<8x60xf32>
    %634 = tpu.matmul %633, %0, %cst_152 {dimension_numbers = #tpu.dot_dimension_numbers<[1], [0], [0], [1], [0, 0, 1, 1], [], []>} : vector<8x12xbf16>, vector<12x60xbf16>, vector<8x60xf32> -> vector<8x60xf32>
    %635 = vector.broadcast %12 : vector<1x60xf32> to vector<8x60xf32>
    %636 = arith.addf %634, %635 : vector<8x60xf32>
    %cst_153 = arith.constant 0.000000e+00 : f32
    %637 = vector.broadcast %cst_153 : f32 to vector<8x60xf32>
    %638 = arith.maximumf %636, %637 : vector<8x60xf32>
    %639 = arith.truncf %590 : vector<8x36xf32> to vector<8x36xbf16>
    %cst_154 = arith.constant dense<0.000000e+00> : vector<8x108xf32>
    %640 = tpu.matmul %639, %1, %cst_154 {dimension_numbers = #tpu.dot_dimension_numbers<[1], [0], [0], [1], [0, 0, 1, 1], [], []>} : vector<8x36xbf16>, vector<36x108xbf16>, vector<8x108xf32> -> vector<8x108xf32>
    %641 = vector.broadcast %13 : vector<1x108xf32> to vector<8x108xf32>
    %642 = arith.addf %640, %641 : vector<8x108xf32>
    %643 = arith.truncf %638 : vector<8x60xf32> to vector<8x60xbf16>
    %cst_155 = arith.constant dense<0.000000e+00> : vector<8x108xf32>
    %644 = tpu.matmul %643, %2, %cst_155 {dimension_numbers = #tpu.dot_dimension_numbers<[1], [0], [0], [1], [0, 0, 1, 1], [], []>} : vector<8x60xbf16>, vector<60x108xbf16>, vector<8x108xf32> -> vector<8x108xf32>
    %645 = vector.broadcast %14 : vector<1x108xf32> to vector<8x108xf32>
    %646 = arith.addf %644, %645 : vector<8x108xf32>
    %647 = vector.extract_strided_slice %646 {offsets = [0, 60], sizes = [8, 48], strides = [1, 1]} : vector<8x108xf32> to vector<8x48xf32>
    %648 = vector.extract_strided_slice %642 {offsets = [0, 0], sizes = [8, 48], strides = [1, 1]} : vector<8x108xf32> to vector<8x48xf32>
    %649 = vector.extract_strided_slice %590 {offsets = [0, 0], sizes = [8, 16], strides = [1, 1]} : vector<8x36xf32> to vector<8x16xf32>
    %650 = vector.extract_strided_slice %647 {offsets = [0, 0], sizes = [8, 16], strides = [1, 1]} : vector<8x48xf32> to vector<8x16xf32>
    %651 = vector.extract_strided_slice %648 {offsets = [0, 0], sizes = [8, 16], strides = [1, 1]} : vector<8x48xf32> to vector<8x16xf32>
    %652 = arith.addf %650, %651 : vector<8x16xf32>
    %653 = arith.negf %652 : vector<8x16xf32>
    %654 = math.exp %653 : vector<8x16xf32>
    %cst_156 = arith.constant 1.000000e+00 : f32
    %655 = vector.broadcast %cst_156 : f32 to vector<8x16xf32>
    %656 = arith.addf %655, %654 : vector<8x16xf32>
    %657 = arith.divf %655, %656 : vector<8x16xf32>
    %658 = vector.extract_strided_slice %647 {offsets = [0, 16], sizes = [8, 16], strides = [1, 1]} : vector<8x48xf32> to vector<8x16xf32>
    %659 = vector.extract_strided_slice %648 {offsets = [0, 16], sizes = [8, 16], strides = [1, 1]} : vector<8x48xf32> to vector<8x16xf32>
    %660 = arith.addf %658, %659 : vector<8x16xf32>
    %661 = arith.negf %660 : vector<8x16xf32>
    %662 = math.exp %661 : vector<8x16xf32>
    %cst_157 = arith.constant 1.000000e+00 : f32
    %663 = vector.broadcast %cst_157 : f32 to vector<8x16xf32>
    %664 = arith.addf %663, %662 : vector<8x16xf32>
    %665 = arith.divf %663, %664 : vector<8x16xf32>
    %666 = vector.extract_strided_slice %647 {offsets = [0, 32], sizes = [8, 16], strides = [1, 1]} : vector<8x48xf32> to vector<8x16xf32>
    %667 = vector.extract_strided_slice %648 {offsets = [0, 32], sizes = [8, 16], strides = [1, 1]} : vector<8x48xf32> to vector<8x16xf32>
    %668 = arith.mulf %657, %667 : vector<8x16xf32>
    %669 = arith.addf %666, %668 : vector<8x16xf32>
    %670 = math.tanh %669 : vector<8x16xf32>
    %cst_158 = arith.constant 1.000000e+00 : f32
    %671 = vector.broadcast %cst_158 : f32 to vector<8x16xf32>
    %672 = arith.subf %671, %665 : vector<8x16xf32>
    %673 = arith.mulf %672, %670 : vector<8x16xf32>
    %674 = arith.mulf %665, %649 : vector<8x16xf32>
    %675 = arith.addf %673, %674 : vector<8x16xf32>
    %676 = vector.extract_strided_slice %646 {offsets = [0, 12], sizes = [8, 48], strides = [1, 1]} : vector<8x108xf32> to vector<8x48xf32>
    %677 = arith.truncf %675 : vector<8x16xf32> to vector<8x16xbf16>
    %cst_159 = arith.constant dense<0.000000e+00> : vector<8x48xf32>
    %678 = tpu.matmul %677, %3, %cst_159 {dimension_numbers = #tpu.dot_dimension_numbers<[1], [0], [0], [1], [0, 0, 1, 1], [], []>} : vector<8x16xbf16>, vector<16x48xbf16>, vector<8x48xf32> -> vector<8x48xf32>
    %679 = arith.addf %676, %678 : vector<8x48xf32>
    %680 = vector.extract_strided_slice %642 {offsets = [0, 48], sizes = [8, 48], strides = [1, 1]} : vector<8x108xf32> to vector<8x48xf32>
    %681 = vector.extract_strided_slice %590 {offsets = [0, 16], sizes = [8, 16], strides = [1, 1]} : vector<8x36xf32> to vector<8x16xf32>
    %682 = vector.extract_strided_slice %679 {offsets = [0, 0], sizes = [8, 16], strides = [1, 1]} : vector<8x48xf32> to vector<8x16xf32>
    %683 = vector.extract_strided_slice %680 {offsets = [0, 0], sizes = [8, 16], strides = [1, 1]} : vector<8x48xf32> to vector<8x16xf32>
    %684 = arith.addf %682, %683 : vector<8x16xf32>
    %685 = arith.negf %684 : vector<8x16xf32>
    %686 = math.exp %685 : vector<8x16xf32>
    %cst_160 = arith.constant 1.000000e+00 : f32
    %687 = vector.broadcast %cst_160 : f32 to vector<8x16xf32>
    %688 = arith.addf %687, %686 : vector<8x16xf32>
    %689 = arith.divf %687, %688 : vector<8x16xf32>
    %690 = vector.extract_strided_slice %679 {offsets = [0, 16], sizes = [8, 16], strides = [1, 1]} : vector<8x48xf32> to vector<8x16xf32>
    %691 = vector.extract_strided_slice %680 {offsets = [0, 16], sizes = [8, 16], strides = [1, 1]} : vector<8x48xf32> to vector<8x16xf32>
    %692 = arith.addf %690, %691 : vector<8x16xf32>
    %693 = arith.negf %692 : vector<8x16xf32>
    %694 = math.exp %693 : vector<8x16xf32>
    %cst_161 = arith.constant 1.000000e+00 : f32
    %695 = vector.broadcast %cst_161 : f32 to vector<8x16xf32>
    %696 = arith.addf %695, %694 : vector<8x16xf32>
    %697 = arith.divf %695, %696 : vector<8x16xf32>
    %698 = vector.extract_strided_slice %679 {offsets = [0, 32], sizes = [8, 16], strides = [1, 1]} : vector<8x48xf32> to vector<8x16xf32>
    %699 = vector.extract_strided_slice %680 {offsets = [0, 32], sizes = [8, 16], strides = [1, 1]} : vector<8x48xf32> to vector<8x16xf32>
    %700 = arith.mulf %689, %699 : vector<8x16xf32>
    %701 = arith.addf %698, %700 : vector<8x16xf32>
    %702 = math.tanh %701 : vector<8x16xf32>
    %cst_162 = arith.constant 1.000000e+00 : f32
    %703 = vector.broadcast %cst_162 : f32 to vector<8x16xf32>
    %704 = arith.subf %703, %697 : vector<8x16xf32>
    %705 = arith.mulf %704, %702 : vector<8x16xf32>
    %706 = arith.mulf %697, %681 : vector<8x16xf32>
    %707 = arith.addf %705, %706 : vector<8x16xf32>
    %708 = arith.truncf %707 : vector<8x16xf32> to vector<8x16xbf16>
    %cst_163 = arith.constant dense<0.000000e+00> : vector<8x100xf32>
    %709 = tpu.matmul %708, %4, %cst_163 {dimension_numbers = #tpu.dot_dimension_numbers<[1], [0], [0], [1], [0, 0, 1, 1], [], []>} : vector<8x16xbf16>, vector<16x100xbf16>, vector<8x100xf32> -> vector<8x100xf32>
    %710 = vector.broadcast %15 : vector<1x100xf32> to vector<8x100xf32>
    %711 = arith.addf %709, %710 : vector<8x100xf32>
    %712 = vector.extract_strided_slice %711 {offsets = [0, 0], sizes = [8, 4], strides = [1, 1]} : vector<8x100xf32> to vector<8x4xf32>
    %cst_164 = arith.constant 0.000000e+00 : f32
    %713 = vector.broadcast %cst_164 : f32 to vector<8x4xf32>
    %714 = arith.maximumf %712, %713 : vector<8x4xf32>
    %715 = vector.extract_strided_slice %646 {offsets = [0, 0], sizes = [8, 12], strides = [1, 1]} : vector<8x108xf32> to vector<8x12xf32>
    %716 = arith.truncf %714 : vector<8x4xf32> to vector<8x4xbf16>
    %cst_165 = arith.constant dense<0.000000e+00> : vector<8x12xf32>
    %717 = tpu.matmul %716, %5, %cst_165 {dimension_numbers = #tpu.dot_dimension_numbers<[1], [0], [0], [1], [0, 0, 1, 1], [], []>} : vector<8x4xbf16>, vector<4x12xbf16>, vector<8x12xf32> -> vector<8x12xf32>
    %718 = arith.addf %715, %717 : vector<8x12xf32>
    %719 = vector.extract_strided_slice %642 {offsets = [0, 96], sizes = [8, 12], strides = [1, 1]} : vector<8x108xf32> to vector<8x12xf32>
    %720 = vector.extract_strided_slice %590 {offsets = [0, 32], sizes = [8, 4], strides = [1, 1]} : vector<8x36xf32> to vector<8x4xf32>
    %721 = vector.extract_strided_slice %718 {offsets = [0, 0], sizes = [8, 4], strides = [1, 1]} : vector<8x12xf32> to vector<8x4xf32>
    %722 = vector.extract_strided_slice %719 {offsets = [0, 0], sizes = [8, 4], strides = [1, 1]} : vector<8x12xf32> to vector<8x4xf32>
    %723 = arith.addf %721, %722 : vector<8x4xf32>
    %724 = arith.negf %723 : vector<8x4xf32>
    %725 = math.exp %724 : vector<8x4xf32>
    %cst_166 = arith.constant 1.000000e+00 : f32
    %726 = vector.broadcast %cst_166 : f32 to vector<8x4xf32>
    %727 = arith.addf %726, %725 : vector<8x4xf32>
    %728 = arith.divf %726, %727 : vector<8x4xf32>
    %729 = vector.extract_strided_slice %718 {offsets = [0, 4], sizes = [8, 4], strides = [1, 1]} : vector<8x12xf32> to vector<8x4xf32>
    %730 = vector.extract_strided_slice %719 {offsets = [0, 4], sizes = [8, 4], strides = [1, 1]} : vector<8x12xf32> to vector<8x4xf32>
    %731 = arith.addf %729, %730 : vector<8x4xf32>
    %732 = arith.negf %731 : vector<8x4xf32>
    %733 = math.exp %732 : vector<8x4xf32>
    %cst_167 = arith.constant 1.000000e+00 : f32
    %734 = vector.broadcast %cst_167 : f32 to vector<8x4xf32>
    %735 = arith.addf %734, %733 : vector<8x4xf32>
    %736 = arith.divf %734, %735 : vector<8x4xf32>
    %737 = vector.extract_strided_slice %718 {offsets = [0, 8], sizes = [8, 4], strides = [1, 1]} : vector<8x12xf32> to vector<8x4xf32>
    %738 = vector.extract_strided_slice %719 {offsets = [0, 8], sizes = [8, 4], strides = [1, 1]} : vector<8x12xf32> to vector<8x4xf32>
    %739 = arith.mulf %728, %738 : vector<8x4xf32>
    %740 = arith.addf %737, %739 : vector<8x4xf32>
    %741 = math.tanh %740 : vector<8x4xf32>
    %cst_168 = arith.constant 1.000000e+00 : f32
    %742 = vector.broadcast %cst_168 : f32 to vector<8x4xf32>
    %743 = arith.subf %742, %736 : vector<8x4xf32>
    %744 = arith.mulf %743, %741 : vector<8x4xf32>
    %745 = arith.mulf %736, %720 : vector<8x4xf32>
    %746 = arith.addf %744, %745 : vector<8x4xf32>
    %747 = arith.truncf %746 : vector<8x4xf32> to vector<8x4xbf16>
    %cst_169 = arith.constant dense<0.000000e+00> : vector<8x96xf32>
    %748 = tpu.matmul %747, %6, %cst_169 {dimension_numbers = #tpu.dot_dimension_numbers<[1], [0], [0], [1], [0, 0, 1, 1], [], []>} : vector<8x4xbf16>, vector<4x96xbf16>, vector<8x96xf32> -> vector<8x96xf32>
    %749 = vector.broadcast %16 : vector<1x96xf32> to vector<8x96xf32>
    %750 = arith.addf %748, %749 : vector<8x96xf32>
    %751 = vector.extract_strided_slice %711 {offsets = [0, 4], sizes = [8, 80], strides = [1, 1]} : vector<8x100xf32> to vector<8x80xf32>
    %752 = vector.extract_strided_slice %750 {offsets = [0, 0], sizes = [8, 80], strides = [1, 1]} : vector<8x96xf32> to vector<8x80xf32>
    %753 = arith.addf %751, %752 : vector<8x80xf32>
    %cst_170 = arith.constant 0.000000e+00 : f32
    %754 = vector.broadcast %cst_170 : f32 to vector<8x80xf32>
    %755 = arith.maximumf %753, %754 : vector<8x80xf32>
    %756 = arith.truncf %755 : vector<8x80xf32> to vector<8x80xbf16>
    %cst_171 = arith.constant dense<0.000000e+00> : vector<8x8xf32>
    %757 = tpu.matmul %756, %7, %cst_171 {dimension_numbers = #tpu.dot_dimension_numbers<[1], [0], [0], [1], [0, 0, 1, 1], [], []>} : vector<8x80xbf16>, vector<80x8xbf16>, vector<8x8xf32> -> vector<8x8xf32>
    %758 = vector.broadcast %17 : vector<1x8xf32> to vector<8x8xf32>
    %759 = arith.addf %757, %758 : vector<8x8xf32>
    %760 = vector.extract_strided_slice %750 {offsets = [0, 80], sizes = [8, 16], strides = [1, 1]} : vector<8x96xf32> to vector<8x16xf32>
    %761 = arith.truncf %759 : vector<8x8xf32> to vector<8x8xbf16>
    %cst_172 = arith.constant dense<0.000000e+00> : vector<8x16xf32>
    %762 = tpu.matmul %761, %8, %cst_172 {dimension_numbers = #tpu.dot_dimension_numbers<[1], [0], [0], [1], [0, 0, 1, 1], [], []>} : vector<8x8xbf16>, vector<8x16xbf16>, vector<8x16xf32> -> vector<8x16xf32>
    %763 = arith.addf %760, %762 : vector<8x16xf32>
    %cst_173 = arith.constant 0.000000e+00 : f32
    %764 = vector.broadcast %cst_173 : f32 to vector<8x16xf32>
    %765 = arith.maximumf %763, %764 : vector<8x16xf32>
    %766 = vector.extract_strided_slice %711 {offsets = [0, 84], sizes = [8, 16], strides = [1, 1]} : vector<8x100xf32> to vector<8x16xf32>
    %767 = arith.truncf %765 : vector<8x16xf32> to vector<8x16xbf16>
    %cst_174 = arith.constant dense<0.000000e+00> : vector<8x16xf32>
    %768 = tpu.matmul %767, %9, %cst_174 {dimension_numbers = #tpu.dot_dimension_numbers<[1], [0], [0], [1], [0, 0, 1, 1], [], []>} : vector<8x16xbf16>, vector<16x16xbf16>, vector<8x16xf32> -> vector<8x16xf32>
    %769 = arith.addf %766, %768 : vector<8x16xf32>
    %cst_175 = arith.constant 0.000000e+00 : f32
    %770 = vector.broadcast %cst_175 : f32 to vector<8x16xf32>
    %771 = arith.maximumf %769, %770 : vector<8x16xf32>
    %772 = arith.subf %592, %595 : vector<8x2xf32>
    %773 = tpu.concatenate %772, %772, %772, %772 in 1 : vector<8x2xf32>, vector<8x2xf32>, vector<8x2xf32>, vector<8x2xf32> -> vector<8x8xf32>
    %774 = arith.mulf %759, %773 : vector<8x8xf32>
    %cst_176 = arith.constant dense<0.000000e+00> : vector<8x4xf32>
    %775 = tpu.matmul %774, %11, %cst_176 {dimension_numbers = #tpu.dot_dimension_numbers<[1], [0], [0], [1], [0, 0, 1, 1], [], []>} : vector<8x8xf32>, vector<8x4xf32>, vector<8x4xf32> -> vector<8x4xf32>
    %776 = arith.addf %594, %775 : vector<8x4xf32>
    %c3_177 = arith.constant 3 : index
    %c0_178 = arith.constant 0 : index
    %c0_179 = arith.constant 0 : index
    %777 = vector.load %arg5[%c3_177, %c0_178, %c0_179] : memref<12x8x4xf32, #tpu.memory_space<vmem>>, vector<1x8x4xf32>
    %778 = vector.shape_cast %777 : vector<1x8x4xf32> to vector<8x4xf32>
    %779 = vector.shape_cast %776 : vector<8x4xf32> to vector<1x8x4xf32>
    tpu.vector_store %arg5[%c3_177, %c0_178, %c0_179], %779 {strides = array<i32>} : memref<12x8x4xf32, #tpu.memory_space<vmem>>, vector<1x8x4xf32>,
    %780 = tpu.concatenate %675, %771, %746 in 1 : vector<8x16xf32>, vector<8x16xf32>, vector<8x4xf32> -> vector<8x36xf32>
    %c4_180 = arith.constant 4 : index
    %c0_181 = arith.constant 0 : index
    %c0_182 = arith.constant 0 : index
    %781 = vector.load %arg1[%c4_180, %c0_181, %c0_182] : memref<12x8x2xf32, #tpu.memory_space<vmem>>, vector<1x8x2xf32>
    %782 = vector.shape_cast %781 : vector<1x8x2xf32> to vector<8x2xf32>
    %cst_183 = arith.constant dense<0.000000e+00> : vector<8x6xf32>
    %783 = tpu.matmul %776, %10, %cst_183 {dimension_numbers = #tpu.dot_dimension_numbers<[1], [0], [0], [1], [0, 0, 1, 1], [], []>} : vector<8x4xf32>, vector<4x6xf32>, vector<8x6xf32> -> vector<8x6xf32>
    %784 = vector.extract_strided_slice %783 {offsets = [0, 0], sizes = [8, 4], strides = [1, 1]} : vector<8x6xf32> to vector<8x4xf32>
    %785 = vector.extract_strided_slice %783 {offsets = [0, 4], sizes = [8, 2], strides = [1, 1]} : vector<8x6xf32> to vector<8x2xf32>
    %786 = arith.subf %782, %592 : vector<8x2xf32>
    %787 = arith.mulf %786, %786 : vector<8x2xf32>
    %cst_184 = arith.constant dense<0.000000e+00> : vector<8xf32>
    %788 = vector.multi_reduction <add>, %787, %cst_184 [1] : vector<8x2xf32> to vector<8xf32>
    %789 = vector.shape_cast %788 : vector<8xf32> to vector<8x1xf32>
    %cst_185 = arith.constant 1.000000e-24 : f32
    %790 = vector.broadcast %cst_185 : f32 to vector<8x1xf32>
    %791 = arith.maximumf %789, %790 : vector<8x1xf32>
    %792 = math.rsqrt %791 : vector<8x1xf32>
    %793 = vector.broadcast %792 : vector<8x1xf32> to vector<8x2xf32>
    %794 = arith.mulf %786, %793 : vector<8x2xf32>
    %795 = arith.subf %782, %785 : vector<8x2xf32>
    %796 = arith.mulf %795, %795 : vector<8x2xf32>
    %cst_186 = arith.constant dense<0.000000e+00> : vector<8xf32>
    %797 = vector.multi_reduction <add>, %796, %cst_186 [1] : vector<8x2xf32> to vector<8xf32>
    %798 = vector.shape_cast %797 : vector<8xf32> to vector<8x1xf32>
    %cst_187 = arith.constant 1.000000e-24 : f32
    %799 = vector.broadcast %cst_187 : f32 to vector<8x1xf32>
    %800 = arith.maximumf %798, %799 : vector<8x1xf32>
    %801 = math.rsqrt %800 : vector<8x1xf32>
    %802 = vector.broadcast %801 : vector<8x1xf32> to vector<8x2xf32>
    %803 = arith.mulf %795, %802 : vector<8x2xf32>
    %804 = arith.subf %776, %586 : vector<8x4xf32>
    %805 = arith.mulf %804, %804 : vector<8x4xf32>
    %cst_188 = arith.constant dense<0.000000e+00> : vector<8xf32>
    %806 = vector.multi_reduction <add>, %805, %cst_188 [1] : vector<8x4xf32> to vector<8xf32>
    %807 = vector.shape_cast %806 : vector<8xf32> to vector<8x1xf32>
    %cst_189 = arith.constant 1.000000e-24 : f32
    %808 = vector.broadcast %cst_189 : f32 to vector<8x1xf32>
    %809 = arith.maximumf %807, %808 : vector<8x1xf32>
    %810 = math.rsqrt %809 : vector<8x1xf32>
    %811 = vector.broadcast %810 : vector<8x1xf32> to vector<8x4xf32>
    %812 = arith.mulf %804, %811 : vector<8x4xf32>
    %813 = arith.subf %776, %594 : vector<8x4xf32>
    %814 = arith.mulf %813, %813 : vector<8x4xf32>
    %cst_190 = arith.constant dense<0.000000e+00> : vector<8xf32>
    %815 = vector.multi_reduction <add>, %814, %cst_190 [1] : vector<8x4xf32> to vector<8xf32>
    %816 = vector.shape_cast %815 : vector<8xf32> to vector<8x1xf32>
    %cst_191 = arith.constant 1.000000e-24 : f32
    %817 = vector.broadcast %cst_191 : f32 to vector<8x1xf32>
    %818 = arith.maximumf %816, %817 : vector<8x1xf32>
    %819 = math.rsqrt %818 : vector<8x1xf32>
    %820 = vector.broadcast %819 : vector<8x1xf32> to vector<8x4xf32>
    %821 = arith.mulf %813, %820 : vector<8x4xf32>
    %822 = tpu.concatenate %794, %803, %812, %821 in 1 : vector<8x2xf32>, vector<8x2xf32>, vector<8x4xf32>, vector<8x4xf32> -> vector<8x12xf32>
    %823 = arith.truncf %822 : vector<8x12xf32> to vector<8x12xbf16>
    %cst_192 = arith.constant dense<0.000000e+00> : vector<8x60xf32>
    %824 = tpu.matmul %823, %0, %cst_192 {dimension_numbers = #tpu.dot_dimension_numbers<[1], [0], [0], [1], [0, 0, 1, 1], [], []>} : vector<8x12xbf16>, vector<12x60xbf16>, vector<8x60xf32> -> vector<8x60xf32>
    %825 = vector.broadcast %12 : vector<1x60xf32> to vector<8x60xf32>
    %826 = arith.addf %824, %825 : vector<8x60xf32>
    %cst_193 = arith.constant 0.000000e+00 : f32
    %827 = vector.broadcast %cst_193 : f32 to vector<8x60xf32>
    %828 = arith.maximumf %826, %827 : vector<8x60xf32>
    %829 = arith.truncf %780 : vector<8x36xf32> to vector<8x36xbf16>
    %cst_194 = arith.constant dense<0.000000e+00> : vector<8x108xf32>
    %830 = tpu.matmul %829, %1, %cst_194 {dimension_numbers = #tpu.dot_dimension_numbers<[1], [0], [0], [1], [0, 0, 1, 1], [], []>} : vector<8x36xbf16>, vector<36x108xbf16>, vector<8x108xf32> -> vector<8x108xf32>
    %831 = vector.broadcast %13 : vector<1x108xf32> to vector<8x108xf32>
    %832 = arith.addf %830, %831 : vector<8x108xf32>
    %833 = arith.truncf %828 : vector<8x60xf32> to vector<8x60xbf16>
    %cst_195 = arith.constant dense<0.000000e+00> : vector<8x108xf32>
    %834 = tpu.matmul %833, %2, %cst_195 {dimension_numbers = #tpu.dot_dimension_numbers<[1], [0], [0], [1], [0, 0, 1, 1], [], []>} : vector<8x60xbf16>, vector<60x108xbf16>, vector<8x108xf32> -> vector<8x108xf32>
    %835 = vector.broadcast %14 : vector<1x108xf32> to vector<8x108xf32>
    %836 = arith.addf %834, %835 : vector<8x108xf32>
    %837 = vector.extract_strided_slice %836 {offsets = [0, 60], sizes = [8, 48], strides = [1, 1]} : vector<8x108xf32> to vector<8x48xf32>
    %838 = vector.extract_strided_slice %832 {offsets = [0, 0], sizes = [8, 48], strides = [1, 1]} : vector<8x108xf32> to vector<8x48xf32>
    %839 = vector.extract_strided_slice %780 {offsets = [0, 0], sizes = [8, 16], strides = [1, 1]} : vector<8x36xf32> to vector<8x16xf32>
    %840 = vector.extract_strided_slice %837 {offsets = [0, 0], sizes = [8, 16], strides = [1, 1]} : vector<8x48xf32> to vector<8x16xf32>
    %841 = vector.extract_strided_slice %838 {offsets = [0, 0], sizes = [8, 16], strides = [1, 1]} : vector<8x48xf32> to vector<8x16xf32>
    %842 = arith.addf %840, %841 : vector<8x16xf32>
    %843 = arith.negf %842 : vector<8x16xf32>
    %844 = math.exp %843 : vector<8x16xf32>
    %cst_196 = arith.constant 1.000000e+00 : f32
    %845 = vector.broadcast %cst_196 : f32 to vector<8x16xf32>
    %846 = arith.addf %845, %844 : vector<8x16xf32>
    %847 = arith.divf %845, %846 : vector<8x16xf32>
    %848 = vector.extract_strided_slice %837 {offsets = [0, 16], sizes = [8, 16], strides = [1, 1]} : vector<8x48xf32> to vector<8x16xf32>
    %849 = vector.extract_strided_slice %838 {offsets = [0, 16], sizes = [8, 16], strides = [1, 1]} : vector<8x48xf32> to vector<8x16xf32>
    %850 = arith.addf %848, %849 : vector<8x16xf32>
    %851 = arith.negf %850 : vector<8x16xf32>
    %852 = math.exp %851 : vector<8x16xf32>
    %cst_197 = arith.constant 1.000000e+00 : f32
    %853 = vector.broadcast %cst_197 : f32 to vector<8x16xf32>
    %854 = arith.addf %853, %852 : vector<8x16xf32>
    %855 = arith.divf %853, %854 : vector<8x16xf32>
    %856 = vector.extract_strided_slice %837 {offsets = [0, 32], sizes = [8, 16], strides = [1, 1]} : vector<8x48xf32> to vector<8x16xf32>
    %857 = vector.extract_strided_slice %838 {offsets = [0, 32], sizes = [8, 16], strides = [1, 1]} : vector<8x48xf32> to vector<8x16xf32>
    %858 = arith.mulf %847, %857 : vector<8x16xf32>
    %859 = arith.addf %856, %858 : vector<8x16xf32>
    %860 = math.tanh %859 : vector<8x16xf32>
    %cst_198 = arith.constant 1.000000e+00 : f32
    %861 = vector.broadcast %cst_198 : f32 to vector<8x16xf32>
    %862 = arith.subf %861, %855 : vector<8x16xf32>
    %863 = arith.mulf %862, %860 : vector<8x16xf32>
    %864 = arith.mulf %855, %839 : vector<8x16xf32>
    %865 = arith.addf %863, %864 : vector<8x16xf32>
    %866 = vector.extract_strided_slice %836 {offsets = [0, 12], sizes = [8, 48], strides = [1, 1]} : vector<8x108xf32> to vector<8x48xf32>
    %867 = arith.truncf %865 : vector<8x16xf32> to vector<8x16xbf16>
    %cst_199 = arith.constant dense<0.000000e+00> : vector<8x48xf32>
    %868 = tpu.matmul %867, %3, %cst_199 {dimension_numbers = #tpu.dot_dimension_numbers<[1], [0], [0], [1], [0, 0, 1, 1], [], []>} : vector<8x16xbf16>, vector<16x48xbf16>, vector<8x48xf32> -> vector<8x48xf32>
    %869 = arith.addf %866, %868 : vector<8x48xf32>
    %870 = vector.extract_strided_slice %832 {offsets = [0, 48], sizes = [8, 48], strides = [1, 1]} : vector<8x108xf32> to vector<8x48xf32>
    %871 = vector.extract_strided_slice %780 {offsets = [0, 16], sizes = [8, 16], strides = [1, 1]} : vector<8x36xf32> to vector<8x16xf32>
    %872 = vector.extract_strided_slice %869 {offsets = [0, 0], sizes = [8, 16], strides = [1, 1]} : vector<8x48xf32> to vector<8x16xf32>
    %873 = vector.extract_strided_slice %870 {offsets = [0, 0], sizes = [8, 16], strides = [1, 1]} : vector<8x48xf32> to vector<8x16xf32>
    %874 = arith.addf %872, %873 : vector<8x16xf32>
    %875 = arith.negf %874 : vector<8x16xf32>
    %876 = math.exp %875 : vector<8x16xf32>
    %cst_200 = arith.constant 1.000000e+00 : f32
    %877 = vector.broadcast %cst_200 : f32 to vector<8x16xf32>
    %878 = arith.addf %877, %876 : vector<8x16xf32>
    %879 = arith.divf %877, %878 : vector<8x16xf32>
    %880 = vector.extract_strided_slice %869 {offsets = [0, 16], sizes = [8, 16], strides = [1, 1]} : vector<8x48xf32> to vector<8x16xf32>
    %881 = vector.extract_strided_slice %870 {offsets = [0, 16], sizes = [8, 16], strides = [1, 1]} : vector<8x48xf32> to vector<8x16xf32>
    %882 = arith.addf %880, %881 : vector<8x16xf32>
    %883 = arith.negf %882 : vector<8x16xf32>
    %884 = math.exp %883 : vector<8x16xf32>
    %cst_201 = arith.constant 1.000000e+00 : f32
    %885 = vector.broadcast %cst_201 : f32 to vector<8x16xf32>
    %886 = arith.addf %885, %884 : vector<8x16xf32>
    %887 = arith.divf %885, %886 : vector<8x16xf32>
    %888 = vector.extract_strided_slice %869 {offsets = [0, 32], sizes = [8, 16], strides = [1, 1]} : vector<8x48xf32> to vector<8x16xf32>
    %889 = vector.extract_strided_slice %870 {offsets = [0, 32], sizes = [8, 16], strides = [1, 1]} : vector<8x48xf32> to vector<8x16xf32>
    %890 = arith.mulf %879, %889 : vector<8x16xf32>
    %891 = arith.addf %888, %890 : vector<8x16xf32>
    %892 = math.tanh %891 : vector<8x16xf32>
    %cst_202 = arith.constant 1.000000e+00 : f32
    %893 = vector.broadcast %cst_202 : f32 to vector<8x16xf32>
    %894 = arith.subf %893, %887 : vector<8x16xf32>
    %895 = arith.mulf %894, %892 : vector<8x16xf32>
    %896 = arith.mulf %887, %871 : vector<8x16xf32>
    %897 = arith.addf %895, %896 : vector<8x16xf32>
    %898 = arith.truncf %897 : vector<8x16xf32> to vector<8x16xbf16>
    %cst_203 = arith.constant dense<0.000000e+00> : vector<8x100xf32>
    %899 = tpu.matmul %898, %4, %cst_203 {dimension_numbers = #tpu.dot_dimension_numbers<[1], [0], [0], [1], [0, 0, 1, 1], [], []>} : vector<8x16xbf16>, vector<16x100xbf16>, vector<8x100xf32> -> vector<8x100xf32>
    %900 = vector.broadcast %15 : vector<1x100xf32> to vector<8x100xf32>
    %901 = arith.addf %899, %900 : vector<8x100xf32>
    %902 = vector.extract_strided_slice %901 {offsets = [0, 0], sizes = [8, 4], strides = [1, 1]} : vector<8x100xf32> to vector<8x4xf32>
    %cst_204 = arith.constant 0.000000e+00 : f32
    %903 = vector.broadcast %cst_204 : f32 to vector<8x4xf32>
    %904 = arith.maximumf %902, %903 : vector<8x4xf32>
    %905 = vector.extract_strided_slice %836 {offsets = [0, 0], sizes = [8, 12], strides = [1, 1]} : vector<8x108xf32> to vector<8x12xf32>
    %906 = arith.truncf %904 : vector<8x4xf32> to vector<8x4xbf16>
    %cst_205 = arith.constant dense<0.000000e+00> : vector<8x12xf32>
    %907 = tpu.matmul %906, %5, %cst_205 {dimension_numbers = #tpu.dot_dimension_numbers<[1], [0], [0], [1], [0, 0, 1, 1], [], []>} : vector<8x4xbf16>, vector<4x12xbf16>, vector<8x12xf32> -> vector<8x12xf32>
    %908 = arith.addf %905, %907 : vector<8x12xf32>
    %909 = vector.extract_strided_slice %832 {offsets = [0, 96], sizes = [8, 12], strides = [1, 1]} : vector<8x108xf32> to vector<8x12xf32>
    %910 = vector.extract_strided_slice %780 {offsets = [0, 32], sizes = [8, 4], strides = [1, 1]} : vector<8x36xf32> to vector<8x4xf32>
    %911 = vector.extract_strided_slice %908 {offsets = [0, 0], sizes = [8, 4], strides = [1, 1]} : vector<8x12xf32> to vector<8x4xf32>
    %912 = vector.extract_strided_slice %909 {offsets = [0, 0], sizes = [8, 4], strides = [1, 1]} : vector<8x12xf32> to vector<8x4xf32>
    %913 = arith.addf %911, %912 : vector<8x4xf32>
    %914 = arith.negf %913 : vector<8x4xf32>
    %915 = math.exp %914 : vector<8x4xf32>
    %cst_206 = arith.constant 1.000000e+00 : f32
    %916 = vector.broadcast %cst_206 : f32 to vector<8x4xf32>
    %917 = arith.addf %916, %915 : vector<8x4xf32>
    %918 = arith.divf %916, %917 : vector<8x4xf32>
    %919 = vector.extract_strided_slice %908 {offsets = [0, 4], sizes = [8, 4], strides = [1, 1]} : vector<8x12xf32> to vector<8x4xf32>
    %920 = vector.extract_strided_slice %909 {offsets = [0, 4], sizes = [8, 4], strides = [1, 1]} : vector<8x12xf32> to vector<8x4xf32>
    %921 = arith.addf %919, %920 : vector<8x4xf32>
    %922 = arith.negf %921 : vector<8x4xf32>
    %923 = math.exp %922 : vector<8x4xf32>
    %cst_207 = arith.constant 1.000000e+00 : f32
    %924 = vector.broadcast %cst_207 : f32 to vector<8x4xf32>
    %925 = arith.addf %924, %923 : vector<8x4xf32>
    %926 = arith.divf %924, %925 : vector<8x4xf32>
    %927 = vector.extract_strided_slice %908 {offsets = [0, 8], sizes = [8, 4], strides = [1, 1]} : vector<8x12xf32> to vector<8x4xf32>
    %928 = vector.extract_strided_slice %909 {offsets = [0, 8], sizes = [8, 4], strides = [1, 1]} : vector<8x12xf32> to vector<8x4xf32>
    %929 = arith.mulf %918, %928 : vector<8x4xf32>
    %930 = arith.addf %927, %929 : vector<8x4xf32>
    %931 = math.tanh %930 : vector<8x4xf32>
    %cst_208 = arith.constant 1.000000e+00 : f32
    %932 = vector.broadcast %cst_208 : f32 to vector<8x4xf32>
    %933 = arith.subf %932, %926 : vector<8x4xf32>
    %934 = arith.mulf %933, %931 : vector<8x4xf32>
    %935 = arith.mulf %926, %910 : vector<8x4xf32>
    %936 = arith.addf %934, %935 : vector<8x4xf32>
    %937 = arith.truncf %936 : vector<8x4xf32> to vector<8x4xbf16>
    %cst_209 = arith.constant dense<0.000000e+00> : vector<8x96xf32>
    %938 = tpu.matmul %937, %6, %cst_209 {dimension_numbers = #tpu.dot_dimension_numbers<[1], [0], [0], [1], [0, 0, 1, 1], [], []>} : vector<8x4xbf16>, vector<4x96xbf16>, vector<8x96xf32> -> vector<8x96xf32>
    %939 = vector.broadcast %16 : vector<1x96xf32> to vector<8x96xf32>
    %940 = arith.addf %938, %939 : vector<8x96xf32>
    %941 = vector.extract_strided_slice %901 {offsets = [0, 4], sizes = [8, 80], strides = [1, 1]} : vector<8x100xf32> to vector<8x80xf32>
    %942 = vector.extract_strided_slice %940 {offsets = [0, 0], sizes = [8, 80], strides = [1, 1]} : vector<8x96xf32> to vector<8x80xf32>
    %943 = arith.addf %941, %942 : vector<8x80xf32>
    %cst_210 = arith.constant 0.000000e+00 : f32
    %944 = vector.broadcast %cst_210 : f32 to vector<8x80xf32>
    %945 = arith.maximumf %943, %944 : vector<8x80xf32>
    %946 = arith.truncf %945 : vector<8x80xf32> to vector<8x80xbf16>
    %cst_211 = arith.constant dense<0.000000e+00> : vector<8x8xf32>
    %947 = tpu.matmul %946, %7, %cst_211 {dimension_numbers = #tpu.dot_dimension_numbers<[1], [0], [0], [1], [0, 0, 1, 1], [], []>} : vector<8x80xbf16>, vector<80x8xbf16>, vector<8x8xf32> -> vector<8x8xf32>
    %948 = vector.broadcast %17 : vector<1x8xf32> to vector<8x8xf32>
    %949 = arith.addf %947, %948 : vector<8x8xf32>
    %950 = vector.extract_strided_slice %940 {offsets = [0, 80], sizes = [8, 16], strides = [1, 1]} : vector<8x96xf32> to vector<8x16xf32>
    %951 = arith.truncf %949 : vector<8x8xf32> to vector<8x8xbf16>
    %cst_212 = arith.constant dense<0.000000e+00> : vector<8x16xf32>
    %952 = tpu.matmul %951, %8, %cst_212 {dimension_numbers = #tpu.dot_dimension_numbers<[1], [0], [0], [1], [0, 0, 1, 1], [], []>} : vector<8x8xbf16>, vector<8x16xbf16>, vector<8x16xf32> -> vector<8x16xf32>
    %953 = arith.addf %950, %952 : vector<8x16xf32>
    %cst_213 = arith.constant 0.000000e+00 : f32
    %954 = vector.broadcast %cst_213 : f32 to vector<8x16xf32>
    %955 = arith.maximumf %953, %954 : vector<8x16xf32>
    %956 = vector.extract_strided_slice %901 {offsets = [0, 84], sizes = [8, 16], strides = [1, 1]} : vector<8x100xf32> to vector<8x16xf32>
    %957 = arith.truncf %955 : vector<8x16xf32> to vector<8x16xbf16>
    %cst_214 = arith.constant dense<0.000000e+00> : vector<8x16xf32>
    %958 = tpu.matmul %957, %9, %cst_214 {dimension_numbers = #tpu.dot_dimension_numbers<[1], [0], [0], [1], [0, 0, 1, 1], [], []>} : vector<8x16xbf16>, vector<16x16xbf16>, vector<8x16xf32> -> vector<8x16xf32>
    %959 = arith.addf %956, %958 : vector<8x16xf32>
    %cst_215 = arith.constant 0.000000e+00 : f32
    %960 = vector.broadcast %cst_215 : f32 to vector<8x16xf32>
    %961 = arith.maximumf %959, %960 : vector<8x16xf32>
    %962 = arith.subf %782, %785 : vector<8x2xf32>
    %963 = tpu.concatenate %962, %962, %962, %962 in 1 : vector<8x2xf32>, vector<8x2xf32>, vector<8x2xf32>, vector<8x2xf32> -> vector<8x8xf32>
    %964 = arith.mulf %949, %963 : vector<8x8xf32>
    %cst_216 = arith.constant dense<0.000000e+00> : vector<8x4xf32>
    %965 = tpu.matmul %964, %11, %cst_216 {dimension_numbers = #tpu.dot_dimension_numbers<[1], [0], [0], [1], [0, 0, 1, 1], [], []>} : vector<8x8xf32>, vector<8x4xf32>, vector<8x4xf32> -> vector<8x4xf32>
    %966 = arith.addf %784, %965 : vector<8x4xf32>
    %c4_217 = arith.constant 4 : index
    %c0_218 = arith.constant 0 : index
    %c0_219 = arith.constant 0 : index
    %967 = vector.load %arg5[%c4_217, %c0_218, %c0_219] : memref<12x8x4xf32, #tpu.memory_space<vmem>>, vector<1x8x4xf32>
    %968 = vector.shape_cast %967 : vector<1x8x4xf32> to vector<8x4xf32>
    %969 = vector.shape_cast %966 : vector<8x4xf32> to vector<1x8x4xf32>
    tpu.vector_store %arg5[%c4_217, %c0_218, %c0_219], %969 {strides = array<i32>} : memref<12x8x4xf32, #tpu.memory_space<vmem>>, vector<1x8x4xf32>,
    %970 = tpu.concatenate %865, %961, %936 in 1 : vector<8x16xf32>, vector<8x16xf32>, vector<8x4xf32> -> vector<8x36xf32>
    %c5 = arith.constant 5 : index
    %c0_220 = arith.constant 0 : index
    %c0_221 = arith.constant 0 : index
    %971 = vector.load %arg1[%c5, %c0_220, %c0_221] : memref<12x8x2xf32, #tpu.memory_space<vmem>>, vector<1x8x2xf32>
    %972 = vector.shape_cast %971 : vector<1x8x2xf32> to vector<8x2xf32>
    %cst_222 = arith.constant dense<0.000000e+00> : vector<8x6xf32>
    %973 = tpu.matmul %966, %10, %cst_222 {dimension_numbers = #tpu.dot_dimension_numbers<[1], [0], [0], [1], [0, 0, 1, 1], [], []>} : vector<8x4xf32>, vector<4x6xf32>, vector<8x6xf32> -> vector<8x6xf32>
    %974 = vector.extract_strided_slice %973 {offsets = [0, 0], sizes = [8, 4], strides = [1, 1]} : vector<8x6xf32> to vector<8x4xf32>
    %975 = vector.extract_strided_slice %973 {offsets = [0, 4], sizes = [8, 2], strides = [1, 1]} : vector<8x6xf32> to vector<8x2xf32>
    %976 = arith.subf %972, %782 : vector<8x2xf32>
    %977 = arith.mulf %976, %976 : vector<8x2xf32>
    %cst_223 = arith.constant dense<0.000000e+00> : vector<8xf32>
    %978 = vector.multi_reduction <add>, %977, %cst_223 [1] : vector<8x2xf32> to vector<8xf32>
    %979 = vector.shape_cast %978 : vector<8xf32> to vector<8x1xf32>
    %cst_224 = arith.constant 1.000000e-24 : f32
    %980 = vector.broadcast %cst_224 : f32 to vector<8x1xf32>
    %981 = arith.maximumf %979, %980 : vector<8x1xf32>
    %982 = math.rsqrt %981 : vector<8x1xf32>
    %983 = vector.broadcast %982 : vector<8x1xf32> to vector<8x2xf32>
    %984 = arith.mulf %976, %983 : vector<8x2xf32>
    %985 = arith.subf %972, %975 : vector<8x2xf32>
    %986 = arith.mulf %985, %985 : vector<8x2xf32>
    %cst_225 = arith.constant dense<0.000000e+00> : vector<8xf32>
    %987 = vector.multi_reduction <add>, %986, %cst_225 [1] : vector<8x2xf32> to vector<8xf32>
    %988 = vector.shape_cast %987 : vector<8xf32> to vector<8x1xf32>
    %cst_226 = arith.constant 1.000000e-24 : f32
    %989 = vector.broadcast %cst_226 : f32 to vector<8x1xf32>
    %990 = arith.maximumf %988, %989 : vector<8x1xf32>
    %991 = math.rsqrt %990 : vector<8x1xf32>
    %992 = vector.broadcast %991 : vector<8x1xf32> to vector<8x2xf32>
    %993 = arith.mulf %985, %992 : vector<8x2xf32>
    %994 = arith.subf %966, %776 : vector<8x4xf32>
    %995 = arith.mulf %994, %994 : vector<8x4xf32>
    %cst_227 = arith.constant dense<0.000000e+00> : vector<8xf32>
    %996 = vector.multi_reduction <add>, %995, %cst_227 [1] : vector<8x4xf32> to vector<8xf32>
    %997 = vector.shape_cast %996 : vector<8xf32> to vector<8x1xf32>
    %cst_228 = arith.constant 1.000000e-24 : f32
    %998 = vector.broadcast %cst_228 : f32 to vector<8x1xf32>
    %999 = arith.maximumf %997, %998 : vector<8x1xf32>
    %1000 = math.rsqrt %999 : vector<8x1xf32>
    %1001 = vector.broadcast %1000 : vector<8x1xf32> to vector<8x4xf32>
    %1002 = arith.mulf %994, %1001 : vector<8x4xf32>
    %1003 = arith.subf %966, %784 : vector<8x4xf32>
    %1004 = arith.mulf %1003, %1003 : vector<8x4xf32>
    %cst_229 = arith.constant dense<0.000000e+00> : vector<8xf32>
    %1005 = vector.multi_reduction <add>, %1004, %cst_229 [1] : vector<8x4xf32> to vector<8xf32>
    %1006 = vector.shape_cast %1005 : vector<8xf32> to vector<8x1xf32>
    %cst_230 = arith.constant 1.000000e-24 : f32
    %1007 = vector.broadcast %cst_230 : f32 to vector<8x1xf32>
    %1008 = arith.maximumf %1006, %1007 : vector<8x1xf32>
    %1009 = math.rsqrt %1008 : vector<8x1xf32>
    %1010 = vector.broadcast %1009 : vector<8x1xf32> to vector<8x4xf32>
    %1011 = arith.mulf %1003, %1010 : vector<8x4xf32>
    %1012 = tpu.concatenate %984, %993, %1002, %1011 in 1 : vector<8x2xf32>, vector<8x2xf32>, vector<8x4xf32>, vector<8x4xf32> -> vector<8x12xf32>
    %1013 = arith.truncf %1012 : vector<8x12xf32> to vector<8x12xbf16>
    %cst_231 = arith.constant dense<0.000000e+00> : vector<8x60xf32>
    %1014 = tpu.matmul %1013, %0, %cst_231 {dimension_numbers = #tpu.dot_dimension_numbers<[1], [0], [0], [1], [0, 0, 1, 1], [], []>} : vector<8x12xbf16>, vector<12x60xbf16>, vector<8x60xf32> -> vector<8x60xf32>
    %1015 = vector.broadcast %12 : vector<1x60xf32> to vector<8x60xf32>
    %1016 = arith.addf %1014, %1015 : vector<8x60xf32>
    %cst_232 = arith.constant 0.000000e+00 : f32
    %1017 = vector.broadcast %cst_232 : f32 to vector<8x60xf32>
    %1018 = arith.maximumf %1016, %1017 : vector<8x60xf32>
    %1019 = arith.truncf %970 : vector<8x36xf32> to vector<8x36xbf16>
    %cst_233 = arith.constant dense<0.000000e+00> : vector<8x108xf32>
    %1020 = tpu.matmul %1019, %1, %cst_233 {dimension_numbers = #tpu.dot_dimension_numbers<[1], [0], [0], [1], [0, 0, 1, 1], [], []>} : vector<8x36xbf16>, vector<36x108xbf16>, vector<8x108xf32> -> vector<8x108xf32>
    %1021 = vector.broadcast %13 : vector<1x108xf32> to vector<8x108xf32>
    %1022 = arith.addf %1020, %1021 : vector<8x108xf32>
    %1023 = arith.truncf %1018 : vector<8x60xf32> to vector<8x60xbf16>
    %cst_234 = arith.constant dense<0.000000e+00> : vector<8x108xf32>
    %1024 = tpu.matmul %1023, %2, %cst_234 {dimension_numbers = #tpu.dot_dimension_numbers<[1], [0], [0], [1], [0, 0, 1, 1], [], []>} : vector<8x60xbf16>, vector<60x108xbf16>, vector<8x108xf32> -> vector<8x108xf32>
    %1025 = vector.broadcast %14 : vector<1x108xf32> to vector<8x108xf32>
    %1026 = arith.addf %1024, %1025 : vector<8x108xf32>
    %1027 = vector.extract_strided_slice %1026 {offsets = [0, 60], sizes = [8, 48], strides = [1, 1]} : vector<8x108xf32> to vector<8x48xf32>
    %1028 = vector.extract_strided_slice %1022 {offsets = [0, 0], sizes = [8, 48], strides = [1, 1]} : vector<8x108xf32> to vector<8x48xf32>
    %1029 = vector.extract_strided_slice %970 {offsets = [0, 0], sizes = [8, 16], strides = [1, 1]} : vector<8x36xf32> to vector<8x16xf32>
    %1030 = vector.extract_strided_slice %1027 {offsets = [0, 0], sizes = [8, 16], strides = [1, 1]} : vector<8x48xf32> to vector<8x16xf32>
    %1031 = vector.extract_strided_slice %1028 {offsets = [0, 0], sizes = [8, 16], strides = [1, 1]} : vector<8x48xf32> to vector<8x16xf32>
    %1032 = arith.addf %1030, %1031 : vector<8x16xf32>
    %1033 = arith.negf %1032 : vector<8x16xf32>
    %1034 = math.exp %1033 : vector<8x16xf32>
    %cst_235 = arith.constant 1.000000e+00 : f32
    %1035 = vector.broadcast %cst_235 : f32 to vector<8x16xf32>
    %1036 = arith.addf %1035, %1034 : vector<8x16xf32>
    %1037 = arith.divf %1035, %1036 : vector<8x16xf32>
    %1038 = vector.extract_strided_slice %1027 {offsets = [0, 16], sizes = [8, 16], strides = [1, 1]} : vector<8x48xf32> to vector<8x16xf32>
    %1039 = vector.extract_strided_slice %1028 {offsets = [0, 16], sizes = [8, 16], strides = [1, 1]} : vector<8x48xf32> to vector<8x16xf32>
    %1040 = arith.addf %1038, %1039 : vector<8x16xf32>
    %1041 = arith.negf %1040 : vector<8x16xf32>
    %1042 = math.exp %1041 : vector<8x16xf32>
    %cst_236 = arith.constant 1.000000e+00 : f32
    %1043 = vector.broadcast %cst_236 : f32 to vector<8x16xf32>
    %1044 = arith.addf %1043, %1042 : vector<8x16xf32>
    %1045 = arith.divf %1043, %1044 : vector<8x16xf32>
    %1046 = vector.extract_strided_slice %1027 {offsets = [0, 32], sizes = [8, 16], strides = [1, 1]} : vector<8x48xf32> to vector<8x16xf32>
    %1047 = vector.extract_strided_slice %1028 {offsets = [0, 32], sizes = [8, 16], strides = [1, 1]} : vector<8x48xf32> to vector<8x16xf32>
    %1048 = arith.mulf %1037, %1047 : vector<8x16xf32>
    %1049 = arith.addf %1046, %1048 : vector<8x16xf32>
    %1050 = math.tanh %1049 : vector<8x16xf32>
    %cst_237 = arith.constant 1.000000e+00 : f32
    %1051 = vector.broadcast %cst_237 : f32 to vector<8x16xf32>
    %1052 = arith.subf %1051, %1045 : vector<8x16xf32>
    %1053 = arith.mulf %1052, %1050 : vector<8x16xf32>
    %1054 = arith.mulf %1045, %1029 : vector<8x16xf32>
    %1055 = arith.addf %1053, %1054 : vector<8x16xf32>
    %1056 = vector.extract_strided_slice %1026 {offsets = [0, 12], sizes = [8, 48], strides = [1, 1]} : vector<8x108xf32> to vector<8x48xf32>
    %1057 = arith.truncf %1055 : vector<8x16xf32> to vector<8x16xbf16>
    %cst_238 = arith.constant dense<0.000000e+00> : vector<8x48xf32>
    %1058 = tpu.matmul %1057, %3, %cst_238 {dimension_numbers = #tpu.dot_dimension_numbers<[1], [0], [0], [1], [0, 0, 1, 1], [], []>} : vector<8x16xbf16>, vector<16x48xbf16>, vector<8x48xf32> -> vector<8x48xf32>
    %1059 = arith.addf %1056, %1058 : vector<8x48xf32>
    %1060 = vector.extract_strided_slice %1022 {offsets = [0, 48], sizes = [8, 48], strides = [1, 1]} : vector<8x108xf32> to vector<8x48xf32>
    %1061 = vector.extract_strided_slice %970 {offsets = [0, 16], sizes = [8, 16], strides = [1, 1]} : vector<8x36xf32> to vector<8x16xf32>
    %1062 = vector.extract_strided_slice %1059 {offsets = [0, 0], sizes = [8, 16], strides = [1, 1]} : vector<8x48xf32> to vector<8x16xf32>
    %1063 = vector.extract_strided_slice %1060 {offsets = [0, 0], sizes = [8, 16], strides = [1, 1]} : vector<8x48xf32> to vector<8x16xf32>
    %1064 = arith.addf %1062, %1063 : vector<8x16xf32>
    %1065 = arith.negf %1064 : vector<8x16xf32>
    %1066 = math.exp %1065 : vector<8x16xf32>
    %cst_239 = arith.constant 1.000000e+00 : f32
    %1067 = vector.broadcast %cst_239 : f32 to vector<8x16xf32>
    %1068 = arith.addf %1067, %1066 : vector<8x16xf32>
    %1069 = arith.divf %1067, %1068 : vector<8x16xf32>
    %1070 = vector.extract_strided_slice %1059 {offsets = [0, 16], sizes = [8, 16], strides = [1, 1]} : vector<8x48xf32> to vector<8x16xf32>
    %1071 = vector.extract_strided_slice %1060 {offsets = [0, 16], sizes = [8, 16], strides = [1, 1]} : vector<8x48xf32> to vector<8x16xf32>
    %1072 = arith.addf %1070, %1071 : vector<8x16xf32>
    %1073 = arith.negf %1072 : vector<8x16xf32>
    %1074 = math.exp %1073 : vector<8x16xf32>
    %cst_240 = arith.constant 1.000000e+00 : f32
    %1075 = vector.broadcast %cst_240 : f32 to vector<8x16xf32>
    %1076 = arith.addf %1075, %1074 : vector<8x16xf32>
    %1077 = arith.divf %1075, %1076 : vector<8x16xf32>
    %1078 = vector.extract_strided_slice %1059 {offsets = [0, 32], sizes = [8, 16], strides = [1, 1]} : vector<8x48xf32> to vector<8x16xf32>
    %1079 = vector.extract_strided_slice %1060 {offsets = [0, 32], sizes = [8, 16], strides = [1, 1]} : vector<8x48xf32> to vector<8x16xf32>
    %1080 = arith.mulf %1069, %1079 : vector<8x16xf32>
    %1081 = arith.addf %1078, %1080 : vector<8x16xf32>
    %1082 = math.tanh %1081 : vector<8x16xf32>
    %cst_241 = arith.constant 1.000000e+00 : f32
    %1083 = vector.broadcast %cst_241 : f32 to vector<8x16xf32>
    %1084 = arith.subf %1083, %1077 : vector<8x16xf32>
    %1085 = arith.mulf %1084, %1082 : vector<8x16xf32>
    %1086 = arith.mulf %1077, %1061 : vector<8x16xf32>
    %1087 = arith.addf %1085, %1086 : vector<8x16xf32>
    %1088 = arith.truncf %1087 : vector<8x16xf32> to vector<8x16xbf16>
    %cst_242 = arith.constant dense<0.000000e+00> : vector<8x100xf32>
    %1089 = tpu.matmul %1088, %4, %cst_242 {dimension_numbers = #tpu.dot_dimension_numbers<[1], [0], [0], [1], [0, 0, 1, 1], [], []>} : vector<8x16xbf16>, vector<16x100xbf16>, vector<8x100xf32> -> vector<8x100xf32>
    %1090 = vector.broadcast %15 : vector<1x100xf32> to vector<8x100xf32>
    %1091 = arith.addf %1089, %1090 : vector<8x100xf32>
    %1092 = vector.extract_strided_slice %1091 {offsets = [0, 0], sizes = [8, 4], strides = [1, 1]} : vector<8x100xf32> to vector<8x4xf32>
    %cst_243 = arith.constant 0.000000e+00 : f32
    %1093 = vector.broadcast %cst_243 : f32 to vector<8x4xf32>
    %1094 = arith.maximumf %1092, %1093 : vector<8x4xf32>
    %1095 = vector.extract_strided_slice %1026 {offsets = [0, 0], sizes = [8, 12], strides = [1, 1]} : vector<8x108xf32> to vector<8x12xf32>
    %1096 = arith.truncf %1094 : vector<8x4xf32> to vector<8x4xbf16>
    %cst_244 = arith.constant dense<0.000000e+00> : vector<8x12xf32>
    %1097 = tpu.matmul %1096, %5, %cst_244 {dimension_numbers = #tpu.dot_dimension_numbers<[1], [0], [0], [1], [0, 0, 1, 1], [], []>} : vector<8x4xbf16>, vector<4x12xbf16>, vector<8x12xf32> -> vector<8x12xf32>
    %1098 = arith.addf %1095, %1097 : vector<8x12xf32>
    %1099 = vector.extract_strided_slice %1022 {offsets = [0, 96], sizes = [8, 12], strides = [1, 1]} : vector<8x108xf32> to vector<8x12xf32>
    %1100 = vector.extract_strided_slice %970 {offsets = [0, 32], sizes = [8, 4], strides = [1, 1]} : vector<8x36xf32> to vector<8x4xf32>
    %1101 = vector.extract_strided_slice %1098 {offsets = [0, 0], sizes = [8, 4], strides = [1, 1]} : vector<8x12xf32> to vector<8x4xf32>
    %1102 = vector.extract_strided_slice %1099 {offsets = [0, 0], sizes = [8, 4], strides = [1, 1]} : vector<8x12xf32> to vector<8x4xf32>
    %1103 = arith.addf %1101, %1102 : vector<8x4xf32>
    %1104 = arith.negf %1103 : vector<8x4xf32>
    %1105 = math.exp %1104 : vector<8x4xf32>
    %cst_245 = arith.constant 1.000000e+00 : f32
    %1106 = vector.broadcast %cst_245 : f32 to vector<8x4xf32>
    %1107 = arith.addf %1106, %1105 : vector<8x4xf32>
    %1108 = arith.divf %1106, %1107 : vector<8x4xf32>
    %1109 = vector.extract_strided_slice %1098 {offsets = [0, 4], sizes = [8, 4], strides = [1, 1]} : vector<8x12xf32> to vector<8x4xf32>
    %1110 = vector.extract_strided_slice %1099 {offsets = [0, 4], sizes = [8, 4], strides = [1, 1]} : vector<8x12xf32> to vector<8x4xf32>
    %1111 = arith.addf %1109, %1110 : vector<8x4xf32>
    %1112 = arith.negf %1111 : vector<8x4xf32>
    %1113 = math.exp %1112 : vector<8x4xf32>
    %cst_246 = arith.constant 1.000000e+00 : f32
    %1114 = vector.broadcast %cst_246 : f32 to vector<8x4xf32>
    %1115 = arith.addf %1114, %1113 : vector<8x4xf32>
    %1116 = arith.divf %1114, %1115 : vector<8x4xf32>
    %1117 = vector.extract_strided_slice %1098 {offsets = [0, 8], sizes = [8, 4], strides = [1, 1]} : vector<8x12xf32> to vector<8x4xf32>
    %1118 = vector.extract_strided_slice %1099 {offsets = [0, 8], sizes = [8, 4], strides = [1, 1]} : vector<8x12xf32> to vector<8x4xf32>
    %1119 = arith.mulf %1108, %1118 : vector<8x4xf32>
    %1120 = arith.addf %1117, %1119 : vector<8x4xf32>
    %1121 = math.tanh %1120 : vector<8x4xf32>
    %cst_247 = arith.constant 1.000000e+00 : f32
    %1122 = vector.broadcast %cst_247 : f32 to vector<8x4xf32>
    %1123 = arith.subf %1122, %1116 : vector<8x4xf32>
    %1124 = arith.mulf %1123, %1121 : vector<8x4xf32>
    %1125 = arith.mulf %1116, %1100 : vector<8x4xf32>
    %1126 = arith.addf %1124, %1125 : vector<8x4xf32>
    %1127 = arith.truncf %1126 : vector<8x4xf32> to vector<8x4xbf16>
    %cst_248 = arith.constant dense<0.000000e+00> : vector<8x96xf32>
    %1128 = tpu.matmul %1127, %6, %cst_248 {dimension_numbers = #tpu.dot_dimension_numbers<[1], [0], [0], [1], [0, 0, 1, 1], [], []>} : vector<8x4xbf16>, vector<4x96xbf16>, vector<8x96xf32> -> vector<8x96xf32>
    %1129 = vector.broadcast %16 : vector<1x96xf32> to vector<8x96xf32>
    %1130 = arith.addf %1128, %1129 : vector<8x96xf32>
    %1131 = vector.extract_strided_slice %1091 {offsets = [0, 4], sizes = [8, 80], strides = [1, 1]} : vector<8x100xf32> to vector<8x80xf32>
    %1132 = vector.extract_strided_slice %1130 {offsets = [0, 0], sizes = [8, 80], strides = [1, 1]} : vector<8x96xf32> to vector<8x80xf32>
    %1133 = arith.addf %1131, %1132 : vector<8x80xf32>
    %cst_249 = arith.constant 0.000000e+00 : f32
    %1134 = vector.broadcast %cst_249 : f32 to vector<8x80xf32>
    %1135 = arith.maximumf %1133, %1134 : vector<8x80xf32>
    %1136 = arith.truncf %1135 : vector<8x80xf32> to vector<8x80xbf16>
    %cst_250 = arith.constant dense<0.000000e+00> : vector<8x8xf32>
    %1137 = tpu.matmul %1136, %7, %cst_250 {dimension_numbers = #tpu.dot_dimension_numbers<[1], [0], [0], [1], [0, 0, 1, 1], [], []>} : vector<8x80xbf16>, vector<80x8xbf16>, vector<8x8xf32> -> vector<8x8xf32>
    %1138 = vector.broadcast %17 : vector<1x8xf32> to vector<8x8xf32>
    %1139 = arith.addf %1137, %1138 : vector<8x8xf32>
    %1140 = vector.extract_strided_slice %1130 {offsets = [0, 80], sizes = [8, 16], strides = [1, 1]} : vector<8x96xf32> to vector<8x16xf32>
    %1141 = arith.truncf %1139 : vector<8x8xf32> to vector<8x8xbf16>
    %cst_251 = arith.constant dense<0.000000e+00> : vector<8x16xf32>
    %1142 = tpu.matmul %1141, %8, %cst_251 {dimension_numbers = #tpu.dot_dimension_numbers<[1], [0], [0], [1], [0, 0, 1, 1], [], []>} : vector<8x8xbf16>, vector<8x16xbf16>, vector<8x16xf32> -> vector<8x16xf32>
    %1143 = arith.addf %1140, %1142 : vector<8x16xf32>
    %cst_252 = arith.constant 0.000000e+00 : f32
    %1144 = vector.broadcast %cst_252 : f32 to vector<8x16xf32>
    %1145 = arith.maximumf %1143, %1144 : vector<8x16xf32>
    %1146 = vector.extract_strided_slice %1091 {offsets = [0, 84], sizes = [8, 16], strides = [1, 1]} : vector<8x100xf32> to vector<8x16xf32>
    %1147 = arith.truncf %1145 : vector<8x16xf32> to vector<8x16xbf16>
    %cst_253 = arith.constant dense<0.000000e+00> : vector<8x16xf32>
    %1148 = tpu.matmul %1147, %9, %cst_253 {dimension_numbers = #tpu.dot_dimension_numbers<[1], [0], [0], [1], [0, 0, 1, 1], [], []>} : vector<8x16xbf16>, vector<16x16xbf16>, vector<8x16xf32> -> vector<8x16xf32>
    %1149 = arith.addf %1146, %1148 : vector<8x16xf32>
    %cst_254 = arith.constant 0.000000e+00 : f32
    %1150 = vector.broadcast %cst_254 : f32 to vector<8x16xf32>
    %1151 = arith.maximumf %1149, %1150 : vector<8x16xf32>
    %1152 = arith.subf %972, %975 : vector<8x2xf32>
    %1153 = tpu.concatenate %1152, %1152, %1152, %1152 in 1 : vector<8x2xf32>, vector<8x2xf32>, vector<8x2xf32>, vector<8x2xf32> -> vector<8x8xf32>
    %1154 = arith.mulf %1139, %1153 : vector<8x8xf32>
    %cst_255 = arith.constant dense<0.000000e+00> : vector<8x4xf32>
    %1155 = tpu.matmul %1154, %11, %cst_255 {dimension_numbers = #tpu.dot_dimension_numbers<[1], [0], [0], [1], [0, 0, 1, 1], [], []>} : vector<8x8xf32>, vector<8x4xf32>, vector<8x4xf32> -> vector<8x4xf32>
    %1156 = arith.addf %974, %1155 : vector<8x4xf32>
    %c5_256 = arith.constant 5 : index
    %c0_257 = arith.constant 0 : index
    %c0_258 = arith.constant 0 : index
    %1157 = vector.load %arg5[%c5_256, %c0_257, %c0_258] : memref<12x8x4xf32, #tpu.memory_space<vmem>>, vector<1x8x4xf32>
    %1158 = vector.shape_cast %1157 : vector<1x8x4xf32> to vector<8x4xf32>
    %1159 = vector.shape_cast %1156 : vector<8x4xf32> to vector<1x8x4xf32>
    tpu.vector_store %arg5[%c5_256, %c0_257, %c0_258], %1159 {strides = array<i32>} : memref<12x8x4xf32, #tpu.memory_space<vmem>>, vector<1x8x4xf32>,
    %1160 = tpu.concatenate %1055, %1151, %1126 in 1 : vector<8x16xf32>, vector<8x16xf32>, vector<8x4xf32> -> vector<8x36xf32>
    %c6_259 = arith.constant 6 : index
    %c0_260 = arith.constant 0 : index
    %c0_261 = arith.constant 0 : index
    %1161 = vector.load %arg1[%c6_259, %c0_260, %c0_261] : memref<12x8x2xf32, #tpu.memory_space<vmem>>, vector<1x8x2xf32>
    %1162 = vector.shape_cast %1161 : vector<1x8x2xf32> to vector<8x2xf32>
    %cst_262 = arith.constant dense<0.000000e+00> : vector<8x6xf32>
    %1163 = tpu.matmul %1156, %10, %cst_262 {dimension_numbers = #tpu.dot_dimension_numbers<[1], [0], [0], [1], [0, 0, 1, 1], [], []>} : vector<8x4xf32>, vector<4x6xf32>, vector<8x6xf32> -> vector<8x6xf32>
    %1164 = vector.extract_strided_slice %1163 {offsets = [0, 0], sizes = [8, 4], strides = [1, 1]} : vector<8x6xf32> to vector<8x4xf32>
    %1165 = vector.extract_strided_slice %1163 {offsets = [0, 4], sizes = [8, 2], strides = [1, 1]} : vector<8x6xf32> to vector<8x2xf32>
    %1166 = arith.subf %1162, %972 : vector<8x2xf32>
    %1167 = arith.mulf %1166, %1166 : vector<8x2xf32>
    %cst_263 = arith.constant dense<0.000000e+00> : vector<8xf32>
    %1168 = vector.multi_reduction <add>, %1167, %cst_263 [1] : vector<8x2xf32> to vector<8xf32>
    %1169 = vector.shape_cast %1168 : vector<8xf32> to vector<8x1xf32>
    %cst_264 = arith.constant 1.000000e-24 : f32
    %1170 = vector.broadcast %cst_264 : f32 to vector<8x1xf32>
    %1171 = arith.maximumf %1169, %1170 : vector<8x1xf32>
    %1172 = math.rsqrt %1171 : vector<8x1xf32>
    %1173 = vector.broadcast %1172 : vector<8x1xf32> to vector<8x2xf32>
    %1174 = arith.mulf %1166, %1173 : vector<8x2xf32>
    %1175 = arith.subf %1162, %1165 : vector<8x2xf32>
    %1176 = arith.mulf %1175, %1175 : vector<8x2xf32>
    %cst_265 = arith.constant dense<0.000000e+00> : vector<8xf32>
    %1177 = vector.multi_reduction <add>, %1176, %cst_265 [1] : vector<8x2xf32> to vector<8xf32>
    %1178 = vector.shape_cast %1177 : vector<8xf32> to vector<8x1xf32>
    %cst_266 = arith.constant 1.000000e-24 : f32
    %1179 = vector.broadcast %cst_266 : f32 to vector<8x1xf32>
    %1180 = arith.maximumf %1178, %1179 : vector<8x1xf32>
    %1181 = math.rsqrt %1180 : vector<8x1xf32>
    %1182 = vector.broadcast %1181 : vector<8x1xf32> to vector<8x2xf32>
    %1183 = arith.mulf %1175, %1182 : vector<8x2xf32>
    %1184 = arith.subf %1156, %966 : vector<8x4xf32>
    %1185 = arith.mulf %1184, %1184 : vector<8x4xf32>
    %cst_267 = arith.constant dense<0.000000e+00> : vector<8xf32>
    %1186 = vector.multi_reduction <add>, %1185, %cst_267 [1] : vector<8x4xf32> to vector<8xf32>
    %1187 = vector.shape_cast %1186 : vector<8xf32> to vector<8x1xf32>
    %cst_268 = arith.constant 1.000000e-24 : f32
    %1188 = vector.broadcast %cst_268 : f32 to vector<8x1xf32>
    %1189 = arith.maximumf %1187, %1188 : vector<8x1xf32>
    %1190 = math.rsqrt %1189 : vector<8x1xf32>
    %1191 = vector.broadcast %1190 : vector<8x1xf32> to vector<8x4xf32>
    %1192 = arith.mulf %1184, %1191 : vector<8x4xf32>
    %1193 = arith.subf %1156, %974 : vector<8x4xf32>
    %1194 = arith.mulf %1193, %1193 : vector<8x4xf32>
    %cst_269 = arith.constant dense<0.000000e+00> : vector<8xf32>
    %1195 = vector.multi_reduction <add>, %1194, %cst_269 [1] : vector<8x4xf32> to vector<8xf32>
    %1196 = vector.shape_cast %1195 : vector<8xf32> to vector<8x1xf32>
    %cst_270 = arith.constant 1.000000e-24 : f32
    %1197 = vector.broadcast %cst_270 : f32 to vector<8x1xf32>
    %1198 = arith.maximumf %1196, %1197 : vector<8x1xf32>
    %1199 = math.rsqrt %1198 : vector<8x1xf32>
    %1200 = vector.broadcast %1199 : vector<8x1xf32> to vector<8x4xf32>
    %1201 = arith.mulf %1193, %1200 : vector<8x4xf32>
    %1202 = tpu.concatenate %1174, %1183, %1192, %1201 in 1 : vector<8x2xf32>, vector<8x2xf32>, vector<8x4xf32>, vector<8x4xf32> -> vector<8x12xf32>
    %1203 = arith.truncf %1202 : vector<8x12xf32> to vector<8x12xbf16>
    %cst_271 = arith.constant dense<0.000000e+00> : vector<8x60xf32>
    %1204 = tpu.matmul %1203, %0, %cst_271 {dimension_numbers = #tpu.dot_dimension_numbers<[1], [0], [0], [1], [0, 0, 1, 1], [], []>} : vector<8x12xbf16>, vector<12x60xbf16>, vector<8x60xf32> -> vector<8x60xf32>
    %1205 = vector.broadcast %12 : vector<1x60xf32> to vector<8x60xf32>
    %1206 = arith.addf %1204, %1205 : vector<8x60xf32>
    %cst_272 = arith.constant 0.000000e+00 : f32
    %1207 = vector.broadcast %cst_272 : f32 to vector<8x60xf32>
    %1208 = arith.maximumf %1206, %1207 : vector<8x60xf32>
    %1209 = arith.truncf %1160 : vector<8x36xf32> to vector<8x36xbf16>
    %cst_273 = arith.constant dense<0.000000e+00> : vector<8x108xf32>
    %1210 = tpu.matmul %1209, %1, %cst_273 {dimension_numbers = #tpu.dot_dimension_numbers<[1], [0], [0], [1], [0, 0, 1, 1], [], []>} : vector<8x36xbf16>, vector<36x108xbf16>, vector<8x108xf32> -> vector<8x108xf32>
    %1211 = vector.broadcast %13 : vector<1x108xf32> to vector<8x108xf32>
    %1212 = arith.addf %1210, %1211 : vector<8x108xf32>
    %1213 = arith.truncf %1208 : vector<8x60xf32> to vector<8x60xbf16>
    %cst_274 = arith.constant dense<0.000000e+00> : vector<8x108xf32>
    %1214 = tpu.matmul %1213, %2, %cst_274 {dimension_numbers = #tpu.dot_dimension_numbers<[1], [0], [0], [1], [0, 0, 1, 1], [], []>} : vector<8x60xbf16>, vector<60x108xbf16>, vector<8x108xf32> -> vector<8x108xf32>
    %1215 = vector.broadcast %14 : vector<1x108xf32> to vector<8x108xf32>
    %1216 = arith.addf %1214, %1215 : vector<8x108xf32>
    %1217 = vector.extract_strided_slice %1216 {offsets = [0, 60], sizes = [8, 48], strides = [1, 1]} : vector<8x108xf32> to vector<8x48xf32>
    %1218 = vector.extract_strided_slice %1212 {offsets = [0, 0], sizes = [8, 48], strides = [1, 1]} : vector<8x108xf32> to vector<8x48xf32>
    %1219 = vector.extract_strided_slice %1160 {offsets = [0, 0], sizes = [8, 16], strides = [1, 1]} : vector<8x36xf32> to vector<8x16xf32>
    %1220 = vector.extract_strided_slice %1217 {offsets = [0, 0], sizes = [8, 16], strides = [1, 1]} : vector<8x48xf32> to vector<8x16xf32>
    %1221 = vector.extract_strided_slice %1218 {offsets = [0, 0], sizes = [8, 16], strides = [1, 1]} : vector<8x48xf32> to vector<8x16xf32>
    %1222 = arith.addf %1220, %1221 : vector<8x16xf32>
    %1223 = arith.negf %1222 : vector<8x16xf32>
    %1224 = math.exp %1223 : vector<8x16xf32>
    %cst_275 = arith.constant 1.000000e+00 : f32
    %1225 = vector.broadcast %cst_275 : f32 to vector<8x16xf32>
    %1226 = arith.addf %1225, %1224 : vector<8x16xf32>
    %1227 = arith.divf %1225, %1226 : vector<8x16xf32>
    %1228 = vector.extract_strided_slice %1217 {offsets = [0, 16], sizes = [8, 16], strides = [1, 1]} : vector<8x48xf32> to vector<8x16xf32>
    %1229 = vector.extract_strided_slice %1218 {offsets = [0, 16], sizes = [8, 16], strides = [1, 1]} : vector<8x48xf32> to vector<8x16xf32>
    %1230 = arith.addf %1228, %1229 : vector<8x16xf32>
    %1231 = arith.negf %1230 : vector<8x16xf32>
    %1232 = math.exp %1231 : vector<8x16xf32>
    %cst_276 = arith.constant 1.000000e+00 : f32
    %1233 = vector.broadcast %cst_276 : f32 to vector<8x16xf32>
    %1234 = arith.addf %1233, %1232 : vector<8x16xf32>
    %1235 = arith.divf %1233, %1234 : vector<8x16xf32>
    %1236 = vector.extract_strided_slice %1217 {offsets = [0, 32], sizes = [8, 16], strides = [1, 1]} : vector<8x48xf32> to vector<8x16xf32>
    %1237 = vector.extract_strided_slice %1218 {offsets = [0, 32], sizes = [8, 16], strides = [1, 1]} : vector<8x48xf32> to vector<8x16xf32>
    %1238 = arith.mulf %1227, %1237 : vector<8x16xf32>
    %1239 = arith.addf %1236, %1238 : vector<8x16xf32>
    %1240 = math.tanh %1239 : vector<8x16xf32>
    %cst_277 = arith.constant 1.000000e+00 : f32
    %1241 = vector.broadcast %cst_277 : f32 to vector<8x16xf32>
    %1242 = arith.subf %1241, %1235 : vector<8x16xf32>
    %1243 = arith.mulf %1242, %1240 : vector<8x16xf32>
    %1244 = arith.mulf %1235, %1219 : vector<8x16xf32>
    %1245 = arith.addf %1243, %1244 : vector<8x16xf32>
    %1246 = vector.extract_strided_slice %1216 {offsets = [0, 12], sizes = [8, 48], strides = [1, 1]} : vector<8x108xf32> to vector<8x48xf32>
    %1247 = arith.truncf %1245 : vector<8x16xf32> to vector<8x16xbf16>
    %cst_278 = arith.constant dense<0.000000e+00> : vector<8x48xf32>
    %1248 = tpu.matmul %1247, %3, %cst_278 {dimension_numbers = #tpu.dot_dimension_numbers<[1], [0], [0], [1], [0, 0, 1, 1], [], []>} : vector<8x16xbf16>, vector<16x48xbf16>, vector<8x48xf32> -> vector<8x48xf32>
    %1249 = arith.addf %1246, %1248 : vector<8x48xf32>
    %1250 = vector.extract_strided_slice %1212 {offsets = [0, 48], sizes = [8, 48], strides = [1, 1]} : vector<8x108xf32> to vector<8x48xf32>
    %1251 = vector.extract_strided_slice %1160 {offsets = [0, 16], sizes = [8, 16], strides = [1, 1]} : vector<8x36xf32> to vector<8x16xf32>
    %1252 = vector.extract_strided_slice %1249 {offsets = [0, 0], sizes = [8, 16], strides = [1, 1]} : vector<8x48xf32> to vector<8x16xf32>
    %1253 = vector.extract_strided_slice %1250 {offsets = [0, 0], sizes = [8, 16], strides = [1, 1]} : vector<8x48xf32> to vector<8x16xf32>
    %1254 = arith.addf %1252, %1253 : vector<8x16xf32>
    %1255 = arith.negf %1254 : vector<8x16xf32>
    %1256 = math.exp %1255 : vector<8x16xf32>
    %cst_279 = arith.constant 1.000000e+00 : f32
    %1257 = vector.broadcast %cst_279 : f32 to vector<8x16xf32>
    %1258 = arith.addf %1257, %1256 : vector<8x16xf32>
    %1259 = arith.divf %1257, %1258 : vector<8x16xf32>
    %1260 = vector.extract_strided_slice %1249 {offsets = [0, 16], sizes = [8, 16], strides = [1, 1]} : vector<8x48xf32> to vector<8x16xf32>
    %1261 = vector.extract_strided_slice %1250 {offsets = [0, 16], sizes = [8, 16], strides = [1, 1]} : vector<8x48xf32> to vector<8x16xf32>
    %1262 = arith.addf %1260, %1261 : vector<8x16xf32>
    %1263 = arith.negf %1262 : vector<8x16xf32>
    %1264 = math.exp %1263 : vector<8x16xf32>
    %cst_280 = arith.constant 1.000000e+00 : f32
    %1265 = vector.broadcast %cst_280 : f32 to vector<8x16xf32>
    %1266 = arith.addf %1265, %1264 : vector<8x16xf32>
    %1267 = arith.divf %1265, %1266 : vector<8x16xf32>
    %1268 = vector.extract_strided_slice %1249 {offsets = [0, 32], sizes = [8, 16], strides = [1, 1]} : vector<8x48xf32> to vector<8x16xf32>
    %1269 = vector.extract_strided_slice %1250 {offsets = [0, 32], sizes = [8, 16], strides = [1, 1]} : vector<8x48xf32> to vector<8x16xf32>
    %1270 = arith.mulf %1259, %1269 : vector<8x16xf32>
    %1271 = arith.addf %1268, %1270 : vector<8x16xf32>
    %1272 = math.tanh %1271 : vector<8x16xf32>
    %cst_281 = arith.constant 1.000000e+00 : f32
    %1273 = vector.broadcast %cst_281 : f32 to vector<8x16xf32>
    %1274 = arith.subf %1273, %1267 : vector<8x16xf32>
    %1275 = arith.mulf %1274, %1272 : vector<8x16xf32>
    %1276 = arith.mulf %1267, %1251 : vector<8x16xf32>
    %1277 = arith.addf %1275, %1276 : vector<8x16xf32>
    %1278 = arith.truncf %1277 : vector<8x16xf32> to vector<8x16xbf16>
    %cst_282 = arith.constant dense<0.000000e+00> : vector<8x100xf32>
    %1279 = tpu.matmul %1278, %4, %cst_282 {dimension_numbers = #tpu.dot_dimension_numbers<[1], [0], [0], [1], [0, 0, 1, 1], [], []>} : vector<8x16xbf16>, vector<16x100xbf16>, vector<8x100xf32> -> vector<8x100xf32>
    %1280 = vector.broadcast %15 : vector<1x100xf32> to vector<8x100xf32>
    %1281 = arith.addf %1279, %1280 : vector<8x100xf32>
    %1282 = vector.extract_strided_slice %1281 {offsets = [0, 0], sizes = [8, 4], strides = [1, 1]} : vector<8x100xf32> to vector<8x4xf32>
    %cst_283 = arith.constant 0.000000e+00 : f32
    %1283 = vector.broadcast %cst_283 : f32 to vector<8x4xf32>
    %1284 = arith.maximumf %1282, %1283 : vector<8x4xf32>
    %1285 = vector.extract_strided_slice %1216 {offsets = [0, 0], sizes = [8, 12], strides = [1, 1]} : vector<8x108xf32> to vector<8x12xf32>
    %1286 = arith.truncf %1284 : vector<8x4xf32> to vector<8x4xbf16>
    %cst_284 = arith.constant dense<0.000000e+00> : vector<8x12xf32>
    %1287 = tpu.matmul %1286, %5, %cst_284 {dimension_numbers = #tpu.dot_dimension_numbers<[1], [0], [0], [1], [0, 0, 1, 1], [], []>} : vector<8x4xbf16>, vector<4x12xbf16>, vector<8x12xf32> -> vector<8x12xf32>
    %1288 = arith.addf %1285, %1287 : vector<8x12xf32>
    %1289 = vector.extract_strided_slice %1212 {offsets = [0, 96], sizes = [8, 12], strides = [1, 1]} : vector<8x108xf32> to vector<8x12xf32>
    %1290 = vector.extract_strided_slice %1160 {offsets = [0, 32], sizes = [8, 4], strides = [1, 1]} : vector<8x36xf32> to vector<8x4xf32>
    %1291 = vector.extract_strided_slice %1288 {offsets = [0, 0], sizes = [8, 4], strides = [1, 1]} : vector<8x12xf32> to vector<8x4xf32>
    %1292 = vector.extract_strided_slice %1289 {offsets = [0, 0], sizes = [8, 4], strides = [1, 1]} : vector<8x12xf32> to vector<8x4xf32>
    %1293 = arith.addf %1291, %1292 : vector<8x4xf32>
    %1294 = arith.negf %1293 : vector<8x4xf32>
    %1295 = math.exp %1294 : vector<8x4xf32>
    %cst_285 = arith.constant 1.000000e+00 : f32
    %1296 = vector.broadcast %cst_285 : f32 to vector<8x4xf32>
    %1297 = arith.addf %1296, %1295 : vector<8x4xf32>
    %1298 = arith.divf %1296, %1297 : vector<8x4xf32>
    %1299 = vector.extract_strided_slice %1288 {offsets = [0, 4], sizes = [8, 4], strides = [1, 1]} : vector<8x12xf32> to vector<8x4xf32>
    %1300 = vector.extract_strided_slice %1289 {offsets = [0, 4], sizes = [8, 4], strides = [1, 1]} : vector<8x12xf32> to vector<8x4xf32>
    %1301 = arith.addf %1299, %1300 : vector<8x4xf32>
    %1302 = arith.negf %1301 : vector<8x4xf32>
    %1303 = math.exp %1302 : vector<8x4xf32>
    %cst_286 = arith.constant 1.000000e+00 : f32
    %1304 = vector.broadcast %cst_286 : f32 to vector<8x4xf32>
    %1305 = arith.addf %1304, %1303 : vector<8x4xf32>
    %1306 = arith.divf %1304, %1305 : vector<8x4xf32>
    %1307 = vector.extract_strided_slice %1288 {offsets = [0, 8], sizes = [8, 4], strides = [1, 1]} : vector<8x12xf32> to vector<8x4xf32>
    %1308 = vector.extract_strided_slice %1289 {offsets = [0, 8], sizes = [8, 4], strides = [1, 1]} : vector<8x12xf32> to vector<8x4xf32>
    %1309 = arith.mulf %1298, %1308 : vector<8x4xf32>
    %1310 = arith.addf %1307, %1309 : vector<8x4xf32>
    %1311 = math.tanh %1310 : vector<8x4xf32>
    %cst_287 = arith.constant 1.000000e+00 : f32
    %1312 = vector.broadcast %cst_287 : f32 to vector<8x4xf32>
    %1313 = arith.subf %1312, %1306 : vector<8x4xf32>
    %1314 = arith.mulf %1313, %1311 : vector<8x4xf32>
    %1315 = arith.mulf %1306, %1290 : vector<8x4xf32>
    %1316 = arith.addf %1314, %1315 : vector<8x4xf32>
    %1317 = arith.truncf %1316 : vector<8x4xf32> to vector<8x4xbf16>
    %cst_288 = arith.constant dense<0.000000e+00> : vector<8x96xf32>
    %1318 = tpu.matmul %1317, %6, %cst_288 {dimension_numbers = #tpu.dot_dimension_numbers<[1], [0], [0], [1], [0, 0, 1, 1], [], []>} : vector<8x4xbf16>, vector<4x96xbf16>, vector<8x96xf32> -> vector<8x96xf32>
    %1319 = vector.broadcast %16 : vector<1x96xf32> to vector<8x96xf32>
    %1320 = arith.addf %1318, %1319 : vector<8x96xf32>
    %1321 = vector.extract_strided_slice %1281 {offsets = [0, 4], sizes = [8, 80], strides = [1, 1]} : vector<8x100xf32> to vector<8x80xf32>
    %1322 = vector.extract_strided_slice %1320 {offsets = [0, 0], sizes = [8, 80], strides = [1, 1]} : vector<8x96xf32> to vector<8x80xf32>
    %1323 = arith.addf %1321, %1322 : vector<8x80xf32>
    %cst_289 = arith.constant 0.000000e+00 : f32
    %1324 = vector.broadcast %cst_289 : f32 to vector<8x80xf32>
    %1325 = arith.maximumf %1323, %1324 : vector<8x80xf32>
    %1326 = arith.truncf %1325 : vector<8x80xf32> to vector<8x80xbf16>
    %cst_290 = arith.constant dense<0.000000e+00> : vector<8x8xf32>
    %1327 = tpu.matmul %1326, %7, %cst_290 {dimension_numbers = #tpu.dot_dimension_numbers<[1], [0], [0], [1], [0, 0, 1, 1], [], []>} : vector<8x80xbf16>, vector<80x8xbf16>, vector<8x8xf32> -> vector<8x8xf32>
    %1328 = vector.broadcast %17 : vector<1x8xf32> to vector<8x8xf32>
    %1329 = arith.addf %1327, %1328 : vector<8x8xf32>
    %1330 = vector.extract_strided_slice %1320 {offsets = [0, 80], sizes = [8, 16], strides = [1, 1]} : vector<8x96xf32> to vector<8x16xf32>
    %1331 = arith.truncf %1329 : vector<8x8xf32> to vector<8x8xbf16>
    %cst_291 = arith.constant dense<0.000000e+00> : vector<8x16xf32>
    %1332 = tpu.matmul %1331, %8, %cst_291 {dimension_numbers = #tpu.dot_dimension_numbers<[1], [0], [0], [1], [0, 0, 1, 1], [], []>} : vector<8x8xbf16>, vector<8x16xbf16>, vector<8x16xf32> -> vector<8x16xf32>
    %1333 = arith.addf %1330, %1332 : vector<8x16xf32>
    %cst_292 = arith.constant 0.000000e+00 : f32
    %1334 = vector.broadcast %cst_292 : f32 to vector<8x16xf32>
    %1335 = arith.maximumf %1333, %1334 : vector<8x16xf32>
    %1336 = vector.extract_strided_slice %1281 {offsets = [0, 84], sizes = [8, 16], strides = [1, 1]} : vector<8x100xf32> to vector<8x16xf32>
    %1337 = arith.truncf %1335 : vector<8x16xf32> to vector<8x16xbf16>
    %cst_293 = arith.constant dense<0.000000e+00> : vector<8x16xf32>
    %1338 = tpu.matmul %1337, %9, %cst_293 {dimension_numbers = #tpu.dot_dimension_numbers<[1], [0], [0], [1], [0, 0, 1, 1], [], []>} : vector<8x16xbf16>, vector<16x16xbf16>, vector<8x16xf32> -> vector<8x16xf32>
    %1339 = arith.addf %1336, %1338 : vector<8x16xf32>
    %cst_294 = arith.constant 0.000000e+00 : f32
    %1340 = vector.broadcast %cst_294 : f32 to vector<8x16xf32>
    %1341 = arith.maximumf %1339, %1340 : vector<8x16xf32>
    %1342 = arith.subf %1162, %1165 : vector<8x2xf32>
    %1343 = tpu.concatenate %1342, %1342, %1342, %1342 in 1 : vector<8x2xf32>, vector<8x2xf32>, vector<8x2xf32>, vector<8x2xf32> -> vector<8x8xf32>
    %1344 = arith.mulf %1329, %1343 : vector<8x8xf32>
    %cst_295 = arith.constant dense<0.000000e+00> : vector<8x4xf32>
    %1345 = tpu.matmul %1344, %11, %cst_295 {dimension_numbers = #tpu.dot_dimension_numbers<[1], [0], [0], [1], [0, 0, 1, 1], [], []>} : vector<8x8xf32>, vector<8x4xf32>, vector<8x4xf32> -> vector<8x4xf32>
    %1346 = arith.addf %1164, %1345 : vector<8x4xf32>
    %c6_296 = arith.constant 6 : index
    %c0_297 = arith.constant 0 : index
    %c0_298 = arith.constant 0 : index
    %1347 = vector.load %arg5[%c6_296, %c0_297, %c0_298] : memref<12x8x4xf32, #tpu.memory_space<vmem>>, vector<1x8x4xf32>
    %1348 = vector.shape_cast %1347 : vector<1x8x4xf32> to vector<8x4xf32>
    %1349 = vector.shape_cast %1346 : vector<8x4xf32> to vector<1x8x4xf32>
    tpu.vector_store %arg5[%c6_296, %c0_297, %c0_298], %1349 {strides = array<i32>} : memref<12x8x4xf32, #tpu.memory_space<vmem>>, vector<1x8x4xf32>,
    %1350 = tpu.concatenate %1245, %1341, %1316 in 1 : vector<8x16xf32>, vector<8x16xf32>, vector<8x4xf32> -> vector<8x36xf32>
    %c7 = arith.constant 7 : index
    %c0_299 = arith.constant 0 : index
    %c0_300 = arith.constant 0 : index
    %1351 = vector.load %arg1[%c7, %c0_299, %c0_300] : memref<12x8x2xf32, #tpu.memory_space<vmem>>, vector<1x8x2xf32>
    %1352 = vector.shape_cast %1351 : vector<1x8x2xf32> to vector<8x2xf32>
    %cst_301 = arith.constant dense<0.000000e+00> : vector<8x6xf32>
    %1353 = tpu.matmul %1346, %10, %cst_301 {dimension_numbers = #tpu.dot_dimension_numbers<[1], [0], [0], [1], [0, 0, 1, 1], [], []>} : vector<8x4xf32>, vector<4x6xf32>, vector<8x6xf32> -> vector<8x6xf32>
    %1354 = vector.extract_strided_slice %1353 {offsets = [0, 0], sizes = [8, 4], strides = [1, 1]} : vector<8x6xf32> to vector<8x4xf32>
    %1355 = vector.extract_strided_slice %1353 {offsets = [0, 4], sizes = [8, 2], strides = [1, 1]} : vector<8x6xf32> to vector<8x2xf32>
    %1356 = arith.subf %1352, %1162 : vector<8x2xf32>
    %1357 = arith.mulf %1356, %1356 : vector<8x2xf32>
    %cst_302 = arith.constant dense<0.000000e+00> : vector<8xf32>
    %1358 = vector.multi_reduction <add>, %1357, %cst_302 [1] : vector<8x2xf32> to vector<8xf32>
    %1359 = vector.shape_cast %1358 : vector<8xf32> to vector<8x1xf32>
    %cst_303 = arith.constant 1.000000e-24 : f32
    %1360 = vector.broadcast %cst_303 : f32 to vector<8x1xf32>
    %1361 = arith.maximumf %1359, %1360 : vector<8x1xf32>
    %1362 = math.rsqrt %1361 : vector<8x1xf32>
    %1363 = vector.broadcast %1362 : vector<8x1xf32> to vector<8x2xf32>
    %1364 = arith.mulf %1356, %1363 : vector<8x2xf32>
    %1365 = arith.subf %1352, %1355 : vector<8x2xf32>
    %1366 = arith.mulf %1365, %1365 : vector<8x2xf32>
    %cst_304 = arith.constant dense<0.000000e+00> : vector<8xf32>
    %1367 = vector.multi_reduction <add>, %1366, %cst_304 [1] : vector<8x2xf32> to vector<8xf32>
    %1368 = vector.shape_cast %1367 : vector<8xf32> to vector<8x1xf32>
    %cst_305 = arith.constant 1.000000e-24 : f32
    %1369 = vector.broadcast %cst_305 : f32 to vector<8x1xf32>
    %1370 = arith.maximumf %1368, %1369 : vector<8x1xf32>
    %1371 = math.rsqrt %1370 : vector<8x1xf32>
    %1372 = vector.broadcast %1371 : vector<8x1xf32> to vector<8x2xf32>
    %1373 = arith.mulf %1365, %1372 : vector<8x2xf32>
    %1374 = arith.subf %1346, %1156 : vector<8x4xf32>
    %1375 = arith.mulf %1374, %1374 : vector<8x4xf32>
    %cst_306 = arith.constant dense<0.000000e+00> : vector<8xf32>
    %1376 = vector.multi_reduction <add>, %1375, %cst_306 [1] : vector<8x4xf32> to vector<8xf32>
    %1377 = vector.shape_cast %1376 : vector<8xf32> to vector<8x1xf32>
    %cst_307 = arith.constant 1.000000e-24 : f32
    %1378 = vector.broadcast %cst_307 : f32 to vector<8x1xf32>
    %1379 = arith.maximumf %1377, %1378 : vector<8x1xf32>
    %1380 = math.rsqrt %1379 : vector<8x1xf32>
    %1381 = vector.broadcast %1380 : vector<8x1xf32> to vector<8x4xf32>
    %1382 = arith.mulf %1374, %1381 : vector<8x4xf32>
    %1383 = arith.subf %1346, %1164 : vector<8x4xf32>
    %1384 = arith.mulf %1383, %1383 : vector<8x4xf32>
    %cst_308 = arith.constant dense<0.000000e+00> : vector<8xf32>
    %1385 = vector.multi_reduction <add>, %1384, %cst_308 [1] : vector<8x4xf32> to vector<8xf32>
    %1386 = vector.shape_cast %1385 : vector<8xf32> to vector<8x1xf32>
    %cst_309 = arith.constant 1.000000e-24 : f32
    %1387 = vector.broadcast %cst_309 : f32 to vector<8x1xf32>
    %1388 = arith.maximumf %1386, %1387 : vector<8x1xf32>
    %1389 = math.rsqrt %1388 : vector<8x1xf32>
    %1390 = vector.broadcast %1389 : vector<8x1xf32> to vector<8x4xf32>
    %1391 = arith.mulf %1383, %1390 : vector<8x4xf32>
    %1392 = tpu.concatenate %1364, %1373, %1382, %1391 in 1 : vector<8x2xf32>, vector<8x2xf32>, vector<8x4xf32>, vector<8x4xf32> -> vector<8x12xf32>
    %1393 = arith.truncf %1392 : vector<8x12xf32> to vector<8x12xbf16>
    %cst_310 = arith.constant dense<0.000000e+00> : vector<8x60xf32>
    %1394 = tpu.matmul %1393, %0, %cst_310 {dimension_numbers = #tpu.dot_dimension_numbers<[1], [0], [0], [1], [0, 0, 1, 1], [], []>} : vector<8x12xbf16>, vector<12x60xbf16>, vector<8x60xf32> -> vector<8x60xf32>
    %1395 = vector.broadcast %12 : vector<1x60xf32> to vector<8x60xf32>
    %1396 = arith.addf %1394, %1395 : vector<8x60xf32>
    %cst_311 = arith.constant 0.000000e+00 : f32
    %1397 = vector.broadcast %cst_311 : f32 to vector<8x60xf32>
    %1398 = arith.maximumf %1396, %1397 : vector<8x60xf32>
    %1399 = arith.truncf %1350 : vector<8x36xf32> to vector<8x36xbf16>
    %cst_312 = arith.constant dense<0.000000e+00> : vector<8x108xf32>
    %1400 = tpu.matmul %1399, %1, %cst_312 {dimension_numbers = #tpu.dot_dimension_numbers<[1], [0], [0], [1], [0, 0, 1, 1], [], []>} : vector<8x36xbf16>, vector<36x108xbf16>, vector<8x108xf32> -> vector<8x108xf32>
    %1401 = vector.broadcast %13 : vector<1x108xf32> to vector<8x108xf32>
    %1402 = arith.addf %1400, %1401 : vector<8x108xf32>
    %1403 = arith.truncf %1398 : vector<8x60xf32> to vector<8x60xbf16>
    %cst_313 = arith.constant dense<0.000000e+00> : vector<8x108xf32>
    %1404 = tpu.matmul %1403, %2, %cst_313 {dimension_numbers = #tpu.dot_dimension_numbers<[1], [0], [0], [1], [0, 0, 1, 1], [], []>} : vector<8x60xbf16>, vector<60x108xbf16>, vector<8x108xf32> -> vector<8x108xf32>
    %1405 = vector.broadcast %14 : vector<1x108xf32> to vector<8x108xf32>
    %1406 = arith.addf %1404, %1405 : vector<8x108xf32>
    %1407 = vector.extract_strided_slice %1406 {offsets = [0, 60], sizes = [8, 48], strides = [1, 1]} : vector<8x108xf32> to vector<8x48xf32>
    %1408 = vector.extract_strided_slice %1402 {offsets = [0, 0], sizes = [8, 48], strides = [1, 1]} : vector<8x108xf32> to vector<8x48xf32>
    %1409 = vector.extract_strided_slice %1350 {offsets = [0, 0], sizes = [8, 16], strides = [1, 1]} : vector<8x36xf32> to vector<8x16xf32>
    %1410 = vector.extract_strided_slice %1407 {offsets = [0, 0], sizes = [8, 16], strides = [1, 1]} : vector<8x48xf32> to vector<8x16xf32>
    %1411 = vector.extract_strided_slice %1408 {offsets = [0, 0], sizes = [8, 16], strides = [1, 1]} : vector<8x48xf32> to vector<8x16xf32>
    %1412 = arith.addf %1410, %1411 : vector<8x16xf32>
    %1413 = arith.negf %1412 : vector<8x16xf32>
    %1414 = math.exp %1413 : vector<8x16xf32>
    %cst_314 = arith.constant 1.000000e+00 : f32
    %1415 = vector.broadcast %cst_314 : f32 to vector<8x16xf32>
    %1416 = arith.addf %1415, %1414 : vector<8x16xf32>
    %1417 = arith.divf %1415, %1416 : vector<8x16xf32>
    %1418 = vector.extract_strided_slice %1407 {offsets = [0, 16], sizes = [8, 16], strides = [1, 1]} : vector<8x48xf32> to vector<8x16xf32>
    %1419 = vector.extract_strided_slice %1408 {offsets = [0, 16], sizes = [8, 16], strides = [1, 1]} : vector<8x48xf32> to vector<8x16xf32>
    %1420 = arith.addf %1418, %1419 : vector<8x16xf32>
    %1421 = arith.negf %1420 : vector<8x16xf32>
    %1422 = math.exp %1421 : vector<8x16xf32>
    %cst_315 = arith.constant 1.000000e+00 : f32
    %1423 = vector.broadcast %cst_315 : f32 to vector<8x16xf32>
    %1424 = arith.addf %1423, %1422 : vector<8x16xf32>
    %1425 = arith.divf %1423, %1424 : vector<8x16xf32>
    %1426 = vector.extract_strided_slice %1407 {offsets = [0, 32], sizes = [8, 16], strides = [1, 1]} : vector<8x48xf32> to vector<8x16xf32>
    %1427 = vector.extract_strided_slice %1408 {offsets = [0, 32], sizes = [8, 16], strides = [1, 1]} : vector<8x48xf32> to vector<8x16xf32>
    %1428 = arith.mulf %1417, %1427 : vector<8x16xf32>
    %1429 = arith.addf %1426, %1428 : vector<8x16xf32>
    %1430 = math.tanh %1429 : vector<8x16xf32>
    %cst_316 = arith.constant 1.000000e+00 : f32
    %1431 = vector.broadcast %cst_316 : f32 to vector<8x16xf32>
    %1432 = arith.subf %1431, %1425 : vector<8x16xf32>
    %1433 = arith.mulf %1432, %1430 : vector<8x16xf32>
    %1434 = arith.mulf %1425, %1409 : vector<8x16xf32>
    %1435 = arith.addf %1433, %1434 : vector<8x16xf32>
    %1436 = vector.extract_strided_slice %1406 {offsets = [0, 12], sizes = [8, 48], strides = [1, 1]} : vector<8x108xf32> to vector<8x48xf32>
    %1437 = arith.truncf %1435 : vector<8x16xf32> to vector<8x16xbf16>
    %cst_317 = arith.constant dense<0.000000e+00> : vector<8x48xf32>
    %1438 = tpu.matmul %1437, %3, %cst_317 {dimension_numbers = #tpu.dot_dimension_numbers<[1], [0], [0], [1], [0, 0, 1, 1], [], []>} : vector<8x16xbf16>, vector<16x48xbf16>, vector<8x48xf32> -> vector<8x48xf32>
    %1439 = arith.addf %1436, %1438 : vector<8x48xf32>
    %1440 = vector.extract_strided_slice %1402 {offsets = [0, 48], sizes = [8, 48], strides = [1, 1]} : vector<8x108xf32> to vector<8x48xf32>
    %1441 = vector.extract_strided_slice %1350 {offsets = [0, 16], sizes = [8, 16], strides = [1, 1]} : vector<8x36xf32> to vector<8x16xf32>
    %1442 = vector.extract_strided_slice %1439 {offsets = [0, 0], sizes = [8, 16], strides = [1, 1]} : vector<8x48xf32> to vector<8x16xf32>
    %1443 = vector.extract_strided_slice %1440 {offsets = [0, 0], sizes = [8, 16], strides = [1, 1]} : vector<8x48xf32> to vector<8x16xf32>
    %1444 = arith.addf %1442, %1443 : vector<8x16xf32>
    %1445 = arith.negf %1444 : vector<8x16xf32>
    %1446 = math.exp %1445 : vector<8x16xf32>
    %cst_318 = arith.constant 1.000000e+00 : f32
    %1447 = vector.broadcast %cst_318 : f32 to vector<8x16xf32>
    %1448 = arith.addf %1447, %1446 : vector<8x16xf32>
    %1449 = arith.divf %1447, %1448 : vector<8x16xf32>
    %1450 = vector.extract_strided_slice %1439 {offsets = [0, 16], sizes = [8, 16], strides = [1, 1]} : vector<8x48xf32> to vector<8x16xf32>
    %1451 = vector.extract_strided_slice %1440 {offsets = [0, 16], sizes = [8, 16], strides = [1, 1]} : vector<8x48xf32> to vector<8x16xf32>
    %1452 = arith.addf %1450, %1451 : vector<8x16xf32>
    %1453 = arith.negf %1452 : vector<8x16xf32>
    %1454 = math.exp %1453 : vector<8x16xf32>
    %cst_319 = arith.constant 1.000000e+00 : f32
    %1455 = vector.broadcast %cst_319 : f32 to vector<8x16xf32>
    %1456 = arith.addf %1455, %1454 : vector<8x16xf32>
    %1457 = arith.divf %1455, %1456 : vector<8x16xf32>
    %1458 = vector.extract_strided_slice %1439 {offsets = [0, 32], sizes = [8, 16], strides = [1, 1]} : vector<8x48xf32> to vector<8x16xf32>
    %1459 = vector.extract_strided_slice %1440 {offsets = [0, 32], sizes = [8, 16], strides = [1, 1]} : vector<8x48xf32> to vector<8x16xf32>
    %1460 = arith.mulf %1449, %1459 : vector<8x16xf32>
    %1461 = arith.addf %1458, %1460 : vector<8x16xf32>
    %1462 = math.tanh %1461 : vector<8x16xf32>
    %cst_320 = arith.constant 1.000000e+00 : f32
    %1463 = vector.broadcast %cst_320 : f32 to vector<8x16xf32>
    %1464 = arith.subf %1463, %1457 : vector<8x16xf32>
    %1465 = arith.mulf %1464, %1462 : vector<8x16xf32>
    %1466 = arith.mulf %1457, %1441 : vector<8x16xf32>
    %1467 = arith.addf %1465, %1466 : vector<8x16xf32>
    %1468 = arith.truncf %1467 : vector<8x16xf32> to vector<8x16xbf16>
    %cst_321 = arith.constant dense<0.000000e+00> : vector<8x100xf32>
    %1469 = tpu.matmul %1468, %4, %cst_321 {dimension_numbers = #tpu.dot_dimension_numbers<[1], [0], [0], [1], [0, 0, 1, 1], [], []>} : vector<8x16xbf16>, vector<16x100xbf16>, vector<8x100xf32> -> vector<8x100xf32>
    %1470 = vector.broadcast %15 : vector<1x100xf32> to vector<8x100xf32>
    %1471 = arith.addf %1469, %1470 : vector<8x100xf32>
    %1472 = vector.extract_strided_slice %1471 {offsets = [0, 0], sizes = [8, 4], strides = [1, 1]} : vector<8x100xf32> to vector<8x4xf32>
    %cst_322 = arith.constant 0.000000e+00 : f32
    %1473 = vector.broadcast %cst_322 : f32 to vector<8x4xf32>
    %1474 = arith.maximumf %1472, %1473 : vector<8x4xf32>
    %1475 = vector.extract_strided_slice %1406 {offsets = [0, 0], sizes = [8, 12], strides = [1, 1]} : vector<8x108xf32> to vector<8x12xf32>
    %1476 = arith.truncf %1474 : vector<8x4xf32> to vector<8x4xbf16>
    %cst_323 = arith.constant dense<0.000000e+00> : vector<8x12xf32>
    %1477 = tpu.matmul %1476, %5, %cst_323 {dimension_numbers = #tpu.dot_dimension_numbers<[1], [0], [0], [1], [0, 0, 1, 1], [], []>} : vector<8x4xbf16>, vector<4x12xbf16>, vector<8x12xf32> -> vector<8x12xf32>
    %1478 = arith.addf %1475, %1477 : vector<8x12xf32>
    %1479 = vector.extract_strided_slice %1402 {offsets = [0, 96], sizes = [8, 12], strides = [1, 1]} : vector<8x108xf32> to vector<8x12xf32>
    %1480 = vector.extract_strided_slice %1350 {offsets = [0, 32], sizes = [8, 4], strides = [1, 1]} : vector<8x36xf32> to vector<8x4xf32>
    %1481 = vector.extract_strided_slice %1478 {offsets = [0, 0], sizes = [8, 4], strides = [1, 1]} : vector<8x12xf32> to vector<8x4xf32>
    %1482 = vector.extract_strided_slice %1479 {offsets = [0, 0], sizes = [8, 4], strides = [1, 1]} : vector<8x12xf32> to vector<8x4xf32>
    %1483 = arith.addf %1481, %1482 : vector<8x4xf32>
    %1484 = arith.negf %1483 : vector<8x4xf32>
    %1485 = math.exp %1484 : vector<8x4xf32>
    %cst_324 = arith.constant 1.000000e+00 : f32
    %1486 = vector.broadcast %cst_324 : f32 to vector<8x4xf32>
    %1487 = arith.addf %1486, %1485 : vector<8x4xf32>
    %1488 = arith.divf %1486, %1487 : vector<8x4xf32>
    %1489 = vector.extract_strided_slice %1478 {offsets = [0, 4], sizes = [8, 4], strides = [1, 1]} : vector<8x12xf32> to vector<8x4xf32>
    %1490 = vector.extract_strided_slice %1479 {offsets = [0, 4], sizes = [8, 4], strides = [1, 1]} : vector<8x12xf32> to vector<8x4xf32>
    %1491 = arith.addf %1489, %1490 : vector<8x4xf32>
    %1492 = arith.negf %1491 : vector<8x4xf32>
    %1493 = math.exp %1492 : vector<8x4xf32>
    %cst_325 = arith.constant 1.000000e+00 : f32
    %1494 = vector.broadcast %cst_325 : f32 to vector<8x4xf32>
    %1495 = arith.addf %1494, %1493 : vector<8x4xf32>
    %1496 = arith.divf %1494, %1495 : vector<8x4xf32>
    %1497 = vector.extract_strided_slice %1478 {offsets = [0, 8], sizes = [8, 4], strides = [1, 1]} : vector<8x12xf32> to vector<8x4xf32>
    %1498 = vector.extract_strided_slice %1479 {offsets = [0, 8], sizes = [8, 4], strides = [1, 1]} : vector<8x12xf32> to vector<8x4xf32>
    %1499 = arith.mulf %1488, %1498 : vector<8x4xf32>
    %1500 = arith.addf %1497, %1499 : vector<8x4xf32>
    %1501 = math.tanh %1500 : vector<8x4xf32>
    %cst_326 = arith.constant 1.000000e+00 : f32
    %1502 = vector.broadcast %cst_326 : f32 to vector<8x4xf32>
    %1503 = arith.subf %1502, %1496 : vector<8x4xf32>
    %1504 = arith.mulf %1503, %1501 : vector<8x4xf32>
    %1505 = arith.mulf %1496, %1480 : vector<8x4xf32>
    %1506 = arith.addf %1504, %1505 : vector<8x4xf32>
    %1507 = arith.truncf %1506 : vector<8x4xf32> to vector<8x4xbf16>
    %cst_327 = arith.constant dense<0.000000e+00> : vector<8x96xf32>
    %1508 = tpu.matmul %1507, %6, %cst_327 {dimension_numbers = #tpu.dot_dimension_numbers<[1], [0], [0], [1], [0, 0, 1, 1], [], []>} : vector<8x4xbf16>, vector<4x96xbf16>, vector<8x96xf32> -> vector<8x96xf32>
    %1509 = vector.broadcast %16 : vector<1x96xf32> to vector<8x96xf32>
    %1510 = arith.addf %1508, %1509 : vector<8x96xf32>
    %1511 = vector.extract_strided_slice %1471 {offsets = [0, 4], sizes = [8, 80], strides = [1, 1]} : vector<8x100xf32> to vector<8x80xf32>
    %1512 = vector.extract_strided_slice %1510 {offsets = [0, 0], sizes = [8, 80], strides = [1, 1]} : vector<8x96xf32> to vector<8x80xf32>
    %1513 = arith.addf %1511, %1512 : vector<8x80xf32>
    %cst_328 = arith.constant 0.000000e+00 : f32
    %1514 = vector.broadcast %cst_328 : f32 to vector<8x80xf32>
    %1515 = arith.maximumf %1513, %1514 : vector<8x80xf32>
    %1516 = arith.truncf %1515 : vector<8x80xf32> to vector<8x80xbf16>
    %cst_329 = arith.constant dense<0.000000e+00> : vector<8x8xf32>
    %1517 = tpu.matmul %1516, %7, %cst_329 {dimension_numbers = #tpu.dot_dimension_numbers<[1], [0], [0], [1], [0, 0, 1, 1], [], []>} : vector<8x80xbf16>, vector<80x8xbf16>, vector<8x8xf32> -> vector<8x8xf32>
    %1518 = vector.broadcast %17 : vector<1x8xf32> to vector<8x8xf32>
    %1519 = arith.addf %1517, %1518 : vector<8x8xf32>
    %1520 = vector.extract_strided_slice %1510 {offsets = [0, 80], sizes = [8, 16], strides = [1, 1]} : vector<8x96xf32> to vector<8x16xf32>
    %1521 = arith.truncf %1519 : vector<8x8xf32> to vector<8x8xbf16>
    %cst_330 = arith.constant dense<0.000000e+00> : vector<8x16xf32>
    %1522 = tpu.matmul %1521, %8, %cst_330 {dimension_numbers = #tpu.dot_dimension_numbers<[1], [0], [0], [1], [0, 0, 1, 1], [], []>} : vector<8x8xbf16>, vector<8x16xbf16>, vector<8x16xf32> -> vector<8x16xf32>
    %1523 = arith.addf %1520, %1522 : vector<8x16xf32>
    %cst_331 = arith.constant 0.000000e+00 : f32
    %1524 = vector.broadcast %cst_331 : f32 to vector<8x16xf32>
    %1525 = arith.maximumf %1523, %1524 : vector<8x16xf32>
    %1526 = vector.extract_strided_slice %1471 {offsets = [0, 84], sizes = [8, 16], strides = [1, 1]} : vector<8x100xf32> to vector<8x16xf32>
    %1527 = arith.truncf %1525 : vector<8x16xf32> to vector<8x16xbf16>
    %cst_332 = arith.constant dense<0.000000e+00> : vector<8x16xf32>
    %1528 = tpu.matmul %1527, %9, %cst_332 {dimension_numbers = #tpu.dot_dimension_numbers<[1], [0], [0], [1], [0, 0, 1, 1], [], []>} : vector<8x16xbf16>, vector<16x16xbf16>, vector<8x16xf32> -> vector<8x16xf32>
    %1529 = arith.addf %1526, %1528 : vector<8x16xf32>
    %cst_333 = arith.constant 0.000000e+00 : f32
    %1530 = vector.broadcast %cst_333 : f32 to vector<8x16xf32>
    %1531 = arith.maximumf %1529, %1530 : vector<8x16xf32>
    %1532 = arith.subf %1352, %1355 : vector<8x2xf32>
    %1533 = tpu.concatenate %1532, %1532, %1532, %1532 in 1 : vector<8x2xf32>, vector<8x2xf32>, vector<8x2xf32>, vector<8x2xf32> -> vector<8x8xf32>
    %1534 = arith.mulf %1519, %1533 : vector<8x8xf32>
    %cst_334 = arith.constant dense<0.000000e+00> : vector<8x4xf32>
    %1535 = tpu.matmul %1534, %11, %cst_334 {dimension_numbers = #tpu.dot_dimension_numbers<[1], [0], [0], [1], [0, 0, 1, 1], [], []>} : vector<8x8xf32>, vector<8x4xf32>, vector<8x4xf32> -> vector<8x4xf32>
    %1536 = arith.addf %1354, %1535 : vector<8x4xf32>
    %c7_335 = arith.constant 7 : index
    %c0_336 = arith.constant 0 : index
    %c0_337 = arith.constant 0 : index
    %1537 = vector.load %arg5[%c7_335, %c0_336, %c0_337] : memref<12x8x4xf32, #tpu.memory_space<vmem>>, vector<1x8x4xf32>
    %1538 = vector.shape_cast %1537 : vector<1x8x4xf32> to vector<8x4xf32>
    %1539 = vector.shape_cast %1536 : vector<8x4xf32> to vector<1x8x4xf32>
    tpu.vector_store %arg5[%c7_335, %c0_336, %c0_337], %1539 {strides = array<i32>} : memref<12x8x4xf32, #tpu.memory_space<vmem>>, vector<1x8x4xf32>,
    %1540 = tpu.concatenate %1435, %1531, %1506 in 1 : vector<8x16xf32>, vector<8x16xf32>, vector<8x4xf32> -> vector<8x36xf32>
    %c8_338 = arith.constant 8 : index
    %c0_339 = arith.constant 0 : index
    %c0_340 = arith.constant 0 : index
    %1541 = vector.load %arg1[%c8_338, %c0_339, %c0_340] : memref<12x8x2xf32, #tpu.memory_space<vmem>>, vector<1x8x2xf32>
    %1542 = vector.shape_cast %1541 : vector<1x8x2xf32> to vector<8x2xf32>
    %cst_341 = arith.constant dense<0.000000e+00> : vector<8x6xf32>
    %1543 = tpu.matmul %1536, %10, %cst_341 {dimension_numbers = #tpu.dot_dimension_numbers<[1], [0], [0], [1], [0, 0, 1, 1], [], []>} : vector<8x4xf32>, vector<4x6xf32>, vector<8x6xf32> -> vector<8x6xf32>
    %1544 = vector.extract_strided_slice %1543 {offsets = [0, 0], sizes = [8, 4], strides = [1, 1]} : vector<8x6xf32> to vector<8x4xf32>
    %1545 = vector.extract_strided_slice %1543 {offsets = [0, 4], sizes = [8, 2], strides = [1, 1]} : vector<8x6xf32> to vector<8x2xf32>
    %1546 = arith.subf %1542, %1352 : vector<8x2xf32>
    %1547 = arith.mulf %1546, %1546 : vector<8x2xf32>
    %cst_342 = arith.constant dense<0.000000e+00> : vector<8xf32>
    %1548 = vector.multi_reduction <add>, %1547, %cst_342 [1] : vector<8x2xf32> to vector<8xf32>
    %1549 = vector.shape_cast %1548 : vector<8xf32> to vector<8x1xf32>
    %cst_343 = arith.constant 1.000000e-24 : f32
    %1550 = vector.broadcast %cst_343 : f32 to vector<8x1xf32>
    %1551 = arith.maximumf %1549, %1550 : vector<8x1xf32>
    %1552 = math.rsqrt %1551 : vector<8x1xf32>
    %1553 = vector.broadcast %1552 : vector<8x1xf32> to vector<8x2xf32>
    %1554 = arith.mulf %1546, %1553 : vector<8x2xf32>
    %1555 = arith.subf %1542, %1545 : vector<8x2xf32>
    %1556 = arith.mulf %1555, %1555 : vector<8x2xf32>
    %cst_344 = arith.constant dense<0.000000e+00> : vector<8xf32>
    %1557 = vector.multi_reduction <add>, %1556, %cst_344 [1] : vector<8x2xf32> to vector<8xf32>
    %1558 = vector.shape_cast %1557 : vector<8xf32> to vector<8x1xf32>
    %cst_345 = arith.constant 1.000000e-24 : f32
    %1559 = vector.broadcast %cst_345 : f32 to vector<8x1xf32>
    %1560 = arith.maximumf %1558, %1559 : vector<8x1xf32>
    %1561 = math.rsqrt %1560 : vector<8x1xf32>
    %1562 = vector.broadcast %1561 : vector<8x1xf32> to vector<8x2xf32>
    %1563 = arith.mulf %1555, %1562 : vector<8x2xf32>
    %1564 = arith.subf %1536, %1346 : vector<8x4xf32>
    %1565 = arith.mulf %1564, %1564 : vector<8x4xf32>
    %cst_346 = arith.constant dense<0.000000e+00> : vector<8xf32>
    %1566 = vector.multi_reduction <add>, %1565, %cst_346 [1] : vector<8x4xf32> to vector<8xf32>
    %1567 = vector.shape_cast %1566 : vector<8xf32> to vector<8x1xf32>
    %cst_347 = arith.constant 1.000000e-24 : f32
    %1568 = vector.broadcast %cst_347 : f32 to vector<8x1xf32>
    %1569 = arith.maximumf %1567, %1568 : vector<8x1xf32>
    %1570 = math.rsqrt %1569 : vector<8x1xf32>
    %1571 = vector.broadcast %1570 : vector<8x1xf32> to vector<8x4xf32>
    %1572 = arith.mulf %1564, %1571 : vector<8x4xf32>
    %1573 = arith.subf %1536, %1354 : vector<8x4xf32>
    %1574 = arith.mulf %1573, %1573 : vector<8x4xf32>
    %cst_348 = arith.constant dense<0.000000e+00> : vector<8xf32>
    %1575 = vector.multi_reduction <add>, %1574, %cst_348 [1] : vector<8x4xf32> to vector<8xf32>
    %1576 = vector.shape_cast %1575 : vector<8xf32> to vector<8x1xf32>
    %cst_349 = arith.constant 1.000000e-24 : f32
    %1577 = vector.broadcast %cst_349 : f32 to vector<8x1xf32>
    %1578 = arith.maximumf %1576, %1577 : vector<8x1xf32>
    %1579 = math.rsqrt %1578 : vector<8x1xf32>
    %1580 = vector.broadcast %1579 : vector<8x1xf32> to vector<8x4xf32>
    %1581 = arith.mulf %1573, %1580 : vector<8x4xf32>
    %1582 = tpu.concatenate %1554, %1563, %1572, %1581 in 1 : vector<8x2xf32>, vector<8x2xf32>, vector<8x4xf32>, vector<8x4xf32> -> vector<8x12xf32>
    %1583 = arith.truncf %1582 : vector<8x12xf32> to vector<8x12xbf16>
    %cst_350 = arith.constant dense<0.000000e+00> : vector<8x60xf32>
    %1584 = tpu.matmul %1583, %0, %cst_350 {dimension_numbers = #tpu.dot_dimension_numbers<[1], [0], [0], [1], [0, 0, 1, 1], [], []>} : vector<8x12xbf16>, vector<12x60xbf16>, vector<8x60xf32> -> vector<8x60xf32>
    %1585 = vector.broadcast %12 : vector<1x60xf32> to vector<8x60xf32>
    %1586 = arith.addf %1584, %1585 : vector<8x60xf32>
    %cst_351 = arith.constant 0.000000e+00 : f32
    %1587 = vector.broadcast %cst_351 : f32 to vector<8x60xf32>
    %1588 = arith.maximumf %1586, %1587 : vector<8x60xf32>
    %1589 = arith.truncf %1540 : vector<8x36xf32> to vector<8x36xbf16>
    %cst_352 = arith.constant dense<0.000000e+00> : vector<8x108xf32>
    %1590 = tpu.matmul %1589, %1, %cst_352 {dimension_numbers = #tpu.dot_dimension_numbers<[1], [0], [0], [1], [0, 0, 1, 1], [], []>} : vector<8x36xbf16>, vector<36x108xbf16>, vector<8x108xf32> -> vector<8x108xf32>
    %1591 = vector.broadcast %13 : vector<1x108xf32> to vector<8x108xf32>
    %1592 = arith.addf %1590, %1591 : vector<8x108xf32>
    %1593 = arith.truncf %1588 : vector<8x60xf32> to vector<8x60xbf16>
    %cst_353 = arith.constant dense<0.000000e+00> : vector<8x108xf32>
    %1594 = tpu.matmul %1593, %2, %cst_353 {dimension_numbers = #tpu.dot_dimension_numbers<[1], [0], [0], [1], [0, 0, 1, 1], [], []>} : vector<8x60xbf16>, vector<60x108xbf16>, vector<8x108xf32> -> vector<8x108xf32>
    %1595 = vector.broadcast %14 : vector<1x108xf32> to vector<8x108xf32>
    %1596 = arith.addf %1594, %1595 : vector<8x108xf32>
    %1597 = vector.extract_strided_slice %1596 {offsets = [0, 60], sizes = [8, 48], strides = [1, 1]} : vector<8x108xf32> to vector<8x48xf32>
    %1598 = vector.extract_strided_slice %1592 {offsets = [0, 0], sizes = [8, 48], strides = [1, 1]} : vector<8x108xf32> to vector<8x48xf32>
    %1599 = vector.extract_strided_slice %1540 {offsets = [0, 0], sizes = [8, 16], strides = [1, 1]} : vector<8x36xf32> to vector<8x16xf32>
    %1600 = vector.extract_strided_slice %1597 {offsets = [0, 0], sizes = [8, 16], strides = [1, 1]} : vector<8x48xf32> to vector<8x16xf32>
    %1601 = vector.extract_strided_slice %1598 {offsets = [0, 0], sizes = [8, 16], strides = [1, 1]} : vector<8x48xf32> to vector<8x16xf32>
    %1602 = arith.addf %1600, %1601 : vector<8x16xf32>
    %1603 = arith.negf %1602 : vector<8x16xf32>
    %1604 = math.exp %1603 : vector<8x16xf32>
    %cst_354 = arith.constant 1.000000e+00 : f32
    %1605 = vector.broadcast %cst_354 : f32 to vector<8x16xf32>
    %1606 = arith.addf %1605, %1604 : vector<8x16xf32>
    %1607 = arith.divf %1605, %1606 : vector<8x16xf32>
    %1608 = vector.extract_strided_slice %1597 {offsets = [0, 16], sizes = [8, 16], strides = [1, 1]} : vector<8x48xf32> to vector<8x16xf32>
    %1609 = vector.extract_strided_slice %1598 {offsets = [0, 16], sizes = [8, 16], strides = [1, 1]} : vector<8x48xf32> to vector<8x16xf32>
    %1610 = arith.addf %1608, %1609 : vector<8x16xf32>
    %1611 = arith.negf %1610 : vector<8x16xf32>
    %1612 = math.exp %1611 : vector<8x16xf32>
    %cst_355 = arith.constant 1.000000e+00 : f32
    %1613 = vector.broadcast %cst_355 : f32 to vector<8x16xf32>
    %1614 = arith.addf %1613, %1612 : vector<8x16xf32>
    %1615 = arith.divf %1613, %1614 : vector<8x16xf32>
    %1616 = vector.extract_strided_slice %1597 {offsets = [0, 32], sizes = [8, 16], strides = [1, 1]} : vector<8x48xf32> to vector<8x16xf32>
    %1617 = vector.extract_strided_slice %1598 {offsets = [0, 32], sizes = [8, 16], strides = [1, 1]} : vector<8x48xf32> to vector<8x16xf32>
    %1618 = arith.mulf %1607, %1617 : vector<8x16xf32>
    %1619 = arith.addf %1616, %1618 : vector<8x16xf32>
    %1620 = math.tanh %1619 : vector<8x16xf32>
    %cst_356 = arith.constant 1.000000e+00 : f32
    %1621 = vector.broadcast %cst_356 : f32 to vector<8x16xf32>
    %1622 = arith.subf %1621, %1615 : vector<8x16xf32>
    %1623 = arith.mulf %1622, %1620 : vector<8x16xf32>
    %1624 = arith.mulf %1615, %1599 : vector<8x16xf32>
    %1625 = arith.addf %1623, %1624 : vector<8x16xf32>
    %1626 = vector.extract_strided_slice %1596 {offsets = [0, 12], sizes = [8, 48], strides = [1, 1]} : vector<8x108xf32> to vector<8x48xf32>
    %1627 = arith.truncf %1625 : vector<8x16xf32> to vector<8x16xbf16>
    %cst_357 = arith.constant dense<0.000000e+00> : vector<8x48xf32>
    %1628 = tpu.matmul %1627, %3, %cst_357 {dimension_numbers = #tpu.dot_dimension_numbers<[1], [0], [0], [1], [0, 0, 1, 1], [], []>} : vector<8x16xbf16>, vector<16x48xbf16>, vector<8x48xf32> -> vector<8x48xf32>
    %1629 = arith.addf %1626, %1628 : vector<8x48xf32>
    %1630 = vector.extract_strided_slice %1592 {offsets = [0, 48], sizes = [8, 48], strides = [1, 1]} : vector<8x108xf32> to vector<8x48xf32>
    %1631 = vector.extract_strided_slice %1540 {offsets = [0, 16], sizes = [8, 16], strides = [1, 1]} : vector<8x36xf32> to vector<8x16xf32>
    %1632 = vector.extract_strided_slice %1629 {offsets = [0, 0], sizes = [8, 16], strides = [1, 1]} : vector<8x48xf32> to vector<8x16xf32>
    %1633 = vector.extract_strided_slice %1630 {offsets = [0, 0], sizes = [8, 16], strides = [1, 1]} : vector<8x48xf32> to vector<8x16xf32>
    %1634 = arith.addf %1632, %1633 : vector<8x16xf32>
    %1635 = arith.negf %1634 : vector<8x16xf32>
    %1636 = math.exp %1635 : vector<8x16xf32>
    %cst_358 = arith.constant 1.000000e+00 : f32
    %1637 = vector.broadcast %cst_358 : f32 to vector<8x16xf32>
    %1638 = arith.addf %1637, %1636 : vector<8x16xf32>
    %1639 = arith.divf %1637, %1638 : vector<8x16xf32>
    %1640 = vector.extract_strided_slice %1629 {offsets = [0, 16], sizes = [8, 16], strides = [1, 1]} : vector<8x48xf32> to vector<8x16xf32>
    %1641 = vector.extract_strided_slice %1630 {offsets = [0, 16], sizes = [8, 16], strides = [1, 1]} : vector<8x48xf32> to vector<8x16xf32>
    %1642 = arith.addf %1640, %1641 : vector<8x16xf32>
    %1643 = arith.negf %1642 : vector<8x16xf32>
    %1644 = math.exp %1643 : vector<8x16xf32>
    %cst_359 = arith.constant 1.000000e+00 : f32
    %1645 = vector.broadcast %cst_359 : f32 to vector<8x16xf32>
    %1646 = arith.addf %1645, %1644 : vector<8x16xf32>
    %1647 = arith.divf %1645, %1646 : vector<8x16xf32>
    %1648 = vector.extract_strided_slice %1629 {offsets = [0, 32], sizes = [8, 16], strides = [1, 1]} : vector<8x48xf32> to vector<8x16xf32>
    %1649 = vector.extract_strided_slice %1630 {offsets = [0, 32], sizes = [8, 16], strides = [1, 1]} : vector<8x48xf32> to vector<8x16xf32>
    %1650 = arith.mulf %1639, %1649 : vector<8x16xf32>
    %1651 = arith.addf %1648, %1650 : vector<8x16xf32>
    %1652 = math.tanh %1651 : vector<8x16xf32>
    %cst_360 = arith.constant 1.000000e+00 : f32
    %1653 = vector.broadcast %cst_360 : f32 to vector<8x16xf32>
    %1654 = arith.subf %1653, %1647 : vector<8x16xf32>
    %1655 = arith.mulf %1654, %1652 : vector<8x16xf32>
    %1656 = arith.mulf %1647, %1631 : vector<8x16xf32>
    %1657 = arith.addf %1655, %1656 : vector<8x16xf32>
    %1658 = arith.truncf %1657 : vector<8x16xf32> to vector<8x16xbf16>
    %cst_361 = arith.constant dense<0.000000e+00> : vector<8x100xf32>
    %1659 = tpu.matmul %1658, %4, %cst_361 {dimension_numbers = #tpu.dot_dimension_numbers<[1], [0], [0], [1], [0, 0, 1, 1], [], []>} : vector<8x16xbf16>, vector<16x100xbf16>, vector<8x100xf32> -> vector<8x100xf32>
    %1660 = vector.broadcast %15 : vector<1x100xf32> to vector<8x100xf32>
    %1661 = arith.addf %1659, %1660 : vector<8x100xf32>
    %1662 = vector.extract_strided_slice %1661 {offsets = [0, 0], sizes = [8, 4], strides = [1, 1]} : vector<8x100xf32> to vector<8x4xf32>
    %cst_362 = arith.constant 0.000000e+00 : f32
    %1663 = vector.broadcast %cst_362 : f32 to vector<8x4xf32>
    %1664 = arith.maximumf %1662, %1663 : vector<8x4xf32>
    %1665 = vector.extract_strided_slice %1596 {offsets = [0, 0], sizes = [8, 12], strides = [1, 1]} : vector<8x108xf32> to vector<8x12xf32>
    %1666 = arith.truncf %1664 : vector<8x4xf32> to vector<8x4xbf16>
    %cst_363 = arith.constant dense<0.000000e+00> : vector<8x12xf32>
    %1667 = tpu.matmul %1666, %5, %cst_363 {dimension_numbers = #tpu.dot_dimension_numbers<[1], [0], [0], [1], [0, 0, 1, 1], [], []>} : vector<8x4xbf16>, vector<4x12xbf16>, vector<8x12xf32> -> vector<8x12xf32>
    %1668 = arith.addf %1665, %1667 : vector<8x12xf32>
    %1669 = vector.extract_strided_slice %1592 {offsets = [0, 96], sizes = [8, 12], strides = [1, 1]} : vector<8x108xf32> to vector<8x12xf32>
    %1670 = vector.extract_strided_slice %1540 {offsets = [0, 32], sizes = [8, 4], strides = [1, 1]} : vector<8x36xf32> to vector<8x4xf32>
    %1671 = vector.extract_strided_slice %1668 {offsets = [0, 0], sizes = [8, 4], strides = [1, 1]} : vector<8x12xf32> to vector<8x4xf32>
    %1672 = vector.extract_strided_slice %1669 {offsets = [0, 0], sizes = [8, 4], strides = [1, 1]} : vector<8x12xf32> to vector<8x4xf32>
    %1673 = arith.addf %1671, %1672 : vector<8x4xf32>
    %1674 = arith.negf %1673 : vector<8x4xf32>
    %1675 = math.exp %1674 : vector<8x4xf32>
    %cst_364 = arith.constant 1.000000e+00 : f32
    %1676 = vector.broadcast %cst_364 : f32 to vector<8x4xf32>
    %1677 = arith.addf %1676, %1675 : vector<8x4xf32>
    %1678 = arith.divf %1676, %1677 : vector<8x4xf32>
    %1679 = vector.extract_strided_slice %1668 {offsets = [0, 4], sizes = [8, 4], strides = [1, 1]} : vector<8x12xf32> to vector<8x4xf32>
    %1680 = vector.extract_strided_slice %1669 {offsets = [0, 4], sizes = [8, 4], strides = [1, 1]} : vector<8x12xf32> to vector<8x4xf32>
    %1681 = arith.addf %1679, %1680 : vector<8x4xf32>
    %1682 = arith.negf %1681 : vector<8x4xf32>
    %1683 = math.exp %1682 : vector<8x4xf32>
    %cst_365 = arith.constant 1.000000e+00 : f32
    %1684 = vector.broadcast %cst_365 : f32 to vector<8x4xf32>
    %1685 = arith.addf %1684, %1683 : vector<8x4xf32>
    %1686 = arith.divf %1684, %1685 : vector<8x4xf32>
    %1687 = vector.extract_strided_slice %1668 {offsets = [0, 8], sizes = [8, 4], strides = [1, 1]} : vector<8x12xf32> to vector<8x4xf32>
    %1688 = vector.extract_strided_slice %1669 {offsets = [0, 8], sizes = [8, 4], strides = [1, 1]} : vector<8x12xf32> to vector<8x4xf32>
    %1689 = arith.mulf %1678, %1688 : vector<8x4xf32>
    %1690 = arith.addf %1687, %1689 : vector<8x4xf32>
    %1691 = math.tanh %1690 : vector<8x4xf32>
    %cst_366 = arith.constant 1.000000e+00 : f32
    %1692 = vector.broadcast %cst_366 : f32 to vector<8x4xf32>
    %1693 = arith.subf %1692, %1686 : vector<8x4xf32>
    %1694 = arith.mulf %1693, %1691 : vector<8x4xf32>
    %1695 = arith.mulf %1686, %1670 : vector<8x4xf32>
    %1696 = arith.addf %1694, %1695 : vector<8x4xf32>
    %1697 = arith.truncf %1696 : vector<8x4xf32> to vector<8x4xbf16>
    %cst_367 = arith.constant dense<0.000000e+00> : vector<8x96xf32>
    %1698 = tpu.matmul %1697, %6, %cst_367 {dimension_numbers = #tpu.dot_dimension_numbers<[1], [0], [0], [1], [0, 0, 1, 1], [], []>} : vector<8x4xbf16>, vector<4x96xbf16>, vector<8x96xf32> -> vector<8x96xf32>
    %1699 = vector.broadcast %16 : vector<1x96xf32> to vector<8x96xf32>
    %1700 = arith.addf %1698, %1699 : vector<8x96xf32>
    %1701 = vector.extract_strided_slice %1661 {offsets = [0, 4], sizes = [8, 80], strides = [1, 1]} : vector<8x100xf32> to vector<8x80xf32>
    %1702 = vector.extract_strided_slice %1700 {offsets = [0, 0], sizes = [8, 80], strides = [1, 1]} : vector<8x96xf32> to vector<8x80xf32>
    %1703 = arith.addf %1701, %1702 : vector<8x80xf32>
    %cst_368 = arith.constant 0.000000e+00 : f32
    %1704 = vector.broadcast %cst_368 : f32 to vector<8x80xf32>
    %1705 = arith.maximumf %1703, %1704 : vector<8x80xf32>
    %1706 = arith.truncf %1705 : vector<8x80xf32> to vector<8x80xbf16>
    %cst_369 = arith.constant dense<0.000000e+00> : vector<8x8xf32>
    %1707 = tpu.matmul %1706, %7, %cst_369 {dimension_numbers = #tpu.dot_dimension_numbers<[1], [0], [0], [1], [0, 0, 1, 1], [], []>} : vector<8x80xbf16>, vector<80x8xbf16>, vector<8x8xf32> -> vector<8x8xf32>
    %1708 = vector.broadcast %17 : vector<1x8xf32> to vector<8x8xf32>
    %1709 = arith.addf %1707, %1708 : vector<8x8xf32>
    %1710 = vector.extract_strided_slice %1700 {offsets = [0, 80], sizes = [8, 16], strides = [1, 1]} : vector<8x96xf32> to vector<8x16xf32>
    %1711 = arith.truncf %1709 : vector<8x8xf32> to vector<8x8xbf16>
    %cst_370 = arith.constant dense<0.000000e+00> : vector<8x16xf32>
    %1712 = tpu.matmul %1711, %8, %cst_370 {dimension_numbers = #tpu.dot_dimension_numbers<[1], [0], [0], [1], [0, 0, 1, 1], [], []>} : vector<8x8xbf16>, vector<8x16xbf16>, vector<8x16xf32> -> vector<8x16xf32>
    %1713 = arith.addf %1710, %1712 : vector<8x16xf32>
    %cst_371 = arith.constant 0.000000e+00 : f32
    %1714 = vector.broadcast %cst_371 : f32 to vector<8x16xf32>
    %1715 = arith.maximumf %1713, %1714 : vector<8x16xf32>
    %1716 = vector.extract_strided_slice %1661 {offsets = [0, 84], sizes = [8, 16], strides = [1, 1]} : vector<8x100xf32> to vector<8x16xf32>
    %1717 = arith.truncf %1715 : vector<8x16xf32> to vector<8x16xbf16>
    %cst_372 = arith.constant dense<0.000000e+00> : vector<8x16xf32>
    %1718 = tpu.matmul %1717, %9, %cst_372 {dimension_numbers = #tpu.dot_dimension_numbers<[1], [0], [0], [1], [0, 0, 1, 1], [], []>} : vector<8x16xbf16>, vector<16x16xbf16>, vector<8x16xf32> -> vector<8x16xf32>
    %1719 = arith.addf %1716, %1718 : vector<8x16xf32>
    %cst_373 = arith.constant 0.000000e+00 : f32
    %1720 = vector.broadcast %cst_373 : f32 to vector<8x16xf32>
    %1721 = arith.maximumf %1719, %1720 : vector<8x16xf32>
    %1722 = arith.subf %1542, %1545 : vector<8x2xf32>
    %1723 = tpu.concatenate %1722, %1722, %1722, %1722 in 1 : vector<8x2xf32>, vector<8x2xf32>, vector<8x2xf32>, vector<8x2xf32> -> vector<8x8xf32>
    %1724 = arith.mulf %1709, %1723 : vector<8x8xf32>
    %cst_374 = arith.constant dense<0.000000e+00> : vector<8x4xf32>
    %1725 = tpu.matmul %1724, %11, %cst_374 {dimension_numbers = #tpu.dot_dimension_numbers<[1], [0], [0], [1], [0, 0, 1, 1], [], []>} : vector<8x8xf32>, vector<8x4xf32>, vector<8x4xf32> -> vector<8x4xf32>
    %1726 = arith.addf %1544, %1725 : vector<8x4xf32>
    %c8_375 = arith.constant 8 : index
    %c0_376 = arith.constant 0 : index
    %c0_377 = arith.constant 0 : index
    %1727 = vector.load %arg5[%c8_375, %c0_376, %c0_377] : memref<12x8x4xf32, #tpu.memory_space<vmem>>, vector<1x8x4xf32>
    %1728 = vector.shape_cast %1727 : vector<1x8x4xf32> to vector<8x4xf32>
    %1729 = vector.shape_cast %1726 : vector<8x4xf32> to vector<1x8x4xf32>
    tpu.vector_store %arg5[%c8_375, %c0_376, %c0_377], %1729 {strides = array<i32>} : memref<12x8x4xf32, #tpu.memory_space<vmem>>, vector<1x8x4xf32>,
    %1730 = tpu.concatenate %1625, %1721, %1696 in 1 : vector<8x16xf32>, vector<8x16xf32>, vector<8x4xf32> -> vector<8x36xf32>
    %c9 = arith.constant 9 : index
    %c0_378 = arith.constant 0 : index
    %c0_379 = arith.constant 0 : index
    %1731 = vector.load %arg1[%c9, %c0_378, %c0_379] : memref<12x8x2xf32, #tpu.memory_space<vmem>>, vector<1x8x2xf32>
    %1732 = vector.shape_cast %1731 : vector<1x8x2xf32> to vector<8x2xf32>
    %cst_380 = arith.constant dense<0.000000e+00> : vector<8x6xf32>
    %1733 = tpu.matmul %1726, %10, %cst_380 {dimension_numbers = #tpu.dot_dimension_numbers<[1], [0], [0], [1], [0, 0, 1, 1], [], []>} : vector<8x4xf32>, vector<4x6xf32>, vector<8x6xf32> -> vector<8x6xf32>
    %1734 = vector.extract_strided_slice %1733 {offsets = [0, 0], sizes = [8, 4], strides = [1, 1]} : vector<8x6xf32> to vector<8x4xf32>
    %1735 = vector.extract_strided_slice %1733 {offsets = [0, 4], sizes = [8, 2], strides = [1, 1]} : vector<8x6xf32> to vector<8x2xf32>
    %1736 = arith.subf %1732, %1542 : vector<8x2xf32>
    %1737 = arith.mulf %1736, %1736 : vector<8x2xf32>
    %cst_381 = arith.constant dense<0.000000e+00> : vector<8xf32>
    %1738 = vector.multi_reduction <add>, %1737, %cst_381 [1] : vector<8x2xf32> to vector<8xf32>
    %1739 = vector.shape_cast %1738 : vector<8xf32> to vector<8x1xf32>
    %cst_382 = arith.constant 1.000000e-24 : f32
    %1740 = vector.broadcast %cst_382 : f32 to vector<8x1xf32>
    %1741 = arith.maximumf %1739, %1740 : vector<8x1xf32>
    %1742 = math.rsqrt %1741 : vector<8x1xf32>
    %1743 = vector.broadcast %1742 : vector<8x1xf32> to vector<8x2xf32>
    %1744 = arith.mulf %1736, %1743 : vector<8x2xf32>
    %1745 = arith.subf %1732, %1735 : vector<8x2xf32>
    %1746 = arith.mulf %1745, %1745 : vector<8x2xf32>
    %cst_383 = arith.constant dense<0.000000e+00> : vector<8xf32>
    %1747 = vector.multi_reduction <add>, %1746, %cst_383 [1] : vector<8x2xf32> to vector<8xf32>
    %1748 = vector.shape_cast %1747 : vector<8xf32> to vector<8x1xf32>
    %cst_384 = arith.constant 1.000000e-24 : f32
    %1749 = vector.broadcast %cst_384 : f32 to vector<8x1xf32>
    %1750 = arith.maximumf %1748, %1749 : vector<8x1xf32>
    %1751 = math.rsqrt %1750 : vector<8x1xf32>
    %1752 = vector.broadcast %1751 : vector<8x1xf32> to vector<8x2xf32>
    %1753 = arith.mulf %1745, %1752 : vector<8x2xf32>
    %1754 = arith.subf %1726, %1536 : vector<8x4xf32>
    %1755 = arith.mulf %1754, %1754 : vector<8x4xf32>
    %cst_385 = arith.constant dense<0.000000e+00> : vector<8xf32>
    %1756 = vector.multi_reduction <add>, %1755, %cst_385 [1] : vector<8x4xf32> to vector<8xf32>
    %1757 = vector.shape_cast %1756 : vector<8xf32> to vector<8x1xf32>
    %cst_386 = arith.constant 1.000000e-24 : f32
    %1758 = vector.broadcast %cst_386 : f32 to vector<8x1xf32>
    %1759 = arith.maximumf %1757, %1758 : vector<8x1xf32>
    %1760 = math.rsqrt %1759 : vector<8x1xf32>
    %1761 = vector.broadcast %1760 : vector<8x1xf32> to vector<8x4xf32>
    %1762 = arith.mulf %1754, %1761 : vector<8x4xf32>
    %1763 = arith.subf %1726, %1544 : vector<8x4xf32>
    %1764 = arith.mulf %1763, %1763 : vector<8x4xf32>
    %cst_387 = arith.constant dense<0.000000e+00> : vector<8xf32>
    %1765 = vector.multi_reduction <add>, %1764, %cst_387 [1] : vector<8x4xf32> to vector<8xf32>
    %1766 = vector.shape_cast %1765 : vector<8xf32> to vector<8x1xf32>
    %cst_388 = arith.constant 1.000000e-24 : f32
    %1767 = vector.broadcast %cst_388 : f32 to vector<8x1xf32>
    %1768 = arith.maximumf %1766, %1767 : vector<8x1xf32>
    %1769 = math.rsqrt %1768 : vector<8x1xf32>
    %1770 = vector.broadcast %1769 : vector<8x1xf32> to vector<8x4xf32>
    %1771 = arith.mulf %1763, %1770 : vector<8x4xf32>
    %1772 = tpu.concatenate %1744, %1753, %1762, %1771 in 1 : vector<8x2xf32>, vector<8x2xf32>, vector<8x4xf32>, vector<8x4xf32> -> vector<8x12xf32>
    %1773 = arith.truncf %1772 : vector<8x12xf32> to vector<8x12xbf16>
    %cst_389 = arith.constant dense<0.000000e+00> : vector<8x60xf32>
    %1774 = tpu.matmul %1773, %0, %cst_389 {dimension_numbers = #tpu.dot_dimension_numbers<[1], [0], [0], [1], [0, 0, 1, 1], [], []>} : vector<8x12xbf16>, vector<12x60xbf16>, vector<8x60xf32> -> vector<8x60xf32>
    %1775 = vector.broadcast %12 : vector<1x60xf32> to vector<8x60xf32>
    %1776 = arith.addf %1774, %1775 : vector<8x60xf32>
    %cst_390 = arith.constant 0.000000e+00 : f32
    %1777 = vector.broadcast %cst_390 : f32 to vector<8x60xf32>
    %1778 = arith.maximumf %1776, %1777 : vector<8x60xf32>
    %1779 = arith.truncf %1730 : vector<8x36xf32> to vector<8x36xbf16>
    %cst_391 = arith.constant dense<0.000000e+00> : vector<8x108xf32>
    %1780 = tpu.matmul %1779, %1, %cst_391 {dimension_numbers = #tpu.dot_dimension_numbers<[1], [0], [0], [1], [0, 0, 1, 1], [], []>} : vector<8x36xbf16>, vector<36x108xbf16>, vector<8x108xf32> -> vector<8x108xf32>
    %1781 = vector.broadcast %13 : vector<1x108xf32> to vector<8x108xf32>
    %1782 = arith.addf %1780, %1781 : vector<8x108xf32>
    %1783 = arith.truncf %1778 : vector<8x60xf32> to vector<8x60xbf16>
    %cst_392 = arith.constant dense<0.000000e+00> : vector<8x108xf32>
    %1784 = tpu.matmul %1783, %2, %cst_392 {dimension_numbers = #tpu.dot_dimension_numbers<[1], [0], [0], [1], [0, 0, 1, 1], [], []>} : vector<8x60xbf16>, vector<60x108xbf16>, vector<8x108xf32> -> vector<8x108xf32>
    %1785 = vector.broadcast %14 : vector<1x108xf32> to vector<8x108xf32>
    %1786 = arith.addf %1784, %1785 : vector<8x108xf32>
    %1787 = vector.extract_strided_slice %1786 {offsets = [0, 60], sizes = [8, 48], strides = [1, 1]} : vector<8x108xf32> to vector<8x48xf32>
    %1788 = vector.extract_strided_slice %1782 {offsets = [0, 0], sizes = [8, 48], strides = [1, 1]} : vector<8x108xf32> to vector<8x48xf32>
    %1789 = vector.extract_strided_slice %1730 {offsets = [0, 0], sizes = [8, 16], strides = [1, 1]} : vector<8x36xf32> to vector<8x16xf32>
    %1790 = vector.extract_strided_slice %1787 {offsets = [0, 0], sizes = [8, 16], strides = [1, 1]} : vector<8x48xf32> to vector<8x16xf32>
    %1791 = vector.extract_strided_slice %1788 {offsets = [0, 0], sizes = [8, 16], strides = [1, 1]} : vector<8x48xf32> to vector<8x16xf32>
    %1792 = arith.addf %1790, %1791 : vector<8x16xf32>
    %1793 = arith.negf %1792 : vector<8x16xf32>
    %1794 = math.exp %1793 : vector<8x16xf32>
    %cst_393 = arith.constant 1.000000e+00 : f32
    %1795 = vector.broadcast %cst_393 : f32 to vector<8x16xf32>
    %1796 = arith.addf %1795, %1794 : vector<8x16xf32>
    %1797 = arith.divf %1795, %1796 : vector<8x16xf32>
    %1798 = vector.extract_strided_slice %1787 {offsets = [0, 16], sizes = [8, 16], strides = [1, 1]} : vector<8x48xf32> to vector<8x16xf32>
    %1799 = vector.extract_strided_slice %1788 {offsets = [0, 16], sizes = [8, 16], strides = [1, 1]} : vector<8x48xf32> to vector<8x16xf32>
    %1800 = arith.addf %1798, %1799 : vector<8x16xf32>
    %1801 = arith.negf %1800 : vector<8x16xf32>
    %1802 = math.exp %1801 : vector<8x16xf32>
    %cst_394 = arith.constant 1.000000e+00 : f32
    %1803 = vector.broadcast %cst_394 : f32 to vector<8x16xf32>
    %1804 = arith.addf %1803, %1802 : vector<8x16xf32>
    %1805 = arith.divf %1803, %1804 : vector<8x16xf32>
    %1806 = vector.extract_strided_slice %1787 {offsets = [0, 32], sizes = [8, 16], strides = [1, 1]} : vector<8x48xf32> to vector<8x16xf32>
    %1807 = vector.extract_strided_slice %1788 {offsets = [0, 32], sizes = [8, 16], strides = [1, 1]} : vector<8x48xf32> to vector<8x16xf32>
    %1808 = arith.mulf %1797, %1807 : vector<8x16xf32>
    %1809 = arith.addf %1806, %1808 : vector<8x16xf32>
    %1810 = math.tanh %1809 : vector<8x16xf32>
    %cst_395 = arith.constant 1.000000e+00 : f32
    %1811 = vector.broadcast %cst_395 : f32 to vector<8x16xf32>
    %1812 = arith.subf %1811, %1805 : vector<8x16xf32>
    %1813 = arith.mulf %1812, %1810 : vector<8x16xf32>
    %1814 = arith.mulf %1805, %1789 : vector<8x16xf32>
    %1815 = arith.addf %1813, %1814 : vector<8x16xf32>
    %1816 = vector.extract_strided_slice %1786 {offsets = [0, 12], sizes = [8, 48], strides = [1, 1]} : vector<8x108xf32> to vector<8x48xf32>
    %1817 = arith.truncf %1815 : vector<8x16xf32> to vector<8x16xbf16>
    %cst_396 = arith.constant dense<0.000000e+00> : vector<8x48xf32>
    %1818 = tpu.matmul %1817, %3, %cst_396 {dimension_numbers = #tpu.dot_dimension_numbers<[1], [0], [0], [1], [0, 0, 1, 1], [], []>} : vector<8x16xbf16>, vector<16x48xbf16>, vector<8x48xf32> -> vector<8x48xf32>
    %1819 = arith.addf %1816, %1818 : vector<8x48xf32>
    %1820 = vector.extract_strided_slice %1782 {offsets = [0, 48], sizes = [8, 48], strides = [1, 1]} : vector<8x108xf32> to vector<8x48xf32>
    %1821 = vector.extract_strided_slice %1730 {offsets = [0, 16], sizes = [8, 16], strides = [1, 1]} : vector<8x36xf32> to vector<8x16xf32>
    %1822 = vector.extract_strided_slice %1819 {offsets = [0, 0], sizes = [8, 16], strides = [1, 1]} : vector<8x48xf32> to vector<8x16xf32>
    %1823 = vector.extract_strided_slice %1820 {offsets = [0, 0], sizes = [8, 16], strides = [1, 1]} : vector<8x48xf32> to vector<8x16xf32>
    %1824 = arith.addf %1822, %1823 : vector<8x16xf32>
    %1825 = arith.negf %1824 : vector<8x16xf32>
    %1826 = math.exp %1825 : vector<8x16xf32>
    %cst_397 = arith.constant 1.000000e+00 : f32
    %1827 = vector.broadcast %cst_397 : f32 to vector<8x16xf32>
    %1828 = arith.addf %1827, %1826 : vector<8x16xf32>
    %1829 = arith.divf %1827, %1828 : vector<8x16xf32>
    %1830 = vector.extract_strided_slice %1819 {offsets = [0, 16], sizes = [8, 16], strides = [1, 1]} : vector<8x48xf32> to vector<8x16xf32>
    %1831 = vector.extract_strided_slice %1820 {offsets = [0, 16], sizes = [8, 16], strides = [1, 1]} : vector<8x48xf32> to vector<8x16xf32>
    %1832 = arith.addf %1830, %1831 : vector<8x16xf32>
    %1833 = arith.negf %1832 : vector<8x16xf32>
    %1834 = math.exp %1833 : vector<8x16xf32>
    %cst_398 = arith.constant 1.000000e+00 : f32
    %1835 = vector.broadcast %cst_398 : f32 to vector<8x16xf32>
    %1836 = arith.addf %1835, %1834 : vector<8x16xf32>
    %1837 = arith.divf %1835, %1836 : vector<8x16xf32>
    %1838 = vector.extract_strided_slice %1819 {offsets = [0, 32], sizes = [8, 16], strides = [1, 1]} : vector<8x48xf32> to vector<8x16xf32>
    %1839 = vector.extract_strided_slice %1820 {offsets = [0, 32], sizes = [8, 16], strides = [1, 1]} : vector<8x48xf32> to vector<8x16xf32>
    %1840 = arith.mulf %1829, %1839 : vector<8x16xf32>
    %1841 = arith.addf %1838, %1840 : vector<8x16xf32>
    %1842 = math.tanh %1841 : vector<8x16xf32>
    %cst_399 = arith.constant 1.000000e+00 : f32
    %1843 = vector.broadcast %cst_399 : f32 to vector<8x16xf32>
    %1844 = arith.subf %1843, %1837 : vector<8x16xf32>
    %1845 = arith.mulf %1844, %1842 : vector<8x16xf32>
    %1846 = arith.mulf %1837, %1821 : vector<8x16xf32>
    %1847 = arith.addf %1845, %1846 : vector<8x16xf32>
    %1848 = arith.truncf %1847 : vector<8x16xf32> to vector<8x16xbf16>
    %cst_400 = arith.constant dense<0.000000e+00> : vector<8x100xf32>
    %1849 = tpu.matmul %1848, %4, %cst_400 {dimension_numbers = #tpu.dot_dimension_numbers<[1], [0], [0], [1], [0, 0, 1, 1], [], []>} : vector<8x16xbf16>, vector<16x100xbf16>, vector<8x100xf32> -> vector<8x100xf32>
    %1850 = vector.broadcast %15 : vector<1x100xf32> to vector<8x100xf32>
    %1851 = arith.addf %1849, %1850 : vector<8x100xf32>
    %1852 = vector.extract_strided_slice %1851 {offsets = [0, 0], sizes = [8, 4], strides = [1, 1]} : vector<8x100xf32> to vector<8x4xf32>
    %cst_401 = arith.constant 0.000000e+00 : f32
    %1853 = vector.broadcast %cst_401 : f32 to vector<8x4xf32>
    %1854 = arith.maximumf %1852, %1853 : vector<8x4xf32>
    %1855 = vector.extract_strided_slice %1786 {offsets = [0, 0], sizes = [8, 12], strides = [1, 1]} : vector<8x108xf32> to vector<8x12xf32>
    %1856 = arith.truncf %1854 : vector<8x4xf32> to vector<8x4xbf16>
    %cst_402 = arith.constant dense<0.000000e+00> : vector<8x12xf32>
    %1857 = tpu.matmul %1856, %5, %cst_402 {dimension_numbers = #tpu.dot_dimension_numbers<[1], [0], [0], [1], [0, 0, 1, 1], [], []>} : vector<8x4xbf16>, vector<4x12xbf16>, vector<8x12xf32> -> vector<8x12xf32>
    %1858 = arith.addf %1855, %1857 : vector<8x12xf32>
    %1859 = vector.extract_strided_slice %1782 {offsets = [0, 96], sizes = [8, 12], strides = [1, 1]} : vector<8x108xf32> to vector<8x12xf32>
    %1860 = vector.extract_strided_slice %1730 {offsets = [0, 32], sizes = [8, 4], strides = [1, 1]} : vector<8x36xf32> to vector<8x4xf32>
    %1861 = vector.extract_strided_slice %1858 {offsets = [0, 0], sizes = [8, 4], strides = [1, 1]} : vector<8x12xf32> to vector<8x4xf32>
    %1862 = vector.extract_strided_slice %1859 {offsets = [0, 0], sizes = [8, 4], strides = [1, 1]} : vector<8x12xf32> to vector<8x4xf32>
    %1863 = arith.addf %1861, %1862 : vector<8x4xf32>
    %1864 = arith.negf %1863 : vector<8x4xf32>
    %1865 = math.exp %1864 : vector<8x4xf32>
    %cst_403 = arith.constant 1.000000e+00 : f32
    %1866 = vector.broadcast %cst_403 : f32 to vector<8x4xf32>
    %1867 = arith.addf %1866, %1865 : vector<8x4xf32>
    %1868 = arith.divf %1866, %1867 : vector<8x4xf32>
    %1869 = vector.extract_strided_slice %1858 {offsets = [0, 4], sizes = [8, 4], strides = [1, 1]} : vector<8x12xf32> to vector<8x4xf32>
    %1870 = vector.extract_strided_slice %1859 {offsets = [0, 4], sizes = [8, 4], strides = [1, 1]} : vector<8x12xf32> to vector<8x4xf32>
    %1871 = arith.addf %1869, %1870 : vector<8x4xf32>
    %1872 = arith.negf %1871 : vector<8x4xf32>
    %1873 = math.exp %1872 : vector<8x4xf32>
    %cst_404 = arith.constant 1.000000e+00 : f32
    %1874 = vector.broadcast %cst_404 : f32 to vector<8x4xf32>
    %1875 = arith.addf %1874, %1873 : vector<8x4xf32>
    %1876 = arith.divf %1874, %1875 : vector<8x4xf32>
    %1877 = vector.extract_strided_slice %1858 {offsets = [0, 8], sizes = [8, 4], strides = [1, 1]} : vector<8x12xf32> to vector<8x4xf32>
    %1878 = vector.extract_strided_slice %1859 {offsets = [0, 8], sizes = [8, 4], strides = [1, 1]} : vector<8x12xf32> to vector<8x4xf32>
    %1879 = arith.mulf %1868, %1878 : vector<8x4xf32>
    %1880 = arith.addf %1877, %1879 : vector<8x4xf32>
    %1881 = math.tanh %1880 : vector<8x4xf32>
    %cst_405 = arith.constant 1.000000e+00 : f32
    %1882 = vector.broadcast %cst_405 : f32 to vector<8x4xf32>
    %1883 = arith.subf %1882, %1876 : vector<8x4xf32>
    %1884 = arith.mulf %1883, %1881 : vector<8x4xf32>
    %1885 = arith.mulf %1876, %1860 : vector<8x4xf32>
    %1886 = arith.addf %1884, %1885 : vector<8x4xf32>
    %1887 = arith.truncf %1886 : vector<8x4xf32> to vector<8x4xbf16>
    %cst_406 = arith.constant dense<0.000000e+00> : vector<8x96xf32>
    %1888 = tpu.matmul %1887, %6, %cst_406 {dimension_numbers = #tpu.dot_dimension_numbers<[1], [0], [0], [1], [0, 0, 1, 1], [], []>} : vector<8x4xbf16>, vector<4x96xbf16>, vector<8x96xf32> -> vector<8x96xf32>
    %1889 = vector.broadcast %16 : vector<1x96xf32> to vector<8x96xf32>
    %1890 = arith.addf %1888, %1889 : vector<8x96xf32>
    %1891 = vector.extract_strided_slice %1851 {offsets = [0, 4], sizes = [8, 80], strides = [1, 1]} : vector<8x100xf32> to vector<8x80xf32>
    %1892 = vector.extract_strided_slice %1890 {offsets = [0, 0], sizes = [8, 80], strides = [1, 1]} : vector<8x96xf32> to vector<8x80xf32>
    %1893 = arith.addf %1891, %1892 : vector<8x80xf32>
    %cst_407 = arith.constant 0.000000e+00 : f32
    %1894 = vector.broadcast %cst_407 : f32 to vector<8x80xf32>
    %1895 = arith.maximumf %1893, %1894 : vector<8x80xf32>
    %1896 = arith.truncf %1895 : vector<8x80xf32> to vector<8x80xbf16>
    %cst_408 = arith.constant dense<0.000000e+00> : vector<8x8xf32>
    %1897 = tpu.matmul %1896, %7, %cst_408 {dimension_numbers = #tpu.dot_dimension_numbers<[1], [0], [0], [1], [0, 0, 1, 1], [], []>} : vector<8x80xbf16>, vector<80x8xbf16>, vector<8x8xf32> -> vector<8x8xf32>
    %1898 = vector.broadcast %17 : vector<1x8xf32> to vector<8x8xf32>
    %1899 = arith.addf %1897, %1898 : vector<8x8xf32>
    %1900 = vector.extract_strided_slice %1890 {offsets = [0, 80], sizes = [8, 16], strides = [1, 1]} : vector<8x96xf32> to vector<8x16xf32>
    %1901 = arith.truncf %1899 : vector<8x8xf32> to vector<8x8xbf16>
    %cst_409 = arith.constant dense<0.000000e+00> : vector<8x16xf32>
    %1902 = tpu.matmul %1901, %8, %cst_409 {dimension_numbers = #tpu.dot_dimension_numbers<[1], [0], [0], [1], [0, 0, 1, 1], [], []>} : vector<8x8xbf16>, vector<8x16xbf16>, vector<8x16xf32> -> vector<8x16xf32>
    %1903 = arith.addf %1900, %1902 : vector<8x16xf32>
    %cst_410 = arith.constant 0.000000e+00 : f32
    %1904 = vector.broadcast %cst_410 : f32 to vector<8x16xf32>
    %1905 = arith.maximumf %1903, %1904 : vector<8x16xf32>
    %1906 = vector.extract_strided_slice %1851 {offsets = [0, 84], sizes = [8, 16], strides = [1, 1]} : vector<8x100xf32> to vector<8x16xf32>
    %1907 = arith.truncf %1905 : vector<8x16xf32> to vector<8x16xbf16>
    %cst_411 = arith.constant dense<0.000000e+00> : vector<8x16xf32>
    %1908 = tpu.matmul %1907, %9, %cst_411 {dimension_numbers = #tpu.dot_dimension_numbers<[1], [0], [0], [1], [0, 0, 1, 1], [], []>} : vector<8x16xbf16>, vector<16x16xbf16>, vector<8x16xf32> -> vector<8x16xf32>
    %1909 = arith.addf %1906, %1908 : vector<8x16xf32>
    %cst_412 = arith.constant 0.000000e+00 : f32
    %1910 = vector.broadcast %cst_412 : f32 to vector<8x16xf32>
    %1911 = arith.maximumf %1909, %1910 : vector<8x16xf32>
    %1912 = arith.subf %1732, %1735 : vector<8x2xf32>
    %1913 = tpu.concatenate %1912, %1912, %1912, %1912 in 1 : vector<8x2xf32>, vector<8x2xf32>, vector<8x2xf32>, vector<8x2xf32> -> vector<8x8xf32>
    %1914 = arith.mulf %1899, %1913 : vector<8x8xf32>
    %cst_413 = arith.constant dense<0.000000e+00> : vector<8x4xf32>
    %1915 = tpu.matmul %1914, %11, %cst_413 {dimension_numbers = #tpu.dot_dimension_numbers<[1], [0], [0], [1], [0, 0, 1, 1], [], []>} : vector<8x8xf32>, vector<8x4xf32>, vector<8x4xf32> -> vector<8x4xf32>
    %1916 = arith.addf %1734, %1915 : vector<8x4xf32>
    %c9_414 = arith.constant 9 : index
    %c0_415 = arith.constant 0 : index
    %c0_416 = arith.constant 0 : index
    %1917 = vector.load %arg5[%c9_414, %c0_415, %c0_416] : memref<12x8x4xf32, #tpu.memory_space<vmem>>, vector<1x8x4xf32>
    %1918 = vector.shape_cast %1917 : vector<1x8x4xf32> to vector<8x4xf32>
    %1919 = vector.shape_cast %1916 : vector<8x4xf32> to vector<1x8x4xf32>
    tpu.vector_store %arg5[%c9_414, %c0_415, %c0_416], %1919 {strides = array<i32>} : memref<12x8x4xf32, #tpu.memory_space<vmem>>, vector<1x8x4xf32>,
    %1920 = tpu.concatenate %1815, %1911, %1886 in 1 : vector<8x16xf32>, vector<8x16xf32>, vector<8x4xf32> -> vector<8x36xf32>
    %c10 = arith.constant 10 : index
    %c0_417 = arith.constant 0 : index
    %c0_418 = arith.constant 0 : index
    %1921 = vector.load %arg1[%c10, %c0_417, %c0_418] : memref<12x8x2xf32, #tpu.memory_space<vmem>>, vector<1x8x2xf32>
    %1922 = vector.shape_cast %1921 : vector<1x8x2xf32> to vector<8x2xf32>
    %cst_419 = arith.constant dense<0.000000e+00> : vector<8x6xf32>
    %1923 = tpu.matmul %1916, %10, %cst_419 {dimension_numbers = #tpu.dot_dimension_numbers<[1], [0], [0], [1], [0, 0, 1, 1], [], []>} : vector<8x4xf32>, vector<4x6xf32>, vector<8x6xf32> -> vector<8x6xf32>
    %1924 = vector.extract_strided_slice %1923 {offsets = [0, 0], sizes = [8, 4], strides = [1, 1]} : vector<8x6xf32> to vector<8x4xf32>
    %1925 = vector.extract_strided_slice %1923 {offsets = [0, 4], sizes = [8, 2], strides = [1, 1]} : vector<8x6xf32> to vector<8x2xf32>
    %1926 = arith.subf %1922, %1732 : vector<8x2xf32>
    %1927 = arith.mulf %1926, %1926 : vector<8x2xf32>
    %cst_420 = arith.constant dense<0.000000e+00> : vector<8xf32>
    %1928 = vector.multi_reduction <add>, %1927, %cst_420 [1] : vector<8x2xf32> to vector<8xf32>
    %1929 = vector.shape_cast %1928 : vector<8xf32> to vector<8x1xf32>
    %cst_421 = arith.constant 1.000000e-24 : f32
    %1930 = vector.broadcast %cst_421 : f32 to vector<8x1xf32>
    %1931 = arith.maximumf %1929, %1930 : vector<8x1xf32>
    %1932 = math.rsqrt %1931 : vector<8x1xf32>
    %1933 = vector.broadcast %1932 : vector<8x1xf32> to vector<8x2xf32>
    %1934 = arith.mulf %1926, %1933 : vector<8x2xf32>
    %1935 = arith.subf %1922, %1925 : vector<8x2xf32>
    %1936 = arith.mulf %1935, %1935 : vector<8x2xf32>
    %cst_422 = arith.constant dense<0.000000e+00> : vector<8xf32>
    %1937 = vector.multi_reduction <add>, %1936, %cst_422 [1] : vector<8x2xf32> to vector<8xf32>
    %1938 = vector.shape_cast %1937 : vector<8xf32> to vector<8x1xf32>
    %cst_423 = arith.constant 1.000000e-24 : f32
    %1939 = vector.broadcast %cst_423 : f32 to vector<8x1xf32>
    %1940 = arith.maximumf %1938, %1939 : vector<8x1xf32>
    %1941 = math.rsqrt %1940 : vector<8x1xf32>
    %1942 = vector.broadcast %1941 : vector<8x1xf32> to vector<8x2xf32>
    %1943 = arith.mulf %1935, %1942 : vector<8x2xf32>
    %1944 = arith.subf %1916, %1726 : vector<8x4xf32>
    %1945 = arith.mulf %1944, %1944 : vector<8x4xf32>
    %cst_424 = arith.constant dense<0.000000e+00> : vector<8xf32>
    %1946 = vector.multi_reduction <add>, %1945, %cst_424 [1] : vector<8x4xf32> to vector<8xf32>
    %1947 = vector.shape_cast %1946 : vector<8xf32> to vector<8x1xf32>
    %cst_425 = arith.constant 1.000000e-24 : f32
    %1948 = vector.broadcast %cst_425 : f32 to vector<8x1xf32>
    %1949 = arith.maximumf %1947, %1948 : vector<8x1xf32>
    %1950 = math.rsqrt %1949 : vector<8x1xf32>
    %1951 = vector.broadcast %1950 : vector<8x1xf32> to vector<8x4xf32>
    %1952 = arith.mulf %1944, %1951 : vector<8x4xf32>
    %1953 = arith.subf %1916, %1734 : vector<8x4xf32>
    %1954 = arith.mulf %1953, %1953 : vector<8x4xf32>
    %cst_426 = arith.constant dense<0.000000e+00> : vector<8xf32>
    %1955 = vector.multi_reduction <add>, %1954, %cst_426 [1] : vector<8x4xf32> to vector<8xf32>
    %1956 = vector.shape_cast %1955 : vector<8xf32> to vector<8x1xf32>
    %cst_427 = arith.constant 1.000000e-24 : f32
    %1957 = vector.broadcast %cst_427 : f32 to vector<8x1xf32>
    %1958 = arith.maximumf %1956, %1957 : vector<8x1xf32>
    %1959 = math.rsqrt %1958 : vector<8x1xf32>
    %1960 = vector.broadcast %1959 : vector<8x1xf32> to vector<8x4xf32>
    %1961 = arith.mulf %1953, %1960 : vector<8x4xf32>
    %1962 = tpu.concatenate %1934, %1943, %1952, %1961 in 1 : vector<8x2xf32>, vector<8x2xf32>, vector<8x4xf32>, vector<8x4xf32> -> vector<8x12xf32>
    %1963 = arith.truncf %1962 : vector<8x12xf32> to vector<8x12xbf16>
    %cst_428 = arith.constant dense<0.000000e+00> : vector<8x60xf32>
    %1964 = tpu.matmul %1963, %0, %cst_428 {dimension_numbers = #tpu.dot_dimension_numbers<[1], [0], [0], [1], [0, 0, 1, 1], [], []>} : vector<8x12xbf16>, vector<12x60xbf16>, vector<8x60xf32> -> vector<8x60xf32>
    %1965 = vector.broadcast %12 : vector<1x60xf32> to vector<8x60xf32>
    %1966 = arith.addf %1964, %1965 : vector<8x60xf32>
    %cst_429 = arith.constant 0.000000e+00 : f32
    %1967 = vector.broadcast %cst_429 : f32 to vector<8x60xf32>
    %1968 = arith.maximumf %1966, %1967 : vector<8x60xf32>
    %1969 = arith.truncf %1920 : vector<8x36xf32> to vector<8x36xbf16>
    %cst_430 = arith.constant dense<0.000000e+00> : vector<8x108xf32>
    %1970 = tpu.matmul %1969, %1, %cst_430 {dimension_numbers = #tpu.dot_dimension_numbers<[1], [0], [0], [1], [0, 0, 1, 1], [], []>} : vector<8x36xbf16>, vector<36x108xbf16>, vector<8x108xf32> -> vector<8x108xf32>
    %1971 = vector.broadcast %13 : vector<1x108xf32> to vector<8x108xf32>
    %1972 = arith.addf %1970, %1971 : vector<8x108xf32>
    %1973 = arith.truncf %1968 : vector<8x60xf32> to vector<8x60xbf16>
    %cst_431 = arith.constant dense<0.000000e+00> : vector<8x108xf32>
    %1974 = tpu.matmul %1973, %2, %cst_431 {dimension_numbers = #tpu.dot_dimension_numbers<[1], [0], [0], [1], [0, 0, 1, 1], [], []>} : vector<8x60xbf16>, vector<60x108xbf16>, vector<8x108xf32> -> vector<8x108xf32>
    %1975 = vector.broadcast %14 : vector<1x108xf32> to vector<8x108xf32>
    %1976 = arith.addf %1974, %1975 : vector<8x108xf32>
    %1977 = vector.extract_strided_slice %1976 {offsets = [0, 60], sizes = [8, 48], strides = [1, 1]} : vector<8x108xf32> to vector<8x48xf32>
    %1978 = vector.extract_strided_slice %1972 {offsets = [0, 0], sizes = [8, 48], strides = [1, 1]} : vector<8x108xf32> to vector<8x48xf32>
    %1979 = vector.extract_strided_slice %1920 {offsets = [0, 0], sizes = [8, 16], strides = [1, 1]} : vector<8x36xf32> to vector<8x16xf32>
    %1980 = vector.extract_strided_slice %1977 {offsets = [0, 0], sizes = [8, 16], strides = [1, 1]} : vector<8x48xf32> to vector<8x16xf32>
    %1981 = vector.extract_strided_slice %1978 {offsets = [0, 0], sizes = [8, 16], strides = [1, 1]} : vector<8x48xf32> to vector<8x16xf32>
    %1982 = arith.addf %1980, %1981 : vector<8x16xf32>
    %1983 = arith.negf %1982 : vector<8x16xf32>
    %1984 = math.exp %1983 : vector<8x16xf32>
    %cst_432 = arith.constant 1.000000e+00 : f32
    %1985 = vector.broadcast %cst_432 : f32 to vector<8x16xf32>
    %1986 = arith.addf %1985, %1984 : vector<8x16xf32>
    %1987 = arith.divf %1985, %1986 : vector<8x16xf32>
    %1988 = vector.extract_strided_slice %1977 {offsets = [0, 16], sizes = [8, 16], strides = [1, 1]} : vector<8x48xf32> to vector<8x16xf32>
    %1989 = vector.extract_strided_slice %1978 {offsets = [0, 16], sizes = [8, 16], strides = [1, 1]} : vector<8x48xf32> to vector<8x16xf32>
    %1990 = arith.addf %1988, %1989 : vector<8x16xf32>
    %1991 = arith.negf %1990 : vector<8x16xf32>
    %1992 = math.exp %1991 : vector<8x16xf32>
    %cst_433 = arith.constant 1.000000e+00 : f32
    %1993 = vector.broadcast %cst_433 : f32 to vector<8x16xf32>
    %1994 = arith.addf %1993, %1992 : vector<8x16xf32>
    %1995 = arith.divf %1993, %1994 : vector<8x16xf32>
    %1996 = vector.extract_strided_slice %1977 {offsets = [0, 32], sizes = [8, 16], strides = [1, 1]} : vector<8x48xf32> to vector<8x16xf32>
    %1997 = vector.extract_strided_slice %1978 {offsets = [0, 32], sizes = [8, 16], strides = [1, 1]} : vector<8x48xf32> to vector<8x16xf32>
    %1998 = arith.mulf %1987, %1997 : vector<8x16xf32>
    %1999 = arith.addf %1996, %1998 : vector<8x16xf32>
    %2000 = math.tanh %1999 : vector<8x16xf32>
    %cst_434 = arith.constant 1.000000e+00 : f32
    %2001 = vector.broadcast %cst_434 : f32 to vector<8x16xf32>
    %2002 = arith.subf %2001, %1995 : vector<8x16xf32>
    %2003 = arith.mulf %2002, %2000 : vector<8x16xf32>
    %2004 = arith.mulf %1995, %1979 : vector<8x16xf32>
    %2005 = arith.addf %2003, %2004 : vector<8x16xf32>
    %2006 = vector.extract_strided_slice %1976 {offsets = [0, 12], sizes = [8, 48], strides = [1, 1]} : vector<8x108xf32> to vector<8x48xf32>
    %2007 = arith.truncf %2005 : vector<8x16xf32> to vector<8x16xbf16>
    %cst_435 = arith.constant dense<0.000000e+00> : vector<8x48xf32>
    %2008 = tpu.matmul %2007, %3, %cst_435 {dimension_numbers = #tpu.dot_dimension_numbers<[1], [0], [0], [1], [0, 0, 1, 1], [], []>} : vector<8x16xbf16>, vector<16x48xbf16>, vector<8x48xf32> -> vector<8x48xf32>
    %2009 = arith.addf %2006, %2008 : vector<8x48xf32>
    %2010 = vector.extract_strided_slice %1972 {offsets = [0, 48], sizes = [8, 48], strides = [1, 1]} : vector<8x108xf32> to vector<8x48xf32>
    %2011 = vector.extract_strided_slice %1920 {offsets = [0, 16], sizes = [8, 16], strides = [1, 1]} : vector<8x36xf32> to vector<8x16xf32>
    %2012 = vector.extract_strided_slice %2009 {offsets = [0, 0], sizes = [8, 16], strides = [1, 1]} : vector<8x48xf32> to vector<8x16xf32>
    %2013 = vector.extract_strided_slice %2010 {offsets = [0, 0], sizes = [8, 16], strides = [1, 1]} : vector<8x48xf32> to vector<8x16xf32>
    %2014 = arith.addf %2012, %2013 : vector<8x16xf32>
    %2015 = arith.negf %2014 : vector<8x16xf32>
    %2016 = math.exp %2015 : vector<8x16xf32>
    %cst_436 = arith.constant 1.000000e+00 : f32
    %2017 = vector.broadcast %cst_436 : f32 to vector<8x16xf32>
    %2018 = arith.addf %2017, %2016 : vector<8x16xf32>
    %2019 = arith.divf %2017, %2018 : vector<8x16xf32>
    %2020 = vector.extract_strided_slice %2009 {offsets = [0, 16], sizes = [8, 16], strides = [1, 1]} : vector<8x48xf32> to vector<8x16xf32>
    %2021 = vector.extract_strided_slice %2010 {offsets = [0, 16], sizes = [8, 16], strides = [1, 1]} : vector<8x48xf32> to vector<8x16xf32>
    %2022 = arith.addf %2020, %2021 : vector<8x16xf32>
    %2023 = arith.negf %2022 : vector<8x16xf32>
    %2024 = math.exp %2023 : vector<8x16xf32>
    %cst_437 = arith.constant 1.000000e+00 : f32
    %2025 = vector.broadcast %cst_437 : f32 to vector<8x16xf32>
    %2026 = arith.addf %2025, %2024 : vector<8x16xf32>
    %2027 = arith.divf %2025, %2026 : vector<8x16xf32>
    %2028 = vector.extract_strided_slice %2009 {offsets = [0, 32], sizes = [8, 16], strides = [1, 1]} : vector<8x48xf32> to vector<8x16xf32>
    %2029 = vector.extract_strided_slice %2010 {offsets = [0, 32], sizes = [8, 16], strides = [1, 1]} : vector<8x48xf32> to vector<8x16xf32>
    %2030 = arith.mulf %2019, %2029 : vector<8x16xf32>
    %2031 = arith.addf %2028, %2030 : vector<8x16xf32>
    %2032 = math.tanh %2031 : vector<8x16xf32>
    %cst_438 = arith.constant 1.000000e+00 : f32
    %2033 = vector.broadcast %cst_438 : f32 to vector<8x16xf32>
    %2034 = arith.subf %2033, %2027 : vector<8x16xf32>
    %2035 = arith.mulf %2034, %2032 : vector<8x16xf32>
    %2036 = arith.mulf %2027, %2011 : vector<8x16xf32>
    %2037 = arith.addf %2035, %2036 : vector<8x16xf32>
    %2038 = arith.truncf %2037 : vector<8x16xf32> to vector<8x16xbf16>
    %cst_439 = arith.constant dense<0.000000e+00> : vector<8x100xf32>
    %2039 = tpu.matmul %2038, %4, %cst_439 {dimension_numbers = #tpu.dot_dimension_numbers<[1], [0], [0], [1], [0, 0, 1, 1], [], []>} : vector<8x16xbf16>, vector<16x100xbf16>, vector<8x100xf32> -> vector<8x100xf32>
    %2040 = vector.broadcast %15 : vector<1x100xf32> to vector<8x100xf32>
    %2041 = arith.addf %2039, %2040 : vector<8x100xf32>
    %2042 = vector.extract_strided_slice %2041 {offsets = [0, 0], sizes = [8, 4], strides = [1, 1]} : vector<8x100xf32> to vector<8x4xf32>
    %cst_440 = arith.constant 0.000000e+00 : f32
    %2043 = vector.broadcast %cst_440 : f32 to vector<8x4xf32>
    %2044 = arith.maximumf %2042, %2043 : vector<8x4xf32>
    %2045 = vector.extract_strided_slice %1976 {offsets = [0, 0], sizes = [8, 12], strides = [1, 1]} : vector<8x108xf32> to vector<8x12xf32>
    %2046 = arith.truncf %2044 : vector<8x4xf32> to vector<8x4xbf16>
    %cst_441 = arith.constant dense<0.000000e+00> : vector<8x12xf32>
    %2047 = tpu.matmul %2046, %5, %cst_441 {dimension_numbers = #tpu.dot_dimension_numbers<[1], [0], [0], [1], [0, 0, 1, 1], [], []>} : vector<8x4xbf16>, vector<4x12xbf16>, vector<8x12xf32> -> vector<8x12xf32>
    %2048 = arith.addf %2045, %2047 : vector<8x12xf32>
    %2049 = vector.extract_strided_slice %1972 {offsets = [0, 96], sizes = [8, 12], strides = [1, 1]} : vector<8x108xf32> to vector<8x12xf32>
    %2050 = vector.extract_strided_slice %1920 {offsets = [0, 32], sizes = [8, 4], strides = [1, 1]} : vector<8x36xf32> to vector<8x4xf32>
    %2051 = vector.extract_strided_slice %2048 {offsets = [0, 0], sizes = [8, 4], strides = [1, 1]} : vector<8x12xf32> to vector<8x4xf32>
    %2052 = vector.extract_strided_slice %2049 {offsets = [0, 0], sizes = [8, 4], strides = [1, 1]} : vector<8x12xf32> to vector<8x4xf32>
    %2053 = arith.addf %2051, %2052 : vector<8x4xf32>
    %2054 = arith.negf %2053 : vector<8x4xf32>
    %2055 = math.exp %2054 : vector<8x4xf32>
    %cst_442 = arith.constant 1.000000e+00 : f32
    %2056 = vector.broadcast %cst_442 : f32 to vector<8x4xf32>
    %2057 = arith.addf %2056, %2055 : vector<8x4xf32>
    %2058 = arith.divf %2056, %2057 : vector<8x4xf32>
    %2059 = vector.extract_strided_slice %2048 {offsets = [0, 4], sizes = [8, 4], strides = [1, 1]} : vector<8x12xf32> to vector<8x4xf32>
    %2060 = vector.extract_strided_slice %2049 {offsets = [0, 4], sizes = [8, 4], strides = [1, 1]} : vector<8x12xf32> to vector<8x4xf32>
    %2061 = arith.addf %2059, %2060 : vector<8x4xf32>
    %2062 = arith.negf %2061 : vector<8x4xf32>
    %2063 = math.exp %2062 : vector<8x4xf32>
    %cst_443 = arith.constant 1.000000e+00 : f32
    %2064 = vector.broadcast %cst_443 : f32 to vector<8x4xf32>
    %2065 = arith.addf %2064, %2063 : vector<8x4xf32>
    %2066 = arith.divf %2064, %2065 : vector<8x4xf32>
    %2067 = vector.extract_strided_slice %2048 {offsets = [0, 8], sizes = [8, 4], strides = [1, 1]} : vector<8x12xf32> to vector<8x4xf32>
    %2068 = vector.extract_strided_slice %2049 {offsets = [0, 8], sizes = [8, 4], strides = [1, 1]} : vector<8x12xf32> to vector<8x4xf32>
    %2069 = arith.mulf %2058, %2068 : vector<8x4xf32>
    %2070 = arith.addf %2067, %2069 : vector<8x4xf32>
    %2071 = math.tanh %2070 : vector<8x4xf32>
    %cst_444 = arith.constant 1.000000e+00 : f32
    %2072 = vector.broadcast %cst_444 : f32 to vector<8x4xf32>
    %2073 = arith.subf %2072, %2066 : vector<8x4xf32>
    %2074 = arith.mulf %2073, %2071 : vector<8x4xf32>
    %2075 = arith.mulf %2066, %2050 : vector<8x4xf32>
    %2076 = arith.addf %2074, %2075 : vector<8x4xf32>
    %2077 = arith.truncf %2076 : vector<8x4xf32> to vector<8x4xbf16>
    %cst_445 = arith.constant dense<0.000000e+00> : vector<8x96xf32>
    %2078 = tpu.matmul %2077, %6, %cst_445 {dimension_numbers = #tpu.dot_dimension_numbers<[1], [0], [0], [1], [0, 0, 1, 1], [], []>} : vector<8x4xbf16>, vector<4x96xbf16>, vector<8x96xf32> -> vector<8x96xf32>
    %2079 = vector.broadcast %16 : vector<1x96xf32> to vector<8x96xf32>
    %2080 = arith.addf %2078, %2079 : vector<8x96xf32>
    %2081 = vector.extract_strided_slice %2041 {offsets = [0, 4], sizes = [8, 80], strides = [1, 1]} : vector<8x100xf32> to vector<8x80xf32>
    %2082 = vector.extract_strided_slice %2080 {offsets = [0, 0], sizes = [8, 80], strides = [1, 1]} : vector<8x96xf32> to vector<8x80xf32>
    %2083 = arith.addf %2081, %2082 : vector<8x80xf32>
    %cst_446 = arith.constant 0.000000e+00 : f32
    %2084 = vector.broadcast %cst_446 : f32 to vector<8x80xf32>
    %2085 = arith.maximumf %2083, %2084 : vector<8x80xf32>
    %2086 = arith.truncf %2085 : vector<8x80xf32> to vector<8x80xbf16>
    %cst_447 = arith.constant dense<0.000000e+00> : vector<8x8xf32>
    %2087 = tpu.matmul %2086, %7, %cst_447 {dimension_numbers = #tpu.dot_dimension_numbers<[1], [0], [0], [1], [0, 0, 1, 1], [], []>} : vector<8x80xbf16>, vector<80x8xbf16>, vector<8x8xf32> -> vector<8x8xf32>
    %2088 = vector.broadcast %17 : vector<1x8xf32> to vector<8x8xf32>
    %2089 = arith.addf %2087, %2088 : vector<8x8xf32>
    %2090 = vector.extract_strided_slice %2080 {offsets = [0, 80], sizes = [8, 16], strides = [1, 1]} : vector<8x96xf32> to vector<8x16xf32>
    %2091 = arith.truncf %2089 : vector<8x8xf32> to vector<8x8xbf16>
    %cst_448 = arith.constant dense<0.000000e+00> : vector<8x16xf32>
    %2092 = tpu.matmul %2091, %8, %cst_448 {dimension_numbers = #tpu.dot_dimension_numbers<[1], [0], [0], [1], [0, 0, 1, 1], [], []>} : vector<8x8xbf16>, vector<8x16xbf16>, vector<8x16xf32> -> vector<8x16xf32>
    %2093 = arith.addf %2090, %2092 : vector<8x16xf32>
    %cst_449 = arith.constant 0.000000e+00 : f32
    %2094 = vector.broadcast %cst_449 : f32 to vector<8x16xf32>
    %2095 = arith.maximumf %2093, %2094 : vector<8x16xf32>
    %2096 = vector.extract_strided_slice %2041 {offsets = [0, 84], sizes = [8, 16], strides = [1, 1]} : vector<8x100xf32> to vector<8x16xf32>
    %2097 = arith.truncf %2095 : vector<8x16xf32> to vector<8x16xbf16>
    %cst_450 = arith.constant dense<0.000000e+00> : vector<8x16xf32>
    %2098 = tpu.matmul %2097, %9, %cst_450 {dimension_numbers = #tpu.dot_dimension_numbers<[1], [0], [0], [1], [0, 0, 1, 1], [], []>} : vector<8x16xbf16>, vector<16x16xbf16>, vector<8x16xf32> -> vector<8x16xf32>
    %2099 = arith.addf %2096, %2098 : vector<8x16xf32>
    %cst_451 = arith.constant 0.000000e+00 : f32
    %2100 = vector.broadcast %cst_451 : f32 to vector<8x16xf32>
    %2101 = arith.maximumf %2099, %2100 : vector<8x16xf32>
    %2102 = arith.subf %1922, %1925 : vector<8x2xf32>
    %2103 = tpu.concatenate %2102, %2102, %2102, %2102 in 1 : vector<8x2xf32>, vector<8x2xf32>, vector<8x2xf32>, vector<8x2xf32> -> vector<8x8xf32>
    %2104 = arith.mulf %2089, %2103 : vector<8x8xf32>
    %cst_452 = arith.constant dense<0.000000e+00> : vector<8x4xf32>
    %2105 = tpu.matmul %2104, %11, %cst_452 {dimension_numbers = #tpu.dot_dimension_numbers<[1], [0], [0], [1], [0, 0, 1, 1], [], []>} : vector<8x8xf32>, vector<8x4xf32>, vector<8x4xf32> -> vector<8x4xf32>
    %2106 = arith.addf %1924, %2105 : vector<8x4xf32>
    %c10_453 = arith.constant 10 : index
    %c0_454 = arith.constant 0 : index
    %c0_455 = arith.constant 0 : index
    %2107 = vector.load %arg5[%c10_453, %c0_454, %c0_455] : memref<12x8x4xf32, #tpu.memory_space<vmem>>, vector<1x8x4xf32>
    %2108 = vector.shape_cast %2107 : vector<1x8x4xf32> to vector<8x4xf32>
    %2109 = vector.shape_cast %2106 : vector<8x4xf32> to vector<1x8x4xf32>
    tpu.vector_store %arg5[%c10_453, %c0_454, %c0_455], %2109 {strides = array<i32>} : memref<12x8x4xf32, #tpu.memory_space<vmem>>, vector<1x8x4xf32>,
    %2110 = tpu.concatenate %2005, %2101, %2076 in 1 : vector<8x16xf32>, vector<8x16xf32>, vector<8x4xf32> -> vector<8x36xf32>
    %c11 = arith.constant 11 : index
    %c0_456 = arith.constant 0 : index
    %c0_457 = arith.constant 0 : index
    %2111 = vector.load %arg1[%c11, %c0_456, %c0_457] : memref<12x8x2xf32, #tpu.memory_space<vmem>>, vector<1x8x2xf32>
    %2112 = vector.shape_cast %2111 : vector<1x8x2xf32> to vector<8x2xf32>
    %cst_458 = arith.constant dense<0.000000e+00> : vector<8x6xf32>
    %2113 = tpu.matmul %2106, %10, %cst_458 {dimension_numbers = #tpu.dot_dimension_numbers<[1], [0], [0], [1], [0, 0, 1, 1], [], []>} : vector<8x4xf32>, vector<4x6xf32>, vector<8x6xf32> -> vector<8x6xf32>
    %2114 = vector.extract_strided_slice %2113 {offsets = [0, 0], sizes = [8, 4], strides = [1, 1]} : vector<8x6xf32> to vector<8x4xf32>
    %2115 = vector.extract_strided_slice %2113 {offsets = [0, 4], sizes = [8, 2], strides = [1, 1]} : vector<8x6xf32> to vector<8x2xf32>
    %2116 = arith.subf %2112, %1922 : vector<8x2xf32>
    %2117 = arith.mulf %2116, %2116 : vector<8x2xf32>
    %cst_459 = arith.constant dense<0.000000e+00> : vector<8xf32>
    %2118 = vector.multi_reduction <add>, %2117, %cst_459 [1] : vector<8x2xf32> to vector<8xf32>
    %2119 = vector.shape_cast %2118 : vector<8xf32> to vector<8x1xf32>
    %cst_460 = arith.constant 1.000000e-24 : f32
    %2120 = vector.broadcast %cst_460 : f32 to vector<8x1xf32>
    %2121 = arith.maximumf %2119, %2120 : vector<8x1xf32>
    %2122 = math.rsqrt %2121 : vector<8x1xf32>
    %2123 = vector.broadcast %2122 : vector<8x1xf32> to vector<8x2xf32>
    %2124 = arith.mulf %2116, %2123 : vector<8x2xf32>
    %2125 = arith.subf %2112, %2115 : vector<8x2xf32>
    %2126 = arith.mulf %2125, %2125 : vector<8x2xf32>
    %cst_461 = arith.constant dense<0.000000e+00> : vector<8xf32>
    %2127 = vector.multi_reduction <add>, %2126, %cst_461 [1] : vector<8x2xf32> to vector<8xf32>
    %2128 = vector.shape_cast %2127 : vector<8xf32> to vector<8x1xf32>
    %cst_462 = arith.constant 1.000000e-24 : f32
    %2129 = vector.broadcast %cst_462 : f32 to vector<8x1xf32>
    %2130 = arith.maximumf %2128, %2129 : vector<8x1xf32>
    %2131 = math.rsqrt %2130 : vector<8x1xf32>
    %2132 = vector.broadcast %2131 : vector<8x1xf32> to vector<8x2xf32>
    %2133 = arith.mulf %2125, %2132 : vector<8x2xf32>
    %2134 = arith.subf %2106, %1916 : vector<8x4xf32>
    %2135 = arith.mulf %2134, %2134 : vector<8x4xf32>
    %cst_463 = arith.constant dense<0.000000e+00> : vector<8xf32>
    %2136 = vector.multi_reduction <add>, %2135, %cst_463 [1] : vector<8x4xf32> to vector<8xf32>
    %2137 = vector.shape_cast %2136 : vector<8xf32> to vector<8x1xf32>
    %cst_464 = arith.constant 1.000000e-24 : f32
    %2138 = vector.broadcast %cst_464 : f32 to vector<8x1xf32>
    %2139 = arith.maximumf %2137, %2138 : vector<8x1xf32>
    %2140 = math.rsqrt %2139 : vector<8x1xf32>
    %2141 = vector.broadcast %2140 : vector<8x1xf32> to vector<8x4xf32>
    %2142 = arith.mulf %2134, %2141 : vector<8x4xf32>
    %2143 = arith.subf %2106, %1924 : vector<8x4xf32>
    %2144 = arith.mulf %2143, %2143 : vector<8x4xf32>
    %cst_465 = arith.constant dense<0.000000e+00> : vector<8xf32>
    %2145 = vector.multi_reduction <add>, %2144, %cst_465 [1] : vector<8x4xf32> to vector<8xf32>
    %2146 = vector.shape_cast %2145 : vector<8xf32> to vector<8x1xf32>
    %cst_466 = arith.constant 1.000000e-24 : f32
    %2147 = vector.broadcast %cst_466 : f32 to vector<8x1xf32>
    %2148 = arith.maximumf %2146, %2147 : vector<8x1xf32>
    %2149 = math.rsqrt %2148 : vector<8x1xf32>
    %2150 = vector.broadcast %2149 : vector<8x1xf32> to vector<8x4xf32>
    %2151 = arith.mulf %2143, %2150 : vector<8x4xf32>
    %2152 = tpu.concatenate %2124, %2133, %2142, %2151 in 1 : vector<8x2xf32>, vector<8x2xf32>, vector<8x4xf32>, vector<8x4xf32> -> vector<8x12xf32>
    %2153 = arith.truncf %2152 : vector<8x12xf32> to vector<8x12xbf16>
    %cst_467 = arith.constant dense<0.000000e+00> : vector<8x60xf32>
    %2154 = tpu.matmul %2153, %0, %cst_467 {dimension_numbers = #tpu.dot_dimension_numbers<[1], [0], [0], [1], [0, 0, 1, 1], [], []>} : vector<8x12xbf16>, vector<12x60xbf16>, vector<8x60xf32> -> vector<8x60xf32>
    %2155 = vector.broadcast %12 : vector<1x60xf32> to vector<8x60xf32>
    %2156 = arith.addf %2154, %2155 : vector<8x60xf32>
    %cst_468 = arith.constant 0.000000e+00 : f32
    %2157 = vector.broadcast %cst_468 : f32 to vector<8x60xf32>
    %2158 = arith.maximumf %2156, %2157 : vector<8x60xf32>
    %2159 = arith.truncf %2110 : vector<8x36xf32> to vector<8x36xbf16>
    %cst_469 = arith.constant dense<0.000000e+00> : vector<8x108xf32>
    %2160 = tpu.matmul %2159, %1, %cst_469 {dimension_numbers = #tpu.dot_dimension_numbers<[1], [0], [0], [1], [0, 0, 1, 1], [], []>} : vector<8x36xbf16>, vector<36x108xbf16>, vector<8x108xf32> -> vector<8x108xf32>
    %2161 = vector.broadcast %13 : vector<1x108xf32> to vector<8x108xf32>
    %2162 = arith.addf %2160, %2161 : vector<8x108xf32>
    %2163 = arith.truncf %2158 : vector<8x60xf32> to vector<8x60xbf16>
    %cst_470 = arith.constant dense<0.000000e+00> : vector<8x108xf32>
    %2164 = tpu.matmul %2163, %2, %cst_470 {dimension_numbers = #tpu.dot_dimension_numbers<[1], [0], [0], [1], [0, 0, 1, 1], [], []>} : vector<8x60xbf16>, vector<60x108xbf16>, vector<8x108xf32> -> vector<8x108xf32>
    %2165 = vector.broadcast %14 : vector<1x108xf32> to vector<8x108xf32>
    %2166 = arith.addf %2164, %2165 : vector<8x108xf32>
    %2167 = vector.extract_strided_slice %2166 {offsets = [0, 60], sizes = [8, 48], strides = [1, 1]} : vector<8x108xf32> to vector<8x48xf32>
    %2168 = vector.extract_strided_slice %2162 {offsets = [0, 0], sizes = [8, 48], strides = [1, 1]} : vector<8x108xf32> to vector<8x48xf32>
    %2169 = vector.extract_strided_slice %2110 {offsets = [0, 0], sizes = [8, 16], strides = [1, 1]} : vector<8x36xf32> to vector<8x16xf32>
    %2170 = vector.extract_strided_slice %2167 {offsets = [0, 0], sizes = [8, 16], strides = [1, 1]} : vector<8x48xf32> to vector<8x16xf32>
    %2171 = vector.extract_strided_slice %2168 {offsets = [0, 0], sizes = [8, 16], strides = [1, 1]} : vector<8x48xf32> to vector<8x16xf32>
    %2172 = arith.addf %2170, %2171 : vector<8x16xf32>
    %2173 = arith.negf %2172 : vector<8x16xf32>
    %2174 = math.exp %2173 : vector<8x16xf32>
    %cst_471 = arith.constant 1.000000e+00 : f32
    %2175 = vector.broadcast %cst_471 : f32 to vector<8x16xf32>
    %2176 = arith.addf %2175, %2174 : vector<8x16xf32>
    %2177 = arith.divf %2175, %2176 : vector<8x16xf32>
    %2178 = vector.extract_strided_slice %2167 {offsets = [0, 16], sizes = [8, 16], strides = [1, 1]} : vector<8x48xf32> to vector<8x16xf32>
    %2179 = vector.extract_strided_slice %2168 {offsets = [0, 16], sizes = [8, 16], strides = [1, 1]} : vector<8x48xf32> to vector<8x16xf32>
    %2180 = arith.addf %2178, %2179 : vector<8x16xf32>
    %2181 = arith.negf %2180 : vector<8x16xf32>
    %2182 = math.exp %2181 : vector<8x16xf32>
    %cst_472 = arith.constant 1.000000e+00 : f32
    %2183 = vector.broadcast %cst_472 : f32 to vector<8x16xf32>
    %2184 = arith.addf %2183, %2182 : vector<8x16xf32>
    %2185 = arith.divf %2183, %2184 : vector<8x16xf32>
    %2186 = vector.extract_strided_slice %2167 {offsets = [0, 32], sizes = [8, 16], strides = [1, 1]} : vector<8x48xf32> to vector<8x16xf32>
    %2187 = vector.extract_strided_slice %2168 {offsets = [0, 32], sizes = [8, 16], strides = [1, 1]} : vector<8x48xf32> to vector<8x16xf32>
    %2188 = arith.mulf %2177, %2187 : vector<8x16xf32>
    %2189 = arith.addf %2186, %2188 : vector<8x16xf32>
    %2190 = math.tanh %2189 : vector<8x16xf32>
    %cst_473 = arith.constant 1.000000e+00 : f32
    %2191 = vector.broadcast %cst_473 : f32 to vector<8x16xf32>
    %2192 = arith.subf %2191, %2185 : vector<8x16xf32>
    %2193 = arith.mulf %2192, %2190 : vector<8x16xf32>
    %2194 = arith.mulf %2185, %2169 : vector<8x16xf32>
    %2195 = arith.addf %2193, %2194 : vector<8x16xf32>
    %2196 = vector.extract_strided_slice %2166 {offsets = [0, 12], sizes = [8, 48], strides = [1, 1]} : vector<8x108xf32> to vector<8x48xf32>
    %2197 = arith.truncf %2195 : vector<8x16xf32> to vector<8x16xbf16>
    %cst_474 = arith.constant dense<0.000000e+00> : vector<8x48xf32>
    %2198 = tpu.matmul %2197, %3, %cst_474 {dimension_numbers = #tpu.dot_dimension_numbers<[1], [0], [0], [1], [0, 0, 1, 1], [], []>} : vector<8x16xbf16>, vector<16x48xbf16>, vector<8x48xf32> -> vector<8x48xf32>
    %2199 = arith.addf %2196, %2198 : vector<8x48xf32>
    %2200 = vector.extract_strided_slice %2162 {offsets = [0, 48], sizes = [8, 48], strides = [1, 1]} : vector<8x108xf32> to vector<8x48xf32>
    %2201 = vector.extract_strided_slice %2110 {offsets = [0, 16], sizes = [8, 16], strides = [1, 1]} : vector<8x36xf32> to vector<8x16xf32>
    %2202 = vector.extract_strided_slice %2199 {offsets = [0, 0], sizes = [8, 16], strides = [1, 1]} : vector<8x48xf32> to vector<8x16xf32>
    %2203 = vector.extract_strided_slice %2200 {offsets = [0, 0], sizes = [8, 16], strides = [1, 1]} : vector<8x48xf32> to vector<8x16xf32>
    %2204 = arith.addf %2202, %2203 : vector<8x16xf32>
    %2205 = arith.negf %2204 : vector<8x16xf32>
    %2206 = math.exp %2205 : vector<8x16xf32>
    %cst_475 = arith.constant 1.000000e+00 : f32
    %2207 = vector.broadcast %cst_475 : f32 to vector<8x16xf32>
    %2208 = arith.addf %2207, %2206 : vector<8x16xf32>
    %2209 = arith.divf %2207, %2208 : vector<8x16xf32>
    %2210 = vector.extract_strided_slice %2199 {offsets = [0, 16], sizes = [8, 16], strides = [1, 1]} : vector<8x48xf32> to vector<8x16xf32>
    %2211 = vector.extract_strided_slice %2200 {offsets = [0, 16], sizes = [8, 16], strides = [1, 1]} : vector<8x48xf32> to vector<8x16xf32>
    %2212 = arith.addf %2210, %2211 : vector<8x16xf32>
    %2213 = arith.negf %2212 : vector<8x16xf32>
    %2214 = math.exp %2213 : vector<8x16xf32>
    %cst_476 = arith.constant 1.000000e+00 : f32
    %2215 = vector.broadcast %cst_476 : f32 to vector<8x16xf32>
    %2216 = arith.addf %2215, %2214 : vector<8x16xf32>
    %2217 = arith.divf %2215, %2216 : vector<8x16xf32>
    %2218 = vector.extract_strided_slice %2199 {offsets = [0, 32], sizes = [8, 16], strides = [1, 1]} : vector<8x48xf32> to vector<8x16xf32>
    %2219 = vector.extract_strided_slice %2200 {offsets = [0, 32], sizes = [8, 16], strides = [1, 1]} : vector<8x48xf32> to vector<8x16xf32>
    %2220 = arith.mulf %2209, %2219 : vector<8x16xf32>
    %2221 = arith.addf %2218, %2220 : vector<8x16xf32>
    %2222 = math.tanh %2221 : vector<8x16xf32>
    %cst_477 = arith.constant 1.000000e+00 : f32
    %2223 = vector.broadcast %cst_477 : f32 to vector<8x16xf32>
    %2224 = arith.subf %2223, %2217 : vector<8x16xf32>
    %2225 = arith.mulf %2224, %2222 : vector<8x16xf32>
    %2226 = arith.mulf %2217, %2201 : vector<8x16xf32>
    %2227 = arith.addf %2225, %2226 : vector<8x16xf32>
    %2228 = arith.truncf %2227 : vector<8x16xf32> to vector<8x16xbf16>
    %cst_478 = arith.constant dense<0.000000e+00> : vector<8x100xf32>
    %2229 = tpu.matmul %2228, %4, %cst_478 {dimension_numbers = #tpu.dot_dimension_numbers<[1], [0], [0], [1], [0, 0, 1, 1], [], []>} : vector<8x16xbf16>, vector<16x100xbf16>, vector<8x100xf32> -> vector<8x100xf32>
    %2230 = vector.broadcast %15 : vector<1x100xf32> to vector<8x100xf32>
    %2231 = arith.addf %2229, %2230 : vector<8x100xf32>
    %2232 = vector.extract_strided_slice %2231 {offsets = [0, 0], sizes = [8, 4], strides = [1, 1]} : vector<8x100xf32> to vector<8x4xf32>
    %cst_479 = arith.constant 0.000000e+00 : f32
    %2233 = vector.broadcast %cst_479 : f32 to vector<8x4xf32>
    %2234 = arith.maximumf %2232, %2233 : vector<8x4xf32>
    %2235 = vector.extract_strided_slice %2166 {offsets = [0, 0], sizes = [8, 12], strides = [1, 1]} : vector<8x108xf32> to vector<8x12xf32>
    %2236 = arith.truncf %2234 : vector<8x4xf32> to vector<8x4xbf16>
    %cst_480 = arith.constant dense<0.000000e+00> : vector<8x12xf32>
    %2237 = tpu.matmul %2236, %5, %cst_480 {dimension_numbers = #tpu.dot_dimension_numbers<[1], [0], [0], [1], [0, 0, 1, 1], [], []>} : vector<8x4xbf16>, vector<4x12xbf16>, vector<8x12xf32> -> vector<8x12xf32>
    %2238 = arith.addf %2235, %2237 : vector<8x12xf32>
    %2239 = vector.extract_strided_slice %2162 {offsets = [0, 96], sizes = [8, 12], strides = [1, 1]} : vector<8x108xf32> to vector<8x12xf32>
    %2240 = vector.extract_strided_slice %2110 {offsets = [0, 32], sizes = [8, 4], strides = [1, 1]} : vector<8x36xf32> to vector<8x4xf32>
    %2241 = vector.extract_strided_slice %2238 {offsets = [0, 0], sizes = [8, 4], strides = [1, 1]} : vector<8x12xf32> to vector<8x4xf32>
    %2242 = vector.extract_strided_slice %2239 {offsets = [0, 0], sizes = [8, 4], strides = [1, 1]} : vector<8x12xf32> to vector<8x4xf32>
    %2243 = arith.addf %2241, %2242 : vector<8x4xf32>
    %2244 = arith.negf %2243 : vector<8x4xf32>
    %2245 = math.exp %2244 : vector<8x4xf32>
    %cst_481 = arith.constant 1.000000e+00 : f32
    %2246 = vector.broadcast %cst_481 : f32 to vector<8x4xf32>
    %2247 = arith.addf %2246, %2245 : vector<8x4xf32>
    %2248 = arith.divf %2246, %2247 : vector<8x4xf32>
    %2249 = vector.extract_strided_slice %2238 {offsets = [0, 4], sizes = [8, 4], strides = [1, 1]} : vector<8x12xf32> to vector<8x4xf32>
    %2250 = vector.extract_strided_slice %2239 {offsets = [0, 4], sizes = [8, 4], strides = [1, 1]} : vector<8x12xf32> to vector<8x4xf32>
    %2251 = arith.addf %2249, %2250 : vector<8x4xf32>
    %2252 = arith.negf %2251 : vector<8x4xf32>
    %2253 = math.exp %2252 : vector<8x4xf32>
    %cst_482 = arith.constant 1.000000e+00 : f32
    %2254 = vector.broadcast %cst_482 : f32 to vector<8x4xf32>
    %2255 = arith.addf %2254, %2253 : vector<8x4xf32>
    %2256 = arith.divf %2254, %2255 : vector<8x4xf32>
    %2257 = vector.extract_strided_slice %2238 {offsets = [0, 8], sizes = [8, 4], strides = [1, 1]} : vector<8x12xf32> to vector<8x4xf32>
    %2258 = vector.extract_strided_slice %2239 {offsets = [0, 8], sizes = [8, 4], strides = [1, 1]} : vector<8x12xf32> to vector<8x4xf32>
    %2259 = arith.mulf %2248, %2258 : vector<8x4xf32>
    %2260 = arith.addf %2257, %2259 : vector<8x4xf32>
    %2261 = math.tanh %2260 : vector<8x4xf32>
    %cst_483 = arith.constant 1.000000e+00 : f32
    %2262 = vector.broadcast %cst_483 : f32 to vector<8x4xf32>
    %2263 = arith.subf %2262, %2256 : vector<8x4xf32>
    %2264 = arith.mulf %2263, %2261 : vector<8x4xf32>
    %2265 = arith.mulf %2256, %2240 : vector<8x4xf32>
    %2266 = arith.addf %2264, %2265 : vector<8x4xf32>
    %2267 = arith.truncf %2266 : vector<8x4xf32> to vector<8x4xbf16>
    %cst_484 = arith.constant dense<0.000000e+00> : vector<8x96xf32>
    %2268 = tpu.matmul %2267, %6, %cst_484 {dimension_numbers = #tpu.dot_dimension_numbers<[1], [0], [0], [1], [0, 0, 1, 1], [], []>} : vector<8x4xbf16>, vector<4x96xbf16>, vector<8x96xf32> -> vector<8x96xf32>
    %2269 = vector.broadcast %16 : vector<1x96xf32> to vector<8x96xf32>
    %2270 = arith.addf %2268, %2269 : vector<8x96xf32>
    %2271 = vector.extract_strided_slice %2231 {offsets = [0, 4], sizes = [8, 80], strides = [1, 1]} : vector<8x100xf32> to vector<8x80xf32>
    %2272 = vector.extract_strided_slice %2270 {offsets = [0, 0], sizes = [8, 80], strides = [1, 1]} : vector<8x96xf32> to vector<8x80xf32>
    %2273 = arith.addf %2271, %2272 : vector<8x80xf32>
    %cst_485 = arith.constant 0.000000e+00 : f32
    %2274 = vector.broadcast %cst_485 : f32 to vector<8x80xf32>
    %2275 = arith.maximumf %2273, %2274 : vector<8x80xf32>
    %2276 = arith.truncf %2275 : vector<8x80xf32> to vector<8x80xbf16>
    %cst_486 = arith.constant dense<0.000000e+00> : vector<8x8xf32>
    %2277 = tpu.matmul %2276, %7, %cst_486 {dimension_numbers = #tpu.dot_dimension_numbers<[1], [0], [0], [1], [0, 0, 1, 1], [], []>} : vector<8x80xbf16>, vector<80x8xbf16>, vector<8x8xf32> -> vector<8x8xf32>
    %2278 = vector.broadcast %17 : vector<1x8xf32> to vector<8x8xf32>
    %2279 = arith.addf %2277, %2278 : vector<8x8xf32>
    %2280 = vector.extract_strided_slice %2270 {offsets = [0, 80], sizes = [8, 16], strides = [1, 1]} : vector<8x96xf32> to vector<8x16xf32>
    %2281 = arith.truncf %2279 : vector<8x8xf32> to vector<8x8xbf16>
    %cst_487 = arith.constant dense<0.000000e+00> : vector<8x16xf32>
    %2282 = tpu.matmul %2281, %8, %cst_487 {dimension_numbers = #tpu.dot_dimension_numbers<[1], [0], [0], [1], [0, 0, 1, 1], [], []>} : vector<8x8xbf16>, vector<8x16xbf16>, vector<8x16xf32> -> vector<8x16xf32>
    %2283 = arith.addf %2280, %2282 : vector<8x16xf32>
    %cst_488 = arith.constant 0.000000e+00 : f32
    %2284 = vector.broadcast %cst_488 : f32 to vector<8x16xf32>
    %2285 = arith.maximumf %2283, %2284 : vector<8x16xf32>
    %2286 = vector.extract_strided_slice %2231 {offsets = [0, 84], sizes = [8, 16], strides = [1, 1]} : vector<8x100xf32> to vector<8x16xf32>
    %2287 = arith.truncf %2285 : vector<8x16xf32> to vector<8x16xbf16>
    %cst_489 = arith.constant dense<0.000000e+00> : vector<8x16xf32>
    %2288 = tpu.matmul %2287, %9, %cst_489 {dimension_numbers = #tpu.dot_dimension_numbers<[1], [0], [0], [1], [0, 0, 1, 1], [], []>} : vector<8x16xbf16>, vector<16x16xbf16>, vector<8x16xf32> -> vector<8x16xf32>
    %2289 = arith.addf %2286, %2288 : vector<8x16xf32>
    %cst_490 = arith.constant 0.000000e+00 : f32
    %2290 = vector.broadcast %cst_490 : f32 to vector<8x16xf32>
    %2291 = arith.maximumf %2289, %2290 : vector<8x16xf32>
    %2292 = arith.subf %2112, %2115 : vector<8x2xf32>
    %2293 = tpu.concatenate %2292, %2292, %2292, %2292 in 1 : vector<8x2xf32>, vector<8x2xf32>, vector<8x2xf32>, vector<8x2xf32> -> vector<8x8xf32>
    %2294 = arith.mulf %2279, %2293 : vector<8x8xf32>
    %cst_491 = arith.constant dense<0.000000e+00> : vector<8x4xf32>
    %2295 = tpu.matmul %2294, %11, %cst_491 {dimension_numbers = #tpu.dot_dimension_numbers<[1], [0], [0], [1], [0, 0, 1, 1], [], []>} : vector<8x8xf32>, vector<8x4xf32>, vector<8x4xf32> -> vector<8x4xf32>
    %2296 = arith.addf %2114, %2295 : vector<8x4xf32>
    %c11_492 = arith.constant 11 : index
    %c0_493 = arith.constant 0 : index
    %c0_494 = arith.constant 0 : index
    %2297 = vector.load %arg5[%c11_492, %c0_493, %c0_494] : memref<12x8x4xf32, #tpu.memory_space<vmem>>, vector<1x8x4xf32>
    %2298 = vector.shape_cast %2297 : vector<1x8x4xf32> to vector<8x4xf32>
    %2299 = vector.shape_cast %2296 : vector<8x4xf32> to vector<1x8x4xf32>
    tpu.vector_store %arg5[%c11_492, %c0_493, %c0_494], %2299 {strides = array<i32>} : memref<12x8x4xf32, #tpu.memory_space<vmem>>, vector<1x8x4xf32>,
    %2300 = tpu.concatenate %2195, %2291, %2266 in 1 : vector<8x16xf32>, vector<8x16xf32>, vector<8x4xf32> -> vector<8x36xf32>
    %c0_495 = arith.constant 0 : index
    %c0_496 = arith.constant 0 : index
    %2301 = vector.load %arg6[%c0_495, %c0_496] : memref<8x40xf32, #tpu.memory_space<vmem>>, vector<8x4xf32>
    tpu.vector_store %arg6[%c0_495, %c0_496], %2296 {strides = array<i32>} : memref<8x40xf32, #tpu.memory_space<vmem>>, vector<8x4xf32>,
    %2302 = vector.extract_strided_slice %2300 {offsets = [0, 0], sizes = [8, 16], strides = [1, 1]} : vector<8x36xf32> to vector<8x16xf32>
    %c0_497 = arith.constant 0 : index
    %c4_498 = arith.constant 4 : index
    %2303 = vector.load %arg6[%c0_497, %c4_498] : memref<8x40xf32, #tpu.memory_space<vmem>>, vector<8x16xf32>
    tpu.vector_store %arg6[%c0_497, %c4_498], %2302 {strides = array<i32>} : memref<8x40xf32, #tpu.memory_space<vmem>>, vector<8x16xf32>,
    %2304 = vector.extract_strided_slice %2300 {offsets = [0, 16], sizes = [8, 16], strides = [1, 1]} : vector<8x36xf32> to vector<8x16xf32>
    %c0_499 = arith.constant 0 : index
    %c20 = arith.constant 20 : index
    %2305 = vector.load %arg6[%c0_499, %c20] : memref<8x40xf32, #tpu.memory_space<vmem>>, vector<8x16xf32>
    tpu.vector_store %arg6[%c0_499, %c20], %2304 {strides = array<i32>} : memref<8x40xf32, #tpu.memory_space<vmem>>, vector<8x16xf32>,
    %2306 = vector.extract_strided_slice %2300 {offsets = [0, 32], sizes = [8, 4], strides = [1, 1]} : vector<8x36xf32> to vector<8x4xf32>
    %c0_500 = arith.constant 0 : index
    %c36 = arith.constant 36 : index
    %2307 = vector.load %arg6[%c0_500, %c36] : memref<8x40xf32, #tpu.memory_space<vmem>>, vector<8x4xf32>
    tpu.vector_store %arg6[%c0_500, %c36], %2306 {strides = array<i32>} : memref<8x40xf32, #tpu.memory_space<vmem>>, vector<8x4xf32>,
    return
  }
  func.func @transform_0(%arg0: i32) -> (i32, i32, i32) {
    %c0_i32 = arith.constant 0 : i32
    %c0_i32_0 = arith.constant 0 : i32
    %c0_i32_1 = arith.constant 0 : i32
    return %c0_i32, %arg0, %c0_i32_0 : i32, i32, i32
  }
  func.func @transform_1(%arg0: i32) -> (i32, i32) {
    %c0_i32 = arith.constant 0 : i32
    %c0_i32_0 = arith.constant 0 : i32
    return %arg0, %c0_i32 : i32, i32
  }
  func.func @transform_2(%arg0: i32) -> (i32, i32) {
    %c0_i32 = arith.constant 0 : i32
    %c0_i32_0 = arith.constant 0 : i32
    %c0_i32_1 = arith.constant 0 : i32
    return %c0_i32, %c0_i32_0 : i32, i32
  }
  func.func @transform_3(%arg0: i32) -> (i32, i32) {
    %c0_i32 = arith.constant 0 : i32
    %c0_i32_0 = arith.constant 0 : i32
    %c0_i32_1 = arith.constant 0 : i32
    return %c0_i32, %c0_i32_0 : i32, i32
  }
  func.func @transform_4(%arg0: i32) -> (i32, i32, i32) {
    %c0_i32 = arith.constant 0 : i32
    %c0_i32_0 = arith.constant 0 : i32
    %c0_i32_1 = arith.constant 0 : i32
    return %c0_i32, %arg0, %c0_i32_0 : i32, i32, i32
  }
  func.func @transform_5(%arg0: i32) -> (i32, i32) {
    %c0_i32 = arith.constant 0 : i32
    %c0_i32_0 = arith.constant 0 : i32
    return %arg0, %c0_i32 : i32, i32
  }
}

</mosaic_0001>

<llo_original>
// kernel: tpu_custom_call.1
$region0: #{tpu_custom_call.1}
  #allocation0 [shape = 'u32[]', space=smem, size = 0x4, offset = 0x4, fixed_abs, tag = 'smem constant byte address 0x4 - core index']
  #allocation1 [shape = 'u32[72,128]{1,0:T(1,128)}', space=vmem, size = 0x9000, scoped, tag = 'internal scratch']
  %s0 = inlined_call_operand.vmem [shape: f32[12,8,2], index: 0, kind: input, shape index: {}]
  %s1 = inlined_call_operand.vmem [shape: f32[8,42], index: 1, kind: input, shape index: {}]
  %s2 = inlined_call_operand.hbm [shape: bf16[304,128], index: 2, kind: input, shape index: {}]
  %s3 = inlined_call_operand.vmem [shape: f32[64,128], index: 3, kind: input, shape index: {}]
  %s4 = inlined_call_operand.vmem [shape: f32[12,8,4], index: 4, kind: output, shape index: {0}]
  %s5 = inlined_call_operand.hbm [shape: f32[8,40], index: 5, kind: output, shape index: {1}]
  %6 = xla_tuple %s4, %s5
  %s7 = sld [smem:[#allocation0]]
  $region38: #{tpu_custom_call.1} parent=0
    _
  %s9 = ssub.s32 1, %s7
  %s10 = scalar_select 0, %s9, %s7
  $region1: #{tpu_custom_call.1} parent=0
    #allocation2 [shape = 'u8[77824]{0}', space=vmem, size = 0x13000, scoped, tag = 'input window, operand 2, single buffered']
    #allocation3 [shape = 's32[1]{0}', space=sflag, size = 0x4, scoped, tag = 'scoped memory for tpu_custom_call.1']
    #allocation4 [shape = 's32[1]{0}', space=sflag, size = 0x4, scoped, tag = 'scoped memory for tpu_custom_call.1']
    #allocation5 [shape = 'u8[4096]{0}', space=vmem, size = 0x1000, scoped, tag = 'output window, operand 1, single buffered']
    %11 = vsyncpa [#allocation3], 0
    %12 = vsyncpa [#allocation4], 0
    // Predicated region
    $region2: #{tpu_custom_call.1} parent=1 // pred_check
      _
    $region3: #{tpu_custom_call.1} parent=1 // pred_check_branch
      %14 = sbr.rel (0) target = $region5
    $region4: #{tpu_custom_call.1} parent=1 // pred_region
      _
    $region5: #{tpu_custom_call.1} parent=1 // pred_fallthru
      _
    // Predicated region
    $region6: #{tpu_custom_call.1} parent=1 // pred_check
      _
    $region7: #{tpu_custom_call.1} parent=1 // pred_check_branch
      %16 = sbr.rel (0) target = $region9
    $region8: #{tpu_custom_call.1} parent=1 // pred_region
      _
    $region9: #{tpu_custom_call.1} parent=1 // pred_fallthru
      _
    // Predicated region
    $region10: #{tpu_custom_call.1} parent=1 // pred_check
      _
    $region11: #{tpu_custom_call.1} parent=1 // pred_check_branch
      %18 = sbr.rel (0) target = $region13
    $region12: #{tpu_custom_call.1} parent=1 // pred_region
      %20 = vsyncadd [#allocation3], 0
      %s21 = sshll.u32 %s2, 4
      %s22 = int_to_ptr.hbm [resolvable:$true] %s21
      %s23 = sshll.u32 [#allocation2], 4
      %s24 = int_to_ptr.vmem [resolvable:$true] %s23
      %29 = dma.hbm_to_vmem [thread:$0]  %s22, 2432, %s24, [#allocation3], 64, 64, 4
    $region13: #{tpu_custom_call.1} parent=1 // pred_fallthru
      _
    // Predicated region
    $region14: #{tpu_custom_call.1} parent=1 // pred_check
      _
    $region15: #{tpu_custom_call.1} parent=1 // pred_check_branch
      %31 = sbr.rel (0) target = $region17
    $region16: #{tpu_custom_call.1} parent=1 // pred_region
      _
    $region17: #{tpu_custom_call.1} parent=1 // pred_fallthru
      _
    // Predicated region
    $region18: #{tpu_custom_call.1} parent=1 // pred_check
      _
    $region19: #{tpu_custom_call.1} parent=1 // pred_check_branch
      %33 = sbr.rel (0) target = $region21
    $region20: #{tpu_custom_call.1} parent=1 // pred_region
      %35 = dma.done [#allocation3], 2432
    $region21: #{tpu_custom_call.1} parent=1 // pred_fallthru
      _
    %v37 = vld [vmem:[#allocation2] sm:$0xf]
    %v38 = vld [vmem:[#allocation2 + $0x4] sm:$0x3]
    %v39 = vld [vmem:[#allocation2 + $0x8] sm:$0xf]
    %v40 = vld [vmem:[#allocation2 + $0xc] sm:$0xf]
    %v41 = vld [vmem:[#allocation2 + $0x10] sm:$0xf]
    %v42 = vld [vmem:[#allocation2 + $0x14] sm:$0xf]
    %v43 = vld [vmem:[#allocation2 + $0x18] sm:$0x3]
    %v44 = vld [vmem:[#allocation2 + $0x20] sm:$0xf]
    %v45 = vld [vmem:[#allocation2 + $0x24] sm:$0xf]
    %v46 = vld [vmem:[#allocation2 + $0x28] sm:$0xf]
    %v47 = vld [vmem:[#allocation2 + $0x2c] sm:$0xf]
    %v48 = vld [vmem:[#allocation2 + $0x30] sm:$0xf]
    %v49 = vld [vmem:[#allocation2 + $0x34] sm:$0xf]
    %v50 = vld [vmem:[#allocation2 + $0x38] sm:$0xf]
    %v51 = vld [vmem:[#allocation2 + $0x3c] sm:$0x3]
    %v52 = vld [vmem:[#allocation2 + $0x40] sm:$0xf]
    %v53 = vld [vmem:[#allocation2 + $0x44] sm:$0xf]
    %v54 = vld [vmem:[#allocation2 + $0x48] sm:$0xf]
    %v55 = vld [vmem:[#allocation2 + $0x4c] sm:$0xf]
    %v56 = vld [vmem:[#allocation2 + $0x50] sm:$0x3]
    %v57 = vld [vmem:[#allocation2 + $0x58] sm:$0x3]
    %v58 = vld [vmem:[#allocation2 + $0x60] sm:$0xf]
    %v59 = vld [vmem:[#allocation2 + $0x64] sm:$0xf]
    %v60 = vld [vmem:[#allocation2 + $0x68] sm:$0xf]
    %v61 = vld [vmem:[#allocation2 + $0x6c] sm:$0xf]
    %v62 = vld [vmem:[#allocation2 + $0x70] sm:$0xf]
    %v63 = vld [vmem:[#allocation2 + $0x74] sm:$0xf]
    %v64 = vld [vmem:[#allocation2 + $0x78] sm:$0xf]
    %v65 = vld [vmem:[#allocation2 + $0x7c] sm:$0xf]
    %v66 = vld [vmem:[#allocation2 + $0x80] sm:$0xf]
    %v67 = vld [vmem:[#allocation2 + $0x84] sm:$0xf]
    %v68 = vld [vmem:[#allocation2 + $0x88] sm:$0xf]
    %v69 = vld [vmem:[#allocation2 + $0x90] sm:$0xf]
    %v70 = vld [vmem:[#allocation2 + $0x94] sm:$0xf]
    %v71 = vld [vmem:[%s3] sm:$0xf]
    %v72 = vld [vmem:[%s3 + $0x8] sm:$0xff]
    %v73 = vld [vmem:[%s3 + $0x10] sm:$0x1]
    %v74 = vld [vmem:[%s3 + $0x18] sm:$0x1]
    %v75 = vld [vmem:[%s3 + $0x20] sm:$0x1]
    %v76 = vld [vmem:[%s3 + $0x28] sm:$0x1]
    %v77 = vld [vmem:[%s3 + $0x30] sm:$0x1]
    %v78 = vld [vmem:[%s3 + $0x38] sm:$0x1]
    %v79 = vld [vmem:[%s1] sm:$0xff]
    %v80 = vld [vmem:[%s0] sm:$0xff]
    %vm81 = vcmask 31744
    %v83 = vsel %vm81, %v79, 0
    %vm85 = vcmask 1043456
    %v87 = vsel %vm85, %v71, 0
    %89 = vmatpush.msra.mxu0 0.0
    %90 = vmatpush.msra.mxu0 0.0
    %91 = vmatpush.msra.mxu0 0.0
    %92 = vmatpush.msra.mxu0 0.0
    %93 = vmatpush.msra.mxu0 0.0
    %94 = vmatpush.msra.mxu0 0.0
    %95 = vmatpush.msra.mxu0 0.0
    %96 = vmatpush.msra.mxu0 0.0
    %97 = vmatpush.msra.mxu0 0.0
    %98 = vmatpush.msra.mxu0 0.0
    %99 = vmatpush.msra.mxu0 0.0
    %100 = vmatpush.msra.mxu0 0.0
    %101 = vmatpush.msra.mxu0 0.0
    %102 = vmatpush.msra.mxu0 0.0
    %103 = vmatpush.msra.mxu0 0.0
    %104 = vmatpush.msra.mxu0 %v87
    %105 = vmatmul.f32.gmra.mxu0 %v83
    %v106 = vpop.f32.mrf.mxu0
    %v107 = vadd.f32 0.0, %v106
    %108 = vdwg.mxu0
    %109 = vrot.lane.b32.xlu0 %v79, 124
    %v110 = vpop.permute.xlu0 %109
    %v112 = vsub.f32 %v80, %v110
    %v113 = vmul.f32 %v112, %v112
    %vm114 = vcmask 15360
    %v115 = vsel %vm114, %v113, 0.0
    %116 = vadd.xlane.f32.xlu0 %v115
    %v117 = vpop.xlane.xlu0 %116
    %v118 = vmax.f32 %v117, 1e-24
    %v119 = vrsqrt.pop %v118
    %v120 = vmul.f32 %v119, %v118
    %v121 = vmul.f32 %v120, %v119
    %v122 = vmul.f32 0.5, %v121
    %v123 = vsub.f32 1.5, %v122
    %v124 = vmul.f32 %v119, %v123
    %vm125 = vweird.f32 %v118
    %vm126 = vweird.f32 %v119
    %vm127 = vmor %vm125, %vm126
    %v128 = vsel %vm127, %v119, %v124
    %v129 = vmul.f32 %v112, %v128
    %131 = vrot.lane.b32.xlu0 %v107, 124
    %v132 = vpop.permute.xlu0 %131
    %v134 = vsub.f32 %v80, %v132
    %v135 = vmul.f32 %v134, %v134
    %v136 = vsel %vm114, %v135, 0.0
    %137 = vadd.xlane.f32.xlu0 %v136
    %v138 = vpop.xlane.xlu0 %137
    %v139 = vmax.f32 %v138, 1e-24
    %v140 = vrsqrt.pop %v139
    %v141 = vmul.f32 %v140, %v139
    %v142 = vmul.f32 %v141, %v140
    %v143 = vmul.f32 0.5, %v142
    %v144 = vsub.f32 1.5, %v143
    %v145 = vmul.f32 %v140, %v144
    %vm146 = vweird.f32 %v139
    %vm147 = vweird.f32 %v140
    %vm148 = vmor %vm146, %vm147
    %v149 = vsel %vm148, %v140, %v145
    %v150 = vmul.f32 %v134, %v149
    %v151 = vsub.f32 %v79, %v79
    %v152 = vmul.f32 %v151, %v151
    %v153 = vsel %vm81, %v152, 0.0
    %154 = vadd.xlane.f32.xlu0 %v153
    %v155 = vpop.xlane.xlu0 %154
    %v156 = vmax.f32 %v155, 1e-24
    %v157 = vrsqrt.pop %v156
    %v158 = vmul.f32 %v157, %v156
    %v159 = vmul.f32 %v158, %v157
    %v160 = vmul.f32 0.5, %v159
    %v161 = vsub.f32 1.5, %v160
    %v162 = vmul.f32 %v157, %v161
    %vm163 = vweird.f32 %v156
    %vm164 = vweird.f32 %v157
    %vm165 = vmor %vm163, %vm164
    %v166 = vsel %vm165, %v157, %v162
    %v167 = vmul.f32 %v151, %v166
    %169 = vrot.lane.b32.xlu0 %v150, 2
    %v170 = vpop.permute.xlu0 %169
    %173 = vrot.lane.b32.xlu0 %v167, 4
    %v174 = vpop.permute.xlu0 %173
    %176 = vrot.lane.b32.xlu0 %v167, 8
    %v177 = vpop.permute.xlu0 %176
    %v179 = vsel %vm114, %v129, %v170
    %v180 = vsel %vm81, %v179, %v174
    %vm181 = vcmask 64512
    %v182 = vsel %vm181, %v180, %v177
    %v183 = vpack.c.bf16 %v182, %v182
    %v184 = vperm.slane %v73, 0
    %v187 = vunpack.c.l.b16 %v37
    %v188 = vunpack.c.l.b16 %v38
    %v189 = vpack.c.b16 %v188, %v187
    %vm190 = vcmask 97280
    %v192 = vsel %vm190, %v183, 0
    %vm194 = vcmask 1045504
    %v196 = vsel %vm194, %v189, 0
    %198 = vmatpush.bf16.msra.mxu0 0
    %199 = vmatpush.bf16.msra.mxu0 0
    %200 = vmatpush.bf16.msra.mxu0 0
    %201 = vmatpush.bf16.msra.mxu0 0
    %202 = vmatpush.bf16.msra.mxu0 0
    %203 = vmatpush.bf16.msra.mxu0 0
    %204 = vmatpush.bf16.msra.mxu0 0
    %205 = vmatpush.bf16.msra.mxu0 %v196
    %206 = vmatmul.bf16.gmra.mxu0 %v192
    %v207 = vpop.f32.mrf.mxu0
    %v208 = vadd.f32 %v184, %v207
    %v209 = vpop.f32.mrf.mxu0
    %210 = vdwg.mxu0
    %v211 = vmax.f32 %v208, 0.0
    %v212 = vpack.c.bf16 %v79, %v79
    %v213 = vperm.slane %v74, 0
    %215 = vrot.lane.b32.xlu0 %v212, 122
    %v216 = vpop.permute.xlu0 %215
    %v222 = vunpack.c.l.b16 %v39
    %v223 = vunpack.c.l.b16 %v40
    %v224 = vunpack.c.l.b16 %v41
    %v225 = vunpack.c.l.b16 %v42
    %v226 = vunpack.c.l.b16 %v43
    %v227 = vpack.c.b16 %v223, %v222
    %v228 = vpack.c.b16 %v225, %v224
    %v229 = vpack.c.b16 %v226, %v226
    %vm232 = vcmask 293888
    %v234 = vsel %vm232, %v216, 0
    %vm236 = vcmask 1041408
    %v238 = vsel %vm236, %v229, 0
    %240 = vmatpush.bf16.msra.mxu0 0
    %241 = vmatpush.bf16.msra.mxu0 0
    %242 = vmatpush.bf16.msra.mxu0 0
    %243 = vmatpush.bf16.msra.mxu0 0
    %244 = vmatpush.bf16.msra.mxu0 0
    %245 = vmatpush.bf16.msra.mxu0 %v238
    %246 = vmatpush.bf16.msra.mxu0 %v228
    %247 = vmatpush.bf16.msra.mxu0 %v227
    %248 = vmatmul.bf16.gmra.mxu0 %v234
    %v249 = vpop.f32.mrf.mxu0
    %v250 = vadd.f32 %v213, %v249
    %v251 = vpop.f32.mrf.mxu0
    %252 = vdwg.mxu0
    %v253 = vpack.c.bf16 %v211, %v211
    %v254 = vperm.slane %v75, 0
    %v263 = vunpack.c.l.b16 %v44
    %v264 = vunpack.c.l.b16 %v45
    %v265 = vunpack.c.l.b16 %v46
    %v266 = vunpack.c.l.b16 %v47
    %v267 = vunpack.c.l.b16 %v48
    %v268 = vunpack.c.l.b16 %v49
    %v269 = vunpack.c.l.b16 %v50
    %v270 = vunpack.c.l.b16 %v51
    %v271 = vpack.c.b16 %v264, %v263
    %v272 = vpack.c.b16 %v266, %v265
    %v273 = vpack.c.b16 %v268, %v267
    %v274 = vpack.c.b16 %v270, %v269
    %vm278 = vcmask 490496
    %v280 = vsel %vm278, %v253, 0
    %v283 = vsel %vm194, %v274, 0
    %285 = vmatpush.bf16.msra.mxu0 0
    %286 = vmatpush.bf16.msra.mxu0 0
    %287 = vmatpush.bf16.msra.mxu0 0
    %288 = vmatpush.bf16.msra.mxu0 0
    %289 = vmatpush.bf16.msra.mxu0 %v283
    %290 = vmatpush.bf16.msra.mxu0 %v273
    %291 = vmatpush.bf16.msra.mxu0 %v272
    %292 = vmatpush.bf16.msra.mxu0 %v271
    %293 = vmatmul.bf16.gmra.mxu0 %v280
    %v294 = vpop.f32.mrf.mxu0
    %v295 = vadd.f32 %v254, %v294
    %v296 = vpop.f32.mrf.mxu0
    %297 = vdwg.mxu0
    %299 = vrot.lane.b32.xlu0 %v250, 60
    %v300 = vpop.permute.xlu0 %299
    %v302 = vadd.f32 %v295, %v300
    %v303 = vxor.u32 %v302, 2147483648
    %v304 = vmul.f32 %v303, 1.442695
    %v305 = vpow.pop %v304
    %v306 = vadd.f32 %v305, 1.0
    %v307 = vrcp.pop %v306
    %v308 = vmul.f32 %v306, %v307
    %v309 = vsub.f32 1.0, %v308
    %v310 = vmul.f32 %v307, %v309
    %v311 = vadd.f32 %v307, %v310
    %vm312 = vweird.f32 %v306
    %vm313 = vweird.f32 %v307
    %vm314 = vmor %vm312, %vm313
    %v315 = vsel %vm314, %v307, %v311
    %v316 = vand.u32 2147483647, %v306
    %vm317 = vcmp.eq.f32.partialorder %v316, 8.507059e+37
    %v318 = vand.u32 %v306, 2147483648
    %v319 = vor.u32 1.1754944e-38, %v318
    %v320 = vsel %vm317, %v319, %v315
    %v321 = vmul.f32 1.0, %v320
    %322 = vrot.lane.b32.xlu0 %v250, 28
    %v323 = vpop.permute.xlu0 %322
    %v325 = vmul.f32 %v321, %v323
    %327 = vrot.lane.b32.xlu0 %v325, 32
    %v328 = vpop.permute.xlu0 %327
    %v330 = vadd.f32 %v295, %v328
    %v331 = vtanh.pop %v330
    %v332 = vsub.f32 1.0, %v321
    %334 = vrot.lane.b32.xlu0 %v331, 112
    %v335 = vpop.permute.xlu0 %334
    %v337 = vmul.f32 %v332, %v335
    %338 = vrot.lane.b32.xlu0 %v79, 70
    %v339 = vpop.permute.xlu0 %338
    %v341 = vmul.f32 %v321, %v339
    %v342 = vadd.f32 %v337, %v341
    %v343 = vpack.c.bf16 %v342, %v342
    %345 = vrot.lane.b32.xlu0 %v343, 52
    %v346 = vpop.permute.xlu0 %345
    %v349 = vunpack.c.l.b16 %v52
    %v350 = vunpack.c.l.b16 %v53
    %v351 = vpack.c.b16 %v350, %v349
    %vm353 = vcmask 130048
    %v355 = vsel %vm353, %v346, 0
    %357 = vmatpush.bf16.msra.mxu0 0
    %358 = vmatpush.bf16.msra.mxu0 0
    %359 = vmatpush.bf16.msra.mxu0 0
    %360 = vmatpush.bf16.msra.mxu0 0
    %361 = vmatpush.bf16.msra.mxu0 0
    %362 = vmatpush.bf16.msra.mxu0 0
    %363 = vmatpush.bf16.msra.mxu0 0
    %364 = vmatpush.bf16.msra.mxu0 %v351
    %365 = vmatmul.bf16.gmra.mxu0 %v355
    %v366 = vpop.f32.mrf.mxu0
    %v367 = vadd.f32 0.0, %v366
    %v368 = vpop.f32.mrf.mxu0
    %369 = vdwg.mxu0
    %371 = vrot.lane.b32.xlu0 %v367, 12
    %v372 = vpop.permute.xlu0 %371
    %v374 = vadd.f32 %v295, %v372
    %375 = vrot.lane.b32.xlu0 %v250, 92
    %v376 = vpop.permute.xlu0 %375
    %v378 = vadd.f32 %v374, %v376
    %v379 = vxor.u32 %v378, 2147483648
    %v380 = vmul.f32 %v379, 1.442695
    %v381 = vpow.pop %v380
    %v382 = vadd.f32 %v381, 1.0
    %v383 = vrcp.pop %v382
    %v384 = vmul.f32 %v382, %v383
    %v385 = vsub.f32 1.0, %v384
    %v386 = vmul.f32 %v383, %v385
    %v387 = vadd.f32 %v383, %v386
    %vm388 = vweird.f32 %v382
    %vm389 = vweird.f32 %v383
    %vm390 = vmor %vm388, %vm389
    %v391 = vsel %vm390, %v383, %v387
    %v392 = vand.u32 2147483647, %v382
    %vm393 = vcmp.eq.f32.partialorder %v392, 8.507059e+37
    %v394 = vand.u32 %v382, 2147483648
    %v395 = vor.u32 1.1754944e-38, %v394
    %v396 = vsel %vm393, %v395, %v391
    %v397 = vmul.f32 1.0, %v396
    %v398 = vmul.f32 %v397, %v300
    %400 = vrot.lane.b32.xlu0 %v398, 32
    %v401 = vpop.permute.xlu0 %400
    %v403 = vadd.f32 %v374, %v401
    %v404 = vtanh.pop %v403
    %v405 = vsub.f32 1.0, %v397
    %407 = vrot.lane.b32.xlu0 %v404, 112
    %v408 = vpop.permute.xlu0 %407
    %v410 = vmul.f32 %v405, %v408
    %411 = vrot.lane.b32.xlu0 %v79, 6
    %v412 = vpop.permute.xlu0 %411
    %v414 = vmul.f32 %v397, %v412
    %v415 = vadd.f32 %v410, %v414
    %v416 = vpack.c.bf16 %v415, %v415
    %v417 = vperm.slane %v76, 0
    %419 = vrot.lane.b32.xlu0 %v416, 100
    %v420 = vpop.permute.xlu0 %419
    %v423 = vunpack.c.l.b16 %v54
    %v424 = vunpack.c.l.b16 %v55
    %v425 = vpack.c.b16 %v424, %v423
    %v428 = vsel %vm353, %v420, 0
    %430 = vmatpush.bf16.msra.mxu0 0
    %431 = vmatpush.bf16.msra.mxu0 0
    %432 = vmatpush.bf16.msra.mxu0 0
    %433 = vmatpush.bf16.msra.mxu0 0
    %434 = vmatpush.bf16.msra.mxu0 0
    %435 = vmatpush.bf16.msra.mxu0 0
    %436 = vmatpush.bf16.msra.mxu0 0
    %437 = vmatpush.bf16.msra.mxu0 %v425
    %438 = vmatmul.bf16.gmra.mxu0 %v428
    %v439 = vpop.f32.mrf.mxu0
    %v440 = vadd.f32 %v417, %v439
    %v441 = vpop.f32.mrf.mxu0
    %442 = vdwg.mxu0
    %v443 = vmax.f32 %v440, 0.0
    %v444 = vpack.c.bf16 %v443, %v443
    %v446 = vsel %vm81, %v444, 0
    %v449 = vsel %vm236, %v56, 0
    %451 = vmatpush.bf16.msra.mxu0 0
    %452 = vmatpush.bf16.msra.mxu0 0
    %453 = vmatpush.bf16.msra.mxu0 0
    %454 = vmatpush.bf16.msra.mxu0 0
    %455 = vmatpush.bf16.msra.mxu0 0
    %456 = vmatpush.bf16.msra.mxu0 0
    %457 = vmatpush.bf16.msra.mxu0 0
    %458 = vmatpush.bf16.msra.mxu0 %v449
    %459 = vmatmul.bf16.gmra.mxu0 %v446
    %v460 = vpop.f32.mrf.mxu0
    %v461 = vadd.f32 0.0, %v460
    %v462 = vpop.f32.mrf.mxu0
    %463 = vdwg.mxu0
    %v464 = vadd.f32 %v295, %v461
    %465 = vrot.lane.b32.xlu0 %v250, 32
    %v466 = vpop.permute.xlu0 %465
    %v468 = vadd.f32 %v464, %v466
    %v469 = vxor.u32 %v468, 2147483648
    %v470 = vmul.f32 %v469, 1.442695
    %v471 = vpow.pop %v470
    %v472 = vadd.f32 %v471, 1.0
    %v473 = vrcp.pop %v472
    %v474 = vmul.f32 %v472, %v473
    %v475 = vsub.f32 1.0, %v474
    %v476 = vmul.f32 %v473, %v475
    %v477 = vadd.f32 %v473, %v476
    %vm478 = vweird.f32 %v472
    %vm479 = vweird.f32 %v473
    %vm480 = vmor %vm478, %vm479
    %v481 = vsel %vm480, %v473, %v477
    %v482 = vand.u32 2147483647, %v472
    %vm483 = vcmp.eq.f32.partialorder %v482, 8.507059e+37
    %v484 = vand.u32 %v472, 2147483648
    %v485 = vor.u32 1.1754944e-38, %v484
    %v486 = vsel %vm483, %v485, %v481
    %v487 = vmul.f32 1.0, %v486
    %488 = vrot.lane.b32.xlu0 %v250, 24
    %v489 = vpop.permute.xlu0 %488
    %v491 = vmul.f32 %v487, %v489
    %493 = vrot.lane.b32.xlu0 %v491, 8
    %v494 = vpop.permute.xlu0 %493
    %v496 = vadd.f32 %v464, %v494
    %v497 = vtanh.pop %v496
    %v498 = vsub.f32 1.0, %v487
    %500 = vrot.lane.b32.xlu0 %v497, 124
    %v501 = vpop.permute.xlu0 %500
    %v503 = vmul.f32 %v498, %v501
    %504 = vrot.lane.b32.xlu0 %v79, 94
    %v505 = vpop.permute.xlu0 %504
    %v507 = vmul.f32 %v487, %v505
    %v508 = vadd.f32 %v503, %v507
    %v509 = vpack.c.bf16 %v508, %v508
    %v510 = vperm.slane %v77, 0
    %512 = vrot.lane.b32.xlu0 %v509, 124
    %v513 = vpop.permute.xlu0 %512
    %v515 = vsel %vm81, %v513, 0
    %v518 = vsel %vm236, %v57, 0
    %520 = vmatpush.bf16.msra.mxu0 0
    %521 = vmatpush.bf16.msra.mxu0 0
    %522 = vmatpush.bf16.msra.mxu0 0
    %523 = vmatpush.bf16.msra.mxu0 0
    %524 = vmatpush.bf16.msra.mxu0 0
    %525 = vmatpush.bf16.msra.mxu0 0
    %526 = vmatpush.bf16.msra.mxu0 0
    %527 = vmatpush.bf16.msra.mxu0 %v518
    %528 = vmatmul.bf16.gmra.mxu0 %v515
    %v529 = vpop.f32.mrf.mxu0
    %v530 = vadd.f32 %v510, %v529
    %v531 = vpop.f32.mrf.mxu0
    %532 = vdwg.mxu0
    %534 = vrot.lane.b32.xlu0 %v530, 4
    %v535 = vpop.permute.xlu0 %534
    %v537 = vadd.f32 %v440, %v535
    %v538 = vmax.f32 %v537, 0.0
    %v539 = vpack.c.bf16 %v538, %v538
    %v540 = vperm.slane %v78, 0
    %542 = vrot.lane.b32.xlu0 %v539, 124
    %v543 = vpop.permute.xlu0 %542
    %v554 = vunpack.c.l.b16 %v58
    %v555 = vunpack.c.l.b16 %v59
    %v556 = vunpack.c.l.b16 %v60
    %v557 = vunpack.c.l.b16 %v61
    %v558 = vunpack.c.l.b16 %v62
    %v559 = vunpack.c.l.b16 %v63
    %v560 = vunpack.c.l.b16 %v64
    %v561 = vunpack.c.l.b16 %v65
    %v562 = vunpack.c.l.b16 %v66
    %v563 = vunpack.c.l.b16 %v67
    %v564 = vpack.c.b16 %v555, %v554
    %v565 = vpack.c.b16 %v557, %v556
    %v566 = vpack.c.b16 %v559, %v558
    %v567 = vpack.c.b16 %v561, %v560
    %v568 = vpack.c.b16 %v563, %v562
    %vm574 = vcmask 654336
    %v576 = vsel %vm574, %v543, 0
    %578 = vmatpush.bf16.msra.mxu0 0
    %579 = vmatpush.bf16.msra.mxu0 0
    %580 = vmatpush.bf16.msra.mxu0 0
    %581 = vmatpush.bf16.msra.mxu0 %v568
    %582 = vmatpush.bf16.msra.mxu0 %v567
    %583 = vmatpush.bf16.msra.mxu0 %v566
    %584 = vmatpush.bf16.msra.mxu0 %v565
    %585 = vmatpush.bf16.msra.mxu0 %v564
    %586 = vmatmul.bf16.gmra.mxu0 %v576
    %v587 = vpop.f32.mrf.mxu0
    %v588 = vadd.f32 %v540, %v587
    %v589 = vpop.f32.mrf.mxu0
    %590 = vdwg.mxu0
    %v591 = vpack.c.bf16 %v588, %v588
    %v593 = vsel %vm181, %v591, 0
    %v596 = vsel %vm85, %v68, 0
    %598 = vmatpush.bf16.msra.mxu0 0
    %599 = vmatpush.bf16.msra.mxu0 0
    %600 = vmatpush.bf16.msra.mxu0 0
    %601 = vmatpush.bf16.msra.mxu0 0
    %602 = vmatpush.bf16.msra.mxu0 0
    %603 = vmatpush.bf16.msra.mxu0 0
    %604 = vmatpush.bf16.msra.mxu0 0
    %605 = vmatpush.bf16.msra.mxu0 %v596
    %606 = vmatmul.bf16.gmra.mxu0 %v593
    %v607 = vpop.f32.mrf.mxu0
    %v608 = vadd.f32 0.0, %v607
    %v609 = vpop.f32.mrf.mxu0
    %610 = vdwg.mxu0
    %612 = vrot.lane.b32.xlu0 %v608, 80
    %v613 = vpop.permute.xlu0 %612
    %v615 = vadd.f32 %v530, %v613
    %v616 = vmax.f32 %v615, 0.0
    %v617 = vpack.c.bf16 %v616, %v616
    %619 = vrot.lane.b32.xlu0 %v617, 48
    %v620 = vpop.permute.xlu0 %619
    %v623 = vunpack.c.l.b16 %v69
    %v624 = vunpack.c.l.b16 %v70
    %v625 = vpack.c.b16 %v624, %v623
    %v628 = vsel %vm353, %v620, 0
    %630 = vmatpush.bf16.msra.mxu0 0
    %631 = vmatpush.bf16.msra.mxu0 0
    %632 = vmatpush.bf16.msra.mxu0 0
    %633 = vmatpush.bf16.msra.mxu0 0
    %634 = vmatpush.bf16.msra.mxu0 0
    %635 = vmatpush.bf16.msra.mxu0 0
    %636 = vmatpush.bf16.msra.mxu0 0
    %637 = vmatpush.bf16.msra.mxu0 %v625
    %638 = vmatmul.bf16.gmra.mxu0 %v628
    %v639 = vpop.f32.mrf.mxu0
    %v640 = vadd.f32 0.0, %v639
    %v641 = vpop.f32.mrf.mxu0
    %642 = vdwg.mxu0
    %644 = vrot.lane.b32.xlu0 %v640, 84
    %v645 = vpop.permute.xlu0 %644
    %v647 = vadd.f32 %v440, %v645
    %v648 = vmax.f32 %v647, 0.0
    %650 = vrot.lane.b32.xlu0 %v134, 2
    %v651 = vpop.permute.xlu0 %650
    %653 = vrot.lane.b32.xlu0 %v134, 4
    %v654 = vpop.permute.xlu0 %653
    %656 = vrot.lane.b32.xlu0 %v134, 6
    %v657 = vpop.permute.xlu0 %656
    %v659 = vsel %vm114, %v134, %v651
    %v660 = vsel %vm81, %v659, %v654
    %vm661 = vcmask 48128
    %v662 = vsel %vm661, %v660, %v657
    %v663 = vmul.f32 %v588, %v662
    %v665 = vsel %vm181, %v663, 0
    %667 = vmatpush.msra.mxu0 0.0
    %668 = vmatpush.msra.mxu0 0.0
    %669 = vmatpush.msra.mxu0 0.0
    %670 = vmatpush.msra.mxu0 0.0
    %671 = vmatpush.msra.mxu0 0.0
    %672 = vmatpush.msra.mxu0 0.0
    %673 = vmatpush.msra.mxu0 0.0
    %674 = vmatpush.msra.mxu0 0.0
    %675 = vmatpush.msra.mxu0 0.0
    %676 = vmatpush.msra.mxu0 0.0
    %677 = vmatpush.msra.mxu0 0.0
    %678 = vmatpush.msra.mxu0 0.0
    %679 = vmatpush.msra.mxu0 0.0
    %680 = vmatpush.msra.mxu0 0.0
    %681 = vmatpush.msra.mxu0 0.0
    %682 = vmatpush.msra.mxu0 %v72
    %683 = vmatmul.f32.gmra.mxu0 %v665
    %v684 = vpop.f32.mrf.mxu0
    %v685 = vadd.f32 0.0, %v684
    %686 = vdwg.mxu0
    %v687 = vadd.f32 %v107, %v685
    %688 = vst.msk [vmem:[%s4] sm:$0xff] %vm81, %v687
    %690 = vrot.lane.b32.xlu0 %v342, 52
    %v691 = vpop.permute.xlu0 %690
    %694 = vrot.lane.b32.xlu0 %v648, 60
    %v695 = vpop.permute.xlu0 %694
    %698 = vrot.lane.b32.xlu0 %v508, 28
    %v699 = vpop.permute.xlu0 %698
    %v701 = vsel %vm353, %v691, %v695
    %vm702 = vcmask 261120
    %v703 = vsel %vm702, %v701, %v699
    %s704 = scalar_lea.vmem %s0, 8
    %v705 = vld [vmem:[%s704] sm:$0xff]
    %v707 = vsel %vm81, %v687, 0
    %709 = vmatpush.msra.mxu0 0.0
    %710 = vmatpush.msra.mxu0 0.0
    %711 = vmatpush.msra.mxu0 0.0
    %712 = vmatpush.msra.mxu0 0.0
    %713 = vmatpush.msra.mxu0 0.0
    %714 = vmatpush.msra.mxu0 0.0
    %715 = vmatpush.msra.mxu0 0.0
    %716 = vmatpush.msra.mxu0 0.0
    %717 = vmatpush.msra.mxu0 0.0
    %718 = vmatpush.msra.mxu0 0.0
    %719 = vmatpush.msra.mxu0 0.0
    %720 = vmatpush.msra.mxu0 0.0
    %721 = vmatpush.msra.mxu0 0.0
    %722 = vmatpush.msra.mxu0 0.0
    %723 = vmatpush.msra.mxu0 0.0
    %724 = vmatpush.msra.mxu0 %v87
    %725 = vmatmul.f32.gmra.mxu0 %v707
    %v726 = vpop.f32.mrf.mxu0
    %v727 = vadd.f32 0.0, %v726
    %728 = vdwg.mxu0
    %v729 = vsub.f32 %v705, %v80
    %v730 = vmul.f32 %v729, %v729
    %v731 = vsel %vm114, %v730, 0.0
    %732 = vadd.xlane.f32.xlu0 %v731
    %v733 = vpop.xlane.xlu0 %732
    %v734 = vmax.f32 %v733, 1e-24
    %v735 = vrsqrt.pop %v734
    %v736 = vmul.f32 %v735, %v734
    %v737 = vmul.f32 %v736, %v735
    %v738 = vmul.f32 0.5, %v737
    %v739 = vsub.f32 1.5, %v738
    %v740 = vmul.f32 %v735, %v739
    %vm741 = vweird.f32 %v734
    %vm742 = vweird.f32 %v735
    %vm743 = vmor %vm741, %vm742
    %v744 = vsel %vm743, %v735, %v740
    %v745 = vmul.f32 %v729, %v744
    %747 = vrot.lane.b32.xlu0 %v727, 124
    %v748 = vpop.permute.xlu0 %747
    %v750 = vsub.f32 %v705, %v748
    %v751 = vmul.f32 %v750, %v750
    %v752 = vsel %vm114, %v751, 0.0
    %753 = vadd.xlane.f32.xlu0 %v752
    %v754 = vpop.xlane.xlu0 %753
    %v755 = vmax.f32 %v754, 1e-24
    %v756 = vrsqrt.pop %v755
    %v757 = vmul.f32 %v756, %v755
    %v758 = vmul.f32 %v757, %v756
    %v759 = vmul.f32 0.5, %v758
    %v760 = vsub.f32 1.5, %v759
    %v761 = vmul.f32 %v756, %v760
    %vm762 = vweird.f32 %v755
    %vm763 = vweird.f32 %v756
    %vm764 = vmor %vm762, %vm763
    %v765 = vsel %vm764, %v756, %v761
    %v766 = vmul.f32 %v750, %v765
    %v767 = vsub.f32 %v687, %v79
    %v768 = vmul.f32 %v767, %v767
    %v769 = vsel %vm81, %v768, 0.0
    %770 = vadd.xlane.f32.xlu0 %v769
    %v771 = vpop.xlane.xlu0 %770
    %v772 = vmax.f32 %v771, 1e-24
    %v773 = vrsqrt.pop %v772
    %v774 = vmul.f32 %v773, %v772
    %v775 = vmul.f32 %v774, %v773
    %v776 = vmul.f32 0.5, %v775
    %v777 = vsub.f32 1.5, %v776
    %v778 = vmul.f32 %v773, %v777
    %vm779 = vweird.f32 %v772
    %vm780 = vweird.f32 %v773
    %vm781 = vmor %vm779, %vm780
    %v782 = vsel %vm781, %v773, %v778
    %v783 = vmul.f32 %v767, %v782
    %v784 = vsub.f32 %v687, %v107
    %v785 = vmul.f32 %v784, %v784
    %v786 = vsel %vm81, %v785, 0.0
    %787 = vadd.xlane.f32.xlu0 %v786
    %v788 = vpop.xlane.xlu0 %787
    %v789 = vmax.f32 %v788, 1e-24
    %v790 = vrsqrt.pop %v789
    %v791 = vmul.f32 %v790, %v789
    %v792 = vmul.f32 %v791, %v790
    %v793 = vmul.f32 0.5, %v792
    %v794 = vsub.f32 1.5, %v793
    %v795 = vmul.f32 %v790, %v794
    %vm796 = vweird.f32 %v789
    %vm797 = vweird.f32 %v790
    %vm798 = vmor %vm796, %vm797
    %v799 = vsel %vm798, %v790, %v795
    %v800 = vmul.f32 %v784, %v799
    %802 = vrot.lane.b32.xlu0 %v766, 2
    %v803 = vpop.permute.xlu0 %802
    %806 = vrot.lane.b32.xlu0 %v783, 4
    %v807 = vpop.permute.xlu0 %806
    %810 = vrot.lane.b32.xlu0 %v800, 8
    %v811 = vpop.permute.xlu0 %810
    %v813 = vsel %vm114, %v745, %v803
    %v814 = vsel %vm81, %v813, %v807
    %v815 = vsel %vm181, %v814, %v811
    %v816 = vpack.c.bf16 %v815, %v815
    %v818 = vsel %vm190, %v816, 0
    %820 = vmatpush.bf16.msra.mxu0 0
    %821 = vmatpush.bf16.msra.mxu0 0
    %822 = vmatpush.bf16.msra.mxu0 0
    %823 = vmatpush.bf16.msra.mxu0 0
    %824 = vmatpush.bf16.msra.mxu0 0
    %825 = vmatpush.bf16.msra.mxu0 0
    %826 = vmatpush.bf16.msra.mxu0 0
    %827 = vmatpush.bf16.msra.mxu0 %v196
    %828 = vmatmul.bf16.gmra.mxu0 %v818
    %v829 = vpop.f32.mrf.mxu0
    %v830 = vadd.f32 %v184, %v829
    %v831 = vpop.f32.mrf.mxu0
    %832 = vdwg.mxu0
    %v833 = vmax.f32 %v830, 0.0
    %v834 = vpack.c.bf16 %v703, %v703
    %v836 = vsel %vm232, %v834, 0
    %838 = vmatpush.bf16.msra.mxu0 0
    %839 = vmatpush.bf16.msra.mxu0 0
    %840 = vmatpush.bf16.msra.mxu0 0
    %841 = vmatpush.bf16.msra.mxu0 0
    %842 = vmatpush.bf16.msra.mxu0 0
    %843 = vmatpush.bf16.msra.mxu0 %v238
    %844 = vmatpush.bf16.msra.mxu0 %v228
    %845 = vmatpush.bf16.msra.mxu0 %v227
    %846 = vmatmul.bf16.gmra.mxu0 %v836
    %v847 = vpop.f32.mrf.mxu0
    %v848 = vadd.f32 %v213, %v847
    %v849 = vpop.f32.mrf.mxu0
    %850 = vdwg.mxu0
    %v851 = vpack.c.bf16 %v833, %v833
    %v853 = vsel %vm278, %v851, 0
    %855 = vmatpush.bf16.msra.mxu0 0
    %856 = vmatpush.bf16.msra.mxu0 0
    %857 = vmatpush.bf16.msra.mxu0 0
    %858 = vmatpush.bf16.msra.mxu0 0
    %859 = vmatpush.bf16.msra.mxu0 %v283
    %860 = vmatpush.bf16.msra.mxu0 %v273
    %861 = vmatpush.bf16.msra.mxu0 %v272
    %862 = vmatpush.bf16.msra.mxu0 %v271
    %863 = vmatmul.bf16.gmra.mxu0 %v853
    %v864 = vpop.f32.mrf.mxu0
    %v865 = vadd.f32 %v254, %v864
    %v866 = vpop.f32.mrf.mxu0
    %867 = vdwg.mxu0
    %869 = vrot.lane.b32.xlu0 %v848, 60
    %v870 = vpop.permute.xlu0 %869
    %v872 = vadd.f32 %v865, %v870
    %v873 = vxor.u32 %v872, 2147483648
    %v874 = vmul.f32 %v873, 1.442695
    %v875 = vpow.pop %v874
    %v876 = vadd.f32 %v875, 1.0
    %v877 = vrcp.pop %v876
    %v878 = vmul.f32 %v876, %v877
    %v879 = vsub.f32 1.0, %v878
    %v880 = vmul.f32 %v877, %v879
    %v881 = vadd.f32 %v877, %v880
    %vm882 = vweird.f32 %v876
    %vm883 = vweird.f32 %v877
    %vm884 = vmor %vm882, %vm883
    %v885 = vsel %vm884, %v877, %v881
    %v886 = vand.u32 2147483647, %v876
    %vm887 = vcmp.eq.f32.partialorder %v886, 8.507059e+37
    %v888 = vand.u32 %v876, 2147483648
    %v889 = vor.u32 1.1754944e-38, %v888
    %v890 = vsel %vm887, %v889, %v885
    %v891 = vmul.f32 1.0, %v890
    %892 = vrot.lane.b32.xlu0 %v848, 28
    %v893 = vpop.permute.xlu0 %892
    %v895 = vmul.f32 %v891, %v893
    %897 = vrot.lane.b32.xlu0 %v895, 32
    %v898 = vpop.permute.xlu0 %897
    %v900 = vadd.f32 %v865, %v898
    %v901 = vtanh.pop %v900
    %v902 = vsub.f32 1.0, %v891
    %904 = vrot.lane.b32.xlu0 %v901, 112
    %v905 = vpop.permute.xlu0 %904
    %v907 = vmul.f32 %v902, %v905
    %909 = vrot.lane.b32.xlu0 %v703, 76
    %v910 = vpop.permute.xlu0 %909
    %v912 = vmul.f32 %v891, %v910
    %v913 = vadd.f32 %v907, %v912
    %v914 = vpack.c.bf16 %v913, %v913
    %916 = vrot.lane.b32.xlu0 %v914, 52
    %v917 = vpop.permute.xlu0 %916
    %v919 = vsel %vm353, %v917, 0
    %921 = vmatpush.bf16.msra.mxu0 0
    %922 = vmatpush.bf16.msra.mxu0 0
    %923 = vmatpush.bf16.msra.mxu0 0
    %924 = vmatpush.bf16.msra.mxu0 0
    %925 = vmatpush.bf16.msra.mxu0 0
    %926 = vmatpush.bf16.msra.mxu0 0
    %927 = vmatpush.bf16.msra.mxu0 0
    %928 = vmatpush.bf16.msra.mxu0 %v351
    %929 = vmatmul.bf16.gmra.mxu0 %v919
    %v930 = vpop.f32.mrf.mxu0
    %v931 = vadd.f32 0.0, %v930
    %v932 = vpop.f32.mrf.mxu0
    %933 = vdwg.mxu0
    %935 = vrot.lane.b32.xlu0 %v931, 12
    %v936 = vpop.permute.xlu0 %935
    %v938 = vadd.f32 %v865, %v936
    %939 = vrot.lane.b32.xlu0 %v848, 92
    %v940 = vpop.permute.xlu0 %939
    %v942 = vadd.f32 %v938, %v940
    %v943 = vxor.u32 %v942, 2147483648
    %v944 = vmul.f32 %v943, 1.442695
    %v945 = vpow.pop %v944
    %v946 = vadd.f32 %v945, 1.0
    %v947 = vrcp.pop %v946
    %v948 = vmul.f32 %v946, %v947
    %v949 = vsub.f32 1.0, %v948
    %v950 = vmul.f32 %v947, %v949
    %v951 = vadd.f32 %v947, %v950
    %vm952 = vweird.f32 %v946
    %vm953 = vweird.f32 %v947
    %vm954 = vmor %vm952, %vm953
    %v955 = vsel %vm954, %v947, %v951
    %v956 = vand.u32 2147483647, %v946
    %vm957 = vcmp.eq.f32.partialorder %v956, 8.507059e+37
    %v958 = vand.u32 %v946, 2147483648
    %v959 = vor.u32 1.1754944e-38, %v958
    %v960 = vsel %vm957, %v959, %v955
    %v961 = vmul.f32 1.0, %v960
    %v962 = vmul.f32 %v961, %v870
    %964 = vrot.lane.b32.xlu0 %v962, 32
    %v965 = vpop.permute.xlu0 %964
    %v967 = vadd.f32 %v938, %v965
    %v968 = vtanh.pop %v967
    %v969 = vsub.f32 1.0, %v961
    %971 = vrot.lane.b32.xlu0 %v968, 112
    %v972 = vpop.permute.xlu0 %971
    %v974 = vmul.f32 %v969, %v972
    %975 = vrot.lane.b32.xlu0 %v703, 12
    %v976 = vpop.permute.xlu0 %975
    %v978 = vmul.f32 %v961, %v976
    %v979 = vadd.f32 %v974, %v978
    %v980 = vpack.c.bf16 %v979, %v979
    %982 = vrot.lane.b32.xlu0 %v980, 100
    %v983 = vpop.permute.xlu0 %982
    %v985 = vsel %vm353, %v983, 0
    %987 = vmatpush.bf16.msra.mxu0 0
    %988 = vmatpush.bf16.msra.mxu0 0
    %989 = vmatpush.bf16.msra.mxu0 0
    %990 = vmatpush.bf16.msra.mxu0 0
    %991 = vmatpush.bf16.msra.mxu0 0
    %992 = vmatpush.bf16.msra.mxu0 0
    %993 = vmatpush.bf16.msra.mxu0 0
    %994 = vmatpush.bf16.msra.mxu0 %v425
    %995 = vmatmul.bf16.gmra.mxu0 %v985
    %v996 = vpop.f32.mrf.mxu0
    %v997 = vadd.f32 %v417, %v996
    %v998 = vpop.f32.mrf.mxu0
    %999 = vdwg.mxu0
    %v1000 = vmax.f32 %v997, 0.0
    %v1001 = vpack.c.bf16 %v1000, %v1000
    %v1003 = vsel %vm81, %v1001, 0
    %1005 = vmatpush.bf16.msra.mxu0 0
    %1006 = vmatpush.bf16.msra.mxu0 0
    %1007 = vmatpush.bf16.msra.mxu0 0
    %1008 = vmatpush.bf16.msra.mxu0 0
    %1009 = vmatpush.bf16.msra.mxu0 0
    %1010 = vmatpush.bf16.msra.mxu0 0
    %1011 = vmatpush.bf16.msra.mxu0 0
    %1012 = vmatpush.bf16.msra.mxu0 %v449
    %1013 = vmatmul.bf16.gmra.mxu0 %v1003
    %v1014 = vpop.f32.mrf.mxu0
    %v1015 = vadd.f32 0.0, %v1014
    %v1016 = vpop.f32.mrf.mxu0
    %1017 = vdwg.mxu0
    %v1018 = vadd.f32 %v865, %v1015
    %1019 = vrot.lane.b32.xlu0 %v848, 32
    %v1020 = vpop.permute.xlu0 %1019
    %v1022 = vadd.f32 %v1018, %v1020
    %v1023 = vxor.u32 %v1022, 2147483648
    %v1024 = vmul.f32 %v1023, 1.442695
    %v1025 = vpow.pop %v1024
    %v1026 = vadd.f32 %v1025, 1.0
    %v1027 = vrcp.pop %v1026
    %v1028 = vmul.f32 %v1026, %v1027
    %v1029 = vsub.f32 1.0, %v1028
    %v1030 = vmul.f32 %v1027, %v1029
    %v1031 = vadd.f32 %v1027, %v1030
    %vm1032 = vweird.f32 %v1026
    %vm1033 = vweird.f32 %v1027
    %vm1034 = vmor %vm1032, %vm1033
    %v1035 = vsel %vm1034, %v1027, %v1031
    %v1036 = vand.u32 2147483647, %v1026
    %vm1037 = vcmp.eq.f32.partialorder %v1036, 8.507059e+37
    %v1038 = vand.u32 %v1026, 2147483648
    %v1039 = vor.u32 1.1754944e-38, %v1038
    %v1040 = vsel %vm1037, %v1039, %v1035
    %v1041 = vmul.f32 1.0, %v1040
    %1042 = vrot.lane.b32.xlu0 %v848, 24
    %v1043 = vpop.permute.xlu0 %1042
    %v1045 = vmul.f32 %v1041, %v1043
    %1047 = vrot.lane.b32.xlu0 %v1045, 8
    %v1048 = vpop.permute.xlu0 %1047
    %v1050 = vadd.f32 %v1018, %v1048
    %v1051 = vtanh.pop %v1050
    %v1052 = vsub.f32 1.0, %v1041
    %1054 = vrot.lane.b32.xlu0 %v1051, 124
    %v1055 = vpop.permute.xlu0 %1054
    %v1057 = vmul.f32 %v1052, %v1055
    %1058 = vrot.lane.b32.xlu0 %v703, 100
    %v1059 = vpop.permute.xlu0 %1058
    %v1061 = vmul.f32 %v1041, %v1059
    %v1062 = vadd.f32 %v1057, %v1061
    %v1063 = vpack.c.bf16 %v1062, %v1062
    %1065 = vrot.lane.b32.xlu0 %v1063, 124
    %v1066 = vpop.permute.xlu0 %1065
    %v1068 = vsel %vm81, %v1066, 0
    %1070 = vmatpush.bf16.msra.mxu0 0
    %1071 = vmatpush.bf16.msra.mxu0 0
    %1072 = vmatpush.bf16.msra.mxu0 0
    %1073 = vmatpush.bf16.msra.mxu0 0
    %1074 = vmatpush.bf16.msra.mxu0 0
    %1075 = vmatpush.bf16.msra.mxu0 0
    %1076 = vmatpush.bf16.msra.mxu0 0
    %1077 = vmatpush.bf16.msra.mxu0 %v518
    %1078 = vmatmul.bf16.gmra.mxu0 %v1068
    %v1079 = vpop.f32.mrf.mxu0
    %v1080 = vadd.f32 %v510, %v1079
    %v1081 = vpop.f32.mrf.mxu0
    %1082 = vdwg.mxu0
    %1084 = vrot.lane.b32.xlu0 %v1080, 4
    %v1085 = vpop.permute.xlu0 %1084
    %v1087 = vadd.f32 %v997, %v1085
    %v1088 = vmax.f32 %v1087, 0.0
    %v1089 = vpack.c.bf16 %v1088, %v1088
    %1091 = vrot.lane.b32.xlu0 %v1089, 124
    %v1092 = vpop.permute.xlu0 %1091
    %v1094 = vsel %vm574, %v1092, 0
    %1096 = vmatpush.bf16.msra.mxu0 0
    %1097 = vmatpush.bf16.msra.mxu0 0
    %1098 = vmatpush.bf16.msra.mxu0 0
    %1099 = vmatpush.bf16.msra.mxu0 %v568
    %1100 = vmatpush.bf16.msra.mxu0 %v567
    %1101 = vmatpush.bf16.msra.mxu0 %v566
    %1102 = vmatpush.bf16.msra.mxu0 %v565
    %1103 = vmatpush.bf16.msra.mxu0 %v564
    %1104 = vmatmul.bf16.gmra.mxu0 %v1094
    %v1105 = vpop.f32.mrf.mxu0
    %v1106 = vadd.f32 %v540, %v1105
    %v1107 = vpop.f32.mrf.mxu0
    %1108 = vdwg.mxu0
    %v1109 = vpack.c.bf16 %v1106, %v1106
    %v1111 = vsel %vm181, %v1109, 0
    %1113 = vmatpush.bf16.msra.mxu0 0
    %1114 = vmatpush.bf16.msra.mxu0 0
    %1115 = vmatpush.bf16.msra.mxu0 0
    %1116 = vmatpush.bf16.msra.mxu0 0
    %1117 = vmatpush.bf16.msra.mxu0 0
    %1118 = vmatpush.bf16.msra.mxu0 0
    %1119 = vmatpush.bf16.msra.mxu0 0
    %1120 = vmatpush.bf16.msra.mxu0 %v596
    %1121 = vmatmul.bf16.gmra.mxu0 %v1111
    %v1122 = vpop.f32.mrf.mxu0
    %v1123 = vadd.f32 0.0, %v1122
    %v1124 = vpop.f32.mrf.mxu0
    %1125 = vdwg.mxu0
    %1127 = vrot.lane.b32.xlu0 %v1123, 80
    %v1128 = vpop.permute.xlu0 %1127
    %v1130 = vadd.f32 %v1080, %v1128
    %v1131 = vmax.f32 %v1130, 0.0
    %v1132 = vpack.c.bf16 %v1131, %v1131
    %1134 = vrot.lane.b32.xlu0 %v1132, 48
    %v1135 = vpop.permute.xlu0 %1134
    %v1137 = vsel %vm353, %v1135, 0
    %1139 = vmatpush.bf16.msra.mxu0 0
    %1140 = vmatpush.bf16.msra.mxu0 0
    %1141 = vmatpush.bf16.msra.mxu0 0
    %1142 = vmatpush.bf16.msra.mxu0 0
    %1143 = vmatpush.bf16.msra.mxu0 0
    %1144 = vmatpush.bf16.msra.mxu0 0
    %1145 = vmatpush.bf16.msra.mxu0 0
    %1146 = vmatpush.bf16.msra.mxu0 %v625
    %1147 = vmatmul.bf16.gmra.mxu0 %v1137
    %v1148 = vpop.f32.mrf.mxu0
    %v1149 = vadd.f32 0.0, %v1148
    %v1150 = vpop.f32.mrf.mxu0
    %1151 = vdwg.mxu0
    %1153 = vrot.lane.b32.xlu0 %v1149, 84
    %v1154 = vpop.permute.xlu0 %1153
    %v1156 = vadd.f32 %v997, %v1154
    %v1157 = vmax.f32 %v1156, 0.0
    %1159 = vrot.lane.b32.xlu0 %v750, 2
    %v1160 = vpop.permute.xlu0 %1159
    %1162 = vrot.lane.b32.xlu0 %v750, 4
    %v1163 = vpop.permute.xlu0 %1162
    %1165 = vrot.lane.b32.xlu0 %v750, 6
    %v1166 = vpop.permute.xlu0 %1165
    %v1168 = vsel %vm114, %v750, %v1160
    %v1169 = vsel %vm81, %v1168, %v1163
    %v1170 = vsel %vm661, %v1169, %v1166
    %v1171 = vmul.f32 %v1106, %v1170
    %v1173 = vsel %vm181, %v1171, 0
    %1175 = vmatpush.msra.mxu0 0.0
    %1176 = vmatpush.msra.mxu0 0.0
    %1177 = vmatpush.msra.mxu0 0.0
    %1178 = vmatpush.msra.mxu0 0.0
    %1179 = vmatpush.msra.mxu0 0.0
    %1180 = vmatpush.msra.mxu0 0.0
    %1181 = vmatpush.msra.mxu0 0.0
    %1182 = vmatpush.msra.mxu0 0.0
    %1183 = vmatpush.msra.mxu0 0.0
    %1184 = vmatpush.msra.mxu0 0.0
    %1185 = vmatpush.msra.mxu0 0.0
    %1186 = vmatpush.msra.mxu0 0.0
    %1187 = vmatpush.msra.mxu0 0.0
    %1188 = vmatpush.msra.mxu0 0.0
    %1189 = vmatpush.msra.mxu0 0.0
    %1190 = vmatpush.msra.mxu0 %v72
    %1191 = vmatmul.f32.gmra.mxu0 %v1173
    %v1192 = vpop.f32.mrf.mxu0
    %v1193 = vadd.f32 0.0, %v1192
    %1194 = vdwg.mxu0
    %v1195 = vadd.f32 %v727, %v1193
    %s1196 = scalar_lea.vmem %s4, 8
    %1197 = vst.msk [vmem:[%s1196] sm:$0xff] %vm81, %v1195
    %1199 = vrot.lane.b32.xlu0 %v913, 52
    %v1200 = vpop.permute.xlu0 %1199
    %1203 = vrot.lane.b32.xlu0 %v1157, 60
    %v1204 = vpop.permute.xlu0 %1203
    %1207 = vrot.lane.b32.xlu0 %v1062, 28
    %v1208 = vpop.permute.xlu0 %1207
    %v1210 = vsel %vm353, %v1200, %v1204
    %v1211 = vsel %vm702, %v1210, %v1208
    %s1212 = scalar_lea.vmem %s0, 16
    %v1213 = vld [vmem:[%s1212] sm:$0xff]
    %v1215 = vsel %vm81, %v1195, 0
    %1217 = vmatpush.msra.mxu0 0.0
    %1218 = vmatpush.msra.mxu0 0.0
    %1219 = vmatpush.msra.mxu0 0.0
    %1220 = vmatpush.msra.mxu0 0.0
    %1221 = vmatpush.msra.mxu0 0.0
    %1222 = vmatpush.msra.mxu0 0.0
    %1223 = vmatpush.msra.mxu0 0.0
    %1224 = vmatpush.msra.mxu0 0.0
    %1225 = vmatpush.msra.mxu0 0.0
    %1226 = vmatpush.msra.mxu0 0.0
    %1227 = vmatpush.msra.mxu0 0.0
    %1228 = vmatpush.msra.mxu0 0.0
    %1229 = vmatpush.msra.mxu0 0.0
    %1230 = vmatpush.msra.mxu0 0.0
    %1231 = vmatpush.msra.mxu0 0.0
    %1232 = vmatpush.msra.mxu0 %v87
    %1233 = vmatmul.f32.gmra.mxu0 %v1215
    %v1234 = vpop.f32.mrf.mxu0
    %v1235 = vadd.f32 0.0, %v1234
    %1236 = vdwg.mxu0
    %v1237 = vsub.f32 %v1213, %v705
    %v1238 = vmul.f32 %v1237, %v1237
    %v1239 = vsel %vm114, %v1238, 0.0
    %1240 = vadd.xlane.f32.xlu0 %v1239
    %v1241 = vpop.xlane.xlu0 %1240
    %v1242 = vmax.f32 %v1241, 1e-24
    %v1243 = vrsqrt.pop %v1242
    %v1244 = vmul.f32 %v1243, %v1242
    %v1245 = vmul.f32 %v1244, %v1243
    %v1246 = vmul.f32 0.5, %v1245
    %v1247 = vsub.f32 1.5, %v1246
    %v1248 = vmul.f32 %v1243, %v1247
    %vm1249 = vweird.f32 %v1242
    %vm1250 = vweird.f32 %v1243
    %vm1251 = vmor %vm1249, %vm1250
    %v1252 = vsel %vm1251, %v1243, %v1248
    %v1253 = vmul.f32 %v1237, %v1252
    %1255 = vrot.lane.b32.xlu0 %v1235, 124
    %v1256 = vpop.permute.xlu0 %1255
    %v1258 = vsub.f32 %v1213, %v1256
    %v1259 = vmul.f32 %v1258, %v1258
    %v1260 = vsel %vm114, %v1259, 0.0
    %1261 = vadd.xlane.f32.xlu0 %v1260
    %v1262 = vpop.xlane.xlu0 %1261
    %v1263 = vmax.f32 %v1262, 1e-24
    %v1264 = vrsqrt.pop %v1263
    %v1265 = vmul.f32 %v1264, %v1263
    %v1266 = vmul.f32 %v1265, %v1264
    %v1267 = vmul.f32 0.5, %v1266
    %v1268 = vsub.f32 1.5, %v1267
    %v1269 = vmul.f32 %v1264, %v1268
    %vm1270 = vweird.f32 %v1263
    %vm1271 = vweird.f32 %v1264
    %vm1272 = vmor %vm1270, %vm1271
    %v1273 = vsel %vm1272, %v1264, %v1269
    %v1274 = vmul.f32 %v1258, %v1273
    %v1275 = vsub.f32 %v1195, %v687
    %v1276 = vmul.f32 %v1275, %v1275
    %v1277 = vsel %vm81, %v1276, 0.0
    %1278 = vadd.xlane.f32.xlu0 %v1277
    %v1279 = vpop.xlane.xlu0 %1278
    %v1280 = vmax.f32 %v1279, 1e-24
    %v1281 = vrsqrt.pop %v1280
    %v1282 = vmul.f32 %v1281, %v1280
    %v1283 = vmul.f32 %v1282, %v1281
    %v1284 = vmul.f32 0.5, %v1283
    %v1285 = vsub.f32 1.5, %v1284
    %v1286 = vmul.f32 %v1281, %v1285
    %vm1287 = vweird.f32 %v1280
    %vm1288 = vweird.f32 %v1281
    %vm1289 = vmor %vm1287, %vm1288
    %v1290 = vsel %vm1289, %v1281, %v1286
    %v1291 = vmul.f32 %v1275, %v1290
    %v1292 = vsub.f32 %v1195, %v727
    %v1293 = vmul.f32 %v1292, %v1292
    %v1294 = vsel %vm81, %v1293, 0.0
    %1295 = vadd.xlane.f32.xlu0 %v1294
    %v1296 = vpop.xlane.xlu0 %1295
    %v1297 = vmax.f32 %v1296, 1e-24
    %v1298 = vrsqrt.pop %v1297
    %v1299 = vmul.f32 %v1298, %v1297
    %v1300 = vmul.f32 %v1299, %v1298
    %v1301 = vmul.f32 0.5, %v1300
    %v1302 = vsub.f32 1.5, %v1301
    %v1303 = vmul.f32 %v1298, %v1302
    %vm1304 = vweird.f32 %v1297
    %vm1305 = vweird.f32 %v1298
    %vm1306 = vmor %vm1304, %vm1305
    %v1307 = vsel %vm1306, %v1298, %v1303
    %v1308 = vmul.f32 %v1292, %v1307
    %1310 = vrot.lane.b32.xlu0 %v1274, 2
    %v1311 = vpop.permute.xlu0 %1310
    %1314 = vrot.lane.b32.xlu0 %v1291, 4
    %v1315 = vpop.permute.xlu0 %1314
    %1318 = vrot.lane.b32.xlu0 %v1308, 8
    %v1319 = vpop.permute.xlu0 %1318
    %v1321 = vsel %vm114, %v1253, %v1311
    %v1322 = vsel %vm81, %v1321, %v1315
    %v1323 = vsel %vm181, %v1322, %v1319
    %v1324 = vpack.c.bf16 %v1323, %v1323
    %v1326 = vsel %vm190, %v1324, 0
    %1328 = vmatpush.bf16.msra.mxu0 0
    %1329 = vmatpush.bf16.msra.mxu0 0
    %1330 = vmatpush.bf16.msra.mxu0 0
    %1331 = vmatpush.bf16.msra.mxu0 0
    %1332 = vmatpush.bf16.msra.mxu0 0
    %1333 = vmatpush.bf16.msra.mxu0 0
    %1334 = vmatpush.bf16.msra.mxu0 0
    %1335 = vmatpush.bf16.msra.mxu0 %v196
    %1336 = vmatmul.bf16.gmra.mxu0 %v1326
    %v1337 = vpop.f32.mrf.mxu0
    %v1338 = vadd.f32 %v184, %v1337
    %v1339 = vpop.f32.mrf.mxu0
    %1340 = vdwg.mxu0
    %v1341 = vmax.f32 %v1338, 0.0
    %v1342 = vpack.c.bf16 %v1211, %v1211
    %v1344 = vsel %vm232, %v1342, 0
    %1346 = vmatpush.bf16.msra.mxu0 0
    %1347 = vmatpush.bf16.msra.mxu0 0
    %1348 = vmatpush.bf16.msra.mxu0 0
    %1349 = vmatpush.bf16.msra.mxu0 0
    %1350 = vmatpush.bf16.msra.mxu0 0
    %1351 = vmatpush.bf16.msra.mxu0 %v238
    %1352 = vmatpush.bf16.msra.mxu0 %v228
    %1353 = vmatpush.bf16.msra.mxu0 %v227
    %1354 = vmatmul.bf16.gmra.mxu0 %v1344
    %v1355 = vpop.f32.mrf.mxu0
    %v1356 = vadd.f32 %v213, %v1355
    %v1357 = vpop.f32.mrf.mxu0
    %1358 = vdwg.mxu0
    %v1359 = vpack.c.bf16 %v1341, %v1341
    %v1361 = vsel %vm278, %v1359, 0
    %1363 = vmatpush.bf16.msra.mxu0 0
    %1364 = vmatpush.bf16.msra.mxu0 0
    %1365 = vmatpush.bf16.msra.mxu0 0
    %1366 = vmatpush.bf16.msra.mxu0 0
    %1367 = vmatpush.bf16.msra.mxu0 %v283
    %1368 = vmatpush.bf16.msra.mxu0 %v273
    %1369 = vmatpush.bf16.msra.mxu0 %v272
    %1370 = vmatpush.bf16.msra.mxu0 %v271
    %1371 = vmatmul.bf16.gmra.mxu0 %v1361
    %v1372 = vpop.f32.mrf.mxu0
    %v1373 = vadd.f32 %v254, %v1372
    %v1374 = vpop.f32.mrf.mxu0
    %1375 = vdwg.mxu0
    %1377 = vrot.lane.b32.xlu0 %v1356, 60
    %v1378 = vpop.permute.xlu0 %1377
    %v1380 = vadd.f32 %v1373, %v1378
    %v1381 = vxor.u32 %v1380, 2147483648
    %v1382 = vmul.f32 %v1381, 1.442695
    %v1383 = vpow.pop %v1382
    %v1384 = vadd.f32 %v1383, 1.0
    %v1385 = vrcp.pop %v1384
    %v1386 = vmul.f32 %v1384, %v1385
    %v1387 = vsub.f32 1.0, %v1386
    %v1388 = vmul.f32 %v1385, %v1387
    %v1389 = vadd.f32 %v1385, %v1388
    %vm1390 = vweird.f32 %v1384
    %vm1391 = vweird.f32 %v1385
    %vm1392 = vmor %vm1390, %vm1391
    %v1393 = vsel %vm1392, %v1385, %v1389
    %v1394 = vand.u32 2147483647, %v1384
    %vm1395 = vcmp.eq.f32.partialorder %v1394, 8.507059e+37
    %v1396 = vand.u32 %v1384, 2147483648
    %v1397 = vor.u32 1.1754944e-38, %v1396
    %v1398 = vsel %vm1395, %v1397, %v1393
    %v1399 = vmul.f32 1.0, %v1398
    %1400 = vrot.lane.b32.xlu0 %v1356, 28
    %v1401 = vpop.permute.xlu0 %1400
    %v1403 = vmul.f32 %v1399, %v1401
    %1405 = vrot.lane.b32.xlu0 %v1403, 32
    %v1406 = vpop.permute.xlu0 %1405
    %v1408 = vadd.f32 %v1373, %v1406
    %v1409 = vtanh.pop %v1408
    %v1410 = vsub.f32 1.0, %v1399
    %1412 = vrot.lane.b32.xlu0 %v1409, 112
    %v1413 = vpop.permute.xlu0 %1412
    %v1415 = vmul.f32 %v1410, %v1413
    %1417 = vrot.lane.b32.xlu0 %v1211, 76
    %v1418 = vpop.permute.xlu0 %1417
    %v1420 = vmul.f32 %v1399, %v1418
    %v1421 = vadd.f32 %v1415, %v1420
    %v1422 = vpack.c.bf16 %v1421, %v1421
    %1424 = vrot.lane.b32.xlu0 %v1422, 52
    %v1425 = vpop.permute.xlu0 %1424
    %v1427 = vsel %vm353, %v1425, 0
    %1429 = vmatpush.bf16.msra.mxu0 0
    %1430 = vmatpush.bf16.msra.mxu0 0
    %1431 = vmatpush.bf16.msra.mxu0 0
    %1432 = vmatpush.bf16.msra.mxu0 0
    %1433 = vmatpush.bf16.msra.mxu0 0
    %1434 = vmatpush.bf16.msra.mxu0 0
    %1435 = vmatpush.bf16.msra.mxu0 0
    %1436 = vmatpush.bf16.msra.mxu0 %v351
    %1437 = vmatmul.bf16.gmra.mxu0 %v1427
    %v1438 = vpop.f32.mrf.mxu0
    %v1439 = vadd.f32 0.0, %v1438
    %v1440 = vpop.f32.mrf.mxu0
    %1441 = vdwg.mxu0
    %1443 = vrot.lane.b32.xlu0 %v1439, 12
    %v1444 = vpop.permute.xlu0 %1443
    %v1446 = vadd.f32 %v1373, %v1444
    %1447 = vrot.lane.b32.xlu0 %v1356, 92
    %v1448 = vpop.permute.xlu0 %1447
    %v1450 = vadd.f32 %v1446, %v1448
    %v1451 = vxor.u32 %v1450, 2147483648
    %v1452 = vmul.f32 %v1451, 1.442695
    %v1453 = vpow.pop %v1452
    %v1454 = vadd.f32 %v1453, 1.0
    %v1455 = vrcp.pop %v1454
    %v1456 = vmul.f32 %v1454, %v1455
    %v1457 = vsub.f32 1.0, %v1456
    %v1458 = vmul.f32 %v1455, %v1457
    %v1459 = vadd.f32 %v1455, %v1458
    %vm1460 = vweird.f32 %v1454
    %vm1461 = vweird.f32 %v1455
    %vm1462 = vmor %vm1460, %vm1461
    %v1463 = vsel %vm1462, %v1455, %v1459
    %v1464 = vand.u32 2147483647, %v1454
    %vm1465 = vcmp.eq.f32.partialorder %v1464, 8.507059e+37
    %v1466 = vand.u32 %v1454, 2147483648
    %v1467 = vor.u32 1.1754944e-38, %v1466
    %v1468 = vsel %vm1465, %v1467, %v1463
    %v1469 = vmul.f32 1.0, %v1468
    %v1470 = vmul.f32 %v1469, %v1378
    %1472 = vrot.lane.b32.xlu0 %v1470, 32
    %v1473 = vpop.permute.xlu0 %1472
    %v1475 = vadd.f32 %v1446, %v1473
    %v1476 = vtanh.pop %v1475
    %v1477 = vsub.f32 1.0, %v1469
    %1479 = vrot.lane.b32.xlu0 %v1476, 112
    %v1480 = vpop.permute.xlu0 %1479
    %v1482 = vmul.f32 %v1477, %v1480
    %1483 = vrot.lane.b32.xlu0 %v1211, 12
    %v1484 = vpop.permute.xlu0 %1483
    %v1486 = vmul.f32 %v1469, %v1484
    %v1487 = vadd.f32 %v1482, %v1486
    %v1488 = vpack.c.bf16 %v1487, %v1487
    %1490 = vrot.lane.b32.xlu0 %v1488, 100
    %v1491 = vpop.permute.xlu0 %1490
    %v1493 = vsel %vm353, %v1491, 0
    %1495 = vmatpush.bf16.msra.mxu0 0
    %1496 = vmatpush.bf16.msra.mxu0 0
    %1497 = vmatpush.bf16.msra.mxu0 0
    %1498 = vmatpush.bf16.msra.mxu0 0
    %1499 = vmatpush.bf16.msra.mxu0 0
    %1500 = vmatpush.bf16.msra.mxu0 0
    %1501 = vmatpush.bf16.msra.mxu0 0
    %1502 = vmatpush.bf16.msra.mxu0 %v425
    %1503 = vmatmul.bf16.gmra.mxu0 %v1493
    %v1504 = vpop.f32.mrf.mxu0
    %v1505 = vadd.f32 %v417, %v1504
    %v1506 = vpop.f32.mrf.mxu0
    %1507 = vdwg.mxu0
    %v1508 = vmax.f32 %v1505, 0.0
    %v1509 = vpack.c.bf16 %v1508, %v1508
    %v1511 = vsel %vm81, %v1509, 0
    %1513 = vmatpush.bf16.msra.mxu0 0
    %1514 = vmatpush.bf16.msra.mxu0 0
    %1515 = vmatpush.bf16.msra.mxu0 0
    %1516 = vmatpush.bf16.msra.mxu0 0
    %1517 = vmatpush.bf16.msra.mxu0 0
    %1518 = vmatpush.bf16.msra.mxu0 0
    %1519 = vmatpush.bf16.msra.mxu0 0
    %1520 = vmatpush.bf16.msra.mxu0 %v449
    %1521 = vmatmul.bf16.gmra.mxu0 %v1511
    %v1522 = vpop.f32.mrf.mxu0
    %v1523 = vadd.f32 0.0, %v1522
    %v1524 = vpop.f32.mrf.mxu0
    %1525 = vdwg.mxu0
    %v1526 = vadd.f32 %v1373, %v1523
    %1527 = vrot.lane.b32.xlu0 %v1356, 32
    %v1528 = vpop.permute.xlu0 %1527
    %v1530 = vadd.f32 %v1526, %v1528
    %v1531 = vxor.u32 %v1530, 2147483648
    %v1532 = vmul.f32 %v1531, 1.442695
    %v1533 = vpow.pop %v1532
    %v1534 = vadd.f32 %v1533, 1.0
    %v1535 = vrcp.pop %v1534
    %v1536 = vmul.f32 %v1534, %v1535
    %v1537 = vsub.f32 1.0, %v1536
    %v1538 = vmul.f32 %v1535, %v1537
    %v1539 = vadd.f32 %v1535, %v1538
    %vm1540 = vweird.f32 %v1534
    %vm1541 = vweird.f32 %v1535
    %vm1542 = vmor %vm1540, %vm1541
    %v1543 = vsel %vm1542, %v1535, %v1539
    %v1544 = vand.u32 2147483647, %v1534
    %vm1545 = vcmp.eq.f32.partialorder %v1544, 8.507059e+37
    %v1546 = vand.u32 %v1534, 2147483648
    %v1547 = vor.u32 1.1754944e-38, %v1546
    %v1548 = vsel %vm1545, %v1547, %v1543
    %v1549 = vmul.f32 1.0, %v1548
    %1550 = vrot.lane.b32.xlu0 %v1356, 24
    %v1551 = vpop.permute.xlu0 %1550
    %v1553 = vmul.f32 %v1549, %v1551
    %1555 = vrot.lane.b32.xlu0 %v1553, 8
    %v1556 = vpop.permute.xlu0 %1555
    %v1558 = vadd.f32 %v1526, %v1556
    %v1559 = vtanh.pop %v1558
    %v1560 = vsub.f32 1.0, %v1549
    %1562 = vrot.lane.b32.xlu0 %v1559, 124
    %v1563 = vpop.permute.xlu0 %1562
    %v1565 = vmul.f32 %v1560, %v1563
    %1566 = vrot.lane.b32.xlu0 %v1211, 100
    %v1567 = vpop.permute.xlu0 %1566
    %v1569 = vmul.f32 %v1549, %v1567
    %v1570 = vadd.f32 %v1565, %v1569
    %v1571 = vpack.c.bf16 %v1570, %v1570
    %1573 = vrot.lane.b32.xlu0 %v1571, 124
    %v1574 = vpop.permute.xlu0 %1573
    %v1576 = vsel %vm81, %v1574, 0
    %1578 = vmatpush.bf16.msra.mxu0 0
    %1579 = vmatpush.bf16.msra.mxu0 0
    %1580 = vmatpush.bf16.msra.mxu0 0
    %1581 = vmatpush.bf16.msra.mxu0 0
    %1582 = vmatpush.bf16.msra.mxu0 0
    %1583 = vmatpush.bf16.msra.mxu0 0
    %1584 = vmatpush.bf16.msra.mxu0 0
    %1585 = vmatpush.bf16.msra.mxu0 %v518
    %1586 = vmatmul.bf16.gmra.mxu0 %v1576
    %v1587 = vpop.f32.mrf.mxu0
    %v1588 = vadd.f32 %v510, %v1587
    %v1589 = vpop.f32.mrf.mxu0
    %1590 = vdwg.mxu0
    %1592 = vrot.lane.b32.xlu0 %v1588, 4
    %v1593 = vpop.permute.xlu0 %1592
    %v1595 = vadd.f32 %v1505, %v1593
    %v1596 = vmax.f32 %v1595, 0.0
    %v1597 = vpack.c.bf16 %v1596, %v1596
    %1599 = vrot.lane.b32.xlu0 %v1597, 124
    %v1600 = vpop.permute.xlu0 %1599
    %v1602 = vsel %vm574, %v1600, 0
    %1604 = vmatpush.bf16.msra.mxu0 0
    %1605 = vmatpush.bf16.msra.mxu0 0
    %1606 = vmatpush.bf16.msra.mxu0 0
    %1607 = vmatpush.bf16.msra.mxu0 %v568
    %1608 = vmatpush.bf16.msra.mxu0 %v567
    %1609 = vmatpush.bf16.msra.mxu0 %v566
    %1610 = vmatpush.bf16.msra.mxu0 %v565
    %1611 = vmatpush.bf16.msra.mxu0 %v564
    %1612 = vmatmul.bf16.gmra.mxu0 %v1602
    %v1613 = vpop.f32.mrf.mxu0
    %v1614 = vadd.f32 %v540, %v1613
    %v1615 = vpop.f32.mrf.mxu0
    %1616 = vdwg.mxu0
    %v1617 = vpack.c.bf16 %v1614, %v1614
    %v1619 = vsel %vm181, %v1617, 0
    %1621 = vmatpush.bf16.msra.mxu0 0
    %1622 = vmatpush.bf16.msra.mxu0 0
    %1623 = vmatpush.bf16.msra.mxu0 0
    %1624 = vmatpush.bf16.msra.mxu0 0
    %1625 = vmatpush.bf16.msra.mxu0 0
    %1626 = vmatpush.bf16.msra.mxu0 0
    %1627 = vmatpush.bf16.msra.mxu0 0
    %1628 = vmatpush.bf16.msra.mxu0 %v596
    %1629 = vmatmul.bf16.gmra.mxu0 %v1619
    %v1630 = vpop.f32.mrf.mxu0
    %v1631 = vadd.f32 0.0, %v1630
    %v1632 = vpop.f32.mrf.mxu0
    %1633 = vdwg.mxu0
    %1635 = vrot.lane.b32.xlu0 %v1631, 80
    %v1636 = vpop.permute.xlu0 %1635
    %v1638 = vadd.f32 %v1588, %v1636
    %v1639 = vmax.f32 %v1638, 0.0
    %v1640 = vpack.c.bf16 %v1639, %v1639
    %1642 = vrot.lane.b32.xlu0 %v1640, 48
    %v1643 = vpop.permute.xlu0 %1642
    %v1645 = vsel %vm353, %v1643, 0
    %1647 = vmatpush.bf16.msra.mxu0 0
    %1648 = vmatpush.bf16.msra.mxu0 0
    %1649 = vmatpush.bf16.msra.mxu0 0
    %1650 = vmatpush.bf16.msra.mxu0 0
    %1651 = vmatpush.bf16.msra.mxu0 0
    %1652 = vmatpush.bf16.msra.mxu0 0
    %1653 = vmatpush.bf16.msra.mxu0 0
    %1654 = vmatpush.bf16.msra.mxu0 %v625
    %1655 = vmatmul.bf16.gmra.mxu0 %v1645
    %v1656 = vpop.f32.mrf.mxu0
    %v1657 = vadd.f32 0.0, %v1656
    %v1658 = vpop.f32.mrf.mxu0
    %1659 = vdwg.mxu0
    %1661 = vrot.lane.b32.xlu0 %v1657, 84
    %v1662 = vpop.permute.xlu0 %1661
    %v1664 = vadd.f32 %v1505, %v1662
    %v1665 = vmax.f32 %v1664, 0.0
    %1667 = vrot.lane.b32.xlu0 %v1258, 2
    %v1668 = vpop.permute.xlu0 %1667
    %1670 = vrot.lane.b32.xlu0 %v1258, 4
    %v1671 = vpop.permute.xlu0 %1670
    %1673 = vrot.lane.b32.xlu0 %v1258, 6
    %v1674 = vpop.permute.xlu0 %1673
    %v1676 = vsel %vm114, %v1258, %v1668
    %v1677 = vsel %vm81, %v1676, %v1671
    %v1678 = vsel %vm661, %v1677, %v1674
    %v1679 = vmul.f32 %v1614, %v1678
    %v1681 = vsel %vm181, %v1679, 0
    %1683 = vmatpush.msra.mxu0 0.0
    %1684 = vmatpush.msra.mxu0 0.0
    %1685 = vmatpush.msra.mxu0 0.0
    %1686 = vmatpush.msra.mxu0 0.0
    %1687 = vmatpush.msra.mxu0 0.0
    %1688 = vmatpush.msra.mxu0 0.0
    %1689 = vmatpush.msra.mxu0 0.0
    %1690 = vmatpush.msra.mxu0 0.0
    %1691 = vmatpush.msra.mxu0 0.0
    %1692 = vmatpush.msra.mxu0 0.0
    %1693 = vmatpush.msra.mxu0 0.0
    %1694 = vmatpush.msra.mxu0 0.0
    %1695 = vmatpush.msra.mxu0 0.0
    %1696 = vmatpush.msra.mxu0 0.0
    %1697 = vmatpush.msra.mxu0 0.0
    %1698 = vmatpush.msra.mxu0 %v72
    %1699 = vmatmul.f32.gmra.mxu0 %v1681
    %v1700 = vpop.f32.mrf.mxu0
    %v1701 = vadd.f32 0.0, %v1700
    %1702 = vdwg.mxu0
    %v1703 = vadd.f32 %v1235, %v1701
    %s1704 = scalar_lea.vmem %s4, 16
    %1705 = vst.msk [vmem:[%s1704] sm:$0xff] %vm81, %v1703
    %1707 = vrot.lane.b32.xlu0 %v1421, 52
    %v1708 = vpop.permute.xlu0 %1707
    %1711 = vrot.lane.b32.xlu0 %v1665, 60
    %v1712 = vpop.permute.xlu0 %1711
    %1715 = vrot.lane.b32.xlu0 %v1570, 28
    %v1716 = vpop.permute.xlu0 %1715
    %v1718 = vsel %vm353, %v1708, %v1712
    %v1719 = vsel %vm702, %v1718, %v1716
    %s1720 = scalar_lea.vmem %s0, 24
    %v1721 = vld [vmem:[%s1720] sm:$0xff]
    %v1723 = vsel %vm81, %v1703, 0
    %1725 = vmatpush.msra.mxu0 0.0
    %1726 = vmatpush.msra.mxu0 0.0
    %1727 = vmatpush.msra.mxu0 0.0
    %1728 = vmatpush.msra.mxu0 0.0
    %1729 = vmatpush.msra.mxu0 0.0
    %1730 = vmatpush.msra.mxu0 0.0
    %1731 = vmatpush.msra.mxu0 0.0
    %1732 = vmatpush.msra.mxu0 0.0
    %1733 = vmatpush.msra.mxu0 0.0
    %1734 = vmatpush.msra.mxu0 0.0
    %1735 = vmatpush.msra.mxu0 0.0
    %1736 = vmatpush.msra.mxu0 0.0
    %1737 = vmatpush.msra.mxu0 0.0
    %1738 = vmatpush.msra.mxu0 0.0
    %1739 = vmatpush.msra.mxu0 0.0
    %1740 = vmatpush.msra.mxu0 %v87
    %1741 = vmatmul.f32.gmra.mxu0 %v1723
    %v1742 = vpop.f32.mrf.mxu0
    %v1743 = vadd.f32 0.0, %v1742
    %1744 = vdwg.mxu0
    %v1745 = vsub.f32 %v1721, %v1213
    %v1746 = vmul.f32 %v1745, %v1745
    %v1747 = vsel %vm114, %v1746, 0.0
    %1748 = vadd.xlane.f32.xlu0 %v1747
    %v1749 = vpop.xlane.xlu0 %1748
    %v1750 = vmax.f32 %v1749, 1e-24
    %v1751 = vrsqrt.pop %v1750
    %v1752 = vmul.f32 %v1751, %v1750
    %v1753 = vmul.f32 %v1752, %v1751
    %v1754 = vmul.f32 0.5, %v1753
    %v1755 = vsub.f32 1.5, %v1754
    %v1756 = vmul.f32 %v1751, %v1755
    %vm1757 = vweird.f32 %v1750
    %vm1758 = vweird.f32 %v1751
    %vm1759 = vmor %vm1757, %vm1758
    %v1760 = vsel %vm1759, %v1751, %v1756
    %v1761 = vmul.f32 %v1745, %v1760
    %1763 = vrot.lane.b32.xlu0 %v1743, 124
    %v1764 = vpop.permute.xlu0 %1763
    %v1766 = vsub.f32 %v1721, %v1764
    %v1767 = vmul.f32 %v1766, %v1766
    %v1768 = vsel %vm114, %v1767, 0.0
    %1769 = vadd.xlane.f32.xlu0 %v1768
    %v1770 = vpop.xlane.xlu0 %1769
    %v1771 = vmax.f32 %v1770, 1e-24
    %v1772 = vrsqrt.pop %v1771
    %v1773 = vmul.f32 %v1772, %v1771
    %v1774 = vmul.f32 %v1773, %v1772
    %v1775 = vmul.f32 0.5, %v1774
    %v1776 = vsub.f32 1.5, %v1775
    %v1777 = vmul.f32 %v1772, %v1776
    %vm1778 = vweird.f32 %v1771
    %vm1779 = vweird.f32 %v1772
    %vm1780 = vmor %vm1778, %vm1779
    %v1781 = vsel %vm1780, %v1772, %v1777
    %v1782 = vmul.f32 %v1766, %v1781
    %v1783 = vsub.f32 %v1703, %v1195
    %v1784 = vmul.f32 %v1783, %v1783
    %v1785 = vsel %vm81, %v1784, 0.0
    %1786 = vadd.xlane.f32.xlu0 %v1785
    %v1787 = vpop.xlane.xlu0 %1786
    %v1788 = vmax.f32 %v1787, 1e-24
    %v1789 = vrsqrt.pop %v1788
    %v1790 = vmul.f32 %v1789, %v1788
    %v1791 = vmul.f32 %v1790, %v1789
    %v1792 = vmul.f32 0.5, %v1791
    %v1793 = vsub.f32 1.5, %v1792
    %v1794 = vmul.f32 %v1789, %v1793
    %vm1795 = vweird.f32 %v1788
    %vm1796 = vweird.f32 %v1789
    %vm1797 = vmor %vm1795, %vm1796
    %v1798 = vsel %vm1797, %v1789, %v1794
    %v1799 = vmul.f32 %v1783, %v1798
    %v1800 = vsub.f32 %v1703, %v1235
    %v1801 = vmul.f32 %v1800, %v1800
    %v1802 = vsel %vm81, %v1801, 0.0
    %1803 = vadd.xlane.f32.xlu0 %v1802
    %v1804 = vpop.xlane.xlu0 %1803
    %v1805 = vmax.f32 %v1804, 1e-24
    %v1806 = vrsqrt.pop %v1805
    %v1807 = vmul.f32 %v1806, %v1805
    %v1808 = vmul.f32 %v1807, %v1806
    %v1809 = vmul.f32 0.5, %v1808
    %v1810 = vsub.f32 1.5, %v1809
    %v1811 = vmul.f32 %v1806, %v1810
    %vm1812 = vweird.f32 %v1805
    %vm1813 = vweird.f32 %v1806
    %vm1814 = vmor %vm1812, %vm1813
    %v1815 = vsel %vm1814, %v1806, %v1811
    %v1816 = vmul.f32 %v1800, %v1815
    %1818 = vrot.lane.b32.xlu0 %v1782, 2
    %v1819 = vpop.permute.xlu0 %1818
    %1822 = vrot.lane.b32.xlu0 %v1799, 4
    %v1823 = vpop.permute.xlu0 %1822
    %1826 = vrot.lane.b32.xlu0 %v1816, 8
    %v1827 = vpop.permute.xlu0 %1826
    %v1829 = vsel %vm114, %v1761, %v1819
    %v1830 = vsel %vm81, %v1829, %v1823
    %v1831 = vsel %vm181, %v1830, %v1827
    %v1832 = vpack.c.bf16 %v1831, %v1831
    %v1834 = vsel %vm190, %v1832, 0
    %1836 = vmatpush.bf16.msra.mxu0 0
    %1837 = vmatpush.bf16.msra.mxu0 0
    %1838 = vmatpush.bf16.msra.mxu0 0
    %1839 = vmatpush.bf16.msra.mxu0 0
    %1840 = vmatpush.bf16.msra.mxu0 0
    %1841 = vmatpush.bf16.msra.mxu0 0
    %1842 = vmatpush.bf16.msra.mxu0 0
    %1843 = vmatpush.bf16.msra.mxu0 %v196
    %1844 = vmatmul.bf16.gmra.mxu0 %v1834
    %v1845 = vpop.f32.mrf.mxu0
    %v1846 = vadd.f32 %v184, %v1845
    %v1847 = vpop.f32.mrf.mxu0
    %1848 = vdwg.mxu0
    %v1849 = vmax.f32 %v1846, 0.0
    %v1850 = vpack.c.bf16 %v1719, %v1719
    %v1852 = vsel %vm232, %v1850, 0
    %1854 = vmatpush.bf16.msra.mxu0 0
    %1855 = vmatpush.bf16.msra.mxu0 0
    %1856 = vmatpush.bf16.msra.mxu0 0
    %1857 = vmatpush.bf16.msra.mxu0 0
    %1858 = vmatpush.bf16.msra.mxu0 0
    %1859 = vmatpush.bf16.msra.mxu0 %v238
    %1860 = vmatpush.bf16.msra.mxu0 %v228
    %1861 = vmatpush.bf16.msra.mxu0 %v227
    %1862 = vmatmul.bf16.gmra.mxu0 %v1852
    %v1863 = vpop.f32.mrf.mxu0
    %v1864 = vadd.f32 %v213, %v1863
    %v1865 = vpop.f32.mrf.mxu0
    %1866 = vdwg.mxu0
    %v1867 = vpack.c.bf16 %v1849, %v1849
    %v1869 = vsel %vm278, %v1867, 0
    %1871 = vmatpush.bf16.msra.mxu0 0
    %1872 = vmatpush.bf16.msra.mxu0 0
    %1873 = vmatpush.bf16.msra.mxu0 0
    %1874 = vmatpush.bf16.msra.mxu0 0
    %1875 = vmatpush.bf16.msra.mxu0 %v283
    %1876 = vmatpush.bf16.msra.mxu0 %v273
    %1877 = vmatpush.bf16.msra.mxu0 %v272
    %1878 = vmatpush.bf16.msra.mxu0 %v271
    %1879 = vmatmul.bf16.gmra.mxu0 %v1869
    %v1880 = vpop.f32.mrf.mxu0
    %v1881 = vadd.f32 %v254, %v1880
    %v1882 = vpop.f32.mrf.mxu0
    %1883 = vdwg.mxu0
    %1885 = vrot.lane.b32.xlu0 %v1864, 60
    %v1886 = vpop.permute.xlu0 %1885
    %v1888 = vadd.f32 %v1881, %v1886
    %v1889 = vxor.u32 %v1888, 2147483648
    %v1890 = vmul.f32 %v1889, 1.442695
    %v1891 = vpow.pop %v1890
    %v1892 = vadd.f32 %v1891, 1.0
    %v1893 = vrcp.pop %v1892
    %v1894 = vmul.f32 %v1892, %v1893
    %v1895 = vsub.f32 1.0, %v1894
    %v1896 = vmul.f32 %v1893, %v1895
    %v1897 = vadd.f32 %v1893, %v1896
    %vm1898 = vweird.f32 %v1892
    %vm1899 = vweird.f32 %v1893
    %vm1900 = vmor %vm1898, %vm1899
    %v1901 = vsel %vm1900, %v1893, %v1897
    %v1902 = vand.u32 2147483647, %v1892
    %vm1903 = vcmp.eq.f32.partialorder %v1902, 8.507059e+37
    %v1904 = vand.u32 %v1892, 2147483648
    %v1905 = vor.u32 1.1754944e-38, %v1904
    %v1906 = vsel %vm1903, %v1905, %v1901
    %v1907 = vmul.f32 1.0, %v1906
    %1908 = vrot.lane.b32.xlu0 %v1864, 28
    %v1909 = vpop.permute.xlu0 %1908
    %v1911 = vmul.f32 %v1907, %v1909
    %1913 = vrot.lane.b32.xlu0 %v1911, 32
    %v1914 = vpop.permute.xlu0 %1913
    %v1916 = vadd.f32 %v1881, %v1914
    %v1917 = vtanh.pop %v1916
    %v1918 = vsub.f32 1.0, %v1907
    %1920 = vrot.lane.b32.xlu0 %v1917, 112
    %v1921 = vpop.permute.xlu0 %1920
    %v1923 = vmul.f32 %v1918, %v1921
    %1925 = vrot.lane.b32.xlu0 %v1719, 76
    %v1926 = vpop.permute.xlu0 %1925
    %v1928 = vmul.f32 %v1907, %v1926
    %v1929 = vadd.f32 %v1923, %v1928
    %v1930 = vpack.c.bf16 %v1929, %v1929
    %1932 = vrot.lane.b32.xlu0 %v1930, 52
    %v1933 = vpop.permute.xlu0 %1932
    %v1935 = vsel %vm353, %v1933, 0
    %1937 = vmatpush.bf16.msra.mxu0 0
    %1938 = vmatpush.bf16.msra.mxu0 0
    %1939 = vmatpush.bf16.msra.mxu0 0
    %1940 = vmatpush.bf16.msra.mxu0 0
    %1941 = vmatpush.bf16.msra.mxu0 0
    %1942 = vmatpush.bf16.msra.mxu0 0
    %1943 = vmatpush.bf16.msra.mxu0 0
    %1944 = vmatpush.bf16.msra.mxu0 %v351
    %1945 = vmatmul.bf16.gmra.mxu0 %v1935
    %v1946 = vpop.f32.mrf.mxu0
    %v1947 = vadd.f32 0.0, %v1946
    %v1948 = vpop.f32.mrf.mxu0
    %1949 = vdwg.mxu0
    %1951 = vrot.lane.b32.xlu0 %v1947, 12
    %v1952 = vpop.permute.xlu0 %1951
    %v1954 = vadd.f32 %v1881, %v1952
    %1955 = vrot.lane.b32.xlu0 %v1864, 92
    %v1956 = vpop.permute.xlu0 %1955
    %v1958 = vadd.f32 %v1954, %v1956
    %v1959 = vxor.u32 %v1958, 2147483648
    %v1960 = vmul.f32 %v1959, 1.442695
    %v1961 = vpow.pop %v1960
    %v1962 = vadd.f32 %v1961, 1.0
    %v1963 = vrcp.pop %v1962
    %v1964 = vmul.f32 %v1962, %v1963
    %v1965 = vsub.f32 1.0, %v1964
    %v1966 = vmul.f32 %v1963, %v1965
    %v1967 = vadd.f32 %v1963, %v1966
    %vm1968 = vweird.f32 %v1962
    %vm1969 = vweird.f32 %v1963
    %vm1970 = vmor %vm1968, %vm1969
    %v1971 = vsel %vm1970, %v1963, %v1967
    %v1972 = vand.u32 2147483647, %v1962
    %vm1973 = vcmp.eq.f32.partialorder %v1972, 8.507059e+37
    %v1974 = vand.u32 %v1962, 2147483648
    %v1975 = vor.u32 1.1754944e-38, %v1974
    %v1976 = vsel %vm1973, %v1975, %v1971
    %v1977 = vmul.f32 1.0, %v1976
    %v1978 = vmul.f32 %v1977, %v1886
    %1980 = vrot.lane.b32.xlu0 %v1978, 32
    %v1981 = vpop.permute.xlu0 %1980
    %v1983 = vadd.f32 %v1954, %v1981
    %v1984 = vtanh.pop %v1983
    %v1985 = vsub.f32 1.0, %v1977
    %1987 = vrot.lane.b32.xlu0 %v1984, 112
    %v1988 = vpop.permute.xlu0 %1987
    %v1990 = vmul.f32 %v1985, %v1988
    %1991 = vrot.lane.b32.xlu0 %v1719, 12
    %v1992 = vpop.permute.xlu0 %1991
    %v1994 = vmul.f32 %v1977, %v1992
    %v1995 = vadd.f32 %v1990, %v1994
    %v1996 = vpack.c.bf16 %v1995, %v1995
    %1998 = vrot.lane.b32.xlu0 %v1996, 100
    %v1999 = vpop.permute.xlu0 %1998
    %v2001 = vsel %vm353, %v1999, 0
    %2003 = vmatpush.bf16.msra.mxu0 0
    %2004 = vmatpush.bf16.msra.mxu0 0
    %2005 = vmatpush.bf16.msra.mxu0 0
    %2006 = vmatpush.bf16.msra.mxu0 0
    %2007 = vmatpush.bf16.msra.mxu0 0
    %2008 = vmatpush.bf16.msra.mxu0 0
    %2009 = vmatpush.bf16.msra.mxu0 0
    %2010 = vmatpush.bf16.msra.mxu0 %v425
    %2011 = vmatmul.bf16.gmra.mxu0 %v2001
    %v2012 = vpop.f32.mrf.mxu0
    %v2013 = vadd.f32 %v417, %v2012
    %v2014 = vpop.f32.mrf.mxu0
    %2015 = vdwg.mxu0
    %v2016 = vmax.f32 %v2013, 0.0
    %v2017 = vpack.c.bf16 %v2016, %v2016
    %v2019 = vsel %vm81, %v2017, 0
    %2021 = vmatpush.bf16.msra.mxu0 0
    %2022 = vmatpush.bf16.msra.mxu0 0
    %2023 = vmatpush.bf16.msra.mxu0 0
    %2024 = vmatpush.bf16.msra.mxu0 0
    %2025 = vmatpush.bf16.msra.mxu0 0
    %2026 = vmatpush.bf16.msra.mxu0 0
    %2027 = vmatpush.bf16.msra.mxu0 0
    %2028 = vmatpush.bf16.msra.mxu0 %v449
    %2029 = vmatmul.bf16.gmra.mxu0 %v2019
    %v2030 = vpop.f32.mrf.mxu0
    %v2031 = vadd.f32 0.0, %v2030
    %v2032 = vpop.f32.mrf.mxu0
    %2033 = vdwg.mxu0
    %v2034 = vadd.f32 %v1881, %v2031
    %2035 = vrot.lane.b32.xlu0 %v1864, 32
    %v2036 = vpop.permute.xlu0 %2035
    %v2038 = vadd.f32 %v2034, %v2036
    %v2039 = vxor.u32 %v2038, 2147483648
    %v2040 = vmul.f32 %v2039, 1.442695
    %v2041 = vpow.pop %v2040
    %v2042 = vadd.f32 %v2041, 1.0
    %v2043 = vrcp.pop %v2042
    %v2044 = vmul.f32 %v2042, %v2043
    %v2045 = vsub.f32 1.0, %v2044
    %v2046 = vmul.f32 %v2043, %v2045
    %v2047 = vadd.f32 %v2043, %v2046
    %vm2048 = vweird.f32 %v2042
    %vm2049 = vweird.f32 %v2043
    %vm2050 = vmor %vm2048, %vm2049
    %v2051 = vsel %vm2050, %v2043, %v2047
    %v2052 = vand.u32 2147483647, %v2042
    %vm2053 = vcmp.eq.f32.partialorder %v2052, 8.507059e+37
    %v2054 = vand.u32 %v2042, 2147483648
    %v2055 = vor.u32 1.1754944e-38, %v2054
    %v2056 = vsel %vm2053, %v2055, %v2051
    %v2057 = vmul.f32 1.0, %v2056
    %2058 = vrot.lane.b32.xlu0 %v1864, 24
    %v2059 = vpop.permute.xlu0 %2058
    %v2061 = vmul.f32 %v2057, %v2059
    %2063 = vrot.lane.b32.xlu0 %v2061, 8
    %v2064 = vpop.permute.xlu0 %2063
    %v2066 = vadd.f32 %v2034, %v2064
    %v2067 = vtanh.pop %v2066
    %v2068 = vsub.f32 1.0, %v2057
    %2070 = vrot.lane.b32.xlu0 %v2067, 124
    %v2071 = vpop.permute.xlu0 %2070
    %v2073 = vmul.f32 %v2068, %v2071
    %2074 = vrot.lane.b32.xlu0 %v1719, 100
    %v2075 = vpop.permute.xlu0 %2074
    %v2077 = vmul.f32 %v2057, %v2075
    %v2078 = vadd.f32 %v2073, %v2077
    %v2079 = vpack.c.bf16 %v2078, %v2078
    %2081 = vrot.lane.b32.xlu0 %v2079, 124
    %v2082 = vpop.permute.xlu0 %2081
    %v2084 = vsel %vm81, %v2082, 0
    %2086 = vmatpush.bf16.msra.mxu0 0
    %2087 = vmatpush.bf16.msra.mxu0 0
    %2088 = vmatpush.bf16.msra.mxu0 0
    %2089 = vmatpush.bf16.msra.mxu0 0
    %2090 = vmatpush.bf16.msra.mxu0 0
    %2091 = vmatpush.bf16.msra.mxu0 0
    %2092 = vmatpush.bf16.msra.mxu0 0
    %2093 = vmatpush.bf16.msra.mxu0 %v518
    %2094 = vmatmul.bf16.gmra.mxu0 %v2084
    %v2095 = vpop.f32.mrf.mxu0
    %v2096 = vadd.f32 %v510, %v2095
    %v2097 = vpop.f32.mrf.mxu0
    %2098 = vdwg.mxu0
    %2100 = vrot.lane.b32.xlu0 %v2096, 4
    %v2101 = vpop.permute.xlu0 %2100
    %v2103 = vadd.f32 %v2013, %v2101
    %v2104 = vmax.f32 %v2103, 0.0
    %v2105 = vpack.c.bf16 %v2104, %v2104
    %2107 = vrot.lane.b32.xlu0 %v2105, 124
    %v2108 = vpop.permute.xlu0 %2107
    %v2110 = vsel %vm574, %v2108, 0
    %2112 = vmatpush.bf16.msra.mxu0 0
    %2113 = vmatpush.bf16.msra.mxu0 0
    %2114 = vmatpush.bf16.msra.mxu0 0
    %2115 = vmatpush.bf16.msra.mxu0 %v568
    %2116 = vmatpush.bf16.msra.mxu0 %v567
    %2117 = vmatpush.bf16.msra.mxu0 %v566
    %2118 = vmatpush.bf16.msra.mxu0 %v565
    %2119 = vmatpush.bf16.msra.mxu0 %v564
    %2120 = vmatmul.bf16.gmra.mxu0 %v2110
    %v2121 = vpop.f32.mrf.mxu0
    %v2122 = vadd.f32 %v540, %v2121
    %v2123 = vpop.f32.mrf.mxu0
    %2124 = vdwg.mxu0
    %v2125 = vpack.c.bf16 %v2122, %v2122
    %v2127 = vsel %vm181, %v2125, 0
    %2129 = vmatpush.bf16.msra.mxu0 0
    %2130 = vmatpush.bf16.msra.mxu0 0
    %2131 = vmatpush.bf16.msra.mxu0 0
    %2132 = vmatpush.bf16.msra.mxu0 0
    %2133 = vmatpush.bf16.msra.mxu0 0
    %2134 = vmatpush.bf16.msra.mxu0 0
    %2135 = vmatpush.bf16.msra.mxu0 0
    %2136 = vmatpush.bf16.msra.mxu0 %v596
    %2137 = vmatmul.bf16.gmra.mxu0 %v2127
    %v2138 = vpop.f32.mrf.mxu0
    %v2139 = vadd.f32 0.0, %v2138
    %v2140 = vpop.f32.mrf.mxu0
    %2141 = vdwg.mxu0
    %2143 = vrot.lane.b32.xlu0 %v2139, 80
    %v2144 = vpop.permute.xlu0 %2143
    %v2146 = vadd.f32 %v2096, %v2144
    %v2147 = vmax.f32 %v2146, 0.0
    %v2148 = vpack.c.bf16 %v2147, %v2147
    %2150 = vrot.lane.b32.xlu0 %v2148, 48
    %v2151 = vpop.permute.xlu0 %2150
    %v2153 = vsel %vm353, %v2151, 0
    %2155 = vmatpush.bf16.msra.mxu0 0
    %2156 = vmatpush.bf16.msra.mxu0 0
    %2157 = vmatpush.bf16.msra.mxu0 0
    %2158 = vmatpush.bf16.msra.mxu0 0
    %2159 = vmatpush.bf16.msra.mxu0 0
    %2160 = vmatpush.bf16.msra.mxu0 0
    %2161 = vmatpush.bf16.msra.mxu0 0
    %2162 = vmatpush.bf16.msra.mxu0 %v625
    %2163 = vmatmul.bf16.gmra.mxu0 %v2153
    %v2164 = vpop.f32.mrf.mxu0
    %v2165 = vadd.f32 0.0, %v2164
    %v2166 = vpop.f32.mrf.mxu0
    %2167 = vdwg.mxu0
    %2169 = vrot.lane.b32.xlu0 %v2165, 84
    %v2170 = vpop.permute.xlu0 %2169
    %v2172 = vadd.f32 %v2013, %v2170
    %v2173 = vmax.f32 %v2172, 0.0
    %2175 = vrot.lane.b32.xlu0 %v1766, 2
    %v2176 = vpop.permute.xlu0 %2175
    %2178 = vrot.lane.b32.xlu0 %v1766, 4
    %v2179 = vpop.permute.xlu0 %2178
    %2181 = vrot.lane.b32.xlu0 %v1766, 6
    %v2182 = vpop.permute.xlu0 %2181
    %v2184 = vsel %vm114, %v1766, %v2176
    %v2185 = vsel %vm81, %v2184, %v2179
    %v2186 = vsel %vm661, %v2185, %v2182
    %v2187 = vmul.f32 %v2122, %v2186
    %v2189 = vsel %vm181, %v2187, 0
    %2191 = vmatpush.msra.mxu0 0.0
    %2192 = vmatpush.msra.mxu0 0.0
    %2193 = vmatpush.msra.mxu0 0.0
    %2194 = vmatpush.msra.mxu0 0.0
    %2195 = vmatpush.msra.mxu0 0.0
    %2196 = vmatpush.msra.mxu0 0.0
    %2197 = vmatpush.msra.mxu0 0.0
    %2198 = vmatpush.msra.mxu0 0.0
    %2199 = vmatpush.msra.mxu0 0.0
    %2200 = vmatpush.msra.mxu0 0.0
    %2201 = vmatpush.msra.mxu0 0.0
    %2202 = vmatpush.msra.mxu0 0.0
    %2203 = vmatpush.msra.mxu0 0.0
    %2204 = vmatpush.msra.mxu0 0.0
    %2205 = vmatpush.msra.mxu0 0.0
    %2206 = vmatpush.msra.mxu0 %v72
    %2207 = vmatmul.f32.gmra.mxu0 %v2189
    %v2208 = vpop.f32.mrf.mxu0
    %v2209 = vadd.f32 0.0, %v2208
    %2210 = vdwg.mxu0
    %v2211 = vadd.f32 %v1743, %v2209
    %s2212 = scalar_lea.vmem %s4, 24
    %2213 = vst.msk [vmem:[%s2212] sm:$0xff] %vm81, %v2211
    %2215 = vrot.lane.b32.xlu0 %v1929, 52
    %v2216 = vpop.permute.xlu0 %2215
    %2219 = vrot.lane.b32.xlu0 %v2173, 60
    %v2220 = vpop.permute.xlu0 %2219
    %2223 = vrot.lane.b32.xlu0 %v2078, 28
    %v2224 = vpop.permute.xlu0 %2223
    %v2226 = vsel %vm353, %v2216, %v2220
    %v2227 = vsel %vm702, %v2226, %v2224
    %s2228 = scalar_lea.vmem %s0, 32
    %v2229 = vld [vmem:[%s2228] sm:$0xff]
    %v2231 = vsel %vm81, %v2211, 0
    %2233 = vmatpush.msra.mxu0 0.0
    %2234 = vmatpush.msra.mxu0 0.0
    %2235 = vmatpush.msra.mxu0 0.0
    %2236 = vmatpush.msra.mxu0 0.0
    %2237 = vmatpush.msra.mxu0 0.0
    %2238 = vmatpush.msra.mxu0 0.0
    %2239 = vmatpush.msra.mxu0 0.0
    %2240 = vmatpush.msra.mxu0 0.0
    %2241 = vmatpush.msra.mxu0 0.0
    %2242 = vmatpush.msra.mxu0 0.0
    %2243 = vmatpush.msra.mxu0 0.0
    %2244 = vmatpush.msra.mxu0 0.0
    %2245 = vmatpush.msra.mxu0 0.0
    %2246 = vmatpush.msra.mxu0 0.0
    %2247 = vmatpush.msra.mxu0 0.0
    %2248 = vmatpush.msra.mxu0 %v87
    %2249 = vmatmul.f32.gmra.mxu0 %v2231
    %v2250 = vpop.f32.mrf.mxu0
    %v2251 = vadd.f32 0.0, %v2250
    %2252 = vdwg.mxu0
    %v2253 = vsub.f32 %v2229, %v1721
    %v2254 = vmul.f32 %v2253, %v2253
    %v2255 = vsel %vm114, %v2254, 0.0
    %2256 = vadd.xlane.f32.xlu0 %v2255
    %v2257 = vpop.xlane.xlu0 %2256
    %v2258 = vmax.f32 %v2257, 1e-24
    %v2259 = vrsqrt.pop %v2258
    %v2260 = vmul.f32 %v2259, %v2258
    %v2261 = vmul.f32 %v2260, %v2259
    %v2262 = vmul.f32 0.5, %v2261
    %v2263 = vsub.f32 1.5, %v2262
    %v2264 = vmul.f32 %v2259, %v2263
    %vm2265 = vweird.f32 %v2258
    %vm2266 = vweird.f32 %v2259
    %vm2267 = vmor %vm2265, %vm2266
    %v2268 = vsel %vm2267, %v2259, %v2264
    %v2269 = vmul.f32 %v2253, %v2268
    %2271 = vrot.lane.b32.xlu0 %v2251, 124
    %v2272 = vpop.permute.xlu0 %2271
    %v2274 = vsub.f32 %v2229, %v2272
    %v2275 = vmul.f32 %v2274, %v2274
    %v2276 = vsel %vm114, %v2275, 0.0
    %2277 = vadd.xlane.f32.xlu0 %v2276
    %v2278 = vpop.xlane.xlu0 %2277
    %v2279 = vmax.f32 %v2278, 1e-24
    %v2280 = vrsqrt.pop %v2279
    %v2281 = vmul.f32 %v2280, %v2279
    %v2282 = vmul.f32 %v2281, %v2280
    %v2283 = vmul.f32 0.5, %v2282
    %v2284 = vsub.f32 1.5, %v2283
    %v2285 = vmul.f32 %v2280, %v2284
    %vm2286 = vweird.f32 %v2279
    %vm2287 = vweird.f32 %v2280
    %vm2288 = vmor %vm2286, %vm2287
    %v2289 = vsel %vm2288, %v2280, %v2285
    %v2290 = vmul.f32 %v2274, %v2289
    %v2291 = vsub.f32 %v2211, %v1703
    %v2292 = vmul.f32 %v2291, %v2291
    %v2293 = vsel %vm81, %v2292, 0.0
    %2294 = vadd.xlane.f32.xlu0 %v2293
    %v2295 = vpop.xlane.xlu0 %2294
    %v2296 = vmax.f32 %v2295, 1e-24
    %v2297 = vrsqrt.pop %v2296
    %v2298 = vmul.f32 %v2297, %v2296
    %v2299 = vmul.f32 %v2298, %v2297
    %v2300 = vmul.f32 0.5, %v2299
    %v2301 = vsub.f32 1.5, %v2300
    %v2302 = vmul.f32 %v2297, %v2301
    %vm2303 = vweird.f32 %v2296
    %vm2304 = vweird.f32 %v2297
    %vm2305 = vmor %vm2303, %vm2304
    %v2306 = vsel %vm2305, %v2297, %v2302
    %v2307 = vmul.f32 %v2291, %v2306
    %v2308 = vsub.f32 %v2211, %v1743
    %v2309 = vmul.f32 %v2308, %v2308
    %v2310 = vsel %vm81, %v2309, 0.0
    %2311 = vadd.xlane.f32.xlu0 %v2310
    %v2312 = vpop.xlane.xlu0 %2311
    %v2313 = vmax.f32 %v2312, 1e-24
    %v2314 = vrsqrt.pop %v2313
    %v2315 = vmul.f32 %v2314, %v2313
    %v2316 = vmul.f32 %v2315, %v2314
    %v2317 = vmul.f32 0.5, %v2316
    %v2318 = vsub.f32 1.5, %v2317
    %v2319 = vmul.f32 %v2314, %v2318
    %vm2320 = vweird.f32 %v2313
    %vm2321 = vweird.f32 %v2314
    %vm2322 = vmor %vm2320, %vm2321
    %v2323 = vsel %vm2322, %v2314, %v2319
    %v2324 = vmul.f32 %v2308, %v2323
    %2326 = vrot.lane.b32.xlu0 %v2290, 2
    %v2327 = vpop.permute.xlu0 %2326
    %2330 = vrot.lane.b32.xlu0 %v2307, 4
    %v2331 = vpop.permute.xlu0 %2330
    %2334 = vrot.lane.b32.xlu0 %v2324, 8
    %v2335 = vpop.permute.xlu0 %2334
    %v2337 = vsel %vm114, %v2269, %v2327
    %v2338 = vsel %vm81, %v2337, %v2331
    %v2339 = vsel %vm181, %v2338, %v2335
    %v2340 = vpack.c.bf16 %v2339, %v2339
    %v2342 = vsel %vm190, %v2340, 0
    %2344 = vmatpush.bf16.msra.mxu0 0
    %2345 = vmatpush.bf16.msra.mxu0 0
    %2346 = vmatpush.bf16.msra.mxu0 0
    %2347 = vmatpush.bf16.msra.mxu0 0
    %2348 = vmatpush.bf16.msra.mxu0 0
    %2349 = vmatpush.bf16.msra.mxu0 0
    %2350 = vmatpush.bf16.msra.mxu0 0
    %2351 = vmatpush.bf16.msra.mxu0 %v196
    %2352 = vmatmul.bf16.gmra.mxu0 %v2342
    %v2353 = vpop.f32.mrf.mxu0
    %v2354 = vadd.f32 %v184, %v2353
    %v2355 = vpop.f32.mrf.mxu0
    %2356 = vdwg.mxu0
    %v2357 = vmax.f32 %v2354, 0.0
    %v2358 = vpack.c.bf16 %v2227, %v2227
    %v2360 = vsel %vm232, %v2358, 0
    %2362 = vmatpush.bf16.msra.mxu0 0
    %2363 = vmatpush.bf16.msra.mxu0 0
    %2364 = vmatpush.bf16.msra.mxu0 0
    %2365 = vmatpush.bf16.msra.mxu0 0
    %2366 = vmatpush.bf16.msra.mxu0 0
    %2367 = vmatpush.bf16.msra.mxu0 %v238
    %2368 = vmatpush.bf16.msra.mxu0 %v228
    %2369 = vmatpush.bf16.msra.mxu0 %v227
    %2370 = vmatmul.bf16.gmra.mxu0 %v2360
    %v2371 = vpop.f32.mrf.mxu0
    %v2372 = vadd.f32 %v213, %v2371
    %v2373 = vpop.f32.mrf.mxu0
    %2374 = vdwg.mxu0
    %v2375 = vpack.c.bf16 %v2357, %v2357
    %v2377 = vsel %vm278, %v2375, 0
    %2379 = vmatpush.bf16.msra.mxu0 0
    %2380 = vmatpush.bf16.msra.mxu0 0
    %2381 = vmatpush.bf16.msra.mxu0 0
    %2382 = vmatpush.bf16.msra.mxu0 0
    %2383 = vmatpush.bf16.msra.mxu0 %v283
    %2384 = vmatpush.bf16.msra.mxu0 %v273
    %2385 = vmatpush.bf16.msra.mxu0 %v272
    %2386 = vmatpush.bf16.msra.mxu0 %v271
    %2387 = vmatmul.bf16.gmra.mxu0 %v2377
    %v2388 = vpop.f32.mrf.mxu0
    %v2389 = vadd.f32 %v254, %v2388
    %v2390 = vpop.f32.mrf.mxu0
    %2391 = vdwg.mxu0
    %2393 = vrot.lane.b32.xlu0 %v2372, 60
    %v2394 = vpop.permute.xlu0 %2393
    %v2396 = vadd.f32 %v2389, %v2394
    %v2397 = vxor.u32 %v2396, 2147483648
    %v2398 = vmul.f32 %v2397, 1.442695
    %v2399 = vpow.pop %v2398
    %v2400 = vadd.f32 %v2399, 1.0
    %v2401 = vrcp.pop %v2400
    %v2402 = vmul.f32 %v2400, %v2401
    %v2403 = vsub.f32 1.0, %v2402
    %v2404 = vmul.f32 %v2401, %v2403
    %v2405 = vadd.f32 %v2401, %v2404
    %vm2406 = vweird.f32 %v2400
    %vm2407 = vweird.f32 %v2401
    %vm2408 = vmor %vm2406, %vm2407
    %v2409 = vsel %vm2408, %v2401, %v2405
    %v2410 = vand.u32 2147483647, %v2400
    %vm2411 = vcmp.eq.f32.partialorder %v2410, 8.507059e+37
    %v2412 = vand.u32 %v2400, 2147483648
    %v2413 = vor.u32 1.1754944e-38, %v2412
    %v2414 = vsel %vm2411, %v2413, %v2409
    %v2415 = vmul.f32 1.0, %v2414
    %2416 = vrot.lane.b32.xlu0 %v2372, 28
    %v2417 = vpop.permute.xlu0 %2416
    %v2419 = vmul.f32 %v2415, %v2417
    %2421 = vrot.lane.b32.xlu0 %v2419, 32
    %v2422 = vpop.permute.xlu0 %2421
    %v2424 = vadd.f32 %v2389, %v2422
    %v2425 = vtanh.pop %v2424
    %v2426 = vsub.f32 1.0, %v2415
    %2428 = vrot.lane.b32.xlu0 %v2425, 112
    %v2429 = vpop.permute.xlu0 %2428
    %v2431 = vmul.f32 %v2426, %v2429
    %2433 = vrot.lane.b32.xlu0 %v2227, 76
    %v2434 = vpop.permute.xlu0 %2433
    %v2436 = vmul.f32 %v2415, %v2434
    %v2437 = vadd.f32 %v2431, %v2436
    %v2438 = vpack.c.bf16 %v2437, %v2437
    %2440 = vrot.lane.b32.xlu0 %v2438, 52
    %v2441 = vpop.permute.xlu0 %2440
    %v2443 = vsel %vm353, %v2441, 0
    %2445 = vmatpush.bf16.msra.mxu0 0
    %2446 = vmatpush.bf16.msra.mxu0 0
    %2447 = vmatpush.bf16.msra.mxu0 0
    %2448 = vmatpush.bf16.msra.mxu0 0
    %2449 = vmatpush.bf16.msra.mxu0 0
    %2450 = vmatpush.bf16.msra.mxu0 0
    %2451 = vmatpush.bf16.msra.mxu0 0
    %2452 = vmatpush.bf16.msra.mxu0 %v351
    %2453 = vmatmul.bf16.gmra.mxu0 %v2443
    %v2454 = vpop.f32.mrf.mxu0
    %v2455 = vadd.f32 0.0, %v2454
    %v2456 = vpop.f32.mrf.mxu0
    %2457 = vdwg.mxu0
    %2459 = vrot.lane.b32.xlu0 %v2455, 12
    %v2460 = vpop.permute.xlu0 %2459
    %v2462 = vadd.f32 %v2389, %v2460
    %2463 = vrot.lane.b32.xlu0 %v2372, 92
    %v2464 = vpop.permute.xlu0 %2463
    %v2466 = vadd.f32 %v2462, %v2464
    %v2467 = vxor.u32 %v2466, 2147483648
    %v2468 = vmul.f32 %v2467, 1.442695
    %v2469 = vpow.pop %v2468
    %v2470 = vadd.f32 %v2469, 1.0
    %v2471 = vrcp.pop %v2470
    %v2472 = vmul.f32 %v2470, %v2471
    %v2473 = vsub.f32 1.0, %v2472
    %v2474 = vmul.f32 %v2471, %v2473
    %v2475 = vadd.f32 %v2471, %v2474
    %vm2476 = vweird.f32 %v2470
    %vm2477 = vweird.f32 %v2471
    %vm2478 = vmor %vm2476, %vm2477
    %v2479 = vsel %vm2478, %v2471, %v2475
    %v2480 = vand.u32 2147483647, %v2470
    %vm2481 = vcmp.eq.f32.partialorder %v2480, 8.507059e+37
    %v2482 = vand.u32 %v2470, 2147483648
    %v2483 = vor.u32 1.1754944e-38, %v2482
    %v2484 = vsel %vm2481, %v2483, %v2479
    %v2485 = vmul.f32 1.0, %v2484
    %v2486 = vmul.f32 %v2485, %v2394
    %2488 = vrot.lane.b32.xlu0 %v2486, 32
    %v2489 = vpop.permute.xlu0 %2488
    %v2491 = vadd.f32 %v2462, %v2489
    %v2492 = vtanh.pop %v2491
    %v2493 = vsub.f32 1.0, %v2485
    %2495 = vrot.lane.b32.xlu0 %v2492, 112
    %v2496 = vpop.permute.xlu0 %2495
    %v2498 = vmul.f32 %v2493, %v2496
    %2499 = vrot.lane.b32.xlu0 %v2227, 12
    %v2500 = vpop.permute.xlu0 %2499
    %v2502 = vmul.f32 %v2485, %v2500
    %v2503 = vadd.f32 %v2498, %v2502
    %v2504 = vpack.c.bf16 %v2503, %v2503
    %2506 = vrot.lane.b32.xlu0 %v2504, 100
    %v2507 = vpop.permute.xlu0 %2506
    %v2509 = vsel %vm353, %v2507, 0
    %2511 = vmatpush.bf16.msra.mxu0 0
    %2512 = vmatpush.bf16.msra.mxu0 0
    %2513 = vmatpush.bf16.msra.mxu0 0
    %2514 = vmatpush.bf16.msra.mxu0 0
    %2515 = vmatpush.bf16.msra.mxu0 0
    %2516 = vmatpush.bf16.msra.mxu0 0
    %2517 = vmatpush.bf16.msra.mxu0 0
    %2518 = vmatpush.bf16.msra.mxu0 %v425
    %2519 = vmatmul.bf16.gmra.mxu0 %v2509
    %v2520 = vpop.f32.mrf.mxu0
    %v2521 = vadd.f32 %v417, %v2520
    %v2522 = vpop.f32.mrf.mxu0
    %2523 = vdwg.mxu0
    %v2524 = vmax.f32 %v2521, 0.0
    %v2525 = vpack.c.bf16 %v2524, %v2524
    %v2527 = vsel %vm81, %v2525, 0
    %2529 = vmatpush.bf16.msra.mxu0 0
    %2530 = vmatpush.bf16.msra.mxu0 0
    %2531 = vmatpush.bf16.msra.mxu0 0
    %2532 = vmatpush.bf16.msra.mxu0 0
    %2533 = vmatpush.bf16.msra.mxu0 0
    %2534 = vmatpush.bf16.msra.mxu0 0
    %2535 = vmatpush.bf16.msra.mxu0 0
    %2536 = vmatpush.bf16.msra.mxu0 %v449
    %2537 = vmatmul.bf16.gmra.mxu0 %v2527
    %v2538 = vpop.f32.mrf.mxu0
    %v2539 = vadd.f32 0.0, %v2538
    %v2540 = vpop.f32.mrf.mxu0
    %2541 = vdwg.mxu0
    %v2542 = vadd.f32 %v2389, %v2539
    %2543 = vrot.lane.b32.xlu0 %v2372, 32
    %v2544 = vpop.permute.xlu0 %2543
    %v2546 = vadd.f32 %v2542, %v2544
    %v2547 = vxor.u32 %v2546, 2147483648
    %v2548 = vmul.f32 %v2547, 1.442695
    %v2549 = vpow.pop %v2548
    %v2550 = vadd.f32 %v2549, 1.0
    %v2551 = vrcp.pop %v2550
    %v2552 = vmul.f32 %v2550, %v2551
    %v2553 = vsub.f32 1.0, %v2552
    %v2554 = vmul.f32 %v2551, %v2553
    %v2555 = vadd.f32 %v2551, %v2554
    %vm2556 = vweird.f32 %v2550
    %vm2557 = vweird.f32 %v2551
    %vm2558 = vmor %vm2556, %vm2557
    %v2559 = vsel %vm2558, %v2551, %v2555
    %v2560 = vand.u32 2147483647, %v2550
    %vm2561 = vcmp.eq.f32.partialorder %v2560, 8.507059e+37
    %v2562 = vand.u32 %v2550, 2147483648
    %v2563 = vor.u32 1.1754944e-38, %v2562
    %v2564 = vsel %vm2561, %v2563, %v2559
    %v2565 = vmul.f32 1.0, %v2564
    %2566 = vrot.lane.b32.xlu0 %v2372, 24
    %v2567 = vpop.permute.xlu0 %2566
    %v2569 = vmul.f32 %v2565, %v2567
    %2571 = vrot.lane.b32.xlu0 %v2569, 8
    %v2572 = vpop.permute.xlu0 %2571
    %v2574 = vadd.f32 %v2542, %v2572
    %v2575 = vtanh.pop %v2574
    %v2576 = vsub.f32 1.0, %v2565
    %2578 = vrot.lane.b32.xlu0 %v2575, 124
    %v2579 = vpop.permute.xlu0 %2578
    %v2581 = vmul.f32 %v2576, %v2579
    %2582 = vrot.lane.b32.xlu0 %v2227, 100
    %v2583 = vpop.permute.xlu0 %2582
    %v2585 = vmul.f32 %v2565, %v2583
    %v2586 = vadd.f32 %v2581, %v2585
    %v2587 = vpack.c.bf16 %v2586, %v2586
    %2589 = vrot.lane.b32.xlu0 %v2587, 124
    %v2590 = vpop.permute.xlu0 %2589
    %v2592 = vsel %vm81, %v2590, 0
    %2594 = vmatpush.bf16.msra.mxu0 0
    %2595 = vmatpush.bf16.msra.mxu0 0
    %2596 = vmatpush.bf16.msra.mxu0 0
    %2597 = vmatpush.bf16.msra.mxu0 0
    %2598 = vmatpush.bf16.msra.mxu0 0
    %2599 = vmatpush.bf16.msra.mxu0 0
    %2600 = vmatpush.bf16.msra.mxu0 0
    %2601 = vmatpush.bf16.msra.mxu0 %v518
    %2602 = vmatmul.bf16.gmra.mxu0 %v2592
    %v2603 = vpop.f32.mrf.mxu0
    %v2604 = vadd.f32 %v510, %v2603
    %v2605 = vpop.f32.mrf.mxu0
    %2606 = vdwg.mxu0
    %2608 = vrot.lane.b32.xlu0 %v2604, 4
    %v2609 = vpop.permute.xlu0 %2608
    %v2611 = vadd.f32 %v2521, %v2609
    %v2612 = vmax.f32 %v2611, 0.0
    %v2613 = vpack.c.bf16 %v2612, %v2612
    %2615 = vrot.lane.b32.xlu0 %v2613, 124
    %v2616 = vpop.permute.xlu0 %2615
    %v2618 = vsel %vm574, %v2616, 0
    %2620 = vmatpush.bf16.msra.mxu0 0
    %2621 = vmatpush.bf16.msra.mxu0 0
    %2622 = vmatpush.bf16.msra.mxu0 0
    %2623 = vmatpush.bf16.msra.mxu0 %v568
    %2624 = vmatpush.bf16.msra.mxu0 %v567
    %2625 = vmatpush.bf16.msra.mxu0 %v566
    %2626 = vmatpush.bf16.msra.mxu0 %v565
    %2627 = vmatpush.bf16.msra.mxu0 %v564
    %2628 = vmatmul.bf16.gmra.mxu0 %v2618
    %v2629 = vpop.f32.mrf.mxu0
    %v2630 = vadd.f32 %v540, %v2629
    %v2631 = vpop.f32.mrf.mxu0
    %2632 = vdwg.mxu0
    %v2633 = vpack.c.bf16 %v2630, %v2630
    %v2635 = vsel %vm181, %v2633, 0
    %2637 = vmatpush.bf16.msra.mxu0 0
    %2638 = vmatpush.bf16.msra.mxu0 0
    %2639 = vmatpush.bf16.msra.mxu0 0
    %2640 = vmatpush.bf16.msra.mxu0 0
    %2641 = vmatpush.bf16.msra.mxu0 0
    %2642 = vmatpush.bf16.msra.mxu0 0
    %2643 = vmatpush.bf16.msra.mxu0 0
    %2644 = vmatpush.bf16.msra.mxu0 %v596
    %2645 = vmatmul.bf16.gmra.mxu0 %v2635
    %v2646 = vpop.f32.mrf.mxu0
    %v2647 = vadd.f32 0.0, %v2646
    %v2648 = vpop.f32.mrf.mxu0
    %2649 = vdwg.mxu0
    %2651 = vrot.lane.b32.xlu0 %v2647, 80
    %v2652 = vpop.permute.xlu0 %2651
    %v2654 = vadd.f32 %v2604, %v2652
    %v2655 = vmax.f32 %v2654, 0.0
    %v2656 = vpack.c.bf16 %v2655, %v2655
    %2658 = vrot.lane.b32.xlu0 %v2656, 48
    %v2659 = vpop.permute.xlu0 %2658
    %v2661 = vsel %vm353, %v2659, 0
    %2663 = vmatpush.bf16.msra.mxu0 0
    %2664 = vmatpush.bf16.msra.mxu0 0
    %2665 = vmatpush.bf16.msra.mxu0 0
    %2666 = vmatpush.bf16.msra.mxu0 0
    %2667 = vmatpush.bf16.msra.mxu0 0
    %2668 = vmatpush.bf16.msra.mxu0 0
    %2669 = vmatpush.bf16.msra.mxu0 0
    %2670 = vmatpush.bf16.msra.mxu0 %v625
    %2671 = vmatmul.bf16.gmra.mxu0 %v2661
    %v2672 = vpop.f32.mrf.mxu0
    %v2673 = vadd.f32 0.0, %v2672
    %v2674 = vpop.f32.mrf.mxu0
    %2675 = vdwg.mxu0
    %2677 = vrot.lane.b32.xlu0 %v2673, 84
    %v2678 = vpop.permute.xlu0 %2677
    %v2680 = vadd.f32 %v2521, %v2678
    %v2681 = vmax.f32 %v2680, 0.0
    %2683 = vrot.lane.b32.xlu0 %v2274, 2
    %v2684 = vpop.permute.xlu0 %2683
    %2686 = vrot.lane.b32.xlu0 %v2274, 4
    %v2687 = vpop.permute.xlu0 %2686
    %2689 = vrot.lane.b32.xlu0 %v2274, 6
    %v2690 = vpop.permute.xlu0 %2689
    %v2692 = vsel %vm114, %v2274, %v2684
    %v2693 = vsel %vm81, %v2692, %v2687
    %v2694 = vsel %vm661, %v2693, %v2690
    %v2695 = vmul.f32 %v2630, %v2694
    %v2697 = vsel %vm181, %v2695, 0
    %2699 = vmatpush.msra.mxu0 0.0
    %2700 = vmatpush.msra.mxu0 0.0
    %2701 = vmatpush.msra.mxu0 0.0
    %2702 = vmatpush.msra.mxu0 0.0
    %2703 = vmatpush.msra.mxu0 0.0
    %2704 = vmatpush.msra.mxu0 0.0
    %2705 = vmatpush.msra.mxu0 0.0
    %2706 = vmatpush.msra.mxu0 0.0
    %2707 = vmatpush.msra.mxu0 0.0
    %2708 = vmatpush.msra.mxu0 0.0
    %2709 = vmatpush.msra.mxu0 0.0
    %2710 = vmatpush.msra.mxu0 0.0
    %2711 = vmatpush.msra.mxu0 0.0
    %2712 = vmatpush.msra.mxu0 0.0
    %2713 = vmatpush.msra.mxu0 0.0
    %2714 = vmatpush.msra.mxu0 %v72
    %2715 = vmatmul.f32.gmra.mxu0 %v2697
    %v2716 = vpop.f32.mrf.mxu0
    %v2717 = vadd.f32 0.0, %v2716
    %2718 = vdwg.mxu0
    %v2719 = vadd.f32 %v2251, %v2717
    %s2720 = scalar_lea.vmem %s4, 32
    %2721 = vst.msk [vmem:[%s2720] sm:$0xff] %vm81, %v2719
    %2723 = vrot.lane.b32.xlu0 %v2437, 52
    %v2724 = vpop.permute.xlu0 %2723
    %2727 = vrot.lane.b32.xlu0 %v2681, 60
    %v2728 = vpop.permute.xlu0 %2727
    %2731 = vrot.lane.b32.xlu0 %v2586, 28
    %v2732 = vpop.permute.xlu0 %2731
    %v2734 = vsel %vm353, %v2724, %v2728
    %v2735 = vsel %vm702, %v2734, %v2732
    %s2736 = scalar_lea.vmem %s0, 40
    %v2737 = vld [vmem:[%s2736] sm:$0xff]
    %v2739 = vsel %vm81, %v2719, 0
    %2741 = vmatpush.msra.mxu0 0.0
    %2742 = vmatpush.msra.mxu0 0.0
    %2743 = vmatpush.msra.mxu0 0.0
    %2744 = vmatpush.msra.mxu0 0.0
    %2745 = vmatpush.msra.mxu0 0.0
    %2746 = vmatpush.msra.mxu0 0.0
    %2747 = vmatpush.msra.mxu0 0.0
    %2748 = vmatpush.msra.mxu0 0.0
    %2749 = vmatpush.msra.mxu0 0.0
    %2750 = vmatpush.msra.mxu0 0.0
    %2751 = vmatpush.msra.mxu0 0.0
    %2752 = vmatpush.msra.mxu0 0.0
    %2753 = vmatpush.msra.mxu0 0.0
    %2754 = vmatpush.msra.mxu0 0.0
    %2755 = vmatpush.msra.mxu0 0.0
    %2756 = vmatpush.msra.mxu0 %v87
    %2757 = vmatmul.f32.gmra.mxu0 %v2739
    %v2758 = vpop.f32.mrf.mxu0
    %v2759 = vadd.f32 0.0, %v2758
    %2760 = vdwg.mxu0
    %v2761 = vsub.f32 %v2737, %v2229
    %v2762 = vmul.f32 %v2761, %v2761
    %v2763 = vsel %vm114, %v2762, 0.0
    %2764 = vadd.xlane.f32.xlu0 %v2763
    %v2765 = vpop.xlane.xlu0 %2764
    %v2766 = vmax.f32 %v2765, 1e-24
    %v2767 = vrsqrt.pop %v2766
    %v2768 = vmul.f32 %v2767, %v2766
    %v2769 = vmul.f32 %v2768, %v2767
    %v2770 = vmul.f32 0.5, %v2769
    %v2771 = vsub.f32 1.5, %v2770
    %v2772 = vmul.f32 %v2767, %v2771
    %vm2773 = vweird.f32 %v2766
    %vm2774 = vweird.f32 %v2767
    %vm2775 = vmor %vm2773, %vm2774
    %v2776 = vsel %vm2775, %v2767, %v2772
    %v2777 = vmul.f32 %v2761, %v2776
    %2779 = vrot.lane.b32.xlu0 %v2759, 124
    %v2780 = vpop.permute.xlu0 %2779
    %v2782 = vsub.f32 %v2737, %v2780
    %v2783 = vmul.f32 %v2782, %v2782
    %v2784 = vsel %vm114, %v2783, 0.0
    %2785 = vadd.xlane.f32.xlu0 %v2784
    %v2786 = vpop.xlane.xlu0 %2785
    %v2787 = vmax.f32 %v2786, 1e-24
    %v2788 = vrsqrt.pop %v2787
    %v2789 = vmul.f32 %v2788, %v2787
    %v2790 = vmul.f32 %v2789, %v2788
    %v2791 = vmul.f32 0.5, %v2790
    %v2792 = vsub.f32 1.5, %v2791
    %v2793 = vmul.f32 %v2788, %v2792
    %vm2794 = vweird.f32 %v2787
    %vm2795 = vweird.f32 %v2788
    %vm2796 = vmor %vm2794, %vm2795
    %v2797 = vsel %vm2796, %v2788, %v2793
    %v2798 = vmul.f32 %v2782, %v2797
    %v2799 = vsub.f32 %v2719, %v2211
    %v2800 = vmul.f32 %v2799, %v2799
    %v2801 = vsel %vm81, %v2800, 0.0
    %2802 = vadd.xlane.f32.xlu0 %v2801
    %v2803 = vpop.xlane.xlu0 %2802
    %v2804 = vmax.f32 %v2803, 1e-24
    %v2805 = vrsqrt.pop %v2804
    %v2806 = vmul.f32 %v2805, %v2804
    %v2807 = vmul.f32 %v2806, %v2805
    %v2808 = vmul.f32 0.5, %v2807
    %v2809 = vsub.f32 1.5, %v2808
    %v2810 = vmul.f32 %v2805, %v2809
    %vm2811 = vweird.f32 %v2804
    %vm2812 = vweird.f32 %v2805
    %vm2813 = vmor %vm2811, %vm2812
    %v2814 = vsel %vm2813, %v2805, %v2810
    %v2815 = vmul.f32 %v2799, %v2814
    %v2816 = vsub.f32 %v2719, %v2251
    %v2817 = vmul.f32 %v2816, %v2816
    %v2818 = vsel %vm81, %v2817, 0.0
    %2819 = vadd.xlane.f32.xlu0 %v2818
    %v2820 = vpop.xlane.xlu0 %2819
    %v2821 = vmax.f32 %v2820, 1e-24
    %v2822 = vrsqrt.pop %v2821
    %v2823 = vmul.f32 %v2822, %v2821
    %v2824 = vmul.f32 %v2823, %v2822
    %v2825 = vmul.f32 0.5, %v2824
    %v2826 = vsub.f32 1.5, %v2825
    %v2827 = vmul.f32 %v2822, %v2826
    %vm2828 = vweird.f32 %v2821
    %vm2829 = vweird.f32 %v2822
    %vm2830 = vmor %vm2828, %vm2829
    %v2831 = vsel %vm2830, %v2822, %v2827
    %v2832 = vmul.f32 %v2816, %v2831
    %2834 = vrot.lane.b32.xlu0 %v2798, 2
    %v2835 = vpop.permute.xlu0 %2834
    %2838 = vrot.lane.b32.xlu0 %v2815, 4
    %v2839 = vpop.permute.xlu0 %2838
    %2842 = vrot.lane.b32.xlu0 %v2832, 8
    %v2843 = vpop.permute.xlu0 %2842
    %v2845 = vsel %vm114, %v2777, %v2835
    %v2846 = vsel %vm81, %v2845, %v2839
    %v2847 = vsel %vm181, %v2846, %v2843
    %v2848 = vpack.c.bf16 %v2847, %v2847
    %v2850 = vsel %vm190, %v2848, 0
    %2852 = vmatpush.bf16.msra.mxu0 0
    %2853 = vmatpush.bf16.msra.mxu0 0
    %2854 = vmatpush.bf16.msra.mxu0 0
    %2855 = vmatpush.bf16.msra.mxu0 0
    %2856 = vmatpush.bf16.msra.mxu0 0
    %2857 = vmatpush.bf16.msra.mxu0 0
    %2858 = vmatpush.bf16.msra.mxu0 0
    %2859 = vmatpush.bf16.msra.mxu0 %v196
    %2860 = vmatmul.bf16.gmra.mxu0 %v2850
    %v2861 = vpop.f32.mrf.mxu0
    %v2862 = vadd.f32 %v184, %v2861
    %v2863 = vpop.f32.mrf.mxu0
    %2864 = vdwg.mxu0
    %v2865 = vmax.f32 %v2862, 0.0
    %v2866 = vpack.c.bf16 %v2735, %v2735
    %v2868 = vsel %vm232, %v2866, 0
    %2870 = vmatpush.bf16.msra.mxu0 0
    %2871 = vmatpush.bf16.msra.mxu0 0
    %2872 = vmatpush.bf16.msra.mxu0 0
    %2873 = vmatpush.bf16.msra.mxu0 0
    %2874 = vmatpush.bf16.msra.mxu0 0
    %2875 = vmatpush.bf16.msra.mxu0 %v238
    %2876 = vmatpush.bf16.msra.mxu0 %v228
    %2877 = vmatpush.bf16.msra.mxu0 %v227
    %2878 = vmatmul.bf16.gmra.mxu0 %v2868
    %v2879 = vpop.f32.mrf.mxu0
    %v2880 = vadd.f32 %v213, %v2879
    %v2881 = vpop.f32.mrf.mxu0
    %2882 = vdwg.mxu0
    %v2883 = vpack.c.bf16 %v2865, %v2865
    %v2885 = vsel %vm278, %v2883, 0
    %2887 = vmatpush.bf16.msra.mxu0 0
    %2888 = vmatpush.bf16.msra.mxu0 0
    %2889 = vmatpush.bf16.msra.mxu0 0
    %2890 = vmatpush.bf16.msra.mxu0 0
    %2891 = vmatpush.bf16.msra.mxu0 %v283
    %2892 = vmatpush.bf16.msra.mxu0 %v273
    %2893 = vmatpush.bf16.msra.mxu0 %v272
    %2894 = vmatpush.bf16.msra.mxu0 %v271
    %2895 = vmatmul.bf16.gmra.mxu0 %v2885
    %v2896 = vpop.f32.mrf.mxu0
    %v2897 = vadd.f32 %v254, %v2896
    %v2898 = vpop.f32.mrf.mxu0
    %2899 = vdwg.mxu0
    %2901 = vrot.lane.b32.xlu0 %v2880, 60
    %v2902 = vpop.permute.xlu0 %2901
    %v2904 = vadd.f32 %v2897, %v2902
    %v2905 = vxor.u32 %v2904, 2147483648
    %v2906 = vmul.f32 %v2905, 1.442695
    %v2907 = vpow.pop %v2906
    %v2908 = vadd.f32 %v2907, 1.0
    %v2909 = vrcp.pop %v2908
    %v2910 = vmul.f32 %v2908, %v2909
    %v2911 = vsub.f32 1.0, %v2910
    %v2912 = vmul.f32 %v2909, %v2911
    %v2913 = vadd.f32 %v2909, %v2912
    %vm2914 = vweird.f32 %v2908
    %vm2915 = vweird.f32 %v2909
    %vm2916 = vmor %vm2914, %vm2915
    %v2917 = vsel %vm2916, %v2909, %v2913
    %v2918 = vand.u32 2147483647, %v2908
    %vm2919 = vcmp.eq.f32.partialorder %v2918, 8.507059e+37
    %v2920 = vand.u32 %v2908, 2147483648
    %v2921 = vor.u32 1.1754944e-38, %v2920
    %v2922 = vsel %vm2919, %v2921, %v2917
    %v2923 = vmul.f32 1.0, %v2922
    %2924 = vrot.lane.b32.xlu0 %v2880, 28
    %v2925 = vpop.permute.xlu0 %2924
    %v2927 = vmul.f32 %v2923, %v2925
    %2929 = vrot.lane.b32.xlu0 %v2927, 32
    %v2930 = vpop.permute.xlu0 %2929
    %v2932 = vadd.f32 %v2897, %v2930
    %v2933 = vtanh.pop %v2932
    %v2934 = vsub.f32 1.0, %v2923
    %2936 = vrot.lane.b32.xlu0 %v2933, 112
    %v2937 = vpop.permute.xlu0 %2936
    %v2939 = vmul.f32 %v2934, %v2937
    %2941 = vrot.lane.b32.xlu0 %v2735, 76
    %v2942 = vpop.permute.xlu0 %2941
    %v2944 = vmul.f32 %v2923, %v2942
    %v2945 = vadd.f32 %v2939, %v2944
    %v2946 = vpack.c.bf16 %v2945, %v2945
    %2948 = vrot.lane.b32.xlu0 %v2946, 52
    %v2949 = vpop.permute.xlu0 %2948
    %v2951 = vsel %vm353, %v2949, 0
    %2953 = vmatpush.bf16.msra.mxu0 0
    %2954 = vmatpush.bf16.msra.mxu0 0
    %2955 = vmatpush.bf16.msra.mxu0 0
    %2956 = vmatpush.bf16.msra.mxu0 0
    %2957 = vmatpush.bf16.msra.mxu0 0
    %2958 = vmatpush.bf16.msra.mxu0 0
    %2959 = vmatpush.bf16.msra.mxu0 0
    %2960 = vmatpush.bf16.msra.mxu0 %v351
    %2961 = vmatmul.bf16.gmra.mxu0 %v2951
    %v2962 = vpop.f32.mrf.mxu0
    %v2963 = vadd.f32 0.0, %v2962
    %v2964 = vpop.f32.mrf.mxu0
    %2965 = vdwg.mxu0
    %2967 = vrot.lane.b32.xlu0 %v2963, 12
    %v2968 = vpop.permute.xlu0 %2967
    %v2970 = vadd.f32 %v2897, %v2968
    %2971 = vrot.lane.b32.xlu0 %v2880, 92
    %v2972 = vpop.permute.xlu0 %2971
    %v2974 = vadd.f32 %v2970, %v2972
    %v2975 = vxor.u32 %v2974, 2147483648
    %v2976 = vmul.f32 %v2975, 1.442695
    %v2977 = vpow.pop %v2976
    %v2978 = vadd.f32 %v2977, 1.0
    %v2979 = vrcp.pop %v2978
    %v2980 = vmul.f32 %v2978, %v2979
    %v2981 = vsub.f32 1.0, %v2980
    %v2982 = vmul.f32 %v2979, %v2981
    %v2983 = vadd.f32 %v2979, %v2982
    %vm2984 = vweird.f32 %v2978
    %vm2985 = vweird.f32 %v2979
    %vm2986 = vmor %vm2984, %vm2985
    %v2987 = vsel %vm2986, %v2979, %v2983
    %v2988 = vand.u32 2147483647, %v2978
    %vm2989 = vcmp.eq.f32.partialorder %v2988, 8.507059e+37
    %v2990 = vand.u32 %v2978, 2147483648
    %v2991 = vor.u32 1.1754944e-38, %v2990
    %v2992 = vsel %vm2989, %v2991, %v2987
    %v2993 = vmul.f32 1.0, %v2992
    %v2994 = vmul.f32 %v2993, %v2902
    %2996 = vrot.lane.b32.xlu0 %v2994, 32
    %v2997 = vpop.permute.xlu0 %2996
    %v2999 = vadd.f32 %v2970, %v2997
    %v3000 = vtanh.pop %v2999
    %v3001 = vsub.f32 1.0, %v2993
    %3003 = vrot.lane.b32.xlu0 %v3000, 112
    %v3004 = vpop.permute.xlu0 %3003
    %v3006 = vmul.f32 %v3001, %v3004
    %3007 = vrot.lane.b32.xlu0 %v2735, 12
    %v3008 = vpop.permute.xlu0 %3007
    %v3010 = vmul.f32 %v2993, %v3008
    %v3011 = vadd.f32 %v3006, %v3010
    %v3012 = vpack.c.bf16 %v3011, %v3011
    %3014 = vrot.lane.b32.xlu0 %v3012, 100
    %v3015 = vpop.permute.xlu0 %3014
    %v3017 = vsel %vm353, %v3015, 0
    %3019 = vmatpush.bf16.msra.mxu0 0
    %3020 = vmatpush.bf16.msra.mxu0 0
    %3021 = vmatpush.bf16.msra.mxu0 0
    %3022 = vmatpush.bf16.msra.mxu0 0
    %3023 = vmatpush.bf16.msra.mxu0 0
    %3024 = vmatpush.bf16.msra.mxu0 0
    %3025 = vmatpush.bf16.msra.mxu0 0
    %3026 = vmatpush.bf16.msra.mxu0 %v425
    %3027 = vmatmul.bf16.gmra.mxu0 %v3017
    %v3028 = vpop.f32.mrf.mxu0
    %v3029 = vadd.f32 %v417, %v3028
    %v3030 = vpop.f32.mrf.mxu0
    %3031 = vdwg.mxu0
    %v3032 = vmax.f32 %v3029, 0.0
    %v3033 = vpack.c.bf16 %v3032, %v3032
    %v3035 = vsel %vm81, %v3033, 0
    %3037 = vmatpush.bf16.msra.mxu0 0
    %3038 = vmatpush.bf16.msra.mxu0 0
    %3039 = vmatpush.bf16.msra.mxu0 0
    %3040 = vmatpush.bf16.msra.mxu0 0
    %3041 = vmatpush.bf16.msra.mxu0 0
    %3042 = vmatpush.bf16.msra.mxu0 0
    %3043 = vmatpush.bf16.msra.mxu0 0
    %3044 = vmatpush.bf16.msra.mxu0 %v449
    %3045 = vmatmul.bf16.gmra.mxu0 %v3035
    %v3046 = vpop.f32.mrf.mxu0
    %v3047 = vadd.f32 0.0, %v3046
    %v3048 = vpop.f32.mrf.mxu0
    %3049 = vdwg.mxu0
    %v3050 = vadd.f32 %v2897, %v3047
    %3051 = vrot.lane.b32.xlu0 %v2880, 32
    %v3052 = vpop.permute.xlu0 %3051
    %v3054 = vadd.f32 %v3050, %v3052
    %v3055 = vxor.u32 %v3054, 2147483648
    %v3056 = vmul.f32 %v3055, 1.442695
    %v3057 = vpow.pop %v3056
    %v3058 = vadd.f32 %v3057, 1.0
    %v3059 = vrcp.pop %v3058
    %v3060 = vmul.f32 %v3058, %v3059
    %v3061 = vsub.f32 1.0, %v3060
    %v3062 = vmul.f32 %v3059, %v3061
    %v3063 = vadd.f32 %v3059, %v3062
    %vm3064 = vweird.f32 %v3058
    %vm3065 = vweird.f32 %v3059
    %vm3066 = vmor %vm3064, %vm3065
    %v3067 = vsel %vm3066, %v3059, %v3063
    %v3068 = vand.u32 2147483647, %v3058
    %vm3069 = vcmp.eq.f32.partialorder %v3068, 8.507059e+37
    %v3070 = vand.u32 %v3058, 2147483648
    %v3071 = vor.u32 1.1754944e-38, %v3070
    %v3072 = vsel %vm3069, %v3071, %v3067
    %v3073 = vmul.f32 1.0, %v3072
    %3074 = vrot.lane.b32.xlu0 %v2880, 24
    %v3075 = vpop.permute.xlu0 %3074
    %v3077 = vmul.f32 %v3073, %v3075
    %3079 = vrot.lane.b32.xlu0 %v3077, 8
    %v3080 = vpop.permute.xlu0 %3079
    %v3082 = vadd.f32 %v3050, %v3080
    %v3083 = vtanh.pop %v3082
    %v3084 = vsub.f32 1.0, %v3073
    %3086 = vrot.lane.b32.xlu0 %v3083, 124
    %v3087 = vpop.permute.xlu0 %3086
    %v3089 = vmul.f32 %v3084, %v3087
    %3090 = vrot.lane.b32.xlu0 %v2735, 100
    %v3091 = vpop.permute.xlu0 %3090
    %v3093 = vmul.f32 %v3073, %v3091
    %v3094 = vadd.f32 %v3089, %v3093
    %v3095 = vpack.c.bf16 %v3094, %v3094
    %3097 = vrot.lane.b32.xlu0 %v3095, 124
    %v3098 = vpop.permute.xlu0 %3097
    %v3100 = vsel %vm81, %v3098, 0
    %3102 = vmatpush.bf16.msra.mxu0 0
    %3103 = vmatpush.bf16.msra.mxu0 0
    %3104 = vmatpush.bf16.msra.mxu0 0
    %3105 = vmatpush.bf16.msra.mxu0 0
    %3106 = vmatpush.bf16.msra.mxu0 0
    %3107 = vmatpush.bf16.msra.mxu0 0
    %3108 = vmatpush.bf16.msra.mxu0 0
    %3109 = vmatpush.bf16.msra.mxu0 %v518
    %3110 = vmatmul.bf16.gmra.mxu0 %v3100
    %v3111 = vpop.f32.mrf.mxu0
    %v3112 = vadd.f32 %v510, %v3111
    %v3113 = vpop.f32.mrf.mxu0
    %3114 = vdwg.mxu0
    %3116 = vrot.lane.b32.xlu0 %v3112, 4
    %v3117 = vpop.permute.xlu0 %3116
    %v3119 = vadd.f32 %v3029, %v3117
    %v3120 = vmax.f32 %v3119, 0.0
    %v3121 = vpack.c.bf16 %v3120, %v3120
    %3123 = vrot.lane.b32.xlu0 %v3121, 124
    %v3124 = vpop.permute.xlu0 %3123
    %v3126 = vsel %vm574, %v3124, 0
    %3128 = vmatpush.bf16.msra.mxu0 0
    %3129 = vmatpush.bf16.msra.mxu0 0
    %3130 = vmatpush.bf16.msra.mxu0 0
    %3131 = vmatpush.bf16.msra.mxu0 %v568
    %3132 = vmatpush.bf16.msra.mxu0 %v567
    %3133 = vmatpush.bf16.msra.mxu0 %v566
    %3134 = vmatpush.bf16.msra.mxu0 %v565
    %3135 = vmatpush.bf16.msra.mxu0 %v564
    %3136 = vmatmul.bf16.gmra.mxu0 %v3126
    %v3137 = vpop.f32.mrf.mxu0
    %v3138 = vadd.f32 %v540, %v3137
    %v3139 = vpop.f32.mrf.mxu0
    %3140 = vdwg.mxu0
    %v3141 = vpack.c.bf16 %v3138, %v3138
    %v3143 = vsel %vm181, %v3141, 0
    %3145 = vmatpush.bf16.msra.mxu0 0
    %3146 = vmatpush.bf16.msra.mxu0 0
    %3147 = vmatpush.bf16.msra.mxu0 0
    %3148 = vmatpush.bf16.msra.mxu0 0
    %3149 = vmatpush.bf16.msra.mxu0 0
    %3150 = vmatpush.bf16.msra.mxu0 0
    %3151 = vmatpush.bf16.msra.mxu0 0
    %3152 = vmatpush.bf16.msra.mxu0 %v596
    %3153 = vmatmul.bf16.gmra.mxu0 %v3143
    %v3154 = vpop.f32.mrf.mxu0
    %v3155 = vadd.f32 0.0, %v3154
    %v3156 = vpop.f32.mrf.mxu0
    %3157 = vdwg.mxu0
    %3159 = vrot.lane.b32.xlu0 %v3155, 80
    %v3160 = vpop.permute.xlu0 %3159
    %v3162 = vadd.f32 %v3112, %v3160
    %v3163 = vmax.f32 %v3162, 0.0
    %v3164 = vpack.c.bf16 %v3163, %v3163
    %3166 = vrot.lane.b32.xlu0 %v3164, 48
    %v3167 = vpop.permute.xlu0 %3166
    %v3169 = vsel %vm353, %v3167, 0
    %3171 = vmatpush.bf16.msra.mxu0 0
    %3172 = vmatpush.bf16.msra.mxu0 0
    %3173 = vmatpush.bf16.msra.mxu0 0
    %3174 = vmatpush.bf16.msra.mxu0 0
    %3175 = vmatpush.bf16.msra.mxu0 0
    %3176 = vmatpush.bf16.msra.mxu0 0
    %3177 = vmatpush.bf16.msra.mxu0 0
    %3178 = vmatpush.bf16.msra.mxu0 %v625
    %3179 = vmatmul.bf16.gmra.mxu0 %v3169
    %v3180 = vpop.f32.mrf.mxu0
    %v3181 = vadd.f32 0.0, %v3180
    %v3182 = vpop.f32.mrf.mxu0
    %3183 = vdwg.mxu0
    %3185 = vrot.lane.b32.xlu0 %v3181, 84
    %v3186 = vpop.permute.xlu0 %3185
    %v3188 = vadd.f32 %v3029, %v3186
    %v3189 = vmax.f32 %v3188, 0.0
    %3191 = vrot.lane.b32.xlu0 %v2782, 2
    %v3192 = vpop.permute.xlu0 %3191
    %3194 = vrot.lane.b32.xlu0 %v2782, 4
    %v3195 = vpop.permute.xlu0 %3194
    %3197 = vrot.lane.b32.xlu0 %v2782, 6
    %v3198 = vpop.permute.xlu0 %3197
    %v3200 = vsel %vm114, %v2782, %v3192
    %v3201 = vsel %vm81, %v3200, %v3195
    %v3202 = vsel %vm661, %v3201, %v3198
    %v3203 = vmul.f32 %v3138, %v3202
    %v3205 = vsel %vm181, %v3203, 0
    %3207 = vmatpush.msra.mxu0 0.0
    %3208 = vmatpush.msra.mxu0 0.0
    %3209 = vmatpush.msra.mxu0 0.0
    %3210 = vmatpush.msra.mxu0 0.0
    %3211 = vmatpush.msra.mxu0 0.0
    %3212 = vmatpush.msra.mxu0 0.0
    %3213 = vmatpush.msra.mxu0 0.0
    %3214 = vmatpush.msra.mxu0 0.0
    %3215 = vmatpush.msra.mxu0 0.0
    %3216 = vmatpush.msra.mxu0 0.0
    %3217 = vmatpush.msra.mxu0 0.0
    %3218 = vmatpush.msra.mxu0 0.0
    %3219 = vmatpush.msra.mxu0 0.0
    %3220 = vmatpush.msra.mxu0 0.0
    %3221 = vmatpush.msra.mxu0 0.0
    %3222 = vmatpush.msra.mxu0 %v72
    %3223 = vmatmul.f32.gmra.mxu0 %v3205
    %v3224 = vpop.f32.mrf.mxu0
    %v3225 = vadd.f32 0.0, %v3224
    %3226 = vdwg.mxu0
    %v3227 = vadd.f32 %v2759, %v3225
    %s3228 = scalar_lea.vmem %s4, 40
    %3229 = vst.msk [vmem:[%s3228] sm:$0xff] %vm81, %v3227
    %3231 = vrot.lane.b32.xlu0 %v2945, 52
    %v3232 = vpop.permute.xlu0 %3231
    %3235 = vrot.lane.b32.xlu0 %v3189, 60
    %v3236 = vpop.permute.xlu0 %3235
    %3239 = vrot.lane.b32.xlu0 %v3094, 28
    %v3240 = vpop.permute.xlu0 %3239
    %v3242 = vsel %vm353, %v3232, %v3236
    %v3243 = vsel %vm702, %v3242, %v3240
    %s3244 = scalar_lea.vmem %s0, 48
    %v3245 = vld [vmem:[%s3244] sm:$0xff]
    %v3247 = vsel %vm81, %v3227, 0
    %3249 = vmatpush.msra.mxu0 0.0
    %3250 = vmatpush.msra.mxu0 0.0
    %3251 = vmatpush.msra.mxu0 0.0
    %3252 = vmatpush.msra.mxu0 0.0
    %3253 = vmatpush.msra.mxu0 0.0
    %3254 = vmatpush.msra.mxu0 0.0
    %3255 = vmatpush.msra.mxu0 0.0
    %3256 = vmatpush.msra.mxu0 0.0
    %3257 = vmatpush.msra.mxu0 0.0
    %3258 = vmatpush.msra.mxu0 0.0
    %3259 = vmatpush.msra.mxu0 0.0
    %3260 = vmatpush.msra.mxu0 0.0
    %3261 = vmatpush.msra.mxu0 0.0
    %3262 = vmatpush.msra.mxu0 0.0
    %3263 = vmatpush.msra.mxu0 0.0
    %3264 = vmatpush.msra.mxu0 %v87
    %3265 = vmatmul.f32.gmra.mxu0 %v3247
    %v3266 = vpop.f32.mrf.mxu0
    %v3267 = vadd.f32 0.0, %v3266
    %3268 = vdwg.mxu0
    %v3269 = vsub.f32 %v3245, %v2737
    %v3270 = vmul.f32 %v3269, %v3269
    %v3271 = vsel %vm114, %v3270, 0.0
    %3272 = vadd.xlane.f32.xlu0 %v3271
    %v3273 = vpop.xlane.xlu0 %3272
    %v3274 = vmax.f32 %v3273, 1e-24
    %v3275 = vrsqrt.pop %v3274
    %v3276 = vmul.f32 %v3275, %v3274
    %v3277 = vmul.f32 %v3276, %v3275
    %v3278 = vmul.f32 0.5, %v3277
    %v3279 = vsub.f32 1.5, %v3278
    %v3280 = vmul.f32 %v3275, %v3279
    %vm3281 = vweird.f32 %v3274
    %vm3282 = vweird.f32 %v3275
    %vm3283 = vmor %vm3281, %vm3282
    %v3284 = vsel %vm3283, %v3275, %v3280
    %v3285 = vmul.f32 %v3269, %v3284
    %3287 = vrot.lane.b32.xlu0 %v3267, 124
    %v3288 = vpop.permute.xlu0 %3287
    %v3290 = vsub.f32 %v3245, %v3288
    %v3291 = vmul.f32 %v3290, %v3290
    %v3292 = vsel %vm114, %v3291, 0.0
    %3293 = vadd.xlane.f32.xlu0 %v3292
    %v3294 = vpop.xlane.xlu0 %3293
    %v3295 = vmax.f32 %v3294, 1e-24
    %v3296 = vrsqrt.pop %v3295
    %v3297 = vmul.f32 %v3296, %v3295
    %v3298 = vmul.f32 %v3297, %v3296
    %v3299 = vmul.f32 0.5, %v3298
    %v3300 = vsub.f32 1.5, %v3299
    %v3301 = vmul.f32 %v3296, %v3300
    %vm3302 = vweird.f32 %v3295
    %vm3303 = vweird.f32 %v3296
    %vm3304 = vmor %vm3302, %vm3303
    %v3305 = vsel %vm3304, %v3296, %v3301
    %v3306 = vmul.f32 %v3290, %v3305
    %v3307 = vsub.f32 %v3227, %v2719
    %v3308 = vmul.f32 %v3307, %v3307
    %v3309 = vsel %vm81, %v3308, 0.0
    %3310 = vadd.xlane.f32.xlu0 %v3309
    %v3311 = vpop.xlane.xlu0 %3310
    %v3312 = vmax.f32 %v3311, 1e-24
    %v3313 = vrsqrt.pop %v3312
    %v3314 = vmul.f32 %v3313, %v3312
    %v3315 = vmul.f32 %v3314, %v3313
    %v3316 = vmul.f32 0.5, %v3315
    %v3317 = vsub.f32 1.5, %v3316
    %v3318 = vmul.f32 %v3313, %v3317
    %vm3319 = vweird.f32 %v3312
    %vm3320 = vweird.f32 %v3313
    %vm3321 = vmor %vm3319, %vm3320
    %v3322 = vsel %vm3321, %v3313, %v3318
    %v3323 = vmul.f32 %v3307, %v3322
    %v3324 = vsub.f32 %v3227, %v2759
    %v3325 = vmul.f32 %v3324, %v3324
    %v3326 = vsel %vm81, %v3325, 0.0
    %3327 = vadd.xlane.f32.xlu0 %v3326
    %v3328 = vpop.xlane.xlu0 %3327
    %v3329 = vmax.f32 %v3328, 1e-24
    %v3330 = vrsqrt.pop %v3329
    %v3331 = vmul.f32 %v3330, %v3329
    %v3332 = vmul.f32 %v3331, %v3330
    %v3333 = vmul.f32 0.5, %v3332
    %v3334 = vsub.f32 1.5, %v3333
    %v3335 = vmul.f32 %v3330, %v3334
    %vm3336 = vweird.f32 %v3329
    %vm3337 = vweird.f32 %v3330
    %vm3338 = vmor %vm3336, %vm3337
    %v3339 = vsel %vm3338, %v3330, %v3335
    %v3340 = vmul.f32 %v3324, %v3339
    %3342 = vrot.lane.b32.xlu0 %v3306, 2
    %v3343 = vpop.permute.xlu0 %3342
    %3346 = vrot.lane.b32.xlu0 %v3323, 4
    %v3347 = vpop.permute.xlu0 %3346
    %3350 = vrot.lane.b32.xlu0 %v3340, 8
    %v3351 = vpop.permute.xlu0 %3350
    %v3353 = vsel %vm114, %v3285, %v3343
    %v3354 = vsel %vm81, %v3353, %v3347
    %v3355 = vsel %vm181, %v3354, %v3351
    %v3356 = vpack.c.bf16 %v3355, %v3355
    %v3358 = vsel %vm190, %v3356, 0
    %3360 = vmatpush.bf16.msra.mxu0 0
    %3361 = vmatpush.bf16.msra.mxu0 0
    %3362 = vmatpush.bf16.msra.mxu0 0
    %3363 = vmatpush.bf16.msra.mxu0 0
    %3364 = vmatpush.bf16.msra.mxu0 0
    %3365 = vmatpush.bf16.msra.mxu0 0
    %3366 = vmatpush.bf16.msra.mxu0 0
    %3367 = vmatpush.bf16.msra.mxu0 %v196
    %3368 = vmatmul.bf16.gmra.mxu0 %v3358
    %v3369 = vpop.f32.mrf.mxu0
    %v3370 = vadd.f32 %v184, %v3369
    %v3371 = vpop.f32.mrf.mxu0
    %3372 = vdwg.mxu0
    %v3373 = vmax.f32 %v3370, 0.0
    %v3374 = vpack.c.bf16 %v3243, %v3243
    %v3376 = vsel %vm232, %v3374, 0
    %3378 = vmatpush.bf16.msra.mxu0 0
    %3379 = vmatpush.bf16.msra.mxu0 0
    %3380 = vmatpush.bf16.msra.mxu0 0
    %3381 = vmatpush.bf16.msra.mxu0 0
    %3382 = vmatpush.bf16.msra.mxu0 0
    %3383 = vmatpush.bf16.msra.mxu0 %v238
    %3384 = vmatpush.bf16.msra.mxu0 %v228
    %3385 = vmatpush.bf16.msra.mxu0 %v227
    %3386 = vmatmul.bf16.gmra.mxu0 %v3376
    %v3387 = vpop.f32.mrf.mxu0
    %v3388 = vadd.f32 %v213, %v3387
    %v3389 = vpop.f32.mrf.mxu0
    %3390 = vdwg.mxu0
    %v3391 = vpack.c.bf16 %v3373, %v3373
    %v3393 = vsel %vm278, %v3391, 0
    %3395 = vmatpush.bf16.msra.mxu0 0
    %3396 = vmatpush.bf16.msra.mxu0 0
    %3397 = vmatpush.bf16.msra.mxu0 0
    %3398 = vmatpush.bf16.msra.mxu0 0
    %3399 = vmatpush.bf16.msra.mxu0 %v283
    %3400 = vmatpush.bf16.msra.mxu0 %v273
    %3401 = vmatpush.bf16.msra.mxu0 %v272
    %3402 = vmatpush.bf16.msra.mxu0 %v271
    %3403 = vmatmul.bf16.gmra.mxu0 %v3393
    %v3404 = vpop.f32.mrf.mxu0
    %v3405 = vadd.f32 %v254, %v3404
    %v3406 = vpop.f32.mrf.mxu0
    %3407 = vdwg.mxu0
    %3409 = vrot.lane.b32.xlu0 %v3388, 60
    %v3410 = vpop.permute.xlu0 %3409
    %v3412 = vadd.f32 %v3405, %v3410
    %v3413 = vxor.u32 %v3412, 2147483648
    %v3414 = vmul.f32 %v3413, 1.442695
    %v3415 = vpow.pop %v3414
    %v3416 = vadd.f32 %v3415, 1.0
    %v3417 = vrcp.pop %v3416
    %v3418 = vmul.f32 %v3416, %v3417
    %v3419 = vsub.f32 1.0, %v3418
    %v3420 = vmul.f32 %v3417, %v3419
    %v3421 = vadd.f32 %v3417, %v3420
    %vm3422 = vweird.f32 %v3416
    %vm3423 = vweird.f32 %v3417
    %vm3424 = vmor %vm3422, %vm3423
    %v3425 = vsel %vm3424, %v3417, %v3421
    %v3426 = vand.u32 2147483647, %v3416
    %vm3427 = vcmp.eq.f32.partialorder %v3426, 8.507059e+37
    %v3428 = vand.u32 %v3416, 2147483648
    %v3429 = vor.u32 1.1754944e-38, %v3428
    %v3430 = vsel %vm3427, %v3429, %v3425
    %v3431 = vmul.f32 1.0, %v3430
    %3432 = vrot.lane.b32.xlu0 %v3388, 28
    %v3433 = vpop.permute.xlu0 %3432
    %v3435 = vmul.f32 %v3431, %v3433
    %3437 = vrot.lane.b32.xlu0 %v3435, 32
    %v3438 = vpop.permute.xlu0 %3437
    %v3440 = vadd.f32 %v3405, %v3438
    %v3441 = vtanh.pop %v3440
    %v3442 = vsub.f32 1.0, %v3431
    %3444 = vrot.lane.b32.xlu0 %v3441, 112
    %v3445 = vpop.permute.xlu0 %3444
    %v3447 = vmul.f32 %v3442, %v3445
    %3449 = vrot.lane.b32.xlu0 %v3243, 76
    %v3450 = vpop.permute.xlu0 %3449
    %v3452 = vmul.f32 %v3431, %v3450
    %v3453 = vadd.f32 %v3447, %v3452
    %v3454 = vpack.c.bf16 %v3453, %v3453
    %3456 = vrot.lane.b32.xlu0 %v3454, 52
    %v3457 = vpop.permute.xlu0 %3456
    %v3459 = vsel %vm353, %v3457, 0
    %3461 = vmatpush.bf16.msra.mxu0 0
    %3462 = vmatpush.bf16.msra.mxu0 0
    %3463 = vmatpush.bf16.msra.mxu0 0
    %3464 = vmatpush.bf16.msra.mxu0 0
    %3465 = vmatpush.bf16.msra.mxu0 0
    %3466 = vmatpush.bf16.msra.mxu0 0
    %3467 = vmatpush.bf16.msra.mxu0 0
    %3468 = vmatpush.bf16.msra.mxu0 %v351
    %3469 = vmatmul.bf16.gmra.mxu0 %v3459
    %v3470 = vpop.f32.mrf.mxu0
    %v3471 = vadd.f32 0.0, %v3470
    %v3472 = vpop.f32.mrf.mxu0
    %3473 = vdwg.mxu0
    %3475 = vrot.lane.b32.xlu0 %v3471, 12
    %v3476 = vpop.permute.xlu0 %3475
    %v3478 = vadd.f32 %v3405, %v3476
    %3479 = vrot.lane.b32.xlu0 %v3388, 92
    %v3480 = vpop.permute.xlu0 %3479
    %v3482 = vadd.f32 %v3478, %v3480
    %v3483 = vxor.u32 %v3482, 2147483648
    %v3484 = vmul.f32 %v3483, 1.442695
    %v3485 = vpow.pop %v3484
    %v3486 = vadd.f32 %v3485, 1.0
    %v3487 = vrcp.pop %v3486
    %v3488 = vmul.f32 %v3486, %v3487
    %v3489 = vsub.f32 1.0, %v3488
    %v3490 = vmul.f32 %v3487, %v3489
    %v3491 = vadd.f32 %v3487, %v3490
    %vm3492 = vweird.f32 %v3486
    %vm3493 = vweird.f32 %v3487
    %vm3494 = vmor %vm3492, %vm3493
    %v3495 = vsel %vm3494, %v3487, %v3491
    %v3496 = vand.u32 2147483647, %v3486
    %vm3497 = vcmp.eq.f32.partialorder %v3496, 8.507059e+37
    %v3498 = vand.u32 %v3486, 2147483648
    %v3499 = vor.u32 1.1754944e-38, %v3498
    %v3500 = vsel %vm3497, %v3499, %v3495
    %v3501 = vmul.f32 1.0, %v3500
    %v3502 = vmul.f32 %v3501, %v3410
    %3504 = vrot.lane.b32.xlu0 %v3502, 32
    %v3505 = vpop.permute.xlu0 %3504
    %v3507 = vadd.f32 %v3478, %v3505
    %v3508 = vtanh.pop %v3507
    %v3509 = vsub.f32 1.0, %v3501
    %3511 = vrot.lane.b32.xlu0 %v3508, 112
    %v3512 = vpop.permute.xlu0 %3511
    %v3514 = vmul.f32 %v3509, %v3512
    %3515 = vrot.lane.b32.xlu0 %v3243, 12
    %v3516 = vpop.permute.xlu0 %3515
    %v3518 = vmul.f32 %v3501, %v3516
    %v3519 = vadd.f32 %v3514, %v3518
    %v3520 = vpack.c.bf16 %v3519, %v3519
    %3522 = vrot.lane.b32.xlu0 %v3520, 100
    %v3523 = vpop.permute.xlu0 %3522
    %v3525 = vsel %vm353, %v3523, 0
    %3527 = vmatpush.bf16.msra.mxu0 0
    %3528 = vmatpush.bf16.msra.mxu0 0
    %3529 = vmatpush.bf16.msra.mxu0 0
    %3530 = vmatpush.bf16.msra.mxu0 0
    %3531 = vmatpush.bf16.msra.mxu0 0
    %3532 = vmatpush.bf16.msra.mxu0 0
    %3533 = vmatpush.bf16.msra.mxu0 0
    %3534 = vmatpush.bf16.msra.mxu0 %v425
    %3535 = vmatmul.bf16.gmra.mxu0 %v3525
    %v3536 = vpop.f32.mrf.mxu0
    %v3537 = vadd.f32 %v417, %v3536
    %v3538 = vpop.f32.mrf.mxu0
    %3539 = vdwg.mxu0
    %v3540 = vmax.f32 %v3537, 0.0
    %v3541 = vpack.c.bf16 %v3540, %v3540
    %v3543 = vsel %vm81, %v3541, 0
    %3545 = vmatpush.bf16.msra.mxu0 0
    %3546 = vmatpush.bf16.msra.mxu0 0
    %3547 = vmatpush.bf16.msra.mxu0 0
    %3548 = vmatpush.bf16.msra.mxu0 0
    %3549 = vmatpush.bf16.msra.mxu0 0
    %3550 = vmatpush.bf16.msra.mxu0 0
    %3551 = vmatpush.bf16.msra.mxu0 0
    %3552 = vmatpush.bf16.msra.mxu0 %v449
    %3553 = vmatmul.bf16.gmra.mxu0 %v3543
    %v3554 = vpop.f32.mrf.mxu0
    %v3555 = vadd.f32 0.0, %v3554
    %v3556 = vpop.f32.mrf.mxu0
    %3557 = vdwg.mxu0
    %v3558 = vadd.f32 %v3405, %v3555
    %3559 = vrot.lane.b32.xlu0 %v3388, 32
    %v3560 = vpop.permute.xlu0 %3559
    %v3562 = vadd.f32 %v3558, %v3560
    %v3563 = vxor.u32 %v3562, 2147483648
    %v3564 = vmul.f32 %v3563, 1.442695
    %v3565 = vpow.pop %v3564
    %v3566 = vadd.f32 %v3565, 1.0
    %v3567 = vrcp.pop %v3566
    %v3568 = vmul.f32 %v3566, %v3567
    %v3569 = vsub.f32 1.0, %v3568
    %v3570 = vmul.f32 %v3567, %v3569
    %v3571 = vadd.f32 %v3567, %v3570
    %vm3572 = vweird.f32 %v3566
    %vm3573 = vweird.f32 %v3567
    %vm3574 = vmor %vm3572, %vm3573
    %v3575 = vsel %vm3574, %v3567, %v3571
    %v3576 = vand.u32 2147483647, %v3566
    %vm3577 = vcmp.eq.f32.partialorder %v3576, 8.507059e+37
    %v3578 = vand.u32 %v3566, 2147483648
    %v3579 = vor.u32 1.1754944e-38, %v3578
    %v3580 = vsel %vm3577, %v3579, %v3575
    %v3581 = vmul.f32 1.0, %v3580
    %3582 = vrot.lane.b32.xlu0 %v3388, 24
    %v3583 = vpop.permute.xlu0 %3582
    %v3585 = vmul.f32 %v3581, %v3583
    %3587 = vrot.lane.b32.xlu0 %v3585, 8
    %v3588 = vpop.permute.xlu0 %3587
    %v3590 = vadd.f32 %v3558, %v3588
    %v3591 = vtanh.pop %v3590
    %v3592 = vsub.f32 1.0, %v3581
    %3594 = vrot.lane.b32.xlu0 %v3591, 124
    %v3595 = vpop.permute.xlu0 %3594
    %v3597 = vmul.f32 %v3592, %v3595
    %3598 = vrot.lane.b32.xlu0 %v3243, 100
    %v3599 = vpop.permute.xlu0 %3598
    %v3601 = vmul.f32 %v3581, %v3599
    %v3602 = vadd.f32 %v3597, %v3601
    %v3603 = vpack.c.bf16 %v3602, %v3602
    %3605 = vrot.lane.b32.xlu0 %v3603, 124
    %v3606 = vpop.permute.xlu0 %3605
    %v3608 = vsel %vm81, %v3606, 0
    %3610 = vmatpush.bf16.msra.mxu0 0
    %3611 = vmatpush.bf16.msra.mxu0 0
    %3612 = vmatpush.bf16.msra.mxu0 0
    %3613 = vmatpush.bf16.msra.mxu0 0
    %3614 = vmatpush.bf16.msra.mxu0 0
    %3615 = vmatpush.bf16.msra.mxu0 0
    %3616 = vmatpush.bf16.msra.mxu0 0
    %3617 = vmatpush.bf16.msra.mxu0 %v518
    %3618 = vmatmul.bf16.gmra.mxu0 %v3608
    %v3619 = vpop.f32.mrf.mxu0
    %v3620 = vadd.f32 %v510, %v3619
    %v3621 = vpop.f32.mrf.mxu0
    %3622 = vdwg.mxu0
    %3624 = vrot.lane.b32.xlu0 %v3620, 4
    %v3625 = vpop.permute.xlu0 %3624
    %v3627 = vadd.f32 %v3537, %v3625
    %v3628 = vmax.f32 %v3627, 0.0
    %v3629 = vpack.c.bf16 %v3628, %v3628
    %3631 = vrot.lane.b32.xlu0 %v3629, 124
    %v3632 = vpop.permute.xlu0 %3631
    %v3634 = vsel %vm574, %v3632, 0
    %3636 = vmatpush.bf16.msra.mxu0 0
    %3637 = vmatpush.bf16.msra.mxu0 0
    %3638 = vmatpush.bf16.msra.mxu0 0
    %3639 = vmatpush.bf16.msra.mxu0 %v568
    %3640 = vmatpush.bf16.msra.mxu0 %v567
    %3641 = vmatpush.bf16.msra.mxu0 %v566
    %3642 = vmatpush.bf16.msra.mxu0 %v565
    %3643 = vmatpush.bf16.msra.mxu0 %v564
    %3644 = vmatmul.bf16.gmra.mxu0 %v3634
    %v3645 = vpop.f32.mrf.mxu0
    %v3646 = vadd.f32 %v540, %v3645
    %v3647 = vpop.f32.mrf.mxu0
    %3648 = vdwg.mxu0
    %v3649 = vpack.c.bf16 %v3646, %v3646
    %v3651 = vsel %vm181, %v3649, 0
    %3653 = vmatpush.bf16.msra.mxu0 0
    %3654 = vmatpush.bf16.msra.mxu0 0
    %3655 = vmatpush.bf16.msra.mxu0 0
    %3656 = vmatpush.bf16.msra.mxu0 0
    %3657 = vmatpush.bf16.msra.mxu0 0
    %3658 = vmatpush.bf16.msra.mxu0 0
    %3659 = vmatpush.bf16.msra.mxu0 0
    %3660 = vmatpush.bf16.msra.mxu0 %v596
    %3661 = vmatmul.bf16.gmra.mxu0 %v3651
    %v3662 = vpop.f32.mrf.mxu0
    %v3663 = vadd.f32 0.0, %v3662
    %v3664 = vpop.f32.mrf.mxu0
    %3665 = vdwg.mxu0
    %3667 = vrot.lane.b32.xlu0 %v3663, 80
    %v3668 = vpop.permute.xlu0 %3667
    %v3670 = vadd.f32 %v3620, %v3668
    %v3671 = vmax.f32 %v3670, 0.0
    %v3672 = vpack.c.bf16 %v3671, %v3671
    %3674 = vrot.lane.b32.xlu0 %v3672, 48
    %v3675 = vpop.permute.xlu0 %3674
    %v3677 = vsel %vm353, %v3675, 0
    %3679 = vmatpush.bf16.msra.mxu0 0
    %3680 = vmatpush.bf16.msra.mxu0 0
    %3681 = vmatpush.bf16.msra.mxu0 0
    %3682 = vmatpush.bf16.msra.mxu0 0
    %3683 = vmatpush.bf16.msra.mxu0 0
    %3684 = vmatpush.bf16.msra.mxu0 0
    %3685 = vmatpush.bf16.msra.mxu0 0
    %3686 = vmatpush.bf16.msra.mxu0 %v625
    %3687 = vmatmul.bf16.gmra.mxu0 %v3677
    %v3688 = vpop.f32.mrf.mxu0
    %v3689 = vadd.f32 0.0, %v3688
    %v3690 = vpop.f32.mrf.mxu0
    %3691 = vdwg.mxu0
    %3693 = vrot.lane.b32.xlu0 %v3689, 84
    %v3694 = vpop.permute.xlu0 %3693
    %v3696 = vadd.f32 %v3537, %v3694
    %v3697 = vmax.f32 %v3696, 0.0
    %3699 = vrot.lane.b32.xlu0 %v3290, 2
    %v3700 = vpop.permute.xlu0 %3699
    %3702 = vrot.lane.b32.xlu0 %v3290, 4
    %v3703 = vpop.permute.xlu0 %3702
    %3705 = vrot.lane.b32.xlu0 %v3290, 6
    %v3706 = vpop.permute.xlu0 %3705
    %v3708 = vsel %vm114, %v3290, %v3700
    %v3709 = vsel %vm81, %v3708, %v3703
    %v3710 = vsel %vm661, %v3709, %v3706
    %v3711 = vmul.f32 %v3646, %v3710
    %v3713 = vsel %vm181, %v3711, 0
    %3715 = vmatpush.msra.mxu0 0.0
    %3716 = vmatpush.msra.mxu0 0.0
    %3717 = vmatpush.msra.mxu0 0.0
    %3718 = vmatpush.msra.mxu0 0.0
    %3719 = vmatpush.msra.mxu0 0.0
    %3720 = vmatpush.msra.mxu0 0.0
    %3721 = vmatpush.msra.mxu0 0.0
    %3722 = vmatpush.msra.mxu0 0.0
    %3723 = vmatpush.msra.mxu0 0.0
    %3724 = vmatpush.msra.mxu0 0.0
    %3725 = vmatpush.msra.mxu0 0.0
    %3726 = vmatpush.msra.mxu0 0.0
    %3727 = vmatpush.msra.mxu0 0.0
    %3728 = vmatpush.msra.mxu0 0.0
    %3729 = vmatpush.msra.mxu0 0.0
    %3730 = vmatpush.msra.mxu0 %v72
    %3731 = vmatmul.f32.gmra.mxu0 %v3713
    %v3732 = vpop.f32.mrf.mxu0
    %v3733 = vadd.f32 0.0, %v3732
    %3734 = vdwg.mxu0
    %v3735 = vadd.f32 %v3267, %v3733
    %s3736 = scalar_lea.vmem %s4, 48
    %3737 = vst.msk [vmem:[%s3736] sm:$0xff] %vm81, %v3735
    %3739 = vrot.lane.b32.xlu0 %v3453, 52
    %v3740 = vpop.permute.xlu0 %3739
    %3743 = vrot.lane.b32.xlu0 %v3697, 60
    %v3744 = vpop.permute.xlu0 %3743
    %3747 = vrot.lane.b32.xlu0 %v3602, 28
    %v3748 = vpop.permute.xlu0 %3747
    %v3750 = vsel %vm353, %v3740, %v3744
    %v3751 = vsel %vm702, %v3750, %v3748
    %s3752 = scalar_lea.vmem %s0, 56
    %v3753 = vld [vmem:[%s3752] sm:$0xff]
    %v3755 = vsel %vm81, %v3735, 0
    %3757 = vmatpush.msra.mxu0 0.0
    %3758 = vmatpush.msra.mxu0 0.0
    %3759 = vmatpush.msra.mxu0 0.0
    %3760 = vmatpush.msra.mxu0 0.0
    %3761 = vmatpush.msra.mxu0 0.0
    %3762 = vmatpush.msra.mxu0 0.0
    %3763 = vmatpush.msra.mxu0 0.0
    %3764 = vmatpush.msra.mxu0 0.0
    %3765 = vmatpush.msra.mxu0 0.0
    %3766 = vmatpush.msra.mxu0 0.0
    %3767 = vmatpush.msra.mxu0 0.0
    %3768 = vmatpush.msra.mxu0 0.0
    %3769 = vmatpush.msra.mxu0 0.0
    %3770 = vmatpush.msra.mxu0 0.0
    %3771 = vmatpush.msra.mxu0 0.0
    %3772 = vmatpush.msra.mxu0 %v87
    %3773 = vmatmul.f32.gmra.mxu0 %v3755
    %v3774 = vpop.f32.mrf.mxu0
    %v3775 = vadd.f32 0.0, %v3774
    %3776 = vdwg.mxu0
    %v3777 = vsub.f32 %v3753, %v3245
    %v3778 = vmul.f32 %v3777, %v3777
    %v3779 = vsel %vm114, %v3778, 0.0
    %3780 = vadd.xlane.f32.xlu0 %v3779
    %v3781 = vpop.xlane.xlu0 %3780
    %v3782 = vmax.f32 %v3781, 1e-24
    %v3783 = vrsqrt.pop %v3782
    %v3784 = vmul.f32 %v3783, %v3782
    %v3785 = vmul.f32 %v3784, %v3783
    %v3786 = vmul.f32 0.5, %v3785
    %v3787 = vsub.f32 1.5, %v3786
    %v3788 = vmul.f32 %v3783, %v3787
    %vm3789 = vweird.f32 %v3782
    %vm3790 = vweird.f32 %v3783
    %vm3791 = vmor %vm3789, %vm3790
    %v3792 = vsel %vm3791, %v3783, %v3788
    %v3793 = vmul.f32 %v3777, %v3792
    %3795 = vrot.lane.b32.xlu0 %v3775, 124
    %v3796 = vpop.permute.xlu0 %3795
    %v3798 = vsub.f32 %v3753, %v3796
    %v3799 = vmul.f32 %v3798, %v3798
    %v3800 = vsel %vm114, %v3799, 0.0
    %3801 = vadd.xlane.f32.xlu0 %v3800
    %v3802 = vpop.xlane.xlu0 %3801
    %v3803 = vmax.f32 %v3802, 1e-24
    %v3804 = vrsqrt.pop %v3803
    %v3805 = vmul.f32 %v3804, %v3803
    %v3806 = vmul.f32 %v3805, %v3804
    %v3807 = vmul.f32 0.5, %v3806
    %v3808 = vsub.f32 1.5, %v3807
    %v3809 = vmul.f32 %v3804, %v3808
    %vm3810 = vweird.f32 %v3803
    %vm3811 = vweird.f32 %v3804
    %vm3812 = vmor %vm3810, %vm3811
    %v3813 = vsel %vm3812, %v3804, %v3809
    %v3814 = vmul.f32 %v3798, %v3813
    %v3815 = vsub.f32 %v3735, %v3227
    %v3816 = vmul.f32 %v3815, %v3815
    %v3817 = vsel %vm81, %v3816, 0.0
    %3818 = vadd.xlane.f32.xlu0 %v3817
    %v3819 = vpop.xlane.xlu0 %3818
    %v3820 = vmax.f32 %v3819, 1e-24
    %v3821 = vrsqrt.pop %v3820
    %v3822 = vmul.f32 %v3821, %v3820
    %v3823 = vmul.f32 %v3822, %v3821
    %v3824 = vmul.f32 0.5, %v3823
    %v3825 = vsub.f32 1.5, %v3824
    %v3826 = vmul.f32 %v3821, %v3825
    %vm3827 = vweird.f32 %v3820
    %vm3828 = vweird.f32 %v3821
    %vm3829 = vmor %vm3827, %vm3828
    %v3830 = vsel %vm3829, %v3821, %v3826
    %v3831 = vmul.f32 %v3815, %v3830
    %v3832 = vsub.f32 %v3735, %v3267
    %v3833 = vmul.f32 %v3832, %v3832
    %v3834 = vsel %vm81, %v3833, 0.0
    %3835 = vadd.xlane.f32.xlu0 %v3834
    %v3836 = vpop.xlane.xlu0 %3835
    %v3837 = vmax.f32 %v3836, 1e-24
    %v3838 = vrsqrt.pop %v3837
    %v3839 = vmul.f32 %v3838, %v3837
    %v3840 = vmul.f32 %v3839, %v3838
    %v3841 = vmul.f32 0.5, %v3840
    %v3842 = vsub.f32 1.5, %v3841
    %v3843 = vmul.f32 %v3838, %v3842
    %vm3844 = vweird.f32 %v3837
    %vm3845 = vweird.f32 %v3838
    %vm3846 = vmor %vm3844, %vm3845
    %v3847 = vsel %vm3846, %v3838, %v3843
    %v3848 = vmul.f32 %v3832, %v3847
    %3850 = vrot.lane.b32.xlu0 %v3814, 2
    %v3851 = vpop.permute.xlu0 %3850
    %3854 = vrot.lane.b32.xlu0 %v3831, 4
    %v3855 = vpop.permute.xlu0 %3854
    %3858 = vrot.lane.b32.xlu0 %v3848, 8
    %v3859 = vpop.permute.xlu0 %3858
    %v3861 = vsel %vm114, %v3793, %v3851
    %v3862 = vsel %vm81, %v3861, %v3855
    %v3863 = vsel %vm181, %v3862, %v3859
    %v3864 = vpack.c.bf16 %v3863, %v3863
    %v3866 = vsel %vm190, %v3864, 0
    %3868 = vmatpush.bf16.msra.mxu0 0
    %3869 = vmatpush.bf16.msra.mxu0 0
    %3870 = vmatpush.bf16.msra.mxu0 0
    %3871 = vmatpush.bf16.msra.mxu0 0
    %3872 = vmatpush.bf16.msra.mxu0 0
    %3873 = vmatpush.bf16.msra.mxu0 0
    %3874 = vmatpush.bf16.msra.mxu0 0
    %3875 = vmatpush.bf16.msra.mxu0 %v196
    %3876 = vmatmul.bf16.gmra.mxu0 %v3866
    %v3877 = vpop.f32.mrf.mxu0
    %v3878 = vadd.f32 %v184, %v3877
    %v3879 = vpop.f32.mrf.mxu0
    %3880 = vdwg.mxu0
    %v3881 = vmax.f32 %v3878, 0.0
    %v3882 = vpack.c.bf16 %v3751, %v3751
    %v3884 = vsel %vm232, %v3882, 0
    %3886 = vmatpush.bf16.msra.mxu0 0
    %3887 = vmatpush.bf16.msra.mxu0 0
    %3888 = vmatpush.bf16.msra.mxu0 0
    %3889 = vmatpush.bf16.msra.mxu0 0
    %3890 = vmatpush.bf16.msra.mxu0 0
    %3891 = vmatpush.bf16.msra.mxu0 %v238
    %3892 = vmatpush.bf16.msra.mxu0 %v228
    %3893 = vmatpush.bf16.msra.mxu0 %v227
    %3894 = vmatmul.bf16.gmra.mxu0 %v3884
    %v3895 = vpop.f32.mrf.mxu0
    %v3896 = vadd.f32 %v213, %v3895
    %v3897 = vpop.f32.mrf.mxu0
    %3898 = vdwg.mxu0
    %v3899 = vpack.c.bf16 %v3881, %v3881
    %v3901 = vsel %vm278, %v3899, 0
    %3903 = vmatpush.bf16.msra.mxu0 0
    %3904 = vmatpush.bf16.msra.mxu0 0
    %3905 = vmatpush.bf16.msra.mxu0 0
    %3906 = vmatpush.bf16.msra.mxu0 0
    %3907 = vmatpush.bf16.msra.mxu0 %v283
    %3908 = vmatpush.bf16.msra.mxu0 %v273
    %3909 = vmatpush.bf16.msra.mxu0 %v272
    %3910 = vmatpush.bf16.msra.mxu0 %v271
    %3911 = vmatmul.bf16.gmra.mxu0 %v3901
    %v3912 = vpop.f32.mrf.mxu0
    %v3913 = vadd.f32 %v254, %v3912
    %v3914 = vpop.f32.mrf.mxu0
    %3915 = vdwg.mxu0
    %3917 = vrot.lane.b32.xlu0 %v3896, 60
    %v3918 = vpop.permute.xlu0 %3917
    %v3920 = vadd.f32 %v3913, %v3918
    %v3921 = vxor.u32 %v3920, 2147483648
    %v3922 = vmul.f32 %v3921, 1.442695
    %v3923 = vpow.pop %v3922
    %v3924 = vadd.f32 %v3923, 1.0
    %v3925 = vrcp.pop %v3924
    %v3926 = vmul.f32 %v3924, %v3925
    %v3927 = vsub.f32 1.0, %v3926
    %v3928 = vmul.f32 %v3925, %v3927
    %v3929 = vadd.f32 %v3925, %v3928
    %vm3930 = vweird.f32 %v3924
    %vm3931 = vweird.f32 %v3925
    %vm3932 = vmor %vm3930, %vm3931
    %v3933 = vsel %vm3932, %v3925, %v3929
    %v3934 = vand.u32 2147483647, %v3924
    %vm3935 = vcmp.eq.f32.partialorder %v3934, 8.507059e+37
    %v3936 = vand.u32 %v3924, 2147483648
    %v3937 = vor.u32 1.1754944e-38, %v3936
    %v3938 = vsel %vm3935, %v3937, %v3933
    %v3939 = vmul.f32 1.0, %v3938
    %3940 = vrot.lane.b32.xlu0 %v3896, 28
    %v3941 = vpop.permute.xlu0 %3940
    %v3943 = vmul.f32 %v3939, %v3941
    %3945 = vrot.lane.b32.xlu0 %v3943, 32
    %v3946 = vpop.permute.xlu0 %3945
    %v3948 = vadd.f32 %v3913, %v3946
    %v3949 = vtanh.pop %v3948
    %v3950 = vsub.f32 1.0, %v3939
    %3952 = vrot.lane.b32.xlu0 %v3949, 112
    %v3953 = vpop.permute.xlu0 %3952
    %v3955 = vmul.f32 %v3950, %v3953
    %3957 = vrot.lane.b32.xlu0 %v3751, 76
    %v3958 = vpop.permute.xlu0 %3957
    %v3960 = vmul.f32 %v3939, %v3958
    %v3961 = vadd.f32 %v3955, %v3960
    %v3962 = vpack.c.bf16 %v3961, %v3961
    %3964 = vrot.lane.b32.xlu0 %v3962, 52
    %v3965 = vpop.permute.xlu0 %3964
    %v3967 = vsel %vm353, %v3965, 0
    %3969 = vmatpush.bf16.msra.mxu0 0
    %3970 = vmatpush.bf16.msra.mxu0 0
    %3971 = vmatpush.bf16.msra.mxu0 0
    %3972 = vmatpush.bf16.msra.mxu0 0
    %3973 = vmatpush.bf16.msra.mxu0 0
    %3974 = vmatpush.bf16.msra.mxu0 0
    %3975 = vmatpush.bf16.msra.mxu0 0
    %3976 = vmatpush.bf16.msra.mxu0 %v351
    %3977 = vmatmul.bf16.gmra.mxu0 %v3967
    %v3978 = vpop.f32.mrf.mxu0
    %v3979 = vadd.f32 0.0, %v3978
    %v3980 = vpop.f32.mrf.mxu0
    %3981 = vdwg.mxu0
    %3983 = vrot.lane.b32.xlu0 %v3979, 12
    %v3984 = vpop.permute.xlu0 %3983
    %v3986 = vadd.f32 %v3913, %v3984
    %3987 = vrot.lane.b32.xlu0 %v3896, 92
    %v3988 = vpop.permute.xlu0 %3987
    %v3990 = vadd.f32 %v3986, %v3988
    %v3991 = vxor.u32 %v3990, 2147483648
    %v3992 = vmul.f32 %v3991, 1.442695
    %v3993 = vpow.pop %v3992
    %v3994 = vadd.f32 %v3993, 1.0
    %v3995 = vrcp.pop %v3994
    %v3996 = vmul.f32 %v3994, %v3995
    %v3997 = vsub.f32 1.0, %v3996
    %v3998 = vmul.f32 %v3995, %v3997
    %v3999 = vadd.f32 %v3995, %v3998
    %vm4000 = vweird.f32 %v3994
    %vm4001 = vweird.f32 %v3995
    %vm4002 = vmor %vm4000, %vm4001
    %v4003 = vsel %vm4002, %v3995, %v3999
    %v4004 = vand.u32 2147483647, %v3994
    %vm4005 = vcmp.eq.f32.partialorder %v4004, 8.507059e+37
    %v4006 = vand.u32 %v3994, 2147483648
    %v4007 = vor.u32 1.1754944e-38, %v4006
    %v4008 = vsel %vm4005, %v4007, %v4003
    %v4009 = vmul.f32 1.0, %v4008
    %v4010 = vmul.f32 %v4009, %v3918
    %4012 = vrot.lane.b32.xlu0 %v4010, 32
    %v4013 = vpop.permute.xlu0 %4012
    %v4015 = vadd.f32 %v3986, %v4013
    %v4016 = vtanh.pop %v4015
    %v4017 = vsub.f32 1.0, %v4009
    %4019 = vrot.lane.b32.xlu0 %v4016, 112
    %v4020 = vpop.permute.xlu0 %4019
    %v4022 = vmul.f32 %v4017, %v4020
    %4023 = vrot.lane.b32.xlu0 %v3751, 12
    %v4024 = vpop.permute.xlu0 %4023
    %v4026 = vmul.f32 %v4009, %v4024
    %v4027 = vadd.f32 %v4022, %v4026
    %v4028 = vpack.c.bf16 %v4027, %v4027
    %4030 = vrot.lane.b32.xlu0 %v4028, 100
    %v4031 = vpop.permute.xlu0 %4030
    %v4033 = vsel %vm353, %v4031, 0
    %4035 = vmatpush.bf16.msra.mxu0 0
    %4036 = vmatpush.bf16.msra.mxu0 0
    %4037 = vmatpush.bf16.msra.mxu0 0
    %4038 = vmatpush.bf16.msra.mxu0 0
    %4039 = vmatpush.bf16.msra.mxu0 0
    %4040 = vmatpush.bf16.msra.mxu0 0
    %4041 = vmatpush.bf16.msra.mxu0 0
    %4042 = vmatpush.bf16.msra.mxu0 %v425
    %4043 = vmatmul.bf16.gmra.mxu0 %v4033
    %v4044 = vpop.f32.mrf.mxu0
    %v4045 = vadd.f32 %v417, %v4044
    %v4046 = vpop.f32.mrf.mxu0
    %4047 = vdwg.mxu0
    %v4048 = vmax.f32 %v4045, 0.0
    %v4049 = vpack.c.bf16 %v4048, %v4048
    %v4051 = vsel %vm81, %v4049, 0
    %4053 = vmatpush.bf16.msra.mxu0 0
    %4054 = vmatpush.bf16.msra.mxu0 0
    %4055 = vmatpush.bf16.msra.mxu0 0
    %4056 = vmatpush.bf16.msra.mxu0 0
    %4057 = vmatpush.bf16.msra.mxu0 0
    %4058 = vmatpush.bf16.msra.mxu0 0
    %4059 = vmatpush.bf16.msra.mxu0 0
    %4060 = vmatpush.bf16.msra.mxu0 %v449
    %4061 = vmatmul.bf16.gmra.mxu0 %v4051
    %v4062 = vpop.f32.mrf.mxu0
    %v4063 = vadd.f32 0.0, %v4062
    %v4064 = vpop.f32.mrf.mxu0
    %4065 = vdwg.mxu0
    %v4066 = vadd.f32 %v3913, %v4063
    %4067 = vrot.lane.b32.xlu0 %v3896, 32
    %v4068 = vpop.permute.xlu0 %4067
    %v4070 = vadd.f32 %v4066, %v4068
    %v4071 = vxor.u32 %v4070, 2147483648
    %v4072 = vmul.f32 %v4071, 1.442695
    %v4073 = vpow.pop %v4072
    %v4074 = vadd.f32 %v4073, 1.0
    %v4075 = vrcp.pop %v4074
    %v4076 = vmul.f32 %v4074, %v4075
    %v4077 = vsub.f32 1.0, %v4076
    %v4078 = vmul.f32 %v4075, %v4077
    %v4079 = vadd.f32 %v4075, %v4078
    %vm4080 = vweird.f32 %v4074
    %vm4081 = vweird.f32 %v4075
    %vm4082 = vmor %vm4080, %vm4081
    %v4083 = vsel %vm4082, %v4075, %v4079
    %v4084 = vand.u32 2147483647, %v4074
    %vm4085 = vcmp.eq.f32.partialorder %v4084, 8.507059e+37
    %v4086 = vand.u32 %v4074, 2147483648
    %v4087 = vor.u32 1.1754944e-38, %v4086
    %v4088 = vsel %vm4085, %v4087, %v4083
    %v4089 = vmul.f32 1.0, %v4088
    %4090 = vrot.lane.b32.xlu0 %v3896, 24
    %v4091 = vpop.permute.xlu0 %4090
    %v4093 = vmul.f32 %v4089, %v4091
    %4095 = vrot.lane.b32.xlu0 %v4093, 8
    %v4096 = vpop.permute.xlu0 %4095
    %v4098 = vadd.f32 %v4066, %v4096
    %v4099 = vtanh.pop %v4098
    %v4100 = vsub.f32 1.0, %v4089
    %4102 = vrot.lane.b32.xlu0 %v4099, 124
    %v4103 = vpop.permute.xlu0 %4102
    %v4105 = vmul.f32 %v4100, %v4103
    %4106 = vrot.lane.b32.xlu0 %v3751, 100
    %v4107 = vpop.permute.xlu0 %4106
    %v4109 = vmul.f32 %v4089, %v4107
    %v4110 = vadd.f32 %v4105, %v4109
    %v4111 = vpack.c.bf16 %v4110, %v4110
    %4113 = vrot.lane.b32.xlu0 %v4111, 124
    %v4114 = vpop.permute.xlu0 %4113
    %v4116 = vsel %vm81, %v4114, 0
    %4118 = vmatpush.bf16.msra.mxu0 0
    %4119 = vmatpush.bf16.msra.mxu0 0
    %4120 = vmatpush.bf16.msra.mxu0 0
    %4121 = vmatpush.bf16.msra.mxu0 0
    %4122 = vmatpush.bf16.msra.mxu0 0
    %4123 = vmatpush.bf16.msra.mxu0 0
    %4124 = vmatpush.bf16.msra.mxu0 0
    %4125 = vmatpush.bf16.msra.mxu0 %v518
    %4126 = vmatmul.bf16.gmra.mxu0 %v4116
    %v4127 = vpop.f32.mrf.mxu0
    %v4128 = vadd.f32 %v510, %v4127
    %v4129 = vpop.f32.mrf.mxu0
    %4130 = vdwg.mxu0
    %4132 = vrot.lane.b32.xlu0 %v4128, 4
    %v4133 = vpop.permute.xlu0 %4132
    %v4135 = vadd.f32 %v4045, %v4133
    %v4136 = vmax.f32 %v4135, 0.0
    %v4137 = vpack.c.bf16 %v4136, %v4136
    %4139 = vrot.lane.b32.xlu0 %v4137, 124
    %v4140 = vpop.permute.xlu0 %4139
    %v4142 = vsel %vm574, %v4140, 0
    %4144 = vmatpush.bf16.msra.mxu0 0
    %4145 = vmatpush.bf16.msra.mxu0 0
    %4146 = vmatpush.bf16.msra.mxu0 0
    %4147 = vmatpush.bf16.msra.mxu0 %v568
    %4148 = vmatpush.bf16.msra.mxu0 %v567
    %4149 = vmatpush.bf16.msra.mxu0 %v566
    %4150 = vmatpush.bf16.msra.mxu0 %v565
    %4151 = vmatpush.bf16.msra.mxu0 %v564
    %4152 = vmatmul.bf16.gmra.mxu0 %v4142
    %v4153 = vpop.f32.mrf.mxu0
    %v4154 = vadd.f32 %v540, %v4153
    %v4155 = vpop.f32.mrf.mxu0
    %4156 = vdwg.mxu0
    %v4157 = vpack.c.bf16 %v4154, %v4154
    %v4159 = vsel %vm181, %v4157, 0
    %4161 = vmatpush.bf16.msra.mxu0 0
    %4162 = vmatpush.bf16.msra.mxu0 0
    %4163 = vmatpush.bf16.msra.mxu0 0
    %4164 = vmatpush.bf16.msra.mxu0 0
    %4165 = vmatpush.bf16.msra.mxu0 0
    %4166 = vmatpush.bf16.msra.mxu0 0
    %4167 = vmatpush.bf16.msra.mxu0 0
    %4168 = vmatpush.bf16.msra.mxu0 %v596
    %4169 = vmatmul.bf16.gmra.mxu0 %v4159
    %v4170 = vpop.f32.mrf.mxu0
    %v4171 = vadd.f32 0.0, %v4170
    %v4172 = vpop.f32.mrf.mxu0
    %4173 = vdwg.mxu0
    %4175 = vrot.lane.b32.xlu0 %v4171, 80
    %v4176 = vpop.permute.xlu0 %4175
    %v4178 = vadd.f32 %v4128, %v4176
    %v4179 = vmax.f32 %v4178, 0.0
    %v4180 = vpack.c.bf16 %v4179, %v4179
    %4182 = vrot.lane.b32.xlu0 %v4180, 48
    %v4183 = vpop.permute.xlu0 %4182
    %v4185 = vsel %vm353, %v4183, 0
    %4187 = vmatpush.bf16.msra.mxu0 0
    %4188 = vmatpush.bf16.msra.mxu0 0
    %4189 = vmatpush.bf16.msra.mxu0 0
    %4190 = vmatpush.bf16.msra.mxu0 0
    %4191 = vmatpush.bf16.msra.mxu0 0
    %4192 = vmatpush.bf16.msra.mxu0 0
    %4193 = vmatpush.bf16.msra.mxu0 0
    %4194 = vmatpush.bf16.msra.mxu0 %v625
    %4195 = vmatmul.bf16.gmra.mxu0 %v4185
    %v4196 = vpop.f32.mrf.mxu0
    %v4197 = vadd.f32 0.0, %v4196
    %v4198 = vpop.f32.mrf.mxu0
    %4199 = vdwg.mxu0
    %4201 = vrot.lane.b32.xlu0 %v4197, 84
    %v4202 = vpop.permute.xlu0 %4201
    %v4204 = vadd.f32 %v4045, %v4202
    %v4205 = vmax.f32 %v4204, 0.0
    %4207 = vrot.lane.b32.xlu0 %v3798, 2
    %v4208 = vpop.permute.xlu0 %4207
    %4210 = vrot.lane.b32.xlu0 %v3798, 4
    %v4211 = vpop.permute.xlu0 %4210
    %4213 = vrot.lane.b32.xlu0 %v3798, 6
    %v4214 = vpop.permute.xlu0 %4213
    %v4216 = vsel %vm114, %v3798, %v4208
    %v4217 = vsel %vm81, %v4216, %v4211
    %v4218 = vsel %vm661, %v4217, %v4214
    %v4219 = vmul.f32 %v4154, %v4218
    %v4221 = vsel %vm181, %v4219, 0
    %4223 = vmatpush.msra.mxu0 0.0
    %4224 = vmatpush.msra.mxu0 0.0
    %4225 = vmatpush.msra.mxu0 0.0
    %4226 = vmatpush.msra.mxu0 0.0
    %4227 = vmatpush.msra.mxu0 0.0
    %4228 = vmatpush.msra.mxu0 0.0
    %4229 = vmatpush.msra.mxu0 0.0
    %4230 = vmatpush.msra.mxu0 0.0
    %4231 = vmatpush.msra.mxu0 0.0
    %4232 = vmatpush.msra.mxu0 0.0
    %4233 = vmatpush.msra.mxu0 0.0
    %4234 = vmatpush.msra.mxu0 0.0
    %4235 = vmatpush.msra.mxu0 0.0
    %4236 = vmatpush.msra.mxu0 0.0
    %4237 = vmatpush.msra.mxu0 0.0
    %4238 = vmatpush.msra.mxu0 %v72
    %4239 = vmatmul.f32.gmra.mxu0 %v4221
    %v4240 = vpop.f32.mrf.mxu0
    %v4241 = vadd.f32 0.0, %v4240
    %4242 = vdwg.mxu0
    %v4243 = vadd.f32 %v3775, %v4241
    %s4244 = scalar_lea.vmem %s4, 56
    %4245 = vst.msk [vmem:[%s4244] sm:$0xff] %vm81, %v4243
    %4247 = vrot.lane.b32.xlu0 %v3961, 52
    %v4248 = vpop.permute.xlu0 %4247
    %4251 = vrot.lane.b32.xlu0 %v4205, 60
    %v4252 = vpop.permute.xlu0 %4251
    %4255 = vrot.lane.b32.xlu0 %v4110, 28
    %v4256 = vpop.permute.xlu0 %4255
    %v4258 = vsel %vm353, %v4248, %v4252
    %v4259 = vsel %vm702, %v4258, %v4256
    %s4260 = scalar_lea.vmem %s0, 64
    %v4261 = vld [vmem:[%s4260] sm:$0xff]
    %v4263 = vsel %vm81, %v4243, 0
    %4265 = vmatpush.msra.mxu0 0.0
    %4266 = vmatpush.msra.mxu0 0.0
    %4267 = vmatpush.msra.mxu0 0.0
    %4268 = vmatpush.msra.mxu0 0.0
    %4269 = vmatpush.msra.mxu0 0.0
    %4270 = vmatpush.msra.mxu0 0.0
    %4271 = vmatpush.msra.mxu0 0.0
    %4272 = vmatpush.msra.mxu0 0.0
    %4273 = vmatpush.msra.mxu0 0.0
    %4274 = vmatpush.msra.mxu0 0.0
    %4275 = vmatpush.msra.mxu0 0.0
    %4276 = vmatpush.msra.mxu0 0.0
    %4277 = vmatpush.msra.mxu0 0.0
    %4278 = vmatpush.msra.mxu0 0.0
    %4279 = vmatpush.msra.mxu0 0.0
    %4280 = vmatpush.msra.mxu0 %v87
    %4281 = vmatmul.f32.gmra.mxu0 %v4263
    %v4282 = vpop.f32.mrf.mxu0
    %v4283 = vadd.f32 0.0, %v4282
    %4284 = vdwg.mxu0
    %v4285 = vsub.f32 %v4261, %v3753
    %v4286 = vmul.f32 %v4285, %v4285
    %v4287 = vsel %vm114, %v4286, 0.0
    %4288 = vadd.xlane.f32.xlu0 %v4287
    %v4289 = vpop.xlane.xlu0 %4288
    %v4290 = vmax.f32 %v4289, 1e-24
    %v4291 = vrsqrt.pop %v4290
    %v4292 = vmul.f32 %v4291, %v4290
    %v4293 = vmul.f32 %v4292, %v4291
    %v4294 = vmul.f32 0.5, %v4293
    %v4295 = vsub.f32 1.5, %v4294
    %v4296 = vmul.f32 %v4291, %v4295
    %vm4297 = vweird.f32 %v4290
    %vm4298 = vweird.f32 %v4291
    %vm4299 = vmor %vm4297, %vm4298
    %v4300 = vsel %vm4299, %v4291, %v4296
    %v4301 = vmul.f32 %v4285, %v4300
    %4303 = vrot.lane.b32.xlu0 %v4283, 124
    %v4304 = vpop.permute.xlu0 %4303
    %v4306 = vsub.f32 %v4261, %v4304
    %v4307 = vmul.f32 %v4306, %v4306
    %v4308 = vsel %vm114, %v4307, 0.0
    %4309 = vadd.xlane.f32.xlu0 %v4308
    %v4310 = vpop.xlane.xlu0 %4309
    %v4311 = vmax.f32 %v4310, 1e-24
    %v4312 = vrsqrt.pop %v4311
    %v4313 = vmul.f32 %v4312, %v4311
    %v4314 = vmul.f32 %v4313, %v4312
    %v4315 = vmul.f32 0.5, %v4314
    %v4316 = vsub.f32 1.5, %v4315
    %v4317 = vmul.f32 %v4312, %v4316
    %vm4318 = vweird.f32 %v4311
    %vm4319 = vweird.f32 %v4312
    %vm4320 = vmor %vm4318, %vm4319
    %v4321 = vsel %vm4320, %v4312, %v4317
    %v4322 = vmul.f32 %v4306, %v4321
    %v4323 = vsub.f32 %v4243, %v3735
    %v4324 = vmul.f32 %v4323, %v4323
    %v4325 = vsel %vm81, %v4324, 0.0
    %4326 = vadd.xlane.f32.xlu0 %v4325
    %v4327 = vpop.xlane.xlu0 %4326
    %v4328 = vmax.f32 %v4327, 1e-24
    %v4329 = vrsqrt.pop %v4328
    %v4330 = vmul.f32 %v4329, %v4328
    %v4331 = vmul.f32 %v4330, %v4329
    %v4332 = vmul.f32 0.5, %v4331
    %v4333 = vsub.f32 1.5, %v4332
    %v4334 = vmul.f32 %v4329, %v4333
    %vm4335 = vweird.f32 %v4328
    %vm4336 = vweird.f32 %v4329
    %vm4337 = vmor %vm4335, %vm4336
    %v4338 = vsel %vm4337, %v4329, %v4334
    %v4339 = vmul.f32 %v4323, %v4338
    %v4340 = vsub.f32 %v4243, %v3775
    %v4341 = vmul.f32 %v4340, %v4340
    %v4342 = vsel %vm81, %v4341, 0.0
    %4343 = vadd.xlane.f32.xlu0 %v4342
    %v4344 = vpop.xlane.xlu0 %4343
    %v4345 = vmax.f32 %v4344, 1e-24
    %v4346 = vrsqrt.pop %v4345
    %v4347 = vmul.f32 %v4346, %v4345
    %v4348 = vmul.f32 %v4347, %v4346
    %v4349 = vmul.f32 0.5, %v4348
    %v4350 = vsub.f32 1.5, %v4349
    %v4351 = vmul.f32 %v4346, %v4350
    %vm4352 = vweird.f32 %v4345
    %vm4353 = vweird.f32 %v4346
    %vm4354 = vmor %vm4352, %vm4353
    %v4355 = vsel %vm4354, %v4346, %v4351
    %v4356 = vmul.f32 %v4340, %v4355
    %4358 = vrot.lane.b32.xlu0 %v4322, 2
    %v4359 = vpop.permute.xlu0 %4358
    %4362 = vrot.lane.b32.xlu0 %v4339, 4
    %v4363 = vpop.permute.xlu0 %4362
    %4366 = vrot.lane.b32.xlu0 %v4356, 8
    %v4367 = vpop.permute.xlu0 %4366
    %v4369 = vsel %vm114, %v4301, %v4359
    %v4370 = vsel %vm81, %v4369, %v4363
    %v4371 = vsel %vm181, %v4370, %v4367
    %v4372 = vpack.c.bf16 %v4371, %v4371
    %v4374 = vsel %vm190, %v4372, 0
    %4376 = vmatpush.bf16.msra.mxu0 0
    %4377 = vmatpush.bf16.msra.mxu0 0
    %4378 = vmatpush.bf16.msra.mxu0 0
    %4379 = vmatpush.bf16.msra.mxu0 0
    %4380 = vmatpush.bf16.msra.mxu0 0
    %4381 = vmatpush.bf16.msra.mxu0 0
    %4382 = vmatpush.bf16.msra.mxu0 0
    %4383 = vmatpush.bf16.msra.mxu0 %v196
    %4384 = vmatmul.bf16.gmra.mxu0 %v4374
    %v4385 = vpop.f32.mrf.mxu0
    %v4386 = vadd.f32 %v184, %v4385
    %v4387 = vpop.f32.mrf.mxu0
    %4388 = vdwg.mxu0
    %v4389 = vmax.f32 %v4386, 0.0
    %v4390 = vpack.c.bf16 %v4259, %v4259
    %v4392 = vsel %vm232, %v4390, 0
    %4394 = vmatpush.bf16.msra.mxu0 0
    %4395 = vmatpush.bf16.msra.mxu0 0
    %4396 = vmatpush.bf16.msra.mxu0 0
    %4397 = vmatpush.bf16.msra.mxu0 0
    %4398 = vmatpush.bf16.msra.mxu0 0
    %4399 = vmatpush.bf16.msra.mxu0 %v238
    %4400 = vmatpush.bf16.msra.mxu0 %v228
    %4401 = vmatpush.bf16.msra.mxu0 %v227
    %4402 = vmatmul.bf16.gmra.mxu0 %v4392
    %v4403 = vpop.f32.mrf.mxu0
    %v4404 = vadd.f32 %v213, %v4403
    %v4405 = vpop.f32.mrf.mxu0
    %4406 = vdwg.mxu0
    %v4407 = vpack.c.bf16 %v4389, %v4389
    %v4409 = vsel %vm278, %v4407, 0
    %4411 = vmatpush.bf16.msra.mxu0 0
    %4412 = vmatpush.bf16.msra.mxu0 0
    %4413 = vmatpush.bf16.msra.mxu0 0
    %4414 = vmatpush.bf16.msra.mxu0 0
    %4415 = vmatpush.bf16.msra.mxu0 %v283
    %4416 = vmatpush.bf16.msra.mxu0 %v273
    %4417 = vmatpush.bf16.msra.mxu0 %v272
    %4418 = vmatpush.bf16.msra.mxu0 %v271
    %4419 = vmatmul.bf16.gmra.mxu0 %v4409
    %v4420 = vpop.f32.mrf.mxu0
    %v4421 = vadd.f32 %v254, %v4420
    %v4422 = vpop.f32.mrf.mxu0
    %4423 = vdwg.mxu0
    %4425 = vrot.lane.b32.xlu0 %v4404, 60
    %v4426 = vpop.permute.xlu0 %4425
    %v4428 = vadd.f32 %v4421, %v4426
    %v4429 = vxor.u32 %v4428, 2147483648
    %v4430 = vmul.f32 %v4429, 1.442695
    %v4431 = vpow.pop %v4430
    %v4432 = vadd.f32 %v4431, 1.0
    %v4433 = vrcp.pop %v4432
    %v4434 = vmul.f32 %v4432, %v4433
    %v4435 = vsub.f32 1.0, %v4434
    %v4436 = vmul.f32 %v4433, %v4435
    %v4437 = vadd.f32 %v4433, %v4436
    %vm4438 = vweird.f32 %v4432
    %vm4439 = vweird.f32 %v4433
    %vm4440 = vmor %vm4438, %vm4439
    %v4441 = vsel %vm4440, %v4433, %v4437
    %v4442 = vand.u32 2147483647, %v4432
    %vm4443 = vcmp.eq.f32.partialorder %v4442, 8.507059e+37
    %v4444 = vand.u32 %v4432, 2147483648
    %v4445 = vor.u32 1.1754944e-38, %v4444
    %v4446 = vsel %vm4443, %v4445, %v4441
    %v4447 = vmul.f32 1.0, %v4446
    %4448 = vrot.lane.b32.xlu0 %v4404, 28
    %v4449 = vpop.permute.xlu0 %4448
    %v4451 = vmul.f32 %v4447, %v4449
    %4453 = vrot.lane.b32.xlu0 %v4451, 32
    %v4454 = vpop.permute.xlu0 %4453
    %v4456 = vadd.f32 %v4421, %v4454
    %v4457 = vtanh.pop %v4456
    %v4458 = vsub.f32 1.0, %v4447
    %4460 = vrot.lane.b32.xlu0 %v4457, 112
    %v4461 = vpop.permute.xlu0 %4460
    %v4463 = vmul.f32 %v4458, %v4461
    %4465 = vrot.lane.b32.xlu0 %v4259, 76
    %v4466 = vpop.permute.xlu0 %4465
    %v4468 = vmul.f32 %v4447, %v4466
    %v4469 = vadd.f32 %v4463, %v4468
    %v4470 = vpack.c.bf16 %v4469, %v4469
    %4472 = vrot.lane.b32.xlu0 %v4470, 52
    %v4473 = vpop.permute.xlu0 %4472
    %v4475 = vsel %vm353, %v4473, 0
    %4477 = vmatpush.bf16.msra.mxu0 0
    %4478 = vmatpush.bf16.msra.mxu0 0
    %4479 = vmatpush.bf16.msra.mxu0 0
    %4480 = vmatpush.bf16.msra.mxu0 0
    %4481 = vmatpush.bf16.msra.mxu0 0
    %4482 = vmatpush.bf16.msra.mxu0 0
    %4483 = vmatpush.bf16.msra.mxu0 0
    %4484 = vmatpush.bf16.msra.mxu0 %v351
    %4485 = vmatmul.bf16.gmra.mxu0 %v4475
    %v4486 = vpop.f32.mrf.mxu0
    %v4487 = vadd.f32 0.0, %v4486
    %v4488 = vpop.f32.mrf.mxu0
    %4489 = vdwg.mxu0
    %4491 = vrot.lane.b32.xlu0 %v4487, 12
    %v4492 = vpop.permute.xlu0 %4491
    %v4494 = vadd.f32 %v4421, %v4492
    %4495 = vrot.lane.b32.xlu0 %v4404, 92
    %v4496 = vpop.permute.xlu0 %4495
    %v4498 = vadd.f32 %v4494, %v4496
    %v4499 = vxor.u32 %v4498, 2147483648
    %v4500 = vmul.f32 %v4499, 1.442695
    %v4501 = vpow.pop %v4500
    %v4502 = vadd.f32 %v4501, 1.0
    %v4503 = vrcp.pop %v4502
    %v4504 = vmul.f32 %v4502, %v4503
    %v4505 = vsub.f32 1.0, %v4504
    %v4506 = vmul.f32 %v4503, %v4505
    %v4507 = vadd.f32 %v4503, %v4506
    %vm4508 = vweird.f32 %v4502
    %vm4509 = vweird.f32 %v4503
    %vm4510 = vmor %vm4508, %vm4509
    %v4511 = vsel %vm4510, %v4503, %v4507
    %v4512 = vand.u32 2147483647, %v4502
    %vm4513 = vcmp.eq.f32.partialorder %v4512, 8.507059e+37
    %v4514 = vand.u32 %v4502, 2147483648
    %v4515 = vor.u32 1.1754944e-38, %v4514
    %v4516 = vsel %vm4513, %v4515, %v4511
    %v4517 = vmul.f32 1.0, %v4516
    %v4518 = vmul.f32 %v4517, %v4426
    %4520 = vrot.lane.b32.xlu0 %v4518, 32
    %v4521 = vpop.permute.xlu0 %4520
    %v4523 = vadd.f32 %v4494, %v4521
    %v4524 = vtanh.pop %v4523
    %v4525 = vsub.f32 1.0, %v4517
    %4527 = vrot.lane.b32.xlu0 %v4524, 112
    %v4528 = vpop.permute.xlu0 %4527
    %v4530 = vmul.f32 %v4525, %v4528
    %4531 = vrot.lane.b32.xlu0 %v4259, 12
    %v4532 = vpop.permute.xlu0 %4531
    %v4534 = vmul.f32 %v4517, %v4532
    %v4535 = vadd.f32 %v4530, %v4534
    %v4536 = vpack.c.bf16 %v4535, %v4535
    %4538 = vrot.lane.b32.xlu0 %v4536, 100
    %v4539 = vpop.permute.xlu0 %4538
    %v4541 = vsel %vm353, %v4539, 0
    %4543 = vmatpush.bf16.msra.mxu0 0
    %4544 = vmatpush.bf16.msra.mxu0 0
    %4545 = vmatpush.bf16.msra.mxu0 0
    %4546 = vmatpush.bf16.msra.mxu0 0
    %4547 = vmatpush.bf16.msra.mxu0 0
    %4548 = vmatpush.bf16.msra.mxu0 0
    %4549 = vmatpush.bf16.msra.mxu0 0
    %4550 = vmatpush.bf16.msra.mxu0 %v425
    %4551 = vmatmul.bf16.gmra.mxu0 %v4541
    %v4552 = vpop.f32.mrf.mxu0
    %v4553 = vadd.f32 %v417, %v4552
    %v4554 = vpop.f32.mrf.mxu0
    %4555 = vdwg.mxu0
    %v4556 = vmax.f32 %v4553, 0.0
    %v4557 = vpack.c.bf16 %v4556, %v4556
    %v4559 = vsel %vm81, %v4557, 0
    %4561 = vmatpush.bf16.msra.mxu0 0
    %4562 = vmatpush.bf16.msra.mxu0 0
    %4563 = vmatpush.bf16.msra.mxu0 0
    %4564 = vmatpush.bf16.msra.mxu0 0
    %4565 = vmatpush.bf16.msra.mxu0 0
    %4566 = vmatpush.bf16.msra.mxu0 0
    %4567 = vmatpush.bf16.msra.mxu0 0
    %4568 = vmatpush.bf16.msra.mxu0 %v449
    %4569 = vmatmul.bf16.gmra.mxu0 %v4559
    %v4570 = vpop.f32.mrf.mxu0
    %v4571 = vadd.f32 0.0, %v4570
    %v4572 = vpop.f32.mrf.mxu0
    %4573 = vdwg.mxu0
    %v4574 = vadd.f32 %v4421, %v4571
    %4575 = vrot.lane.b32.xlu0 %v4404, 32
    %v4576 = vpop.permute.xlu0 %4575
    %v4578 = vadd.f32 %v4574, %v4576
    %v4579 = vxor.u32 %v4578, 2147483648
    %v4580 = vmul.f32 %v4579, 1.442695
    %v4581 = vpow.pop %v4580
    %v4582 = vadd.f32 %v4581, 1.0
    %v4583 = vrcp.pop %v4582
    %v4584 = vmul.f32 %v4582, %v4583
    %v4585 = vsub.f32 1.0, %v4584
    %v4586 = vmul.f32 %v4583, %v4585
    %v4587 = vadd.f32 %v4583, %v4586
    %vm4588 = vweird.f32 %v4582
    %vm4589 = vweird.f32 %v4583
    %vm4590 = vmor %vm4588, %vm4589
    %v4591 = vsel %vm4590, %v4583, %v4587
    %v4592 = vand.u32 2147483647, %v4582
    %vm4593 = vcmp.eq.f32.partialorder %v4592, 8.507059e+37
    %v4594 = vand.u32 %v4582, 2147483648
    %v4595 = vor.u32 1.1754944e-38, %v4594
    %v4596 = vsel %vm4593, %v4595, %v4591
    %v4597 = vmul.f32 1.0, %v4596
    %4598 = vrot.lane.b32.xlu0 %v4404, 24
    %v4599 = vpop.permute.xlu0 %4598
    %v4601 = vmul.f32 %v4597, %v4599
    %4603 = vrot.lane.b32.xlu0 %v4601, 8
    %v4604 = vpop.permute.xlu0 %4603
    %v4606 = vadd.f32 %v4574, %v4604
    %v4607 = vtanh.pop %v4606
    %v4608 = vsub.f32 1.0, %v4597
    %4610 = vrot.lane.b32.xlu0 %v4607, 124
    %v4611 = vpop.permute.xlu0 %4610
    %v4613 = vmul.f32 %v4608, %v4611
    %4614 = vrot.lane.b32.xlu0 %v4259, 100
    %v4615 = vpop.permute.xlu0 %4614
    %v4617 = vmul.f32 %v4597, %v4615
    %v4618 = vadd.f32 %v4613, %v4617
    %v4619 = vpack.c.bf16 %v4618, %v4618
    %4621 = vrot.lane.b32.xlu0 %v4619, 124
    %v4622 = vpop.permute.xlu0 %4621
    %v4624 = vsel %vm81, %v4622, 0
    %4626 = vmatpush.bf16.msra.mxu0 0
    %4627 = vmatpush.bf16.msra.mxu0 0
    %4628 = vmatpush.bf16.msra.mxu0 0
    %4629 = vmatpush.bf16.msra.mxu0 0
    %4630 = vmatpush.bf16.msra.mxu0 0
    %4631 = vmatpush.bf16.msra.mxu0 0
    %4632 = vmatpush.bf16.msra.mxu0 0
    %4633 = vmatpush.bf16.msra.mxu0 %v518
    %4634 = vmatmul.bf16.gmra.mxu0 %v4624
    %v4635 = vpop.f32.mrf.mxu0
    %v4636 = vadd.f32 %v510, %v4635
    %v4637 = vpop.f32.mrf.mxu0
    %4638 = vdwg.mxu0
    %4640 = vrot.lane.b32.xlu0 %v4636, 4
    %v4641 = vpop.permute.xlu0 %4640
    %v4643 = vadd.f32 %v4553, %v4641
    %v4644 = vmax.f32 %v4643, 0.0
    %v4645 = vpack.c.bf16 %v4644, %v4644
    %4647 = vrot.lane.b32.xlu0 %v4645, 124
    %v4648 = vpop.permute.xlu0 %4647
    %v4650 = vsel %vm574, %v4648, 0
    %4652 = vmatpush.bf16.msra.mxu0 0
    %4653 = vmatpush.bf16.msra.mxu0 0
    %4654 = vmatpush.bf16.msra.mxu0 0
    %4655 = vmatpush.bf16.msra.mxu0 %v568
    %4656 = vmatpush.bf16.msra.mxu0 %v567
    %4657 = vmatpush.bf16.msra.mxu0 %v566
    %4658 = vmatpush.bf16.msra.mxu0 %v565
    %4659 = vmatpush.bf16.msra.mxu0 %v564
    %4660 = vmatmul.bf16.gmra.mxu0 %v4650
    %v4661 = vpop.f32.mrf.mxu0
    %v4662 = vadd.f32 %v540, %v4661
    %v4663 = vpop.f32.mrf.mxu0
    %4664 = vdwg.mxu0
    %v4665 = vpack.c.bf16 %v4662, %v4662
    %v4667 = vsel %vm181, %v4665, 0
    %4669 = vmatpush.bf16.msra.mxu0 0
    %4670 = vmatpush.bf16.msra.mxu0 0
    %4671 = vmatpush.bf16.msra.mxu0 0
    %4672 = vmatpush.bf16.msra.mxu0 0
    %4673 = vmatpush.bf16.msra.mxu0 0
    %4674 = vmatpush.bf16.msra.mxu0 0
    %4675 = vmatpush.bf16.msra.mxu0 0
    %4676 = vmatpush.bf16.msra.mxu0 %v596
    %4677 = vmatmul.bf16.gmra.mxu0 %v4667
    %v4678 = vpop.f32.mrf.mxu0
    %v4679 = vadd.f32 0.0, %v4678
    %v4680 = vpop.f32.mrf.mxu0
    %4681 = vdwg.mxu0
    %4683 = vrot.lane.b32.xlu0 %v4679, 80
    %v4684 = vpop.permute.xlu0 %4683
    %v4686 = vadd.f32 %v4636, %v4684
    %v4687 = vmax.f32 %v4686, 0.0
    %v4688 = vpack.c.bf16 %v4687, %v4687
    %4690 = vrot.lane.b32.xlu0 %v4688, 48
    %v4691 = vpop.permute.xlu0 %4690
    %v4693 = vsel %vm353, %v4691, 0
    %4695 = vmatpush.bf16.msra.mxu0 0
    %4696 = vmatpush.bf16.msra.mxu0 0
    %4697 = vmatpush.bf16.msra.mxu0 0
    %4698 = vmatpush.bf16.msra.mxu0 0
    %4699 = vmatpush.bf16.msra.mxu0 0
    %4700 = vmatpush.bf16.msra.mxu0 0
    %4701 = vmatpush.bf16.msra.mxu0 0
    %4702 = vmatpush.bf16.msra.mxu0 %v625
    %4703 = vmatmul.bf16.gmra.mxu0 %v4693
    %v4704 = vpop.f32.mrf.mxu0
    %v4705 = vadd.f32 0.0, %v4704
    %v4706 = vpop.f32.mrf.mxu0
    %4707 = vdwg.mxu0
    %4709 = vrot.lane.b32.xlu0 %v4705, 84
    %v4710 = vpop.permute.xlu0 %4709
    %v4712 = vadd.f32 %v4553, %v4710
    %v4713 = vmax.f32 %v4712, 0.0
    %4715 = vrot.lane.b32.xlu0 %v4306, 2
    %v4716 = vpop.permute.xlu0 %4715
    %4718 = vrot.lane.b32.xlu0 %v4306, 4
    %v4719 = vpop.permute.xlu0 %4718
    %4721 = vrot.lane.b32.xlu0 %v4306, 6
    %v4722 = vpop.permute.xlu0 %4721
    %v4724 = vsel %vm114, %v4306, %v4716
    %v4725 = vsel %vm81, %v4724, %v4719
    %v4726 = vsel %vm661, %v4725, %v4722
    %v4727 = vmul.f32 %v4662, %v4726
    %v4729 = vsel %vm181, %v4727, 0
    %4731 = vmatpush.msra.mxu0 0.0
    %4732 = vmatpush.msra.mxu0 0.0
    %4733 = vmatpush.msra.mxu0 0.0
    %4734 = vmatpush.msra.mxu0 0.0
    %4735 = vmatpush.msra.mxu0 0.0
    %4736 = vmatpush.msra.mxu0 0.0
    %4737 = vmatpush.msra.mxu0 0.0
    %4738 = vmatpush.msra.mxu0 0.0
    %4739 = vmatpush.msra.mxu0 0.0
    %4740 = vmatpush.msra.mxu0 0.0
    %4741 = vmatpush.msra.mxu0 0.0
    %4742 = vmatpush.msra.mxu0 0.0
    %4743 = vmatpush.msra.mxu0 0.0
    %4744 = vmatpush.msra.mxu0 0.0
    %4745 = vmatpush.msra.mxu0 0.0
    %4746 = vmatpush.msra.mxu0 %v72
    %4747 = vmatmul.f32.gmra.mxu0 %v4729
    %v4748 = vpop.f32.mrf.mxu0
    %v4749 = vadd.f32 0.0, %v4748
    %4750 = vdwg.mxu0
    %v4751 = vadd.f32 %v4283, %v4749
    %s4752 = scalar_lea.vmem %s4, 64
    %4753 = vst.msk [vmem:[%s4752] sm:$0xff] %vm81, %v4751
    %4755 = vrot.lane.b32.xlu0 %v4469, 52
    %v4756 = vpop.permute.xlu0 %4755
    %4759 = vrot.lane.b32.xlu0 %v4713, 60
    %v4760 = vpop.permute.xlu0 %4759
    %4763 = vrot.lane.b32.xlu0 %v4618, 28
    %v4764 = vpop.permute.xlu0 %4763
    %v4766 = vsel %vm353, %v4756, %v4760
    %v4767 = vsel %vm702, %v4766, %v4764
    %s4768 = scalar_lea.vmem %s0, 72
    %v4769 = vld [vmem:[%s4768] sm:$0xff]
    %v4771 = vsel %vm81, %v4751, 0
    %4773 = vmatpush.msra.mxu0 0.0
    %4774 = vmatpush.msra.mxu0 0.0
    %4775 = vmatpush.msra.mxu0 0.0
    %4776 = vmatpush.msra.mxu0 0.0
    %4777 = vmatpush.msra.mxu0 0.0
    %4778 = vmatpush.msra.mxu0 0.0
    %4779 = vmatpush.msra.mxu0 0.0
    %4780 = vmatpush.msra.mxu0 0.0
    %4781 = vmatpush.msra.mxu0 0.0
    %4782 = vmatpush.msra.mxu0 0.0
    %4783 = vmatpush.msra.mxu0 0.0
    %4784 = vmatpush.msra.mxu0 0.0
    %4785 = vmatpush.msra.mxu0 0.0
    %4786 = vmatpush.msra.mxu0 0.0
    %4787 = vmatpush.msra.mxu0 0.0
    %4788 = vmatpush.msra.mxu0 %v87
    %4789 = vmatmul.f32.gmra.mxu0 %v4771
    %v4790 = vpop.f32.mrf.mxu0
    %v4791 = vadd.f32 0.0, %v4790
    %4792 = vdwg.mxu0
    %v4793 = vsub.f32 %v4769, %v4261
    %v4794 = vmul.f32 %v4793, %v4793
    %v4795 = vsel %vm114, %v4794, 0.0
    %4796 = vadd.xlane.f32.xlu0 %v4795
    %v4797 = vpop.xlane.xlu0 %4796
    %v4798 = vmax.f32 %v4797, 1e-24
    %v4799 = vrsqrt.pop %v4798
    %v4800 = vmul.f32 %v4799, %v4798
    %v4801 = vmul.f32 %v4800, %v4799
    %v4802 = vmul.f32 0.5, %v4801
    %v4803 = vsub.f32 1.5, %v4802
    %v4804 = vmul.f32 %v4799, %v4803
    %vm4805 = vweird.f32 %v4798
    %vm4806 = vweird.f32 %v4799
    %vm4807 = vmor %vm4805, %vm4806
    %v4808 = vsel %vm4807, %v4799, %v4804
    %v4809 = vmul.f32 %v4793, %v4808
    %4811 = vrot.lane.b32.xlu0 %v4791, 124
    %v4812 = vpop.permute.xlu0 %4811
    %v4814 = vsub.f32 %v4769, %v4812
    %v4815 = vmul.f32 %v4814, %v4814
    %v4816 = vsel %vm114, %v4815, 0.0
    %4817 = vadd.xlane.f32.xlu0 %v4816
    %v4818 = vpop.xlane.xlu0 %4817
    %v4819 = vmax.f32 %v4818, 1e-24
    %v4820 = vrsqrt.pop %v4819
    %v4821 = vmul.f32 %v4820, %v4819
    %v4822 = vmul.f32 %v4821, %v4820
    %v4823 = vmul.f32 0.5, %v4822
    %v4824 = vsub.f32 1.5, %v4823
    %v4825 = vmul.f32 %v4820, %v4824
    %vm4826 = vweird.f32 %v4819
    %vm4827 = vweird.f32 %v4820
    %vm4828 = vmor %vm4826, %vm4827
    %v4829 = vsel %vm4828, %v4820, %v4825
    %v4830 = vmul.f32 %v4814, %v4829
    %v4831 = vsub.f32 %v4751, %v4243
    %v4832 = vmul.f32 %v4831, %v4831
    %v4833 = vsel %vm81, %v4832, 0.0
    %4834 = vadd.xlane.f32.xlu0 %v4833
    %v4835 = vpop.xlane.xlu0 %4834
    %v4836 = vmax.f32 %v4835, 1e-24
    %v4837 = vrsqrt.pop %v4836
    %v4838 = vmul.f32 %v4837, %v4836
    %v4839 = vmul.f32 %v4838, %v4837
    %v4840 = vmul.f32 0.5, %v4839
    %v4841 = vsub.f32 1.5, %v4840
    %v4842 = vmul.f32 %v4837, %v4841
    %vm4843 = vweird.f32 %v4836
    %vm4844 = vweird.f32 %v4837
    %vm4845 = vmor %vm4843, %vm4844
    %v4846 = vsel %vm4845, %v4837, %v4842
    %v4847 = vmul.f32 %v4831, %v4846
    %v4848 = vsub.f32 %v4751, %v4283
    %v4849 = vmul.f32 %v4848, %v4848
    %v4850 = vsel %vm81, %v4849, 0.0
    %4851 = vadd.xlane.f32.xlu0 %v4850
    %v4852 = vpop.xlane.xlu0 %4851
    %v4853 = vmax.f32 %v4852, 1e-24
    %v4854 = vrsqrt.pop %v4853
    %v4855 = vmul.f32 %v4854, %v4853
    %v4856 = vmul.f32 %v4855, %v4854
    %v4857 = vmul.f32 0.5, %v4856
    %v4858 = vsub.f32 1.5, %v4857
    %v4859 = vmul.f32 %v4854, %v4858
    %vm4860 = vweird.f32 %v4853
    %vm4861 = vweird.f32 %v4854
    %vm4862 = vmor %vm4860, %vm4861
    %v4863 = vsel %vm4862, %v4854, %v4859
    %v4864 = vmul.f32 %v4848, %v4863
    %4866 = vrot.lane.b32.xlu0 %v4830, 2
    %v4867 = vpop.permute.xlu0 %4866
    %4870 = vrot.lane.b32.xlu0 %v4847, 4
    %v4871 = vpop.permute.xlu0 %4870
    %4874 = vrot.lane.b32.xlu0 %v4864, 8
    %v4875 = vpop.permute.xlu0 %4874
    %v4877 = vsel %vm114, %v4809, %v4867
    %v4878 = vsel %vm81, %v4877, %v4871
    %v4879 = vsel %vm181, %v4878, %v4875
    %v4880 = vpack.c.bf16 %v4879, %v4879
    %v4882 = vsel %vm190, %v4880, 0
    %4884 = vmatpush.bf16.msra.mxu0 0
    %4885 = vmatpush.bf16.msra.mxu0 0
    %4886 = vmatpush.bf16.msra.mxu0 0
    %4887 = vmatpush.bf16.msra.mxu0 0
    %4888 = vmatpush.bf16.msra.mxu0 0
    %4889 = vmatpush.bf16.msra.mxu0 0
    %4890 = vmatpush.bf16.msra.mxu0 0
    %4891 = vmatpush.bf16.msra.mxu0 %v196
    %4892 = vmatmul.bf16.gmra.mxu0 %v4882
    %v4893 = vpop.f32.mrf.mxu0
    %v4894 = vadd.f32 %v184, %v4893
    %v4895 = vpop.f32.mrf.mxu0
    %4896 = vdwg.mxu0
    %v4897 = vmax.f32 %v4894, 0.0
    %v4898 = vpack.c.bf16 %v4767, %v4767
    %v4900 = vsel %vm232, %v4898, 0
    %4902 = vmatpush.bf16.msra.mxu0 0
    %4903 = vmatpush.bf16.msra.mxu0 0
    %4904 = vmatpush.bf16.msra.mxu0 0
    %4905 = vmatpush.bf16.msra.mxu0 0
    %4906 = vmatpush.bf16.msra.mxu0 0
    %4907 = vmatpush.bf16.msra.mxu0 %v238
    %4908 = vmatpush.bf16.msra.mxu0 %v228
    %4909 = vmatpush.bf16.msra.mxu0 %v227
    %4910 = vmatmul.bf16.gmra.mxu0 %v4900
    %v4911 = vpop.f32.mrf.mxu0
    %v4912 = vadd.f32 %v213, %v4911
    %v4913 = vpop.f32.mrf.mxu0
    %4914 = vdwg.mxu0
    %v4915 = vpack.c.bf16 %v4897, %v4897
    %v4917 = vsel %vm278, %v4915, 0
    %4919 = vmatpush.bf16.msra.mxu0 0
    %4920 = vmatpush.bf16.msra.mxu0 0
    %4921 = vmatpush.bf16.msra.mxu0 0
    %4922 = vmatpush.bf16.msra.mxu0 0
    %4923 = vmatpush.bf16.msra.mxu0 %v283
    %4924 = vmatpush.bf16.msra.mxu0 %v273
    %4925 = vmatpush.bf16.msra.mxu0 %v272
    %4926 = vmatpush.bf16.msra.mxu0 %v271
    %4927 = vmatmul.bf16.gmra.mxu0 %v4917
    %v4928 = vpop.f32.mrf.mxu0
    %v4929 = vadd.f32 %v254, %v4928
    %v4930 = vpop.f32.mrf.mxu0
    %4931 = vdwg.mxu0
    %4933 = vrot.lane.b32.xlu0 %v4912, 60
    %v4934 = vpop.permute.xlu0 %4933
    %v4936 = vadd.f32 %v4929, %v4934
    %v4937 = vxor.u32 %v4936, 2147483648
    %v4938 = vmul.f32 %v4937, 1.442695
    %v4939 = vpow.pop %v4938
    %v4940 = vadd.f32 %v4939, 1.0
    %v4941 = vrcp.pop %v4940
    %v4942 = vmul.f32 %v4940, %v4941
    %v4943 = vsub.f32 1.0, %v4942
    %v4944 = vmul.f32 %v4941, %v4943
    %v4945 = vadd.f32 %v4941, %v4944
    %vm4946 = vweird.f32 %v4940
    %vm4947 = vweird.f32 %v4941
    %vm4948 = vmor %vm4946, %vm4947
    %v4949 = vsel %vm4948, %v4941, %v4945
    %v4950 = vand.u32 2147483647, %v4940
    %vm4951 = vcmp.eq.f32.partialorder %v4950, 8.507059e+37
    %v4952 = vand.u32 %v4940, 2147483648
    %v4953 = vor.u32 1.1754944e-38, %v4952
    %v4954 = vsel %vm4951, %v4953, %v4949
    %v4955 = vmul.f32 1.0, %v4954
    %4956 = vrot.lane.b32.xlu0 %v4912, 28
    %v4957 = vpop.permute.xlu0 %4956
    %v4959 = vmul.f32 %v4955, %v4957
    %4961 = vrot.lane.b32.xlu0 %v4959, 32
    %v4962 = vpop.permute.xlu0 %4961
    %v4964 = vadd.f32 %v4929, %v4962
    %v4965 = vtanh.pop %v4964
    %v4966 = vsub.f32 1.0, %v4955
    %4968 = vrot.lane.b32.xlu0 %v4965, 112
    %v4969 = vpop.permute.xlu0 %4968
    %v4971 = vmul.f32 %v4966, %v4969
    %4973 = vrot.lane.b32.xlu0 %v4767, 76
    %v4974 = vpop.permute.xlu0 %4973
    %v4976 = vmul.f32 %v4955, %v4974
    %v4977 = vadd.f32 %v4971, %v4976
    %v4978 = vpack.c.bf16 %v4977, %v4977
    %4980 = vrot.lane.b32.xlu0 %v4978, 52
    %v4981 = vpop.permute.xlu0 %4980
    %v4983 = vsel %vm353, %v4981, 0
    %4985 = vmatpush.bf16.msra.mxu0 0
    %4986 = vmatpush.bf16.msra.mxu0 0
    %4987 = vmatpush.bf16.msra.mxu0 0
    %4988 = vmatpush.bf16.msra.mxu0 0
    %4989 = vmatpush.bf16.msra.mxu0 0
    %4990 = vmatpush.bf16.msra.mxu0 0
    %4991 = vmatpush.bf16.msra.mxu0 0
    %4992 = vmatpush.bf16.msra.mxu0 %v351
    %4993 = vmatmul.bf16.gmra.mxu0 %v4983
    %v4994 = vpop.f32.mrf.mxu0
    %v4995 = vadd.f32 0.0, %v4994
    %v4996 = vpop.f32.mrf.mxu0
    %4997 = vdwg.mxu0
    %4999 = vrot.lane.b32.xlu0 %v4995, 12
    %v5000 = vpop.permute.xlu0 %4999
    %v5002 = vadd.f32 %v4929, %v5000
    %5003 = vrot.lane.b32.xlu0 %v4912, 92
    %v5004 = vpop.permute.xlu0 %5003
    %v5006 = vadd.f32 %v5002, %v5004
    %v5007 = vxor.u32 %v5006, 2147483648
    %v5008 = vmul.f32 %v5007, 1.442695
    %v5009 = vpow.pop %v5008
    %v5010 = vadd.f32 %v5009, 1.0
    %v5011 = vrcp.pop %v5010
    %v5012 = vmul.f32 %v5010, %v5011
    %v5013 = vsub.f32 1.0, %v5012
    %v5014 = vmul.f32 %v5011, %v5013
    %v5015 = vadd.f32 %v5011, %v5014
    %vm5016 = vweird.f32 %v5010
    %vm5017 = vweird.f32 %v5011
    %vm5018 = vmor %vm5016, %vm5017
    %v5019 = vsel %vm5018, %v5011, %v5015
    %v5020 = vand.u32 2147483647, %v5010
    %vm5021 = vcmp.eq.f32.partialorder %v5020, 8.507059e+37
    %v5022 = vand.u32 %v5010, 2147483648
    %v5023 = vor.u32 1.1754944e-38, %v5022
    %v5024 = vsel %vm5021, %v5023, %v5019
    %v5025 = vmul.f32 1.0, %v5024
    %v5026 = vmul.f32 %v5025, %v4934
    %5028 = vrot.lane.b32.xlu0 %v5026, 32
    %v5029 = vpop.permute.xlu0 %5028
    %v5031 = vadd.f32 %v5002, %v5029
    %v5032 = vtanh.pop %v5031
    %v5033 = vsub.f32 1.0, %v5025
    %5035 = vrot.lane.b32.xlu0 %v5032, 112
    %v5036 = vpop.permute.xlu0 %5035
    %v5038 = vmul.f32 %v5033, %v5036
    %5039 = vrot.lane.b32.xlu0 %v4767, 12
    %v5040 = vpop.permute.xlu0 %5039
    %v5042 = vmul.f32 %v5025, %v5040
    %v5043 = vadd.f32 %v5038, %v5042
    %v5044 = vpack.c.bf16 %v5043, %v5043
    %5046 = vrot.lane.b32.xlu0 %v5044, 100
    %v5047 = vpop.permute.xlu0 %5046
    %v5049 = vsel %vm353, %v5047, 0
    %5051 = vmatpush.bf16.msra.mxu0 0
    %5052 = vmatpush.bf16.msra.mxu0 0
    %5053 = vmatpush.bf16.msra.mxu0 0
    %5054 = vmatpush.bf16.msra.mxu0 0
    %5055 = vmatpush.bf16.msra.mxu0 0
    %5056 = vmatpush.bf16.msra.mxu0 0
    %5057 = vmatpush.bf16.msra.mxu0 0
    %5058 = vmatpush.bf16.msra.mxu0 %v425
    %5059 = vmatmul.bf16.gmra.mxu0 %v5049
    %v5060 = vpop.f32.mrf.mxu0
    %v5061 = vadd.f32 %v417, %v5060
    %v5062 = vpop.f32.mrf.mxu0
    %5063 = vdwg.mxu0
    %v5064 = vmax.f32 %v5061, 0.0
    %v5065 = vpack.c.bf16 %v5064, %v5064
    %v5067 = vsel %vm81, %v5065, 0
    %5069 = vmatpush.bf16.msra.mxu0 0
    %5070 = vmatpush.bf16.msra.mxu0 0
    %5071 = vmatpush.bf16.msra.mxu0 0
    %5072 = vmatpush.bf16.msra.mxu0 0
    %5073 = vmatpush.bf16.msra.mxu0 0
    %5074 = vmatpush.bf16.msra.mxu0 0
    %5075 = vmatpush.bf16.msra.mxu0 0
    %5076 = vmatpush.bf16.msra.mxu0 %v449
    %5077 = vmatmul.bf16.gmra.mxu0 %v5067
    %v5078 = vpop.f32.mrf.mxu0
    %v5079 = vadd.f32 0.0, %v5078
    %v5080 = vpop.f32.mrf.mxu0
    %5081 = vdwg.mxu0
    %v5082 = vadd.f32 %v4929, %v5079
    %5083 = vrot.lane.b32.xlu0 %v4912, 32
    %v5084 = vpop.permute.xlu0 %5083
    %v5086 = vadd.f32 %v5082, %v5084
    %v5087 = vxor.u32 %v5086, 2147483648
    %v5088 = vmul.f32 %v5087, 1.442695
    %v5089 = vpow.pop %v5088
    %v5090 = vadd.f32 %v5089, 1.0
    %v5091 = vrcp.pop %v5090
    %v5092 = vmul.f32 %v5090, %v5091
    %v5093 = vsub.f32 1.0, %v5092
    %v5094 = vmul.f32 %v5091, %v5093
    %v5095 = vadd.f32 %v5091, %v5094
    %vm5096 = vweird.f32 %v5090
    %vm5097 = vweird.f32 %v5091
    %vm5098 = vmor %vm5096, %vm5097
    %v5099 = vsel %vm5098, %v5091, %v5095
    %v5100 = vand.u32 2147483647, %v5090
    %vm5101 = vcmp.eq.f32.partialorder %v5100, 8.507059e+37
    %v5102 = vand.u32 %v5090, 2147483648
    %v5103 = vor.u32 1.1754944e-38, %v5102
    %v5104 = vsel %vm5101, %v5103, %v5099
    %v5105 = vmul.f32 1.0, %v5104
    %5106 = vrot.lane.b32.xlu0 %v4912, 24
    %v5107 = vpop.permute.xlu0 %5106
    %v5109 = vmul.f32 %v5105, %v5107
    %5111 = vrot.lane.b32.xlu0 %v5109, 8
    %v5112 = vpop.permute.xlu0 %5111
    %v5114 = vadd.f32 %v5082, %v5112
    %v5115 = vtanh.pop %v5114
    %v5116 = vsub.f32 1.0, %v5105
    %5118 = vrot.lane.b32.xlu0 %v5115, 124
    %v5119 = vpop.permute.xlu0 %5118
    %v5121 = vmul.f32 %v5116, %v5119
    %5122 = vrot.lane.b32.xlu0 %v4767, 100
    %v5123 = vpop.permute.xlu0 %5122
    %v5125 = vmul.f32 %v5105, %v5123
    %v5126 = vadd.f32 %v5121, %v5125
    %v5127 = vpack.c.bf16 %v5126, %v5126
    %5129 = vrot.lane.b32.xlu0 %v5127, 124
    %v5130 = vpop.permute.xlu0 %5129
    %v5132 = vsel %vm81, %v5130, 0
    %5134 = vmatpush.bf16.msra.mxu0 0
    %5135 = vmatpush.bf16.msra.mxu0 0
    %5136 = vmatpush.bf16.msra.mxu0 0
    %5137 = vmatpush.bf16.msra.mxu0 0
    %5138 = vmatpush.bf16.msra.mxu0 0
    %5139 = vmatpush.bf16.msra.mxu0 0
    %5140 = vmatpush.bf16.msra.mxu0 0
    %5141 = vmatpush.bf16.msra.mxu0 %v518
    %5142 = vmatmul.bf16.gmra.mxu0 %v5132
    %v5143 = vpop.f32.mrf.mxu0
    %v5144 = vadd.f32 %v510, %v5143
    %v5145 = vpop.f32.mrf.mxu0
    %5146 = vdwg.mxu0
    %5148 = vrot.lane.b32.xlu0 %v5144, 4
    %v5149 = vpop.permute.xlu0 %5148
    %v5151 = vadd.f32 %v5061, %v5149
    %v5152 = vmax.f32 %v5151, 0.0
    %v5153 = vpack.c.bf16 %v5152, %v5152
    %5155 = vrot.lane.b32.xlu0 %v5153, 124
    %v5156 = vpop.permute.xlu0 %5155
    %v5158 = vsel %vm574, %v5156, 0
    %5160 = vmatpush.bf16.msra.mxu0 0
    %5161 = vmatpush.bf16.msra.mxu0 0
    %5162 = vmatpush.bf16.msra.mxu0 0
    %5163 = vmatpush.bf16.msra.mxu0 %v568
    %5164 = vmatpush.bf16.msra.mxu0 %v567
    %5165 = vmatpush.bf16.msra.mxu0 %v566
    %5166 = vmatpush.bf16.msra.mxu0 %v565
    %5167 = vmatpush.bf16.msra.mxu0 %v564
    %5168 = vmatmul.bf16.gmra.mxu0 %v5158
    %v5169 = vpop.f32.mrf.mxu0
    %v5170 = vadd.f32 %v540, %v5169
    %v5171 = vpop.f32.mrf.mxu0
    %5172 = vdwg.mxu0
    %v5173 = vpack.c.bf16 %v5170, %v5170
    %v5175 = vsel %vm181, %v5173, 0
    %5177 = vmatpush.bf16.msra.mxu0 0
    %5178 = vmatpush.bf16.msra.mxu0 0
    %5179 = vmatpush.bf16.msra.mxu0 0
    %5180 = vmatpush.bf16.msra.mxu0 0
    %5181 = vmatpush.bf16.msra.mxu0 0
    %5182 = vmatpush.bf16.msra.mxu0 0
    %5183 = vmatpush.bf16.msra.mxu0 0
    %5184 = vmatpush.bf16.msra.mxu0 %v596
    %5185 = vmatmul.bf16.gmra.mxu0 %v5175
    %v5186 = vpop.f32.mrf.mxu0
    %v5187 = vadd.f32 0.0, %v5186
    %v5188 = vpop.f32.mrf.mxu0
    %5189 = vdwg.mxu0
    %5191 = vrot.lane.b32.xlu0 %v5187, 80
    %v5192 = vpop.permute.xlu0 %5191
    %v5194 = vadd.f32 %v5144, %v5192
    %v5195 = vmax.f32 %v5194, 0.0
    %v5196 = vpack.c.bf16 %v5195, %v5195
    %5198 = vrot.lane.b32.xlu0 %v5196, 48
    %v5199 = vpop.permute.xlu0 %5198
    %v5201 = vsel %vm353, %v5199, 0
    %5203 = vmatpush.bf16.msra.mxu0 0
    %5204 = vmatpush.bf16.msra.mxu0 0
    %5205 = vmatpush.bf16.msra.mxu0 0
    %5206 = vmatpush.bf16.msra.mxu0 0
    %5207 = vmatpush.bf16.msra.mxu0 0
    %5208 = vmatpush.bf16.msra.mxu0 0
    %5209 = vmatpush.bf16.msra.mxu0 0
    %5210 = vmatpush.bf16.msra.mxu0 %v625
    %5211 = vmatmul.bf16.gmra.mxu0 %v5201
    %v5212 = vpop.f32.mrf.mxu0
    %v5213 = vadd.f32 0.0, %v5212
    %v5214 = vpop.f32.mrf.mxu0
    %5215 = vdwg.mxu0
    %5217 = vrot.lane.b32.xlu0 %v5213, 84
    %v5218 = vpop.permute.xlu0 %5217
    %v5220 = vadd.f32 %v5061, %v5218
    %v5221 = vmax.f32 %v5220, 0.0
    %5223 = vrot.lane.b32.xlu0 %v4814, 2
    %v5224 = vpop.permute.xlu0 %5223
    %5226 = vrot.lane.b32.xlu0 %v4814, 4
    %v5227 = vpop.permute.xlu0 %5226
    %5229 = vrot.lane.b32.xlu0 %v4814, 6
    %v5230 = vpop.permute.xlu0 %5229
    %v5232 = vsel %vm114, %v4814, %v5224
    %v5233 = vsel %vm81, %v5232, %v5227
    %v5234 = vsel %vm661, %v5233, %v5230
    %v5235 = vmul.f32 %v5170, %v5234
    %v5237 = vsel %vm181, %v5235, 0
    %5239 = vmatpush.msra.mxu0 0.0
    %5240 = vmatpush.msra.mxu0 0.0
    %5241 = vmatpush.msra.mxu0 0.0
    %5242 = vmatpush.msra.mxu0 0.0
    %5243 = vmatpush.msra.mxu0 0.0
    %5244 = vmatpush.msra.mxu0 0.0
    %5245 = vmatpush.msra.mxu0 0.0
    %5246 = vmatpush.msra.mxu0 0.0
    %5247 = vmatpush.msra.mxu0 0.0
    %5248 = vmatpush.msra.mxu0 0.0
    %5249 = vmatpush.msra.mxu0 0.0
    %5250 = vmatpush.msra.mxu0 0.0
    %5251 = vmatpush.msra.mxu0 0.0
    %5252 = vmatpush.msra.mxu0 0.0
    %5253 = vmatpush.msra.mxu0 0.0
    %5254 = vmatpush.msra.mxu0 %v72
    %5255 = vmatmul.f32.gmra.mxu0 %v5237
    %v5256 = vpop.f32.mrf.mxu0
    %v5257 = vadd.f32 0.0, %v5256
    %5258 = vdwg.mxu0
    %v5259 = vadd.f32 %v4791, %v5257
    %s5260 = scalar_lea.vmem %s4, 72
    %5261 = vst.msk [vmem:[%s5260] sm:$0xff] %vm81, %v5259
    %5263 = vrot.lane.b32.xlu0 %v4977, 52
    %v5264 = vpop.permute.xlu0 %5263
    %5267 = vrot.lane.b32.xlu0 %v5221, 60
    %v5268 = vpop.permute.xlu0 %5267
    %5271 = vrot.lane.b32.xlu0 %v5126, 28
    %v5272 = vpop.permute.xlu0 %5271
    %v5274 = vsel %vm353, %v5264, %v5268
    %v5275 = vsel %vm702, %v5274, %v5272
    %s5276 = scalar_lea.vmem %s0, 80
    %v5277 = vld [vmem:[%s5276] sm:$0xff]
    %v5279 = vsel %vm81, %v5259, 0
    %5281 = vmatpush.msra.mxu0 0.0
    %5282 = vmatpush.msra.mxu0 0.0
    %5283 = vmatpush.msra.mxu0 0.0
    %5284 = vmatpush.msra.mxu0 0.0
    %5285 = vmatpush.msra.mxu0 0.0
    %5286 = vmatpush.msra.mxu0 0.0
    %5287 = vmatpush.msra.mxu0 0.0
    %5288 = vmatpush.msra.mxu0 0.0
    %5289 = vmatpush.msra.mxu0 0.0
    %5290 = vmatpush.msra.mxu0 0.0
    %5291 = vmatpush.msra.mxu0 0.0
    %5292 = vmatpush.msra.mxu0 0.0
    %5293 = vmatpush.msra.mxu0 0.0
    %5294 = vmatpush.msra.mxu0 0.0
    %5295 = vmatpush.msra.mxu0 0.0
    %5296 = vmatpush.msra.mxu0 %v87
    %5297 = vmatmul.f32.gmra.mxu0 %v5279
    %v5298 = vpop.f32.mrf.mxu0
    %v5299 = vadd.f32 0.0, %v5298
    %5300 = vdwg.mxu0
    %v5301 = vsub.f32 %v5277, %v4769
    %v5302 = vmul.f32 %v5301, %v5301
    %v5303 = vsel %vm114, %v5302, 0.0
    %5304 = vadd.xlane.f32.xlu0 %v5303
    %v5305 = vpop.xlane.xlu0 %5304
    %v5306 = vmax.f32 %v5305, 1e-24
    %v5307 = vrsqrt.pop %v5306
    %v5308 = vmul.f32 %v5307, %v5306
    %v5309 = vmul.f32 %v5308, %v5307
    %v5310 = vmul.f32 0.5, %v5309
    %v5311 = vsub.f32 1.5, %v5310
    %v5312 = vmul.f32 %v5307, %v5311
    %vm5313 = vweird.f32 %v5306
    %vm5314 = vweird.f32 %v5307
    %vm5315 = vmor %vm5313, %vm5314
    %v5316 = vsel %vm5315, %v5307, %v5312
    %v5317 = vmul.f32 %v5301, %v5316
    %5319 = vrot.lane.b32.xlu0 %v5299, 124
    %v5320 = vpop.permute.xlu0 %5319
    %v5322 = vsub.f32 %v5277, %v5320
    %v5323 = vmul.f32 %v5322, %v5322
    %v5324 = vsel %vm114, %v5323, 0.0
    %5325 = vadd.xlane.f32.xlu0 %v5324
    %v5326 = vpop.xlane.xlu0 %5325
    %v5327 = vmax.f32 %v5326, 1e-24
    %v5328 = vrsqrt.pop %v5327
    %v5329 = vmul.f32 %v5328, %v5327
    %v5330 = vmul.f32 %v5329, %v5328
    %v5331 = vmul.f32 0.5, %v5330
    %v5332 = vsub.f32 1.5, %v5331
    %v5333 = vmul.f32 %v5328, %v5332
    %vm5334 = vweird.f32 %v5327
    %vm5335 = vweird.f32 %v5328
    %vm5336 = vmor %vm5334, %vm5335
    %v5337 = vsel %vm5336, %v5328, %v5333
    %v5338 = vmul.f32 %v5322, %v5337
    %v5339 = vsub.f32 %v5259, %v4751
    %v5340 = vmul.f32 %v5339, %v5339
    %v5341 = vsel %vm81, %v5340, 0.0
    %5342 = vadd.xlane.f32.xlu0 %v5341
    %v5343 = vpop.xlane.xlu0 %5342
    %v5344 = vmax.f32 %v5343, 1e-24
    %v5345 = vrsqrt.pop %v5344
    %v5346 = vmul.f32 %v5345, %v5344
    %v5347 = vmul.f32 %v5346, %v5345
    %v5348 = vmul.f32 0.5, %v5347
    %v5349 = vsub.f32 1.5, %v5348
    %v5350 = vmul.f32 %v5345, %v5349
    %vm5351 = vweird.f32 %v5344
    %vm5352 = vweird.f32 %v5345
    %vm5353 = vmor %vm5351, %vm5352
    %v5354 = vsel %vm5353, %v5345, %v5350
    %v5355 = vmul.f32 %v5339, %v5354
    %v5356 = vsub.f32 %v5259, %v4791
    %v5357 = vmul.f32 %v5356, %v5356
    %v5358 = vsel %vm81, %v5357, 0.0
    %5359 = vadd.xlane.f32.xlu0 %v5358
    %v5360 = vpop.xlane.xlu0 %5359
    %v5361 = vmax.f32 %v5360, 1e-24
    %v5362 = vrsqrt.pop %v5361
    %v5363 = vmul.f32 %v5362, %v5361
    %v5364 = vmul.f32 %v5363, %v5362
    %v5365 = vmul.f32 0.5, %v5364
    %v5366 = vsub.f32 1.5, %v5365
    %v5367 = vmul.f32 %v5362, %v5366
    %vm5368 = vweird.f32 %v5361
    %vm5369 = vweird.f32 %v5362
    %vm5370 = vmor %vm5368, %vm5369
    %v5371 = vsel %vm5370, %v5362, %v5367
    %v5372 = vmul.f32 %v5356, %v5371
    %5374 = vrot.lane.b32.xlu0 %v5338, 2
    %v5375 = vpop.permute.xlu0 %5374
    %5378 = vrot.lane.b32.xlu0 %v5355, 4
    %v5379 = vpop.permute.xlu0 %5378
    %5382 = vrot.lane.b32.xlu0 %v5372, 8
    %v5383 = vpop.permute.xlu0 %5382
    %v5385 = vsel %vm114, %v5317, %v5375
    %v5386 = vsel %vm81, %v5385, %v5379
    %v5387 = vsel %vm181, %v5386, %v5383
    %v5388 = vpack.c.bf16 %v5387, %v5387
    %v5390 = vsel %vm190, %v5388, 0
    %5392 = vmatpush.bf16.msra.mxu0 0
    %5393 = vmatpush.bf16.msra.mxu0 0
    %5394 = vmatpush.bf16.msra.mxu0 0
    %5395 = vmatpush.bf16.msra.mxu0 0
    %5396 = vmatpush.bf16.msra.mxu0 0
    %5397 = vmatpush.bf16.msra.mxu0 0
    %5398 = vmatpush.bf16.msra.mxu0 0
    %5399 = vmatpush.bf16.msra.mxu0 %v196
    %5400 = vmatmul.bf16.gmra.mxu0 %v5390
    %v5401 = vpop.f32.mrf.mxu0
    %v5402 = vadd.f32 %v184, %v5401
    %v5403 = vpop.f32.mrf.mxu0
    %5404 = vdwg.mxu0
    %v5405 = vmax.f32 %v5402, 0.0
    %v5406 = vpack.c.bf16 %v5275, %v5275
    %v5408 = vsel %vm232, %v5406, 0
    %5410 = vmatpush.bf16.msra.mxu0 0
    %5411 = vmatpush.bf16.msra.mxu0 0
    %5412 = vmatpush.bf16.msra.mxu0 0
    %5413 = vmatpush.bf16.msra.mxu0 0
    %5414 = vmatpush.bf16.msra.mxu0 0
    %5415 = vmatpush.bf16.msra.mxu0 %v238
    %5416 = vmatpush.bf16.msra.mxu0 %v228
    %5417 = vmatpush.bf16.msra.mxu0 %v227
    %5418 = vmatmul.bf16.gmra.mxu0 %v5408
    %v5419 = vpop.f32.mrf.mxu0
    %v5420 = vadd.f32 %v213, %v5419
    %v5421 = vpop.f32.mrf.mxu0
    %5422 = vdwg.mxu0
    %v5423 = vpack.c.bf16 %v5405, %v5405
    %v5425 = vsel %vm278, %v5423, 0
    %5427 = vmatpush.bf16.msra.mxu0 0
    %5428 = vmatpush.bf16.msra.mxu0 0
    %5429 = vmatpush.bf16.msra.mxu0 0
    %5430 = vmatpush.bf16.msra.mxu0 0
    %5431 = vmatpush.bf16.msra.mxu0 %v283
    %5432 = vmatpush.bf16.msra.mxu0 %v273
    %5433 = vmatpush.bf16.msra.mxu0 %v272
    %5434 = vmatpush.bf16.msra.mxu0 %v271
    %5435 = vmatmul.bf16.gmra.mxu0 %v5425
    %v5436 = vpop.f32.mrf.mxu0
    %v5437 = vadd.f32 %v254, %v5436
    %v5438 = vpop.f32.mrf.mxu0
    %5439 = vdwg.mxu0
    %5441 = vrot.lane.b32.xlu0 %v5420, 60
    %v5442 = vpop.permute.xlu0 %5441
    %v5444 = vadd.f32 %v5437, %v5442
    %v5445 = vxor.u32 %v5444, 2147483648
    %v5446 = vmul.f32 %v5445, 1.442695
    %v5447 = vpow.pop %v5446
    %v5448 = vadd.f32 %v5447, 1.0
    %v5449 = vrcp.pop %v5448
    %v5450 = vmul.f32 %v5448, %v5449
    %v5451 = vsub.f32 1.0, %v5450
    %v5452 = vmul.f32 %v5449, %v5451
    %v5453 = vadd.f32 %v5449, %v5452
    %vm5454 = vweird.f32 %v5448
    %vm5455 = vweird.f32 %v5449
    %vm5456 = vmor %vm5454, %vm5455
    %v5457 = vsel %vm5456, %v5449, %v5453
    %v5458 = vand.u32 2147483647, %v5448
    %vm5459 = vcmp.eq.f32.partialorder %v5458, 8.507059e+37
    %v5460 = vand.u32 %v5448, 2147483648
    %v5461 = vor.u32 1.1754944e-38, %v5460
    %v5462 = vsel %vm5459, %v5461, %v5457
    %v5463 = vmul.f32 1.0, %v5462
    %5464 = vrot.lane.b32.xlu0 %v5420, 28
    %v5465 = vpop.permute.xlu0 %5464
    %v5467 = vmul.f32 %v5463, %v5465
    %5469 = vrot.lane.b32.xlu0 %v5467, 32
    %v5470 = vpop.permute.xlu0 %5469
    %v5472 = vadd.f32 %v5437, %v5470
    %v5473 = vtanh.pop %v5472
    %v5474 = vsub.f32 1.0, %v5463
    %5476 = vrot.lane.b32.xlu0 %v5473, 112
    %v5477 = vpop.permute.xlu0 %5476
    %v5479 = vmul.f32 %v5474, %v5477
    %5481 = vrot.lane.b32.xlu0 %v5275, 76
    %v5482 = vpop.permute.xlu0 %5481
    %v5484 = vmul.f32 %v5463, %v5482
    %v5485 = vadd.f32 %v5479, %v5484
    %v5486 = vpack.c.bf16 %v5485, %v5485
    %5488 = vrot.lane.b32.xlu0 %v5486, 52
    %v5489 = vpop.permute.xlu0 %5488
    %v5491 = vsel %vm353, %v5489, 0
    %5493 = vmatpush.bf16.msra.mxu0 0
    %5494 = vmatpush.bf16.msra.mxu0 0
    %5495 = vmatpush.bf16.msra.mxu0 0
    %5496 = vmatpush.bf16.msra.mxu0 0
    %5497 = vmatpush.bf16.msra.mxu0 0
    %5498 = vmatpush.bf16.msra.mxu0 0
    %5499 = vmatpush.bf16.msra.mxu0 0
    %5500 = vmatpush.bf16.msra.mxu0 %v351
    %5501 = vmatmul.bf16.gmra.mxu0 %v5491
    %v5502 = vpop.f32.mrf.mxu0
    %v5503 = vadd.f32 0.0, %v5502
    %v5504 = vpop.f32.mrf.mxu0
    %5505 = vdwg.mxu0
    %5507 = vrot.lane.b32.xlu0 %v5503, 12
    %v5508 = vpop.permute.xlu0 %5507
    %v5510 = vadd.f32 %v5437, %v5508
    %5511 = vrot.lane.b32.xlu0 %v5420, 92
    %v5512 = vpop.permute.xlu0 %5511
    %v5514 = vadd.f32 %v5510, %v5512
    %v5515 = vxor.u32 %v5514, 2147483648
    %v5516 = vmul.f32 %v5515, 1.442695
    %v5517 = vpow.pop %v5516
    %v5518 = vadd.f32 %v5517, 1.0
    %v5519 = vrcp.pop %v5518
    %v5520 = vmul.f32 %v5518, %v5519
    %v5521 = vsub.f32 1.0, %v5520
    %v5522 = vmul.f32 %v5519, %v5521
    %v5523 = vadd.f32 %v5519, %v5522
    %vm5524 = vweird.f32 %v5518
    %vm5525 = vweird.f32 %v5519
    %vm5526 = vmor %vm5524, %vm5525
    %v5527 = vsel %vm5526, %v5519, %v5523
    %v5528 = vand.u32 2147483647, %v5518
    %vm5529 = vcmp.eq.f32.partialorder %v5528, 8.507059e+37
    %v5530 = vand.u32 %v5518, 2147483648
    %v5531 = vor.u32 1.1754944e-38, %v5530
    %v5532 = vsel %vm5529, %v5531, %v5527
    %v5533 = vmul.f32 1.0, %v5532
    %v5534 = vmul.f32 %v5533, %v5442
    %5536 = vrot.lane.b32.xlu0 %v5534, 32
    %v5537 = vpop.permute.xlu0 %5536
    %v5539 = vadd.f32 %v5510, %v5537
    %v5540 = vtanh.pop %v5539
    %v5541 = vsub.f32 1.0, %v5533
    %5543 = vrot.lane.b32.xlu0 %v5540, 112
    %v5544 = vpop.permute.xlu0 %5543
    %v5546 = vmul.f32 %v5541, %v5544
    %5547 = vrot.lane.b32.xlu0 %v5275, 12
    %v5548 = vpop.permute.xlu0 %5547
    %v5550 = vmul.f32 %v5533, %v5548
    %v5551 = vadd.f32 %v5546, %v5550
    %v5552 = vpack.c.bf16 %v5551, %v5551
    %5554 = vrot.lane.b32.xlu0 %v5552, 100
    %v5555 = vpop.permute.xlu0 %5554
    %v5557 = vsel %vm353, %v5555, 0
    %5559 = vmatpush.bf16.msra.mxu0 0
    %5560 = vmatpush.bf16.msra.mxu0 0
    %5561 = vmatpush.bf16.msra.mxu0 0
    %5562 = vmatpush.bf16.msra.mxu0 0
    %5563 = vmatpush.bf16.msra.mxu0 0
    %5564 = vmatpush.bf16.msra.mxu0 0
    %5565 = vmatpush.bf16.msra.mxu0 0
    %5566 = vmatpush.bf16.msra.mxu0 %v425
    %5567 = vmatmul.bf16.gmra.mxu0 %v5557
    %v5568 = vpop.f32.mrf.mxu0
    %v5569 = vadd.f32 %v417, %v5568
    %v5570 = vpop.f32.mrf.mxu0
    %5571 = vdwg.mxu0
    %v5572 = vmax.f32 %v5569, 0.0
    %v5573 = vpack.c.bf16 %v5572, %v5572
    %v5575 = vsel %vm81, %v5573, 0
    %5577 = vmatpush.bf16.msra.mxu0 0
    %5578 = vmatpush.bf16.msra.mxu0 0
    %5579 = vmatpush.bf16.msra.mxu0 0
    %5580 = vmatpush.bf16.msra.mxu0 0
    %5581 = vmatpush.bf16.msra.mxu0 0
    %5582 = vmatpush.bf16.msra.mxu0 0
    %5583 = vmatpush.bf16.msra.mxu0 0
    %5584 = vmatpush.bf16.msra.mxu0 %v449
    %5585 = vmatmul.bf16.gmra.mxu0 %v5575
    %v5586 = vpop.f32.mrf.mxu0
    %v5587 = vadd.f32 0.0, %v5586
    %v5588 = vpop.f32.mrf.mxu0
    %5589 = vdwg.mxu0
    %v5590 = vadd.f32 %v5437, %v5587
    %5591 = vrot.lane.b32.xlu0 %v5420, 32
    %v5592 = vpop.permute.xlu0 %5591
    %v5594 = vadd.f32 %v5590, %v5592
    %v5595 = vxor.u32 %v5594, 2147483648
    %v5596 = vmul.f32 %v5595, 1.442695
    %v5597 = vpow.pop %v5596
    %v5598 = vadd.f32 %v5597, 1.0
    %v5599 = vrcp.pop %v5598
    %v5600 = vmul.f32 %v5598, %v5599
    %v5601 = vsub.f32 1.0, %v5600
    %v5602 = vmul.f32 %v5599, %v5601
    %v5603 = vadd.f32 %v5599, %v5602
    %vm5604 = vweird.f32 %v5598
    %vm5605 = vweird.f32 %v5599
    %vm5606 = vmor %vm5604, %vm5605
    %v5607 = vsel %vm5606, %v5599, %v5603
    %v5608 = vand.u32 2147483647, %v5598
    %vm5609 = vcmp.eq.f32.partialorder %v5608, 8.507059e+37
    %v5610 = vand.u32 %v5598, 2147483648
    %v5611 = vor.u32 1.1754944e-38, %v5610
    %v5612 = vsel %vm5609, %v5611, %v5607
    %v5613 = vmul.f32 1.0, %v5612
    %5614 = vrot.lane.b32.xlu0 %v5420, 24
    %v5615 = vpop.permute.xlu0 %5614
    %v5617 = vmul.f32 %v5613, %v5615
    %5619 = vrot.lane.b32.xlu0 %v5617, 8
    %v5620 = vpop.permute.xlu0 %5619
    %v5622 = vadd.f32 %v5590, %v5620
    %v5623 = vtanh.pop %v5622
    %v5624 = vsub.f32 1.0, %v5613
    %5626 = vrot.lane.b32.xlu0 %v5623, 124
    %v5627 = vpop.permute.xlu0 %5626
    %v5629 = vmul.f32 %v5624, %v5627
    %5630 = vrot.lane.b32.xlu0 %v5275, 100
    %v5631 = vpop.permute.xlu0 %5630
    %v5633 = vmul.f32 %v5613, %v5631
    %v5634 = vadd.f32 %v5629, %v5633
    %v5635 = vpack.c.bf16 %v5634, %v5634
    %5637 = vrot.lane.b32.xlu0 %v5635, 124
    %v5638 = vpop.permute.xlu0 %5637
    %v5640 = vsel %vm81, %v5638, 0
    %5642 = vmatpush.bf16.msra.mxu0 0
    %5643 = vmatpush.bf16.msra.mxu0 0
    %5644 = vmatpush.bf16.msra.mxu0 0
    %5645 = vmatpush.bf16.msra.mxu0 0
    %5646 = vmatpush.bf16.msra.mxu0 0
    %5647 = vmatpush.bf16.msra.mxu0 0
    %5648 = vmatpush.bf16.msra.mxu0 0
    %5649 = vmatpush.bf16.msra.mxu0 %v518
    %5650 = vmatmul.bf16.gmra.mxu0 %v5640
    %v5651 = vpop.f32.mrf.mxu0
    %v5652 = vadd.f32 %v510, %v5651
    %v5653 = vpop.f32.mrf.mxu0
    %5654 = vdwg.mxu0
    %5656 = vrot.lane.b32.xlu0 %v5652, 4
    %v5657 = vpop.permute.xlu0 %5656
    %v5659 = vadd.f32 %v5569, %v5657
    %v5660 = vmax.f32 %v5659, 0.0
    %v5661 = vpack.c.bf16 %v5660, %v5660
    %5663 = vrot.lane.b32.xlu0 %v5661, 124
    %v5664 = vpop.permute.xlu0 %5663
    %v5666 = vsel %vm574, %v5664, 0
    %5668 = vmatpush.bf16.msra.mxu0 0
    %5669 = vmatpush.bf16.msra.mxu0 0
    %5670 = vmatpush.bf16.msra.mxu0 0
    %5671 = vmatpush.bf16.msra.mxu0 %v568
    %5672 = vmatpush.bf16.msra.mxu0 %v567
    %5673 = vmatpush.bf16.msra.mxu0 %v566
    %5674 = vmatpush.bf16.msra.mxu0 %v565
    %5675 = vmatpush.bf16.msra.mxu0 %v564
    %5676 = vmatmul.bf16.gmra.mxu0 %v5666
    %v5677 = vpop.f32.mrf.mxu0
    %v5678 = vadd.f32 %v540, %v5677
    %v5679 = vpop.f32.mrf.mxu0
    %5680 = vdwg.mxu0
    %v5681 = vpack.c.bf16 %v5678, %v5678
    %v5683 = vsel %vm181, %v5681, 0
    %5685 = vmatpush.bf16.msra.mxu0 0
    %5686 = vmatpush.bf16.msra.mxu0 0
    %5687 = vmatpush.bf16.msra.mxu0 0
    %5688 = vmatpush.bf16.msra.mxu0 0
    %5689 = vmatpush.bf16.msra.mxu0 0
    %5690 = vmatpush.bf16.msra.mxu0 0
    %5691 = vmatpush.bf16.msra.mxu0 0
    %5692 = vmatpush.bf16.msra.mxu0 %v596
    %5693 = vmatmul.bf16.gmra.mxu0 %v5683
    %v5694 = vpop.f32.mrf.mxu0
    %v5695 = vadd.f32 0.0, %v5694
    %v5696 = vpop.f32.mrf.mxu0
    %5697 = vdwg.mxu0
    %5699 = vrot.lane.b32.xlu0 %v5695, 80
    %v5700 = vpop.permute.xlu0 %5699
    %v5702 = vadd.f32 %v5652, %v5700
    %v5703 = vmax.f32 %v5702, 0.0
    %v5704 = vpack.c.bf16 %v5703, %v5703
    %5706 = vrot.lane.b32.xlu0 %v5704, 48
    %v5707 = vpop.permute.xlu0 %5706
    %v5709 = vsel %vm353, %v5707, 0
    %5711 = vmatpush.bf16.msra.mxu0 0
    %5712 = vmatpush.bf16.msra.mxu0 0
    %5713 = vmatpush.bf16.msra.mxu0 0
    %5714 = vmatpush.bf16.msra.mxu0 0
    %5715 = vmatpush.bf16.msra.mxu0 0
    %5716 = vmatpush.bf16.msra.mxu0 0
    %5717 = vmatpush.bf16.msra.mxu0 0
    %5718 = vmatpush.bf16.msra.mxu0 %v625
    %5719 = vmatmul.bf16.gmra.mxu0 %v5709
    %v5720 = vpop.f32.mrf.mxu0
    %v5721 = vadd.f32 0.0, %v5720
    %v5722 = vpop.f32.mrf.mxu0
    %5723 = vdwg.mxu0
    %5725 = vrot.lane.b32.xlu0 %v5721, 84
    %v5726 = vpop.permute.xlu0 %5725
    %v5728 = vadd.f32 %v5569, %v5726
    %v5729 = vmax.f32 %v5728, 0.0
    %5731 = vrot.lane.b32.xlu0 %v5322, 2
    %v5732 = vpop.permute.xlu0 %5731
    %5734 = vrot.lane.b32.xlu0 %v5322, 4
    %v5735 = vpop.permute.xlu0 %5734
    %5737 = vrot.lane.b32.xlu0 %v5322, 6
    %v5738 = vpop.permute.xlu0 %5737
    %v5740 = vsel %vm114, %v5322, %v5732
    %v5741 = vsel %vm81, %v5740, %v5735
    %v5742 = vsel %vm661, %v5741, %v5738
    %v5743 = vmul.f32 %v5678, %v5742
    %v5745 = vsel %vm181, %v5743, 0
    %5747 = vmatpush.msra.mxu0 0.0
    %5748 = vmatpush.msra.mxu0 0.0
    %5749 = vmatpush.msra.mxu0 0.0
    %5750 = vmatpush.msra.mxu0 0.0
    %5751 = vmatpush.msra.mxu0 0.0
    %5752 = vmatpush.msra.mxu0 0.0
    %5753 = vmatpush.msra.mxu0 0.0
    %5754 = vmatpush.msra.mxu0 0.0
    %5755 = vmatpush.msra.mxu0 0.0
    %5756 = vmatpush.msra.mxu0 0.0
    %5757 = vmatpush.msra.mxu0 0.0
    %5758 = vmatpush.msra.mxu0 0.0
    %5759 = vmatpush.msra.mxu0 0.0
    %5760 = vmatpush.msra.mxu0 0.0
    %5761 = vmatpush.msra.mxu0 0.0
    %5762 = vmatpush.msra.mxu0 %v72
    %5763 = vmatmul.f32.gmra.mxu0 %v5745
    %v5764 = vpop.f32.mrf.mxu0
    %v5765 = vadd.f32 0.0, %v5764
    %5766 = vdwg.mxu0
    %v5767 = vadd.f32 %v5299, %v5765
    %s5768 = scalar_lea.vmem %s4, 80
    %5769 = vst.msk [vmem:[%s5768] sm:$0xff] %vm81, %v5767
    %5771 = vrot.lane.b32.xlu0 %v5485, 52
    %v5772 = vpop.permute.xlu0 %5771
    %5775 = vrot.lane.b32.xlu0 %v5729, 60
    %v5776 = vpop.permute.xlu0 %5775
    %5779 = vrot.lane.b32.xlu0 %v5634, 28
    %v5780 = vpop.permute.xlu0 %5779
    %v5782 = vsel %vm353, %v5772, %v5776
    %v5783 = vsel %vm702, %v5782, %v5780
    %s5784 = scalar_lea.vmem %s0, 88
    %v5785 = vld [vmem:[%s5784] sm:$0xff]
    %v5787 = vsel %vm81, %v5767, 0
    %5789 = vmatpush.msra.mxu0 0.0
    %5790 = vmatpush.msra.mxu0 0.0
    %5791 = vmatpush.msra.mxu0 0.0
    %5792 = vmatpush.msra.mxu0 0.0
    %5793 = vmatpush.msra.mxu0 0.0
    %5794 = vmatpush.msra.mxu0 0.0
    %5795 = vmatpush.msra.mxu0 0.0
    %5796 = vmatpush.msra.mxu0 0.0
    %5797 = vmatpush.msra.mxu0 0.0
    %5798 = vmatpush.msra.mxu0 0.0
    %5799 = vmatpush.msra.mxu0 0.0
    %5800 = vmatpush.msra.mxu0 0.0
    %5801 = vmatpush.msra.mxu0 0.0
    %5802 = vmatpush.msra.mxu0 0.0
    %5803 = vmatpush.msra.mxu0 0.0
    %5804 = vmatpush.msra.mxu0 %v87
    %5805 = vmatmul.f32.gmra.mxu0 %v5787
    %v5806 = vpop.f32.mrf.mxu0
    %v5807 = vadd.f32 0.0, %v5806
    %5808 = vdwg.mxu0
    %v5809 = vsub.f32 %v5785, %v5277
    %v5810 = vmul.f32 %v5809, %v5809
    %v5811 = vsel %vm114, %v5810, 0.0
    %5812 = vadd.xlane.f32.xlu0 %v5811
    %v5813 = vpop.xlane.xlu0 %5812
    %v5814 = vmax.f32 %v5813, 1e-24
    %v5815 = vrsqrt.pop %v5814
    %v5816 = vmul.f32 %v5815, %v5814
    %v5817 = vmul.f32 %v5816, %v5815
    %v5818 = vmul.f32 0.5, %v5817
    %v5819 = vsub.f32 1.5, %v5818
    %v5820 = vmul.f32 %v5815, %v5819
    %vm5821 = vweird.f32 %v5814
    %vm5822 = vweird.f32 %v5815
    %vm5823 = vmor %vm5821, %vm5822
    %v5824 = vsel %vm5823, %v5815, %v5820
    %v5825 = vmul.f32 %v5809, %v5824
    %5827 = vrot.lane.b32.xlu0 %v5807, 124
    %v5828 = vpop.permute.xlu0 %5827
    %v5830 = vsub.f32 %v5785, %v5828
    %v5831 = vmul.f32 %v5830, %v5830
    %v5832 = vsel %vm114, %v5831, 0.0
    %5833 = vadd.xlane.f32.xlu0 %v5832
    %v5834 = vpop.xlane.xlu0 %5833
    %v5835 = vmax.f32 %v5834, 1e-24
    %v5836 = vrsqrt.pop %v5835
    %v5837 = vmul.f32 %v5836, %v5835
    %v5838 = vmul.f32 %v5837, %v5836
    %v5839 = vmul.f32 0.5, %v5838
    %v5840 = vsub.f32 1.5, %v5839
    %v5841 = vmul.f32 %v5836, %v5840
    %vm5842 = vweird.f32 %v5835
    %vm5843 = vweird.f32 %v5836
    %vm5844 = vmor %vm5842, %vm5843
    %v5845 = vsel %vm5844, %v5836, %v5841
    %v5846 = vmul.f32 %v5830, %v5845
    %v5847 = vsub.f32 %v5767, %v5259
    %v5848 = vmul.f32 %v5847, %v5847
    %v5849 = vsel %vm81, %v5848, 0.0
    %5850 = vadd.xlane.f32.xlu0 %v5849
    %v5851 = vpop.xlane.xlu0 %5850
    %v5852 = vmax.f32 %v5851, 1e-24
    %v5853 = vrsqrt.pop %v5852
    %v5854 = vmul.f32 %v5853, %v5852
    %v5855 = vmul.f32 %v5854, %v5853
    %v5856 = vmul.f32 0.5, %v5855
    %v5857 = vsub.f32 1.5, %v5856
    %v5858 = vmul.f32 %v5853, %v5857
    %vm5859 = vweird.f32 %v5852
    %vm5860 = vweird.f32 %v5853
    %vm5861 = vmor %vm5859, %vm5860
    %v5862 = vsel %vm5861, %v5853, %v5858
    %v5863 = vmul.f32 %v5847, %v5862
    %v5864 = vsub.f32 %v5767, %v5299
    %v5865 = vmul.f32 %v5864, %v5864
    %v5866 = vsel %vm81, %v5865, 0.0
    %5867 = vadd.xlane.f32.xlu0 %v5866
    %v5868 = vpop.xlane.xlu0 %5867
    %v5869 = vmax.f32 %v5868, 1e-24
    %v5870 = vrsqrt.pop %v5869
    %v5871 = vmul.f32 %v5870, %v5869
    %v5872 = vmul.f32 %v5871, %v5870
    %v5873 = vmul.f32 0.5, %v5872
    %v5874 = vsub.f32 1.5, %v5873
    %v5875 = vmul.f32 %v5870, %v5874
    %vm5876 = vweird.f32 %v5869
    %vm5877 = vweird.f32 %v5870
    %vm5878 = vmor %vm5876, %vm5877
    %v5879 = vsel %vm5878, %v5870, %v5875
    %v5880 = vmul.f32 %v5864, %v5879
    %5882 = vrot.lane.b32.xlu0 %v5846, 2
    %v5883 = vpop.permute.xlu0 %5882
    %5886 = vrot.lane.b32.xlu0 %v5863, 4
    %v5887 = vpop.permute.xlu0 %5886
    %5890 = vrot.lane.b32.xlu0 %v5880, 8
    %v5891 = vpop.permute.xlu0 %5890
    %v5893 = vsel %vm114, %v5825, %v5883
    %v5894 = vsel %vm81, %v5893, %v5887
    %v5895 = vsel %vm181, %v5894, %v5891
    %v5896 = vpack.c.bf16 %v5895, %v5895
    %v5898 = vsel %vm190, %v5896, 0
    %5900 = vmatpush.bf16.msra.mxu0 0
    %5901 = vmatpush.bf16.msra.mxu0 0
    %5902 = vmatpush.bf16.msra.mxu0 0
    %5903 = vmatpush.bf16.msra.mxu0 0
    %5904 = vmatpush.bf16.msra.mxu0 0
    %5905 = vmatpush.bf16.msra.mxu0 0
    %5906 = vmatpush.bf16.msra.mxu0 0
    %5907 = vmatpush.bf16.msra.mxu0 %v196
    %5908 = vmatmul.bf16.gmra.mxu0 %v5898
    %v5909 = vpop.f32.mrf.mxu0
    %v5910 = vadd.f32 %v184, %v5909
    %v5911 = vpop.f32.mrf.mxu0
    %5912 = vdwg.mxu0
    %v5913 = vmax.f32 %v5910, 0.0
    %v5914 = vpack.c.bf16 %v5783, %v5783
    %v5916 = vsel %vm232, %v5914, 0
    %5918 = vmatpush.bf16.msra.mxu0 0
    %5919 = vmatpush.bf16.msra.mxu0 0
    %5920 = vmatpush.bf16.msra.mxu0 0
    %5921 = vmatpush.bf16.msra.mxu0 0
    %5922 = vmatpush.bf16.msra.mxu0 0
    %5923 = vmatpush.bf16.msra.mxu0 %v238
    %5924 = vmatpush.bf16.msra.mxu0 %v228
    %5925 = vmatpush.bf16.msra.mxu0 %v227
    %5926 = vmatmul.bf16.gmra.mxu0 %v5916
    %v5927 = vpop.f32.mrf.mxu0
    %v5928 = vadd.f32 %v213, %v5927
    %v5929 = vpop.f32.mrf.mxu0
    %5930 = vdwg.mxu0
    %v5931 = vpack.c.bf16 %v5913, %v5913
    %v5933 = vsel %vm278, %v5931, 0
    %5935 = vmatpush.bf16.msra.mxu0 0
    %5936 = vmatpush.bf16.msra.mxu0 0
    %5937 = vmatpush.bf16.msra.mxu0 0
    %5938 = vmatpush.bf16.msra.mxu0 0
    %5939 = vmatpush.bf16.msra.mxu0 %v283
    %5940 = vmatpush.bf16.msra.mxu0 %v273
    %5941 = vmatpush.bf16.msra.mxu0 %v272
    %5942 = vmatpush.bf16.msra.mxu0 %v271
    %5943 = vmatmul.bf16.gmra.mxu0 %v5933
    %v5944 = vpop.f32.mrf.mxu0
    %v5945 = vadd.f32 %v254, %v5944
    %v5946 = vpop.f32.mrf.mxu0
    %5947 = vdwg.mxu0
    %5949 = vrot.lane.b32.xlu0 %v5928, 60
    %v5950 = vpop.permute.xlu0 %5949
    %v5952 = vadd.f32 %v5945, %v5950
    %v5953 = vxor.u32 %v5952, 2147483648
    %v5954 = vmul.f32 %v5953, 1.442695
    %v5955 = vpow.pop %v5954
    %v5956 = vadd.f32 %v5955, 1.0
    %v5957 = vrcp.pop %v5956
    %v5958 = vmul.f32 %v5956, %v5957
    %v5959 = vsub.f32 1.0, %v5958
    %v5960 = vmul.f32 %v5957, %v5959
    %v5961 = vadd.f32 %v5957, %v5960
    %vm5962 = vweird.f32 %v5956
    %vm5963 = vweird.f32 %v5957
    %vm5964 = vmor %vm5962, %vm5963
    %v5965 = vsel %vm5964, %v5957, %v5961
    %v5966 = vand.u32 2147483647, %v5956
    %vm5967 = vcmp.eq.f32.partialorder %v5966, 8.507059e+37
    %v5968 = vand.u32 %v5956, 2147483648
    %v5969 = vor.u32 1.1754944e-38, %v5968
    %v5970 = vsel %vm5967, %v5969, %v5965
    %v5971 = vmul.f32 1.0, %v5970
    %5972 = vrot.lane.b32.xlu0 %v5928, 28
    %v5973 = vpop.permute.xlu0 %5972
    %v5975 = vmul.f32 %v5971, %v5973
    %5977 = vrot.lane.b32.xlu0 %v5975, 32
    %v5978 = vpop.permute.xlu0 %5977
    %v5980 = vadd.f32 %v5945, %v5978
    %v5981 = vtanh.pop %v5980
    %v5982 = vsub.f32 1.0, %v5971
    %5984 = vrot.lane.b32.xlu0 %v5981, 112
    %v5985 = vpop.permute.xlu0 %5984
    %v5987 = vmul.f32 %v5982, %v5985
    %5989 = vrot.lane.b32.xlu0 %v5783, 76
    %v5990 = vpop.permute.xlu0 %5989
    %v5992 = vmul.f32 %v5971, %v5990
    %v5993 = vadd.f32 %v5987, %v5992
    %v5994 = vpack.c.bf16 %v5993, %v5993
    %5996 = vrot.lane.b32.xlu0 %v5994, 52
    %v5997 = vpop.permute.xlu0 %5996
    %v5999 = vsel %vm353, %v5997, 0
    %6001 = vmatpush.bf16.msra.mxu0 0
    %6002 = vmatpush.bf16.msra.mxu0 0
    %6003 = vmatpush.bf16.msra.mxu0 0
    %6004 = vmatpush.bf16.msra.mxu0 0
    %6005 = vmatpush.bf16.msra.mxu0 0
    %6006 = vmatpush.bf16.msra.mxu0 0
    %6007 = vmatpush.bf16.msra.mxu0 0
    %6008 = vmatpush.bf16.msra.mxu0 %v351
    %6009 = vmatmul.bf16.gmra.mxu0 %v5999
    %v6010 = vpop.f32.mrf.mxu0
    %v6011 = vadd.f32 0.0, %v6010
    %v6012 = vpop.f32.mrf.mxu0
    %6013 = vdwg.mxu0
    %6015 = vrot.lane.b32.xlu0 %v6011, 12
    %v6016 = vpop.permute.xlu0 %6015
    %v6018 = vadd.f32 %v5945, %v6016
    %6019 = vrot.lane.b32.xlu0 %v5928, 92
    %v6020 = vpop.permute.xlu0 %6019
    %v6022 = vadd.f32 %v6018, %v6020
    %v6023 = vxor.u32 %v6022, 2147483648
    %v6024 = vmul.f32 %v6023, 1.442695
    %v6025 = vpow.pop %v6024
    %v6026 = vadd.f32 %v6025, 1.0
    %v6027 = vrcp.pop %v6026
    %v6028 = vmul.f32 %v6026, %v6027
    %v6029 = vsub.f32 1.0, %v6028
    %v6030 = vmul.f32 %v6027, %v6029
    %v6031 = vadd.f32 %v6027, %v6030
    %vm6032 = vweird.f32 %v6026
    %vm6033 = vweird.f32 %v6027
    %vm6034 = vmor %vm6032, %vm6033
    %v6035 = vsel %vm6034, %v6027, %v6031
    %v6036 = vand.u32 2147483647, %v6026
    %vm6037 = vcmp.eq.f32.partialorder %v6036, 8.507059e+37
    %v6038 = vand.u32 %v6026, 2147483648
    %v6039 = vor.u32 1.1754944e-38, %v6038
    %v6040 = vsel %vm6037, %v6039, %v6035
    %v6041 = vmul.f32 1.0, %v6040
    %v6042 = vmul.f32 %v6041, %v5950
    %6044 = vrot.lane.b32.xlu0 %v6042, 32
    %v6045 = vpop.permute.xlu0 %6044
    %v6047 = vadd.f32 %v6018, %v6045
    %v6048 = vtanh.pop %v6047
    %v6049 = vsub.f32 1.0, %v6041
    %6051 = vrot.lane.b32.xlu0 %v6048, 112
    %v6052 = vpop.permute.xlu0 %6051
    %v6054 = vmul.f32 %v6049, %v6052
    %6055 = vrot.lane.b32.xlu0 %v5783, 12
    %v6056 = vpop.permute.xlu0 %6055
    %v6058 = vmul.f32 %v6041, %v6056
    %v6059 = vadd.f32 %v6054, %v6058
    %v6060 = vpack.c.bf16 %v6059, %v6059
    %6062 = vrot.lane.b32.xlu0 %v6060, 100
    %v6063 = vpop.permute.xlu0 %6062
    %v6065 = vsel %vm353, %v6063, 0
    %6067 = vmatpush.bf16.msra.mxu0 0
    %6068 = vmatpush.bf16.msra.mxu0 0
    %6069 = vmatpush.bf16.msra.mxu0 0
    %6070 = vmatpush.bf16.msra.mxu0 0
    %6071 = vmatpush.bf16.msra.mxu0 0
    %6072 = vmatpush.bf16.msra.mxu0 0
    %6073 = vmatpush.bf16.msra.mxu0 0
    %6074 = vmatpush.bf16.msra.mxu0 %v425
    %6075 = vmatmul.bf16.gmra.mxu0 %v6065
    %v6076 = vpop.f32.mrf.mxu0
    %v6077 = vadd.f32 %v417, %v6076
    %v6078 = vpop.f32.mrf.mxu0
    %6079 = vdwg.mxu0
    %v6080 = vmax.f32 %v6077, 0.0
    %v6081 = vpack.c.bf16 %v6080, %v6080
    %v6083 = vsel %vm81, %v6081, 0
    %6085 = vmatpush.bf16.msra.mxu0 0
    %6086 = vmatpush.bf16.msra.mxu0 0
    %6087 = vmatpush.bf16.msra.mxu0 0
    %6088 = vmatpush.bf16.msra.mxu0 0
    %6089 = vmatpush.bf16.msra.mxu0 0
    %6090 = vmatpush.bf16.msra.mxu0 0
    %6091 = vmatpush.bf16.msra.mxu0 0
    %6092 = vmatpush.bf16.msra.mxu0 %v449
    %6093 = vmatmul.bf16.gmra.mxu0 %v6083
    %v6094 = vpop.f32.mrf.mxu0
    %v6095 = vadd.f32 0.0, %v6094
    %v6096 = vpop.f32.mrf.mxu0
    %6097 = vdwg.mxu0
    %v6098 = vadd.f32 %v5945, %v6095
    %6099 = vrot.lane.b32.xlu0 %v5928, 32
    %v6100 = vpop.permute.xlu0 %6099
    %v6102 = vadd.f32 %v6098, %v6100
    %v6103 = vxor.u32 %v6102, 2147483648
    %v6104 = vmul.f32 %v6103, 1.442695
    %v6105 = vpow.pop %v6104
    %v6106 = vadd.f32 %v6105, 1.0
    %v6107 = vrcp.pop %v6106
    %v6108 = vmul.f32 %v6106, %v6107
    %v6109 = vsub.f32 1.0, %v6108
    %v6110 = vmul.f32 %v6107, %v6109
    %v6111 = vadd.f32 %v6107, %v6110
    %vm6112 = vweird.f32 %v6106
    %vm6113 = vweird.f32 %v6107
    %vm6114 = vmor %vm6112, %vm6113
    %v6115 = vsel %vm6114, %v6107, %v6111
    %v6116 = vand.u32 2147483647, %v6106
    %vm6117 = vcmp.eq.f32.partialorder %v6116, 8.507059e+37
    %v6118 = vand.u32 %v6106, 2147483648
    %v6119 = vor.u32 1.1754944e-38, %v6118
    %v6120 = vsel %vm6117, %v6119, %v6115
    %v6121 = vmul.f32 1.0, %v6120
    %6122 = vrot.lane.b32.xlu0 %v5928, 24
    %v6123 = vpop.permute.xlu0 %6122
    %v6125 = vmul.f32 %v6121, %v6123
    %6127 = vrot.lane.b32.xlu0 %v6125, 8
    %v6128 = vpop.permute.xlu0 %6127
    %v6130 = vadd.f32 %v6098, %v6128
    %v6131 = vtanh.pop %v6130
    %v6132 = vsub.f32 1.0, %v6121
    %6134 = vrot.lane.b32.xlu0 %v6131, 124
    %v6135 = vpop.permute.xlu0 %6134
    %v6137 = vmul.f32 %v6132, %v6135
    %6138 = vrot.lane.b32.xlu0 %v5783, 100
    %v6139 = vpop.permute.xlu0 %6138
    %v6141 = vmul.f32 %v6121, %v6139
    %v6142 = vadd.f32 %v6137, %v6141
    %v6143 = vpack.c.bf16 %v6142, %v6142
    %6145 = vrot.lane.b32.xlu0 %v6143, 124
    %v6146 = vpop.permute.xlu0 %6145
    %v6148 = vsel %vm81, %v6146, 0
    %6150 = vmatpush.bf16.msra.mxu0 0
    %6151 = vmatpush.bf16.msra.mxu0 0
    %6152 = vmatpush.bf16.msra.mxu0 0
    %6153 = vmatpush.bf16.msra.mxu0 0
    %6154 = vmatpush.bf16.msra.mxu0 0
    %6155 = vmatpush.bf16.msra.mxu0 0
    %6156 = vmatpush.bf16.msra.mxu0 0
    %6157 = vmatpush.bf16.msra.mxu0 %v518
    %6158 = vmatmul.bf16.gmra.mxu0 %v6148
    %v6159 = vpop.f32.mrf.mxu0
    %v6160 = vadd.f32 %v510, %v6159
    %v6161 = vpop.f32.mrf.mxu0
    %6162 = vdwg.mxu0
    %6164 = vrot.lane.b32.xlu0 %v6160, 4
    %v6165 = vpop.permute.xlu0 %6164
    %v6167 = vadd.f32 %v6077, %v6165
    %v6168 = vmax.f32 %v6167, 0.0
    %v6169 = vpack.c.bf16 %v6168, %v6168
    %6171 = vrot.lane.b32.xlu0 %v6169, 124
    %v6172 = vpop.permute.xlu0 %6171
    %v6174 = vsel %vm574, %v6172, 0
    %6176 = vmatpush.bf16.msra.mxu0 0
    %6177 = vmatpush.bf16.msra.mxu0 0
    %6178 = vmatpush.bf16.msra.mxu0 0
    %6179 = vmatpush.bf16.msra.mxu0 %v568
    %6180 = vmatpush.bf16.msra.mxu0 %v567
    %6181 = vmatpush.bf16.msra.mxu0 %v566
    %6182 = vmatpush.bf16.msra.mxu0 %v565
    %6183 = vmatpush.bf16.msra.mxu0 %v564
    %6184 = vmatmul.bf16.gmra.mxu0 %v6174
    %v6185 = vpop.f32.mrf.mxu0
    %v6186 = vadd.f32 %v540, %v6185
    %v6187 = vpop.f32.mrf.mxu0
    %6188 = vdwg.mxu0
    %v6189 = vpack.c.bf16 %v6186, %v6186
    %v6191 = vsel %vm181, %v6189, 0
    %6193 = vmatpush.bf16.msra.mxu0 0
    %6194 = vmatpush.bf16.msra.mxu0 0
    %6195 = vmatpush.bf16.msra.mxu0 0
    %6196 = vmatpush.bf16.msra.mxu0 0
    %6197 = vmatpush.bf16.msra.mxu0 0
    %6198 = vmatpush.bf16.msra.mxu0 0
    %6199 = vmatpush.bf16.msra.mxu0 0
    %6200 = vmatpush.bf16.msra.mxu0 %v596
    %6201 = vmatmul.bf16.gmra.mxu0 %v6191
    %v6202 = vpop.f32.mrf.mxu0
    %v6203 = vadd.f32 0.0, %v6202
    %v6204 = vpop.f32.mrf.mxu0
    %6205 = vdwg.mxu0
    %6207 = vrot.lane.b32.xlu0 %v6203, 80
    %v6208 = vpop.permute.xlu0 %6207
    %v6210 = vadd.f32 %v6160, %v6208
    %v6211 = vmax.f32 %v6210, 0.0
    %v6212 = vpack.c.bf16 %v6211, %v6211
    %6214 = vrot.lane.b32.xlu0 %v6212, 48
    %v6215 = vpop.permute.xlu0 %6214
    %v6217 = vsel %vm353, %v6215, 0
    %6219 = vmatpush.bf16.msra.mxu0 0
    %6220 = vmatpush.bf16.msra.mxu0 0
    %6221 = vmatpush.bf16.msra.mxu0 0
    %6222 = vmatpush.bf16.msra.mxu0 0
    %6223 = vmatpush.bf16.msra.mxu0 0
    %6224 = vmatpush.bf16.msra.mxu0 0
    %6225 = vmatpush.bf16.msra.mxu0 0
    %6226 = vmatpush.bf16.msra.mxu0 %v625
    %6227 = vmatmul.bf16.gmra.mxu0 %v6217
    %v6228 = vpop.f32.mrf.mxu0
    %v6229 = vadd.f32 0.0, %v6228
    %v6230 = vpop.f32.mrf.mxu0
    %6231 = vdwg.mxu0
    %6233 = vrot.lane.b32.xlu0 %v6229, 84
    %v6234 = vpop.permute.xlu0 %6233
    %v6236 = vadd.f32 %v6077, %v6234
    %v6237 = vmax.f32 %v6236, 0.0
    %6239 = vrot.lane.b32.xlu0 %v5830, 2
    %v6240 = vpop.permute.xlu0 %6239
    %6242 = vrot.lane.b32.xlu0 %v5830, 4
    %v6243 = vpop.permute.xlu0 %6242
    %6245 = vrot.lane.b32.xlu0 %v5830, 6
    %v6246 = vpop.permute.xlu0 %6245
    %v6248 = vsel %vm114, %v5830, %v6240
    %v6249 = vsel %vm81, %v6248, %v6243
    %v6250 = vsel %vm661, %v6249, %v6246
    %v6251 = vmul.f32 %v6186, %v6250
    %v6253 = vsel %vm181, %v6251, 0
    %6255 = vmatpush.msra.mxu0 0.0
    %6256 = vmatpush.msra.mxu0 0.0
    %6257 = vmatpush.msra.mxu0 0.0
    %6258 = vmatpush.msra.mxu0 0.0
    %6259 = vmatpush.msra.mxu0 0.0
    %6260 = vmatpush.msra.mxu0 0.0
    %6261 = vmatpush.msra.mxu0 0.0
    %6262 = vmatpush.msra.mxu0 0.0
    %6263 = vmatpush.msra.mxu0 0.0
    %6264 = vmatpush.msra.mxu0 0.0
    %6265 = vmatpush.msra.mxu0 0.0
    %6266 = vmatpush.msra.mxu0 0.0
    %6267 = vmatpush.msra.mxu0 0.0
    %6268 = vmatpush.msra.mxu0 0.0
    %6269 = vmatpush.msra.mxu0 0.0
    %6270 = vmatpush.msra.mxu0 %v72
    %6271 = vmatmul.f32.gmra.mxu0 %v6253
    %v6272 = vpop.f32.mrf.mxu0
    %v6273 = vadd.f32 0.0, %v6272
    %6274 = vdwg.mxu0
    %v6275 = vadd.f32 %v5807, %v6273
    %s6276 = scalar_lea.vmem %s4, 88
    %6277 = vst.msk [vmem:[%s6276] sm:$0xff] %vm81, %v6275
    %6279 = vrot.lane.b32.xlu0 %v5993, 52
    %v6280 = vpop.permute.xlu0 %6279
    %6283 = vrot.lane.b32.xlu0 %v6237, 60
    %v6284 = vpop.permute.xlu0 %6283
    %6287 = vrot.lane.b32.xlu0 %v6142, 28
    %v6288 = vpop.permute.xlu0 %6287
    %v6290 = vsel %vm353, %v6280, %v6284
    %v6291 = vsel %vm702, %v6290, %v6288
    %6292 = vst.msk [vmem:[#allocation5] sm:$0xff] %vm81, %v6275
    %6294 = vrot.lane.b32.xlu0 %v6291, 4
    %v6295 = vpop.permute.xlu0 %6294
    %vm6297 = vcmask 162848
    %6298 = vst.msk [vmem:[#allocation5] sm:$0xff] %vm6297, %v6295
    %vm6299 = vcmask 294048
    %6300 = vst.msk [vmem:[#allocation5] sm:$0xff] %vm6299, %v6295
    %vm6301 = vcmask 326944
    %6302 = vst.msk [vmem:[#allocation5] sm:$0xff] %vm6301, %v6295
    // Predicated region
    $region22: #{tpu_custom_call.1} parent=1 // pred_check
      _
    $region23: #{tpu_custom_call.1} parent=1 // pred_check_branch
      %6304 = sbr.rel (0) target = $region25
    $region24: #{tpu_custom_call.1} parent=1 // pred_region
      _
    $region25: #{tpu_custom_call.1} parent=1 // pred_fallthru
      _
    // Predicated region
    $region26: #{tpu_custom_call.1} parent=1 // pred_check
      _
    $region27: #{tpu_custom_call.1} parent=1 // pred_check_branch
      %6306 = sbr.rel (0) target = $region29
    $region28: #{tpu_custom_call.1} parent=1 // pred_region
      %6308 = vsyncadd [#allocation4], 0
      %s6310 = sshll.u32 [#allocation5], 4
      %s6311 = int_to_ptr.vmem [resolvable:$true] %s6310
      %s6312 = sshll.u32 %s5, 4
      %s6313 = int_to_ptr.hbm [resolvable:$true] %s6312
      %6315 = dma.vmem_to_hbm [thread:$0]  %s6311, 128, %s6313, [#allocation4]
    $region29: #{tpu_custom_call.1} parent=1 // pred_fallthru
      _
    // Predicated region
    $region30: #{tpu_custom_call.1} parent=1 // pred_check
      _
    $region31: #{tpu_custom_call.1} parent=1 // pred_check_branch
      %6317 = sbr.rel (0) target = $region33
    $region32: #{tpu_custom_call.1} parent=1 // pred_region
      _
    $region33: #{tpu_custom_call.1} parent=1 // pred_fallthru
      _
    // Predicated region
    $region34: #{tpu_custom_call.1} parent=1 // pred_check
      _
    $region35: #{tpu_custom_call.1} parent=1 // pred_check_branch
      %6319 = sbr.rel (0) target = $region37
    $region36: #{tpu_custom_call.1} parent=1 // pred_region
      %6321 = dma.done [#allocation4], 128
    $region37: #{tpu_custom_call.1} parent=1 // pred_fallthru
      _
    %6322 = vsyncpa [#allocation3], 1
    %6323 = vsyncpa [#allocation4], 1

</llo_original>
